<compile_context>
chip_gen: v7x
topology: tpu7x:2x2x1
jax: 0.10.0
libtpu: 0.0.40
codegen_flags: <defaults>
</compile_context>

<pallas_src>
import math
from functools import partial

import jax
import jax.numpy as jnp
from jax.experimental import pallas as pl
from jax.experimental.pallas import tpu as pltpu


# ----------------------------- configuration -----------------------------

class Config:
    embedding_size = 16
    hidden_size = 32
    num_hidden_layers = 2          # -> 1 input block + 1 output block
    num_attention_heads = 4
    intermediate_size = 64
    max_position_embeddings = 64
    use_self_cond = True
    layer_norm_eps = 1e-12


# ----------------------------- fused forward kernel -----------------------------

def _erf(x):
    """erf via Abramowitz & Stegun 7.1.26 (max abs err ~1.5e-7, f32-exact)."""
    a1, a2, a3, a4, a5 = 0.254829592, -0.284496736, 1.421413741, -1.453152027, 1.061405429
    p = 0.3275911
    ax = jnp.abs(x)
    t = 1.0 / (1.0 + p * ax)
    poly = ((((a5 * t + a4) * t + a3) * t + a2) * t + a1) * t
    y = 1.0 - poly * jnp.exp(-ax * ax)
    return jnp.where(x < 0.0, -y, y)


def _fwd_kernel(*refs, B, S, H, nh, L, eps, project, use_sc):
    """Whole ScoreEstimator forward, fully VMEM-resident, single invocation."""
    refs = list(refs)
    o_ref = refs.pop()                       # output ref is last
    it = iter(refs)

    t_sin_ref = next(it)                     # (B, H)  sinusoidal timestep emb
    x_ref = next(it)                         # (M, E)
    sc_ref = next(it) if use_sc else None    # (M, E) self-cond
    pos_ref = next(it)                       # (max_pos, H)
    mask_ref = next(it)                      # (B, S)  1/0 attention mask
    te0w, te0b, te1w, te1b = next(it), next(it), next(it), next(it)
    if project:
        wi, bi = next(it), next(it)
        if use_sc:
            wsc, bsc = next(it), next(it)
    tw, tb = next(it), next(it)              # (L,H,H), (L,1,H)
    if use_sc:
        scw, scb = next(it), next(it)        # (L,H,H), (L,1,H)
    qkvw, qkvb = next(it), next(it)          # (L,H,3H), (L,1,3H)
    aow, aob = next(it), next(it)            # (L,H,H), (L,1,H)
    ln1g, ln1b = next(it), next(it)
    fiw, fib = next(it), next(it)            # (L,H,I), (L,1,I)
    fow, fob = next(it), next(it)            # (L,I,H), (L,1,H)
    ln2g, ln2b = next(it), next(it)
    if project:
        wo, bo = next(it), next(it)          # (H,E), (1,E)

    f32 = jnp.float32
    M = B * S
    d = H // nh
    scale = 1.0 / math.sqrt(d)
    half = L // 2
    inv_sqrt2 = 1.0 / math.sqrt(2.0)

    def layernorm(z, g, b):
        mu = jnp.mean(z, axis=-1, keepdims=True)
        zc = z - mu
        var = jnp.mean(zc * zc, axis=-1, keepdims=True)
        return zc * jax.lax.rsqrt(var + eps) * g + b

    # ---- time-embedding MLP at (B, H): Linear -> SiLU -> Linear ----
    ht = jnp.dot(t_sin_ref[...], te0w[...], preferred_element_type=f32) + te0b[...]
    ht = ht * jax.nn.sigmoid(ht)
    ht = jnp.dot(ht, te1w[...], preferred_element_type=f32) + te1b[...]   # (B, H)

    # ---- input / self-cond projections ----
    if project:
        h = jnp.dot(x_ref[...], wi[...], preferred_element_type=f32) + bi[...]
        sc_h = (jnp.dot(sc_ref[...], wsc[...], preferred_element_type=f32) + bsc[...]
                if use_sc else None)
    else:
        h = x_ref[...].astype(f32)
        sc_h = sc_ref[...].astype(f32) if use_sc else None

    # ---- add position embeddings (broadcast over batch in-kernel) ----
    pos = pos_ref[0:S, :]                                            # (S, H)
    h = (h.reshape(B, S, H) + pos[None, :, :]).reshape(M, H)

    # additive attention mask, broadcast over heads & query rows in-kernel
    mask_add = (1.0 - mask_ref[...]) * jnp.finfo(f32).min            # (B, S)
    mask_b = mask_add[:, None, :]                                    # (B, 1, S)

    def bert_layer(l, x2d):
        # residual adds: time proj at (B,H) broadcast over S, then self-cond
        tp = jnp.dot(ht, tw[l], preferred_element_type=f32) + tb[l]          # (B, H)
        h2 = (x2d.reshape(B, S, H) + tp[:, None, :]).reshape(M, H)
        if use_sc:
            h2 = h2 + jnp.dot(sc_h, scw[l], preferred_element_type=f32) + scb[l]

        # fused QKV projection: one (M,H)@(H,3H) MXU op
        qkv = jnp.dot(h2, qkvw[l], preferred_element_type=f32) + qkvb[l]     # (M, 3H)
        ao_w = aow[l]                                                        # (H, H)

        # multi-head self-attention; per-head context folded straight into the
        # output projection (no lane-concatenate of heads).
        attn = jnp.zeros((M, H), f32)
        for hh in range(nh):                                                 # static unroll
            q_h = qkv[:, hh * d:(hh + 1) * d].reshape(B, S, d)
            k_h = qkv[:, H + hh * d:H + (hh + 1) * d].reshape(B, S, d)
            v_h = qkv[:, 2 * H + hh * d:2 * H + (hh + 1) * d].reshape(B, S, d)
            s = jnp.einsum('bqd,bkd->bqk', q_h, k_h,
                           preferred_element_type=f32) * scale + mask_b
            s = s - jnp.max(s, axis=-1, keepdims=True)
            p = jnp.exp(s)
            p = p / jnp.sum(p, axis=-1, keepdims=True)          # exact softmax
            ctx = jnp.einsum('bqk,bkd->bqd', p, v_h,
                             preferred_element_type=f32).reshape(M, d)
            attn = attn + jnp.dot(ctx, ao_w[hh * d:(hh + 1) * d, :],
                                  preferred_element_type=f32)
        attn = attn + aob[l]

        x1 = layernorm(attn + h2, ln1g[l], ln1b[l])

        f = jnp.dot(x1, fiw[l], preferred_element_type=f32) + fib[l]
        f = 0.5 * f * (1.0 + _erf(f * inv_sqrt2))               # exact (erf) GELU
        f = jnp.dot(f, fow[l], preferred_element_type=f32) + fob[l]
        return layernorm(f + x1, ln2g[l], ln2b[l])

    # ---- U-Net style encoder with skip connections, all VMEM-resident ----
    x = h
    skips = []
    for i in range(half):
        skips.append(x)
        x = bert_layer(i, x)
    for i in range(half):
        x = x + skips.pop()                                      # skip add fused in-kernel
        x = bert_layer(i + half, x)

    if project:
        x = jnp.dot(x, wo[...], preferred_element_type=f32) + bo[...]
    o_ref[...] = x


# ----------------------------- parameter init & prep -----------------------------

def _init_linear(key, in_dim, out_dim, scale=0.02):
    kw, kb = jax.random.split(key)
    return {"w": scale * jax.random.normal(kw, (in_dim, out_dim), jnp.float32),
            "b": scale * jax.random.normal(kb, (out_dim,), jnp.float32)}


def _init_layernorm(dim):
    return {"g": jnp.ones((dim,), jnp.float32), "b": jnp.zeros((dim,), jnp.float32)}


def _init_bert_block(key, cfg):
    H, I = cfg.hidden_size, cfg.intermediate_size
    ks = jax.random.split(key, 6)
    return {"q": _init_linear(ks[0], H, H), "k": _init_linear(ks[1], H, H),
            "v": _init_linear(ks[2], H, H), "attn_out": _init_linear(ks[3], H, H),
            "ln1": _init_layernorm(H),
            "ffn_in": _init_linear(ks[4], H, I), "ffn_out": _init_linear(ks[5], I, H),
            "ln2": _init_layernorm(H)}


def init_params(key, cfg):
    E, H, L = cfg.embedding_size, cfg.hidden_size, cfg.num_hidden_layers
    keys = iter(jax.random.split(key, 16 + 4 * L))
    params = {}
    if E != H:
        params["input_projector_x_t"] = _init_linear(next(keys), E, H)
        params["output_projector_x_t"] = _init_linear(next(keys), H, E)
        params["projector_self_cond"] = _init_linear(next(keys), E, H)
    params["time_emb_0"] = _init_linear(next(keys), H, 2 * H)
    params["time_emb_1"] = _init_linear(next(keys), 2 * H, H)
    params["position_embeddings"] = 0.02 * jax.random.normal(
        next(keys), (cfg.max_position_embeddings, H), jnp.float32)
    params["encoder"] = {
        "input_blocks": [_init_bert_block(next(keys), cfg) for _ in range(L // 2)],
        "output_blocks": [_init_bert_block(next(keys), cfg) for _ in range(L // 2)],
        "time_layers": [_init_linear(next(keys), H, H) for _ in range(L)],
        "self_cond_layers": ([_init_linear(next(keys), H, H) for _ in range(L)]
                             if cfg.use_self_cond else None),
    }
    return params


def prepare_params(params, cfg):
    """One-time prep: fused QKV concat, per-layer weight stacking, bias reshapes."""
    H, E, I = cfg.hidden_size, cfg.embedding_size, cfg.intermediate_size
    enc = params["encoder"]
    blocks = list(enc["input_blocks"]) + list(enc["output_blocks"])  # execution order

    def stack(fn):
        return jnp.stack([fn(b) for b in blocks], axis=0)

    p = {
        "te0w": params["time_emb_0"]["w"], "te0b": params["time_emb_0"]["b"].reshape(1, -1),
        "te1w": params["time_emb_1"]["w"], "te1b": params["time_emb_1"]["b"].reshape(1, -1),
        "pos": params["position_embeddings"],
        "tw": jnp.stack([t["w"] for t in enc["time_layers"]]),
        "tb": jnp.stack([t["b"].reshape(1, H) for t in enc["time_layers"]]),
        "qkvw": stack(lambda b: jnp.concatenate([b["q"]["w"], b["k"]["w"], b["v"]["w"]], axis=1)),
        "qkvb": stack(lambda b: jnp.concatenate(
            [b["q"]["b"], b["k"]["b"], b["v"]["b"]], axis=0).reshape(1, 3 * H)),
        "aow": stack(lambda b: b["attn_out"]["w"]),
        "aob": stack(lambda b: b["attn_out"]["b"].reshape(1, H)),
        "ln1g": stack(lambda b: b["ln1"]["g"].reshape(1, H)),
        "ln1b": stack(lambda b: b["ln1"]["b"].reshape(1, H)),
        "fiw": stack(lambda b: b["ffn_in"]["w"]),
        "fib": stack(lambda b: b["ffn_in"]["b"].reshape(1, I)),
        "fow": stack(lambda b: b["ffn_out"]["w"]),
        "fob": stack(lambda b: b["ffn_out"]["b"].reshape(1, H)),
        "ln2g": stack(lambda b: b["ln2"]["g"].reshape(1, H)),
        "ln2b": stack(lambda b: b["ln2"]["b"].reshape(1, H)),
    }
    if cfg.use_self_cond and enc["self_cond_layers"] is not None:
        p["scw"] = jnp.stack([l["w"] for l in enc["self_cond_layers"]])
        p["scb"] = jnp.stack([l["b"].reshape(1, H) for l in enc["self_cond_layers"]])
    if E != H:
        p["wi"] = params["input_projector_x_t"]["w"]
        p["bi"] = params["input_projector_x_t"]["b"].reshape(1, H)
        p["wsc"] = params["projector_self_cond"]["w"]
        p["bsc"] = params["projector_self_cond"]["b"].reshape(1, H)
        p["wo"] = params["output_projector_x_t"]["w"]
        p["bo"] = params["output_projector_x_t"]["b"].reshape(1, E)
    return p


# ----------------------------- model forward -----------------------------

def timestep_embedding(timesteps, dim, max_period=10000.0):
    # TODO(synk): timestep_embedding is not defined in the reference source;
    # standard guided-diffusion sinusoid with [cos, sin] ordering is assumed.
    half = dim // 2
    freqs = jnp.exp(-math.log(max_period) *
                    jnp.arange(half, dtype=jnp.float32) / half)
    args = timesteps.astype(jnp.float32)[:, None] * freqs[None, :]
    emb = jnp.concatenate([jnp.cos(args), jnp.sin(args)], axis=-1)
    if dim % 2:
        emb = jnp.concatenate([emb, jnp.zeros_like(emb[:, :1])], axis=-1)
    return emb


def score_estimator_forward(prepped, cfg, x_t, time_t, attention_mask=None,
                            x_0_self_cond=None):
    B, S, E = x_t.shape
    H = cfg.hidden_size
    L = cfg.num_hidden_layers
    M = B * S
    project = (E != H)
    use_sc = cfg.use_self_cond and (x_0_self_cond is not None)

    # tiny input-dependent glue (B x H sinusoid); everything else is in-kernel
    t_sin = timestep_embedding(time_t, H)
    x2 = x_t.reshape(M, E)
    mask = (attention_mask.astype(jnp.float32) if attention_mask is not None
            else jnp.ones((B, S), jnp.float32))

    args = [t_sin, x2]
    if use_sc:
        args.append(x_0_self_cond.reshape(M, E))
    args += [prepped["pos"], mask,
             prepped["te0w"], prepped["te0b"], prepped["te1w"], prepped["te1b"]]
    if project:
        args += [prepped["wi"], prepped["bi"]]
        if use_sc:
            args += [prepped["wsc"], prepped["bsc"]]
    args += [prepped["tw"], prepped["tb"]]
    if use_sc:
        args += [prepped["scw"], prepped["scb"]]
    args += [prepped["qkvw"], prepped["qkvb"], prepped["aow"], prepped["aob"],
             prepped["ln1g"], prepped["ln1b"], prepped["fiw"], prepped["fib"],
             prepped["fow"], prepped["fob"], prepped["ln2g"], prepped["ln2b"]]
    if project:
        args += [prepped["wo"], prepped["bo"]]

    out_dim = E if project else H
    kern = partial(_fwd_kernel, B=B, S=S, H=H, nh=cfg.num_attention_heads,
                   L=L, eps=cfg.layer_norm_eps, project=project, use_sc=use_sc)
    out = pl.pallas_call(
        kern,
        out_shape=jax.ShapeDtypeStruct((M, out_dim), jnp.float32),
        in_specs=[pl.BlockSpec(memory_space=pltpu.MemorySpace.VMEM) for _ in args],
        out_specs=pl.BlockSpec(memory_space=pltpu.MemorySpace.VMEM),
    )(*args)
    return out.reshape(B, S, out_dim)


# ----------------------------- demo -----------------------------

if __name__ == "__main__":
    cfg = Config()
    B, S, E = 2, 8, cfg.embedding_size

    key = jax.random.PRNGKey(0)
    kp, kx, kt, ksc = jax.random.split(key, 4)

    params = init_params(kp, cfg)
    prepped = prepare_params(params, cfg)           # one-time, outside the hot path

    x_t = jax.random.normal(kx, (B, S, E), jnp.float32)
    time_t = jax.random.uniform(kt, (B,), jnp.float32, 0.0, 100.0)
    attention_mask = jnp.array(
        [[1, 1, 1, 1, 1, 1, 1, 1],
         [1, 1, 1, 1, 1, 0, 0, 0]], jnp.float32)
    x_0_self_cond = jax.random.normal(ksc, (B, S, E), jnp.float32)

    fwd = jax.jit(partial(score_estimator_forward, prepped, cfg))
    out = fwd(x_t, time_t, attention_mask, x_0_self_cond)
    out = jax.block_until_ready(out)

    assert out.shape == (B, S, E), out.shape
    assert bool(jnp.all(jnp.isfinite(out)))
    print("KERNEL_OK")
</pallas_src>

<mosaic_0001>
module attributes {stable_mosaic.version = 11 : i64} {
  func.func @_fwd_kernel(%arg0: memref<2x32xf32, #tpu.memory_space<vmem>>, %arg1: memref<16x16xf32, #tpu.memory_space<vmem>>, %arg2: memref<16x16xf32, #tpu.memory_space<vmem>>, %arg3: memref<64x32xf32, #tpu.memory_space<vmem>>, %arg4: memref<2x8xf32, #tpu.memory_space<vmem>>, %arg5: memref<32x64xf32, #tpu.memory_space<vmem>>, %arg6: memref<1x64xf32, #tpu.memory_space<vmem>>, %arg7: memref<64x32xf32, #tpu.memory_space<vmem>>, %arg8: memref<1x32xf32, #tpu.memory_space<vmem>>, %arg9: memref<16x32xf32, #tpu.memory_space<vmem>>, %arg10: memref<1x32xf32, #tpu.memory_space<vmem>>, %arg11: memref<16x32xf32, #tpu.memory_space<vmem>>, %arg12: memref<1x32xf32, #tpu.memory_space<vmem>>, %arg13: memref<2x32x32xf32, #tpu.memory_space<vmem>>, %arg14: memref<2x1x32xf32, #tpu.memory_space<vmem>>, %arg15: memref<2x32x32xf32, #tpu.memory_space<vmem>>, %arg16: memref<2x1x32xf32, #tpu.memory_space<vmem>>, %arg17: memref<2x32x96xf32, #tpu.memory_space<vmem>>, %arg18: memref<2x1x96xf32, #tpu.memory_space<vmem>>, %arg19: memref<2x32x32xf32, #tpu.memory_space<vmem>>, %arg20: memref<2x1x32xf32, #tpu.memory_space<vmem>>, %arg21: memref<2x1x32xf32, #tpu.memory_space<vmem>>, %arg22: memref<2x1x32xf32, #tpu.memory_space<vmem>>, %arg23: memref<2x32x64xf32, #tpu.memory_space<vmem>>, %arg24: memref<2x1x64xf32, #tpu.memory_space<vmem>>, %arg25: memref<2x64x32xf32, #tpu.memory_space<vmem>>, %arg26: memref<2x1x32xf32, #tpu.memory_space<vmem>>, %arg27: memref<2x1x32xf32, #tpu.memory_space<vmem>>, %arg28: memref<2x1x32xf32, #tpu.memory_space<vmem>>, %arg29: memref<32x16xf32, #tpu.memory_space<vmem>>, %arg30: memref<1x16xf32, #tpu.memory_space<vmem>>, %arg31: memref<16x16xf32, #tpu.memory_space<vmem>>) attributes {dimension_semantics = [], scalar_prefetch = 0 : i64, scratch_operands = 0 : i64, tpu.core_type = #tpu.core_type<tc>} {
    %c0 = arith.constant 0 : index
    %c0_0 = arith.constant 0 : index
    %0 = vector.load %arg0[%c0, %c0_0] : memref<2x32xf32, #tpu.memory_space<vmem>>, vector<2x32xf32>
    %c0_1 = arith.constant 0 : index
    %c0_2 = arith.constant 0 : index
    %1 = vector.load %arg5[%c0_1, %c0_2] : memref<32x64xf32, #tpu.memory_space<vmem>>, vector<32x64xf32>
    %cst = arith.constant dense<0.000000e+00> : vector<2x64xf32>
    %2 = tpu.matmul %0, %1, %cst {dimension_numbers = #tpu.dot_dimension_numbers<[1], [0], [0], [1], [0, 0, 1, 1], [], []>} : vector<2x32xf32>, vector<32x64xf32>, vector<2x64xf32> -> vector<2x64xf32>
    %c0_3 = arith.constant 0 : index
    %c0_4 = arith.constant 0 : index
    %3 = vector.load %arg6[%c0_3, %c0_4] : memref<1x64xf32, #tpu.memory_space<vmem>>, vector<1x64xf32>
    %4 = vector.broadcast %3 : vector<1x64xf32> to vector<2x64xf32>
    %5 = arith.addf %2, %4 : vector<2x64xf32>
    %6 = arith.negf %5 : vector<2x64xf32>
    %7 = math.exp %6 : vector<2x64xf32>
    %cst_5 = arith.constant 1.000000e+00 : f32
    %8 = vector.broadcast %cst_5 : f32 to vector<2x64xf32>
    %9 = arith.addf %8, %7 : vector<2x64xf32>
    %10 = arith.divf %8, %9 : vector<2x64xf32>
    %11 = arith.mulf %5, %10 : vector<2x64xf32>
    %c0_6 = arith.constant 0 : index
    %c0_7 = arith.constant 0 : index
    %12 = vector.load %arg7[%c0_6, %c0_7] : memref<64x32xf32, #tpu.memory_space<vmem>>, vector<64x32xf32>
    %cst_8 = arith.constant dense<0.000000e+00> : vector<2x32xf32>
    %13 = tpu.matmul %11, %12, %cst_8 {dimension_numbers = #tpu.dot_dimension_numbers<[1], [0], [0], [1], [0, 0, 1, 1], [], []>} : vector<2x64xf32>, vector<64x32xf32>, vector<2x32xf32> -> vector<2x32xf32>
    %c0_9 = arith.constant 0 : index
    %c0_10 = arith.constant 0 : index
    %14 = vector.load %arg8[%c0_9, %c0_10] : memref<1x32xf32, #tpu.memory_space<vmem>>, vector<1x32xf32>
    %15 = vector.broadcast %14 : vector<1x32xf32> to vector<2x32xf32>
    %16 = arith.addf %13, %15 : vector<2x32xf32>
    %c0_11 = arith.constant 0 : index
    %c0_12 = arith.constant 0 : index
    %17 = vector.load %arg1[%c0_11, %c0_12] : memref<16x16xf32, #tpu.memory_space<vmem>>, vector<16x16xf32>
    %c0_13 = arith.constant 0 : index
    %c0_14 = arith.constant 0 : index
    %18 = vector.load %arg9[%c0_13, %c0_14] : memref<16x32xf32, #tpu.memory_space<vmem>>, vector<16x32xf32>
    %cst_15 = arith.constant dense<0.000000e+00> : vector<16x32xf32>
    %19 = tpu.matmul %17, %18, %cst_15 {dimension_numbers = #tpu.dot_dimension_numbers<[1], [0], [0], [1], [0, 0, 1, 1], [], []>} : vector<16x16xf32>, vector<16x32xf32>, vector<16x32xf32> -> vector<16x32xf32>
    %c0_16 = arith.constant 0 : index
    %c0_17 = arith.constant 0 : index
    %20 = vector.load %arg10[%c0_16, %c0_17] : memref<1x32xf32, #tpu.memory_space<vmem>>, vector<1x32xf32>
    %21 = vector.broadcast %20 : vector<1x32xf32> to vector<16x32xf32>
    %22 = arith.addf %19, %21 : vector<16x32xf32>
    %c0_18 = arith.constant 0 : index
    %c0_19 = arith.constant 0 : index
    %23 = vector.load %arg2[%c0_18, %c0_19] : memref<16x16xf32, #tpu.memory_space<vmem>>, vector<16x16xf32>
    %c0_20 = arith.constant 0 : index
    %c0_21 = arith.constant 0 : index
    %24 = vector.load %arg11[%c0_20, %c0_21] : memref<16x32xf32, #tpu.memory_space<vmem>>, vector<16x32xf32>
    %cst_22 = arith.constant dense<0.000000e+00> : vector<16x32xf32>
    %25 = tpu.matmul %23, %24, %cst_22 {dimension_numbers = #tpu.dot_dimension_numbers<[1], [0], [0], [1], [0, 0, 1, 1], [], []>} : vector<16x16xf32>, vector<16x32xf32>, vector<16x32xf32> -> vector<16x32xf32>
    %c0_23 = arith.constant 0 : index
    %c0_24 = arith.constant 0 : index
    %26 = vector.load %arg12[%c0_23, %c0_24] : memref<1x32xf32, #tpu.memory_space<vmem>>, vector<1x32xf32>
    %27 = vector.broadcast %26 : vector<1x32xf32> to vector<16x32xf32>
    %28 = arith.addf %25, %27 : vector<16x32xf32>
    %c0_25 = arith.constant 0 : index
    %c0_26 = arith.constant 0 : index
    %29 = vector.load %arg3[%c0_25, %c0_26] : memref<64x32xf32, #tpu.memory_space<vmem>>, vector<8x32xf32>
    %30 = vector.shape_cast %22 : vector<16x32xf32> to vector<2x8x32xf32>
    %31 = vector.shape_cast %29 : vector<8x32xf32> to vector<1x8x32xf32>
    %32 = vector.broadcast %31 : vector<1x8x32xf32> to vector<2x8x32xf32>
    %33 = arith.addf %30, %32 : vector<2x8x32xf32>
    %34 = vector.shape_cast %33 : vector<2x8x32xf32> to vector<16x32xf32>
    %c0_27 = arith.constant 0 : index
    %c0_28 = arith.constant 0 : index
    %35 = vector.load %arg4[%c0_27, %c0_28] : memref<2x8xf32, #tpu.memory_space<vmem>>, vector<2x8xf32>
    %cst_29 = arith.constant 1.000000e+00 : f32
    %36 = vector.broadcast %cst_29 : f32 to vector<2x8xf32>
    %37 = arith.subf %36, %35 : vector<2x8xf32>
    %cst_30 = arith.constant -3.40282347E+38 : f32
    %38 = vector.broadcast %cst_30 : f32 to vector<2x8xf32>
    %39 = arith.mulf %37, %38 : vector<2x8xf32>
    %40 = vector.shape_cast %39 : vector<2x8xf32> to vector<2x1x8xf32>
    %c0_31 = arith.constant 0 : index
    %c0_32 = arith.constant 0 : index
    %c0_33 = arith.constant 0 : index
    %41 = vector.load %arg13[%c0_31, %c0_32, %c0_33] : memref<2x32x32xf32, #tpu.memory_space<vmem>>, vector<1x32x32xf32>
    %42 = vector.shape_cast %41 : vector<1x32x32xf32> to vector<32x32xf32>
    %cst_34 = arith.constant dense<0.000000e+00> : vector<2x32xf32>
    %43 = tpu.matmul %16, %42, %cst_34 {dimension_numbers = #tpu.dot_dimension_numbers<[1], [0], [0], [1], [0, 0, 1, 1], [], []>} : vector<2x32xf32>, vector<32x32xf32>, vector<2x32xf32> -> vector<2x32xf32>
    %c0_35 = arith.constant 0 : index
    %c0_36 = arith.constant 0 : index
    %c0_37 = arith.constant 0 : index
    %44 = vector.load %arg14[%c0_35, %c0_36, %c0_37] : memref<2x1x32xf32, #tpu.memory_space<vmem>>, vector<1x1x32xf32>
    %45 = vector.shape_cast %44 : vector<1x1x32xf32> to vector<1x32xf32>
    %46 = vector.broadcast %45 : vector<1x32xf32> to vector<2x32xf32>
    %47 = arith.addf %43, %46 : vector<2x32xf32>
    %48 = vector.shape_cast %34 : vector<16x32xf32> to vector<2x8x32xf32>
    %49 = vector.shape_cast %47 : vector<2x32xf32> to vector<2x1x32xf32>
    %50 = vector.broadcast %49 : vector<2x1x32xf32> to vector<2x8x32xf32>
    %51 = arith.addf %48, %50 : vector<2x8x32xf32>
    %52 = vector.shape_cast %51 : vector<2x8x32xf32> to vector<16x32xf32>
    %c0_38 = arith.constant 0 : index
    %c0_39 = arith.constant 0 : index
    %c0_40 = arith.constant 0 : index
    %53 = vector.load %arg15[%c0_38, %c0_39, %c0_40] : memref<2x32x32xf32, #tpu.memory_space<vmem>>, vector<1x32x32xf32>
    %54 = vector.shape_cast %53 : vector<1x32x32xf32> to vector<32x32xf32>
    %cst_41 = arith.constant dense<0.000000e+00> : vector<16x32xf32>
    %55 = tpu.matmul %28, %54, %cst_41 {dimension_numbers = #tpu.dot_dimension_numbers<[1], [0], [0], [1], [0, 0, 1, 1], [], []>} : vector<16x32xf32>, vector<32x32xf32>, vector<16x32xf32> -> vector<16x32xf32>
    %56 = arith.addf %52, %55 : vector<16x32xf32>
    %c0_42 = arith.constant 0 : index
    %c0_43 = arith.constant 0 : index
    %c0_44 = arith.constant 0 : index
    %57 = vector.load %arg16[%c0_42, %c0_43, %c0_44] : memref<2x1x32xf32, #tpu.memory_space<vmem>>, vector<1x1x32xf32>
    %58 = vector.shape_cast %57 : vector<1x1x32xf32> to vector<1x32xf32>
    %59 = vector.broadcast %58 : vector<1x32xf32> to vector<16x32xf32>
    %60 = arith.addf %56, %59 : vector<16x32xf32>
    %c0_45 = arith.constant 0 : index
    %c0_46 = arith.constant 0 : index
    %c0_47 = arith.constant 0 : index
    %61 = vector.load %arg17[%c0_45, %c0_46, %c0_47] : memref<2x32x96xf32, #tpu.memory_space<vmem>>, vector<1x32x96xf32>
    %62 = vector.shape_cast %61 : vector<1x32x96xf32> to vector<32x96xf32>
    %cst_48 = arith.constant dense<0.000000e+00> : vector<16x96xf32>
    %63 = tpu.matmul %60, %62, %cst_48 {dimension_numbers = #tpu.dot_dimension_numbers<[1], [0], [0], [1], [0, 0, 1, 1], [], []>} : vector<16x32xf32>, vector<32x96xf32>, vector<16x96xf32> -> vector<16x96xf32>
    %c0_49 = arith.constant 0 : index
    %c0_50 = arith.constant 0 : index
    %c0_51 = arith.constant 0 : index
    %64 = vector.load %arg18[%c0_49, %c0_50, %c0_51] : memref<2x1x96xf32, #tpu.memory_space<vmem>>, vector<1x1x96xf32>
    %65 = vector.shape_cast %64 : vector<1x1x96xf32> to vector<1x96xf32>
    %66 = vector.broadcast %65 : vector<1x96xf32> to vector<16x96xf32>
    %67 = arith.addf %63, %66 : vector<16x96xf32>
    %c0_52 = arith.constant 0 : index
    %c0_53 = arith.constant 0 : index
    %c0_54 = arith.constant 0 : index
    %68 = vector.load %arg19[%c0_52, %c0_53, %c0_54] : memref<2x32x32xf32, #tpu.memory_space<vmem>>, vector<1x32x32xf32>
    %69 = vector.shape_cast %68 : vector<1x32x32xf32> to vector<32x32xf32>
    %cst_55 = arith.constant 0.000000e+00 : f32
    %70 = vector.broadcast %cst_55 : f32 to vector<16x32xf32>
    %71 = vector.extract_strided_slice %67 {offsets = [0, 0], sizes = [16, 8], strides = [1, 1]} : vector<16x96xf32> to vector<16x8xf32>
    %72 = vector.shape_cast %71 : vector<16x8xf32> to vector<2x8x8xf32>
    %73 = vector.extract_strided_slice %67 {offsets = [0, 32], sizes = [16, 8], strides = [1, 1]} : vector<16x96xf32> to vector<16x8xf32>
    %74 = vector.shape_cast %73 : vector<16x8xf32> to vector<2x8x8xf32>
    %75 = vector.extract_strided_slice %67 {offsets = [0, 64], sizes = [16, 8], strides = [1, 1]} : vector<16x96xf32> to vector<16x8xf32>
    %76 = vector.shape_cast %75 : vector<16x8xf32> to vector<2x8x8xf32>
    "tpu.trace_start"() <{level = 10 : i32, message = "bqd,bkd->bqk"}> : () -> ()
    %cst_56 = arith.constant dense<0.000000e+00> : vector<2x8x8xf32>
    %77 = tpu.matmul %72, %74, %cst_56 {dimension_numbers = #tpu.dot_dimension_numbers<[2], [2], [1], [1], [0, 0, 0, 1, 1, 1], [0], [0]>} : vector<2x8x8xf32>, vector<2x8x8xf32>, vector<2x8x8xf32> -> vector<2x8x8xf32>
    "tpu.trace_stop"() : () -> ()
    %cst_57 = arith.constant 0.353553385 : f32
    %78 = vector.broadcast %cst_57 : f32 to vector<2x8x8xf32>
    %79 = arith.mulf %77, %78 : vector<2x8x8xf32>
    %80 = vector.broadcast %40 : vector<2x1x8xf32> to vector<2x8x8xf32>
    %81 = arith.addf %79, %80 : vector<2x8x8xf32>
    %cst_58 = arith.constant dense<0xFF800000> : vector<2x8xf32>
    %82 = vector.multi_reduction <maximumf>, %81, %cst_58 [2] : vector<2x8x8xf32> to vector<2x8xf32>
    %83 = vector.shape_cast %82 : vector<2x8xf32> to vector<2x8x1xf32>
    %84 = vector.broadcast %83 : vector<2x8x1xf32> to vector<2x8x8xf32>
    %85 = arith.subf %81, %84 : vector<2x8x8xf32>
    %86 = math.exp %85 : vector<2x8x8xf32>
    %cst_59 = arith.constant dense<0.000000e+00> : vector<2x8xf32>
    %87 = vector.multi_reduction <add>, %86, %cst_59 [2] : vector<2x8x8xf32> to vector<2x8xf32>
    %88 = vector.shape_cast %87 : vector<2x8xf32> to vector<2x8x1xf32>
    %89 = vector.broadcast %88 : vector<2x8x1xf32> to vector<2x8x8xf32>
    %90 = arith.divf %86, %89 : vector<2x8x8xf32>
    "tpu.trace_start"() <{level = 10 : i32, message = "bqk,bkd->bqd"}> : () -> ()
    %cst_60 = arith.constant dense<0.000000e+00> : vector<2x8x8xf32>
    %91 = tpu.matmul %90, %76, %cst_60 {dimension_numbers = #tpu.dot_dimension_numbers<[2], [1], [1], [2], [0, 0, 0, 1, 1, 2], [0], [0]>} : vector<2x8x8xf32>, vector<2x8x8xf32>, vector<2x8x8xf32> -> vector<2x8x8xf32>
    "tpu.trace_stop"() : () -> ()
    %92 = vector.shape_cast %91 : vector<2x8x8xf32> to vector<16x8xf32>
    %93 = vector.extract_strided_slice %69 {offsets = [0, 0], sizes = [8, 32], strides = [1, 1]} : vector<32x32xf32> to vector<8x32xf32>
    %cst_61 = arith.constant dense<0.000000e+00> : vector<16x32xf32>
    %94 = tpu.matmul %92, %93, %cst_61 {dimension_numbers = #tpu.dot_dimension_numbers<[1], [0], [0], [1], [0, 0, 1, 1], [], []>} : vector<16x8xf32>, vector<8x32xf32>, vector<16x32xf32> -> vector<16x32xf32>
    %95 = arith.addf %70, %94 : vector<16x32xf32>
    %96 = vector.extract_strided_slice %67 {offsets = [0, 8], sizes = [16, 8], strides = [1, 1]} : vector<16x96xf32> to vector<16x8xf32>
    %97 = vector.shape_cast %96 : vector<16x8xf32> to vector<2x8x8xf32>
    %98 = vector.extract_strided_slice %67 {offsets = [0, 40], sizes = [16, 8], strides = [1, 1]} : vector<16x96xf32> to vector<16x8xf32>
    %99 = vector.shape_cast %98 : vector<16x8xf32> to vector<2x8x8xf32>
    %100 = vector.extract_strided_slice %67 {offsets = [0, 72], sizes = [16, 8], strides = [1, 1]} : vector<16x96xf32> to vector<16x8xf32>
    %101 = vector.shape_cast %100 : vector<16x8xf32> to vector<2x8x8xf32>
    "tpu.trace_start"() <{level = 10 : i32, message = "bqd,bkd->bqk"}> : () -> ()
    %cst_62 = arith.constant dense<0.000000e+00> : vector<2x8x8xf32>
    %102 = tpu.matmul %97, %99, %cst_62 {dimension_numbers = #tpu.dot_dimension_numbers<[2], [2], [1], [1], [0, 0, 0, 1, 1, 1], [0], [0]>} : vector<2x8x8xf32>, vector<2x8x8xf32>, vector<2x8x8xf32> -> vector<2x8x8xf32>
    "tpu.trace_stop"() : () -> ()
    %cst_63 = arith.constant 0.353553385 : f32
    %103 = vector.broadcast %cst_63 : f32 to vector<2x8x8xf32>
    %104 = arith.mulf %102, %103 : vector<2x8x8xf32>
    %105 = vector.broadcast %40 : vector<2x1x8xf32> to vector<2x8x8xf32>
    %106 = arith.addf %104, %105 : vector<2x8x8xf32>
    %cst_64 = arith.constant dense<0xFF800000> : vector<2x8xf32>
    %107 = vector.multi_reduction <maximumf>, %106, %cst_64 [2] : vector<2x8x8xf32> to vector<2x8xf32>
    %108 = vector.shape_cast %107 : vector<2x8xf32> to vector<2x8x1xf32>
    %109 = vector.broadcast %108 : vector<2x8x1xf32> to vector<2x8x8xf32>
    %110 = arith.subf %106, %109 : vector<2x8x8xf32>
    %111 = math.exp %110 : vector<2x8x8xf32>
    %cst_65 = arith.constant dense<0.000000e+00> : vector<2x8xf32>
    %112 = vector.multi_reduction <add>, %111, %cst_65 [2] : vector<2x8x8xf32> to vector<2x8xf32>
    %113 = vector.shape_cast %112 : vector<2x8xf32> to vector<2x8x1xf32>
    %114 = vector.broadcast %113 : vector<2x8x1xf32> to vector<2x8x8xf32>
    %115 = arith.divf %111, %114 : vector<2x8x8xf32>
    "tpu.trace_start"() <{level = 10 : i32, message = "bqk,bkd->bqd"}> : () -> ()
    %cst_66 = arith.constant dense<0.000000e+00> : vector<2x8x8xf32>
    %116 = tpu.matmul %115, %101, %cst_66 {dimension_numbers = #tpu.dot_dimension_numbers<[2], [1], [1], [2], [0, 0, 0, 1, 1, 2], [0], [0]>} : vector<2x8x8xf32>, vector<2x8x8xf32>, vector<2x8x8xf32> -> vector<2x8x8xf32>
    "tpu.trace_stop"() : () -> ()
    %117 = vector.shape_cast %116 : vector<2x8x8xf32> to vector<16x8xf32>
    %118 = vector.extract_strided_slice %69 {offsets = [8, 0], sizes = [8, 32], strides = [1, 1]} : vector<32x32xf32> to vector<8x32xf32>
    %cst_67 = arith.constant dense<0.000000e+00> : vector<16x32xf32>
    %119 = tpu.matmul %117, %118, %cst_67 {dimension_numbers = #tpu.dot_dimension_numbers<[1], [0], [0], [1], [0, 0, 1, 1], [], []>} : vector<16x8xf32>, vector<8x32xf32>, vector<16x32xf32> -> vector<16x32xf32>
    %120 = arith.addf %95, %119 : vector<16x32xf32>
    %121 = vector.extract_strided_slice %67 {offsets = [0, 16], sizes = [16, 8], strides = [1, 1]} : vector<16x96xf32> to vector<16x8xf32>
    %122 = vector.shape_cast %121 : vector<16x8xf32> to vector<2x8x8xf32>
    %123 = vector.extract_strided_slice %67 {offsets = [0, 48], sizes = [16, 8], strides = [1, 1]} : vector<16x96xf32> to vector<16x8xf32>
    %124 = vector.shape_cast %123 : vector<16x8xf32> to vector<2x8x8xf32>
    %125 = vector.extract_strided_slice %67 {offsets = [0, 80], sizes = [16, 8], strides = [1, 1]} : vector<16x96xf32> to vector<16x8xf32>
    %126 = vector.shape_cast %125 : vector<16x8xf32> to vector<2x8x8xf32>
    "tpu.trace_start"() <{level = 10 : i32, message = "bqd,bkd->bqk"}> : () -> ()
    %cst_68 = arith.constant dense<0.000000e+00> : vector<2x8x8xf32>
    %127 = tpu.matmul %122, %124, %cst_68 {dimension_numbers = #tpu.dot_dimension_numbers<[2], [2], [1], [1], [0, 0, 0, 1, 1, 1], [0], [0]>} : vector<2x8x8xf32>, vector<2x8x8xf32>, vector<2x8x8xf32> -> vector<2x8x8xf32>
    "tpu.trace_stop"() : () -> ()
    %cst_69 = arith.constant 0.353553385 : f32
    %128 = vector.broadcast %cst_69 : f32 to vector<2x8x8xf32>
    %129 = arith.mulf %127, %128 : vector<2x8x8xf32>
    %130 = vector.broadcast %40 : vector<2x1x8xf32> to vector<2x8x8xf32>
    %131 = arith.addf %129, %130 : vector<2x8x8xf32>
    %cst_70 = arith.constant dense<0xFF800000> : vector<2x8xf32>
    %132 = vector.multi_reduction <maximumf>, %131, %cst_70 [2] : vector<2x8x8xf32> to vector<2x8xf32>
    %133 = vector.shape_cast %132 : vector<2x8xf32> to vector<2x8x1xf32>
    %134 = vector.broadcast %133 : vector<2x8x1xf32> to vector<2x8x8xf32>
    %135 = arith.subf %131, %134 : vector<2x8x8xf32>
    %136 = math.exp %135 : vector<2x8x8xf32>
    %cst_71 = arith.constant dense<0.000000e+00> : vector<2x8xf32>
    %137 = vector.multi_reduction <add>, %136, %cst_71 [2] : vector<2x8x8xf32> to vector<2x8xf32>
    %138 = vector.shape_cast %137 : vector<2x8xf32> to vector<2x8x1xf32>
    %139 = vector.broadcast %138 : vector<2x8x1xf32> to vector<2x8x8xf32>
    %140 = arith.divf %136, %139 : vector<2x8x8xf32>
    "tpu.trace_start"() <{level = 10 : i32, message = "bqk,bkd->bqd"}> : () -> ()
    %cst_72 = arith.constant dense<0.000000e+00> : vector<2x8x8xf32>
    %141 = tpu.matmul %140, %126, %cst_72 {dimension_numbers = #tpu.dot_dimension_numbers<[2], [1], [1], [2], [0, 0, 0, 1, 1, 2], [0], [0]>} : vector<2x8x8xf32>, vector<2x8x8xf32>, vector<2x8x8xf32> -> vector<2x8x8xf32>
    "tpu.trace_stop"() : () -> ()
    %142 = vector.shape_cast %141 : vector<2x8x8xf32> to vector<16x8xf32>
    %143 = vector.extract_strided_slice %69 {offsets = [16, 0], sizes = [8, 32], strides = [1, 1]} : vector<32x32xf32> to vector<8x32xf32>
    %cst_73 = arith.constant dense<0.000000e+00> : vector<16x32xf32>
    %144 = tpu.matmul %142, %143, %cst_73 {dimension_numbers = #tpu.dot_dimension_numbers<[1], [0], [0], [1], [0, 0, 1, 1], [], []>} : vector<16x8xf32>, vector<8x32xf32>, vector<16x32xf32> -> vector<16x32xf32>
    %145 = arith.addf %120, %144 : vector<16x32xf32>
    %146 = vector.extract_strided_slice %67 {offsets = [0, 24], sizes = [16, 8], strides = [1, 1]} : vector<16x96xf32> to vector<16x8xf32>
    %147 = vector.shape_cast %146 : vector<16x8xf32> to vector<2x8x8xf32>
    %148 = vector.extract_strided_slice %67 {offsets = [0, 56], sizes = [16, 8], strides = [1, 1]} : vector<16x96xf32> to vector<16x8xf32>
    %149 = vector.shape_cast %148 : vector<16x8xf32> to vector<2x8x8xf32>
    %150 = vector.extract_strided_slice %67 {offsets = [0, 88], sizes = [16, 8], strides = [1, 1]} : vector<16x96xf32> to vector<16x8xf32>
    %151 = vector.shape_cast %150 : vector<16x8xf32> to vector<2x8x8xf32>
    "tpu.trace_start"() <{level = 10 : i32, message = "bqd,bkd->bqk"}> : () -> ()
    %cst_74 = arith.constant dense<0.000000e+00> : vector<2x8x8xf32>
    %152 = tpu.matmul %147, %149, %cst_74 {dimension_numbers = #tpu.dot_dimension_numbers<[2], [2], [1], [1], [0, 0, 0, 1, 1, 1], [0], [0]>} : vector<2x8x8xf32>, vector<2x8x8xf32>, vector<2x8x8xf32> -> vector<2x8x8xf32>
    "tpu.trace_stop"() : () -> ()
    %cst_75 = arith.constant 0.353553385 : f32
    %153 = vector.broadcast %cst_75 : f32 to vector<2x8x8xf32>
    %154 = arith.mulf %152, %153 : vector<2x8x8xf32>
    %155 = vector.broadcast %40 : vector<2x1x8xf32> to vector<2x8x8xf32>
    %156 = arith.addf %154, %155 : vector<2x8x8xf32>
    %cst_76 = arith.constant dense<0xFF800000> : vector<2x8xf32>
    %157 = vector.multi_reduction <maximumf>, %156, %cst_76 [2] : vector<2x8x8xf32> to vector<2x8xf32>
    %158 = vector.shape_cast %157 : vector<2x8xf32> to vector<2x8x1xf32>
    %159 = vector.broadcast %158 : vector<2x8x1xf32> to vector<2x8x8xf32>
    %160 = arith.subf %156, %159 : vector<2x8x8xf32>
    %161 = math.exp %160 : vector<2x8x8xf32>
    %cst_77 = arith.constant dense<0.000000e+00> : vector<2x8xf32>
    %162 = vector.multi_reduction <add>, %161, %cst_77 [2] : vector<2x8x8xf32> to vector<2x8xf32>
    %163 = vector.shape_cast %162 : vector<2x8xf32> to vector<2x8x1xf32>
    %164 = vector.broadcast %163 : vector<2x8x1xf32> to vector<2x8x8xf32>
    %165 = arith.divf %161, %164 : vector<2x8x8xf32>
    "tpu.trace_start"() <{level = 10 : i32, message = "bqk,bkd->bqd"}> : () -> ()
    %cst_78 = arith.constant dense<0.000000e+00> : vector<2x8x8xf32>
    %166 = tpu.matmul %165, %151, %cst_78 {dimension_numbers = #tpu.dot_dimension_numbers<[2], [1], [1], [2], [0, 0, 0, 1, 1, 2], [0], [0]>} : vector<2x8x8xf32>, vector<2x8x8xf32>, vector<2x8x8xf32> -> vector<2x8x8xf32>
    "tpu.trace_stop"() : () -> ()
    %167 = vector.shape_cast %166 : vector<2x8x8xf32> to vector<16x8xf32>
    %168 = vector.extract_strided_slice %69 {offsets = [24, 0], sizes = [8, 32], strides = [1, 1]} : vector<32x32xf32> to vector<8x32xf32>
    %cst_79 = arith.constant dense<0.000000e+00> : vector<16x32xf32>
    %169 = tpu.matmul %167, %168, %cst_79 {dimension_numbers = #tpu.dot_dimension_numbers<[1], [0], [0], [1], [0, 0, 1, 1], [], []>} : vector<16x8xf32>, vector<8x32xf32>, vector<16x32xf32> -> vector<16x32xf32>
    %170 = arith.addf %145, %169 : vector<16x32xf32>
    %c0_80 = arith.constant 0 : index
    %c0_81 = arith.constant 0 : index
    %c0_82 = arith.constant 0 : index
    %171 = vector.load %arg20[%c0_80, %c0_81, %c0_82] : memref<2x1x32xf32, #tpu.memory_space<vmem>>, vector<1x1x32xf32>
    %172 = vector.shape_cast %171 : vector<1x1x32xf32> to vector<1x32xf32>
    %173 = vector.broadcast %172 : vector<1x32xf32> to vector<16x32xf32>
    %174 = arith.addf %170, %173 : vector<16x32xf32>
    %175 = arith.addf %174, %60 : vector<16x32xf32>
    %c0_83 = arith.constant 0 : index
    %c0_84 = arith.constant 0 : index
    %c0_85 = arith.constant 0 : index
    %176 = vector.load %arg21[%c0_83, %c0_84, %c0_85] : memref<2x1x32xf32, #tpu.memory_space<vmem>>, vector<1x1x32xf32>
    %177 = vector.shape_cast %176 : vector<1x1x32xf32> to vector<1x32xf32>
    %c0_86 = arith.constant 0 : index
    %c0_87 = arith.constant 0 : index
    %c0_88 = arith.constant 0 : index
    %178 = vector.load %arg22[%c0_86, %c0_87, %c0_88] : memref<2x1x32xf32, #tpu.memory_space<vmem>>, vector<1x1x32xf32>
    %179 = vector.shape_cast %178 : vector<1x1x32xf32> to vector<1x32xf32>
    %cst_89 = arith.constant dense<0.000000e+00> : vector<16xf32>
    %180 = vector.multi_reduction <add>, %175, %cst_89 [1] : vector<16x32xf32> to vector<16xf32>
    %181 = vector.shape_cast %180 : vector<16xf32> to vector<16x1xf32>
    %cst_90 = arith.constant 3.200000e+01 : f32
    %182 = vector.broadcast %cst_90 : f32 to vector<16x1xf32>
    %183 = arith.divf %181, %182 : vector<16x1xf32>
    %184 = vector.broadcast %183 : vector<16x1xf32> to vector<16x32xf32>
    %185 = arith.subf %175, %184 : vector<16x32xf32>
    %186 = arith.mulf %185, %185 : vector<16x32xf32>
    %cst_91 = arith.constant dense<0.000000e+00> : vector<16xf32>
    %187 = vector.multi_reduction <add>, %186, %cst_91 [1] : vector<16x32xf32> to vector<16xf32>
    %188 = vector.shape_cast %187 : vector<16xf32> to vector<16x1xf32>
    %cst_92 = arith.constant 3.200000e+01 : f32
    %189 = vector.broadcast %cst_92 : f32 to vector<16x1xf32>
    %190 = arith.divf %188, %189 : vector<16x1xf32>
    %cst_93 = arith.constant 9.99999996E-13 : f32
    %191 = vector.broadcast %cst_93 : f32 to vector<16x1xf32>
    %192 = arith.addf %190, %191 : vector<16x1xf32>
    %193 = math.rsqrt %192 : vector<16x1xf32>
    %194 = vector.broadcast %193 : vector<16x1xf32> to vector<16x32xf32>
    %195 = arith.mulf %185, %194 : vector<16x32xf32>
    %196 = vector.broadcast %177 : vector<1x32xf32> to vector<16x32xf32>
    %197 = arith.mulf %195, %196 : vector<16x32xf32>
    %198 = vector.broadcast %179 : vector<1x32xf32> to vector<16x32xf32>
    %199 = arith.addf %197, %198 : vector<16x32xf32>
    %c0_94 = arith.constant 0 : index
    %c0_95 = arith.constant 0 : index
    %c0_96 = arith.constant 0 : index
    %200 = vector.load %arg23[%c0_94, %c0_95, %c0_96] : memref<2x32x64xf32, #tpu.memory_space<vmem>>, vector<1x32x64xf32>
    %201 = vector.shape_cast %200 : vector<1x32x64xf32> to vector<32x64xf32>
    %cst_97 = arith.constant dense<0.000000e+00> : vector<16x64xf32>
    %202 = tpu.matmul %199, %201, %cst_97 {dimension_numbers = #tpu.dot_dimension_numbers<[1], [0], [0], [1], [0, 0, 1, 1], [], []>} : vector<16x32xf32>, vector<32x64xf32>, vector<16x64xf32> -> vector<16x64xf32>
    %c0_98 = arith.constant 0 : index
    %c0_99 = arith.constant 0 : index
    %c0_100 = arith.constant 0 : index
    %203 = vector.load %arg24[%c0_98, %c0_99, %c0_100] : memref<2x1x64xf32, #tpu.memory_space<vmem>>, vector<1x1x64xf32>
    %204 = vector.shape_cast %203 : vector<1x1x64xf32> to vector<1x64xf32>
    %205 = vector.broadcast %204 : vector<1x64xf32> to vector<16x64xf32>
    %206 = arith.addf %202, %205 : vector<16x64xf32>
    %cst_101 = arith.constant 5.000000e-01 : f32
    %207 = vector.broadcast %cst_101 : f32 to vector<16x64xf32>
    %208 = arith.mulf %207, %206 : vector<16x64xf32>
    %cst_102 = arith.constant 0.707106769 : f32
    %209 = vector.broadcast %cst_102 : f32 to vector<16x64xf32>
    %210 = arith.mulf %206, %209 : vector<16x64xf32>
    %211 = math.absf %210 : vector<16x64xf32>
    %cst_103 = arith.constant 0.327591091 : f32
    %212 = vector.broadcast %cst_103 : f32 to vector<16x64xf32>
    %213 = arith.mulf %212, %211 : vector<16x64xf32>
    %cst_104 = arith.constant 1.000000e+00 : f32
    %214 = vector.broadcast %cst_104 : f32 to vector<16x64xf32>
    %215 = arith.addf %214, %213 : vector<16x64xf32>
    %cst_105 = arith.constant 1.000000e+00 : f32
    %216 = vector.broadcast %cst_105 : f32 to vector<16x64xf32>
    %217 = arith.divf %216, %215 : vector<16x64xf32>
    %cst_106 = arith.constant 1.06140542 : f32
    %218 = vector.broadcast %cst_106 : f32 to vector<16x64xf32>
    %219 = arith.mulf %218, %217 : vector<16x64xf32>
    %cst_107 = arith.constant -1.45315206 : f32
    %220 = vector.broadcast %cst_107 : f32 to vector<16x64xf32>
    %221 = arith.addf %219, %220 : vector<16x64xf32>
    %222 = arith.mulf %221, %217 : vector<16x64xf32>
    %cst_108 = arith.constant 1.42141378 : f32
    %223 = vector.broadcast %cst_108 : f32 to vector<16x64xf32>
    %224 = arith.addf %222, %223 : vector<16x64xf32>
    %225 = arith.mulf %224, %217 : vector<16x64xf32>
    %cst_109 = arith.constant -0.284496725 : f32
    %226 = vector.broadcast %cst_109 : f32 to vector<16x64xf32>
    %227 = arith.addf %225, %226 : vector<16x64xf32>
    %228 = arith.mulf %227, %217 : vector<16x64xf32>
    %cst_110 = arith.constant 0.254829586 : f32
    %229 = vector.broadcast %cst_110 : f32 to vector<16x64xf32>
    %230 = arith.addf %228, %229 : vector<16x64xf32>
    %231 = arith.mulf %230, %217 : vector<16x64xf32>
    %cst_111 = arith.constant 0.000000e+00 : f32
    %232 = vector.broadcast %cst_111 : f32 to vector<16x64xf32>
    %233 = arith.subf %232, %211 : vector<16x64xf32>
    %234 = arith.mulf %233, %211 : vector<16x64xf32>
    %235 = math.exp %234 : vector<16x64xf32>
    %236 = arith.mulf %231, %235 : vector<16x64xf32>
    %cst_112 = arith.constant 1.000000e+00 : f32
    %237 = vector.broadcast %cst_112 : f32 to vector<16x64xf32>
    %238 = arith.subf %237, %236 : vector<16x64xf32>
    %cst_113 = arith.constant 0.000000e+00 : f32
    %239 = vector.broadcast %cst_113 : f32 to vector<16x64xf32>
    %240 = arith.cmpf olt, %210, %239 : vector<16x64xf32>
    %cst_114 = arith.constant 0.000000e+00 : f32
    %241 = vector.broadcast %cst_114 : f32 to vector<16x64xf32>
    %242 = arith.subf %241, %238 : vector<16x64xf32>
    %243 = arith.select %240, %242, %238 : vector<16x64xi1>, vector<16x64xf32>
    %cst_115 = arith.constant 1.000000e+00 : f32
    %244 = vector.broadcast %cst_115 : f32 to vector<16x64xf32>
    %245 = arith.addf %244, %243 : vector<16x64xf32>
    %246 = arith.mulf %208, %245 : vector<16x64xf32>
    %c0_116 = arith.constant 0 : index
    %c0_117 = arith.constant 0 : index
    %c0_118 = arith.constant 0 : index
    %247 = vector.load %arg25[%c0_116, %c0_117, %c0_118] : memref<2x64x32xf32, #tpu.memory_space<vmem>>, vector<1x64x32xf32>
    %248 = vector.shape_cast %247 : vector<1x64x32xf32> to vector<64x32xf32>
    %cst_119 = arith.constant dense<0.000000e+00> : vector<16x32xf32>
    %249 = tpu.matmul %246, %248, %cst_119 {dimension_numbers = #tpu.dot_dimension_numbers<[1], [0], [0], [1], [0, 0, 1, 1], [], []>} : vector<16x64xf32>, vector<64x32xf32>, vector<16x32xf32> -> vector<16x32xf32>
    %c0_120 = arith.constant 0 : index
    %c0_121 = arith.constant 0 : index
    %c0_122 = arith.constant 0 : index
    %250 = vector.load %arg26[%c0_120, %c0_121, %c0_122] : memref<2x1x32xf32, #tpu.memory_space<vmem>>, vector<1x1x32xf32>
    %251 = vector.shape_cast %250 : vector<1x1x32xf32> to vector<1x32xf32>
    %252 = vector.broadcast %251 : vector<1x32xf32> to vector<16x32xf32>
    %253 = arith.addf %249, %252 : vector<16x32xf32>
    %254 = arith.addf %253, %199 : vector<16x32xf32>
    %c0_123 = arith.constant 0 : index
    %c0_124 = arith.constant 0 : index
    %c0_125 = arith.constant 0 : index
    %255 = vector.load %arg27[%c0_123, %c0_124, %c0_125] : memref<2x1x32xf32, #tpu.memory_space<vmem>>, vector<1x1x32xf32>
    %256 = vector.shape_cast %255 : vector<1x1x32xf32> to vector<1x32xf32>
    %c0_126 = arith.constant 0 : index
    %c0_127 = arith.constant 0 : index
    %c0_128 = arith.constant 0 : index
    %257 = vector.load %arg28[%c0_126, %c0_127, %c0_128] : memref<2x1x32xf32, #tpu.memory_space<vmem>>, vector<1x1x32xf32>
    %258 = vector.shape_cast %257 : vector<1x1x32xf32> to vector<1x32xf32>
    %cst_129 = arith.constant dense<0.000000e+00> : vector<16xf32>
    %259 = vector.multi_reduction <add>, %254, %cst_129 [1] : vector<16x32xf32> to vector<16xf32>
    %260 = vector.shape_cast %259 : vector<16xf32> to vector<16x1xf32>
    %cst_130 = arith.constant 3.200000e+01 : f32
    %261 = vector.broadcast %cst_130 : f32 to vector<16x1xf32>
    %262 = arith.divf %260, %261 : vector<16x1xf32>
    %263 = vector.broadcast %262 : vector<16x1xf32> to vector<16x32xf32>
    %264 = arith.subf %254, %263 : vector<16x32xf32>
    %265 = arith.mulf %264, %264 : vector<16x32xf32>
    %cst_131 = arith.constant dense<0.000000e+00> : vector<16xf32>
    %266 = vector.multi_reduction <add>, %265, %cst_131 [1] : vector<16x32xf32> to vector<16xf32>
    %267 = vector.shape_cast %266 : vector<16xf32> to vector<16x1xf32>
    %cst_132 = arith.constant 3.200000e+01 : f32
    %268 = vector.broadcast %cst_132 : f32 to vector<16x1xf32>
    %269 = arith.divf %267, %268 : vector<16x1xf32>
    %cst_133 = arith.constant 9.99999996E-13 : f32
    %270 = vector.broadcast %cst_133 : f32 to vector<16x1xf32>
    %271 = arith.addf %269, %270 : vector<16x1xf32>
    %272 = math.rsqrt %271 : vector<16x1xf32>
    %273 = vector.broadcast %272 : vector<16x1xf32> to vector<16x32xf32>
    %274 = arith.mulf %264, %273 : vector<16x32xf32>
    %275 = vector.broadcast %256 : vector<1x32xf32> to vector<16x32xf32>
    %276 = arith.mulf %274, %275 : vector<16x32xf32>
    %277 = vector.broadcast %258 : vector<1x32xf32> to vector<16x32xf32>
    %278 = arith.addf %276, %277 : vector<16x32xf32>
    %279 = arith.addf %278, %34 : vector<16x32xf32>
    %c1 = arith.constant 1 : index
    %c0_134 = arith.constant 0 : index
    %c0_135 = arith.constant 0 : index
    %280 = vector.load %arg13[%c1, %c0_134, %c0_135] : memref<2x32x32xf32, #tpu.memory_space<vmem>>, vector<1x32x32xf32>
    %281 = vector.shape_cast %280 : vector<1x32x32xf32> to vector<32x32xf32>
    %cst_136 = arith.constant dense<0.000000e+00> : vector<2x32xf32>
    %282 = tpu.matmul %16, %281, %cst_136 {dimension_numbers = #tpu.dot_dimension_numbers<[1], [0], [0], [1], [0, 0, 1, 1], [], []>} : vector<2x32xf32>, vector<32x32xf32>, vector<2x32xf32> -> vector<2x32xf32>
    %c1_137 = arith.constant 1 : index
    %c0_138 = arith.constant 0 : index
    %c0_139 = arith.constant 0 : index
    %283 = vector.load %arg14[%c1_137, %c0_138, %c0_139] : memref<2x1x32xf32, #tpu.memory_space<vmem>>, vector<1x1x32xf32>
    %284 = vector.shape_cast %283 : vector<1x1x32xf32> to vector<1x32xf32>
    %285 = vector.broadcast %284 : vector<1x32xf32> to vector<2x32xf32>
    %286 = arith.addf %282, %285 : vector<2x32xf32>
    %287 = vector.shape_cast %279 : vector<16x32xf32> to vector<2x8x32xf32>
    %288 = vector.shape_cast %286 : vector<2x32xf32> to vector<2x1x32xf32>
    %289 = vector.broadcast %288 : vector<2x1x32xf32> to vector<2x8x32xf32>
    %290 = arith.addf %287, %289 : vector<2x8x32xf32>
    %291 = vector.shape_cast %290 : vector<2x8x32xf32> to vector<16x32xf32>
    %c1_140 = arith.constant 1 : index
    %c0_141 = arith.constant 0 : index
    %c0_142 = arith.constant 0 : index
    %292 = vector.load %arg15[%c1_140, %c0_141, %c0_142] : memref<2x32x32xf32, #tpu.memory_space<vmem>>, vector<1x32x32xf32>
    %293 = vector.shape_cast %292 : vector<1x32x32xf32> to vector<32x32xf32>
    %cst_143 = arith.constant dense<0.000000e+00> : vector<16x32xf32>
    %294 = tpu.matmul %28, %293, %cst_143 {dimension_numbers = #tpu.dot_dimension_numbers<[1], [0], [0], [1], [0, 0, 1, 1], [], []>} : vector<16x32xf32>, vector<32x32xf32>, vector<16x32xf32> -> vector<16x32xf32>
    %295 = arith.addf %291, %294 : vector<16x32xf32>
    %c1_144 = arith.constant 1 : index
    %c0_145 = arith.constant 0 : index
    %c0_146 = arith.constant 0 : index
    %296 = vector.load %arg16[%c1_144, %c0_145, %c0_146] : memref<2x1x32xf32, #tpu.memory_space<vmem>>, vector<1x1x32xf32>
    %297 = vector.shape_cast %296 : vector<1x1x32xf32> to vector<1x32xf32>
    %298 = vector.broadcast %297 : vector<1x32xf32> to vector<16x32xf32>
    %299 = arith.addf %295, %298 : vector<16x32xf32>
    %c1_147 = arith.constant 1 : index
    %c0_148 = arith.constant 0 : index
    %c0_149 = arith.constant 0 : index
    %300 = vector.load %arg17[%c1_147, %c0_148, %c0_149] : memref<2x32x96xf32, #tpu.memory_space<vmem>>, vector<1x32x96xf32>
    %301 = vector.shape_cast %300 : vector<1x32x96xf32> to vector<32x96xf32>
    %cst_150 = arith.constant dense<0.000000e+00> : vector<16x96xf32>
    %302 = tpu.matmul %299, %301, %cst_150 {dimension_numbers = #tpu.dot_dimension_numbers<[1], [0], [0], [1], [0, 0, 1, 1], [], []>} : vector<16x32xf32>, vector<32x96xf32>, vector<16x96xf32> -> vector<16x96xf32>
    %c1_151 = arith.constant 1 : index
    %c0_152 = arith.constant 0 : index
    %c0_153 = arith.constant 0 : index
    %303 = vector.load %arg18[%c1_151, %c0_152, %c0_153] : memref<2x1x96xf32, #tpu.memory_space<vmem>>, vector<1x1x96xf32>
    %304 = vector.shape_cast %303 : vector<1x1x96xf32> to vector<1x96xf32>
    %305 = vector.broadcast %304 : vector<1x96xf32> to vector<16x96xf32>
    %306 = arith.addf %302, %305 : vector<16x96xf32>
    %c1_154 = arith.constant 1 : index
    %c0_155 = arith.constant 0 : index
    %c0_156 = arith.constant 0 : index
    %307 = vector.load %arg19[%c1_154, %c0_155, %c0_156] : memref<2x32x32xf32, #tpu.memory_space<vmem>>, vector<1x32x32xf32>
    %308 = vector.shape_cast %307 : vector<1x32x32xf32> to vector<32x32xf32>
    %cst_157 = arith.constant 0.000000e+00 : f32
    %309 = vector.broadcast %cst_157 : f32 to vector<16x32xf32>
    %310 = vector.extract_strided_slice %306 {offsets = [0, 0], sizes = [16, 8], strides = [1, 1]} : vector<16x96xf32> to vector<16x8xf32>
    %311 = vector.shape_cast %310 : vector<16x8xf32> to vector<2x8x8xf32>
    %312 = vector.extract_strided_slice %306 {offsets = [0, 32], sizes = [16, 8], strides = [1, 1]} : vector<16x96xf32> to vector<16x8xf32>
    %313 = vector.shape_cast %312 : vector<16x8xf32> to vector<2x8x8xf32>
    %314 = vector.extract_strided_slice %306 {offsets = [0, 64], sizes = [16, 8], strides = [1, 1]} : vector<16x96xf32> to vector<16x8xf32>
    %315 = vector.shape_cast %314 : vector<16x8xf32> to vector<2x8x8xf32>
    "tpu.trace_start"() <{level = 10 : i32, message = "bqd,bkd->bqk"}> : () -> ()
    %cst_158 = arith.constant dense<0.000000e+00> : vector<2x8x8xf32>
    %316 = tpu.matmul %311, %313, %cst_158 {dimension_numbers = #tpu.dot_dimension_numbers<[2], [2], [1], [1], [0, 0, 0, 1, 1, 1], [0], [0]>} : vector<2x8x8xf32>, vector<2x8x8xf32>, vector<2x8x8xf32> -> vector<2x8x8xf32>
    "tpu.trace_stop"() : () -> ()
    %cst_159 = arith.constant 0.353553385 : f32
    %317 = vector.broadcast %cst_159 : f32 to vector<2x8x8xf32>
    %318 = arith.mulf %316, %317 : vector<2x8x8xf32>
    %319 = vector.broadcast %40 : vector<2x1x8xf32> to vector<2x8x8xf32>
    %320 = arith.addf %318, %319 : vector<2x8x8xf32>
    %cst_160 = arith.constant dense<0xFF800000> : vector<2x8xf32>
    %321 = vector.multi_reduction <maximumf>, %320, %cst_160 [2] : vector<2x8x8xf32> to vector<2x8xf32>
    %322 = vector.shape_cast %321 : vector<2x8xf32> to vector<2x8x1xf32>
    %323 = vector.broadcast %322 : vector<2x8x1xf32> to vector<2x8x8xf32>
    %324 = arith.subf %320, %323 : vector<2x8x8xf32>
    %325 = math.exp %324 : vector<2x8x8xf32>
    %cst_161 = arith.constant dense<0.000000e+00> : vector<2x8xf32>
    %326 = vector.multi_reduction <add>, %325, %cst_161 [2] : vector<2x8x8xf32> to vector<2x8xf32>
    %327 = vector.shape_cast %326 : vector<2x8xf32> to vector<2x8x1xf32>
    %328 = vector.broadcast %327 : vector<2x8x1xf32> to vector<2x8x8xf32>
    %329 = arith.divf %325, %328 : vector<2x8x8xf32>
    "tpu.trace_start"() <{level = 10 : i32, message = "bqk,bkd->bqd"}> : () -> ()
    %cst_162 = arith.constant dense<0.000000e+00> : vector<2x8x8xf32>
    %330 = tpu.matmul %329, %315, %cst_162 {dimension_numbers = #tpu.dot_dimension_numbers<[2], [1], [1], [2], [0, 0, 0, 1, 1, 2], [0], [0]>} : vector<2x8x8xf32>, vector<2x8x8xf32>, vector<2x8x8xf32> -> vector<2x8x8xf32>
    "tpu.trace_stop"() : () -> ()
    %331 = vector.shape_cast %330 : vector<2x8x8xf32> to vector<16x8xf32>
    %332 = vector.extract_strided_slice %308 {offsets = [0, 0], sizes = [8, 32], strides = [1, 1]} : vector<32x32xf32> to vector<8x32xf32>
    %cst_163 = arith.constant dense<0.000000e+00> : vector<16x32xf32>
    %333 = tpu.matmul %331, %332, %cst_163 {dimension_numbers = #tpu.dot_dimension_numbers<[1], [0], [0], [1], [0, 0, 1, 1], [], []>} : vector<16x8xf32>, vector<8x32xf32>, vector<16x32xf32> -> vector<16x32xf32>
    %334 = arith.addf %309, %333 : vector<16x32xf32>
    %335 = vector.extract_strided_slice %306 {offsets = [0, 8], sizes = [16, 8], strides = [1, 1]} : vector<16x96xf32> to vector<16x8xf32>
    %336 = vector.shape_cast %335 : vector<16x8xf32> to vector<2x8x8xf32>
    %337 = vector.extract_strided_slice %306 {offsets = [0, 40], sizes = [16, 8], strides = [1, 1]} : vector<16x96xf32> to vector<16x8xf32>
    %338 = vector.shape_cast %337 : vector<16x8xf32> to vector<2x8x8xf32>
    %339 = vector.extract_strided_slice %306 {offsets = [0, 72], sizes = [16, 8], strides = [1, 1]} : vector<16x96xf32> to vector<16x8xf32>
    %340 = vector.shape_cast %339 : vector<16x8xf32> to vector<2x8x8xf32>
    "tpu.trace_start"() <{level = 10 : i32, message = "bqd,bkd->bqk"}> : () -> ()
    %cst_164 = arith.constant dense<0.000000e+00> : vector<2x8x8xf32>
    %341 = tpu.matmul %336, %338, %cst_164 {dimension_numbers = #tpu.dot_dimension_numbers<[2], [2], [1], [1], [0, 0, 0, 1, 1, 1], [0], [0]>} : vector<2x8x8xf32>, vector<2x8x8xf32>, vector<2x8x8xf32> -> vector<2x8x8xf32>
    "tpu.trace_stop"() : () -> ()
    %cst_165 = arith.constant 0.353553385 : f32
    %342 = vector.broadcast %cst_165 : f32 to vector<2x8x8xf32>
    %343 = arith.mulf %341, %342 : vector<2x8x8xf32>
    %344 = vector.broadcast %40 : vector<2x1x8xf32> to vector<2x8x8xf32>
    %345 = arith.addf %343, %344 : vector<2x8x8xf32>
    %cst_166 = arith.constant dense<0xFF800000> : vector<2x8xf32>
    %346 = vector.multi_reduction <maximumf>, %345, %cst_166 [2] : vector<2x8x8xf32> to vector<2x8xf32>
    %347 = vector.shape_cast %346 : vector<2x8xf32> to vector<2x8x1xf32>
    %348 = vector.broadcast %347 : vector<2x8x1xf32> to vector<2x8x8xf32>
    %349 = arith.subf %345, %348 : vector<2x8x8xf32>
    %350 = math.exp %349 : vector<2x8x8xf32>
    %cst_167 = arith.constant dense<0.000000e+00> : vector<2x8xf32>
    %351 = vector.multi_reduction <add>, %350, %cst_167 [2] : vector<2x8x8xf32> to vector<2x8xf32>
    %352 = vector.shape_cast %351 : vector<2x8xf32> to vector<2x8x1xf32>
    %353 = vector.broadcast %352 : vector<2x8x1xf32> to vector<2x8x8xf32>
    %354 = arith.divf %350, %353 : vector<2x8x8xf32>
    "tpu.trace_start"() <{level = 10 : i32, message = "bqk,bkd->bqd"}> : () -> ()
    %cst_168 = arith.constant dense<0.000000e+00> : vector<2x8x8xf32>
    %355 = tpu.matmul %354, %340, %cst_168 {dimension_numbers = #tpu.dot_dimension_numbers<[2], [1], [1], [2], [0, 0, 0, 1, 1, 2], [0], [0]>} : vector<2x8x8xf32>, vector<2x8x8xf32>, vector<2x8x8xf32> -> vector<2x8x8xf32>
    "tpu.trace_stop"() : () -> ()
    %356 = vector.shape_cast %355 : vector<2x8x8xf32> to vector<16x8xf32>
    %357 = vector.extract_strided_slice %308 {offsets = [8, 0], sizes = [8, 32], strides = [1, 1]} : vector<32x32xf32> to vector<8x32xf32>
    %cst_169 = arith.constant dense<0.000000e+00> : vector<16x32xf32>
    %358 = tpu.matmul %356, %357, %cst_169 {dimension_numbers = #tpu.dot_dimension_numbers<[1], [0], [0], [1], [0, 0, 1, 1], [], []>} : vector<16x8xf32>, vector<8x32xf32>, vector<16x32xf32> -> vector<16x32xf32>
    %359 = arith.addf %334, %358 : vector<16x32xf32>
    %360 = vector.extract_strided_slice %306 {offsets = [0, 16], sizes = [16, 8], strides = [1, 1]} : vector<16x96xf32> to vector<16x8xf32>
    %361 = vector.shape_cast %360 : vector<16x8xf32> to vector<2x8x8xf32>
    %362 = vector.extract_strided_slice %306 {offsets = [0, 48], sizes = [16, 8], strides = [1, 1]} : vector<16x96xf32> to vector<16x8xf32>
    %363 = vector.shape_cast %362 : vector<16x8xf32> to vector<2x8x8xf32>
    %364 = vector.extract_strided_slice %306 {offsets = [0, 80], sizes = [16, 8], strides = [1, 1]} : vector<16x96xf32> to vector<16x8xf32>
    %365 = vector.shape_cast %364 : vector<16x8xf32> to vector<2x8x8xf32>
    "tpu.trace_start"() <{level = 10 : i32, message = "bqd,bkd->bqk"}> : () -> ()
    %cst_170 = arith.constant dense<0.000000e+00> : vector<2x8x8xf32>
    %366 = tpu.matmul %361, %363, %cst_170 {dimension_numbers = #tpu.dot_dimension_numbers<[2], [2], [1], [1], [0, 0, 0, 1, 1, 1], [0], [0]>} : vector<2x8x8xf32>, vector<2x8x8xf32>, vector<2x8x8xf32> -> vector<2x8x8xf32>
    "tpu.trace_stop"() : () -> ()
    %cst_171 = arith.constant 0.353553385 : f32
    %367 = vector.broadcast %cst_171 : f32 to vector<2x8x8xf32>
    %368 = arith.mulf %366, %367 : vector<2x8x8xf32>
    %369 = vector.broadcast %40 : vector<2x1x8xf32> to vector<2x8x8xf32>
    %370 = arith.addf %368, %369 : vector<2x8x8xf32>
    %cst_172 = arith.constant dense<0xFF800000> : vector<2x8xf32>
    %371 = vector.multi_reduction <maximumf>, %370, %cst_172 [2] : vector<2x8x8xf32> to vector<2x8xf32>
    %372 = vector.shape_cast %371 : vector<2x8xf32> to vector<2x8x1xf32>
    %373 = vector.broadcast %372 : vector<2x8x1xf32> to vector<2x8x8xf32>
    %374 = arith.subf %370, %373 : vector<2x8x8xf32>
    %375 = math.exp %374 : vector<2x8x8xf32>
    %cst_173 = arith.constant dense<0.000000e+00> : vector<2x8xf32>
    %376 = vector.multi_reduction <add>, %375, %cst_173 [2] : vector<2x8x8xf32> to vector<2x8xf32>
    %377 = vector.shape_cast %376 : vector<2x8xf32> to vector<2x8x1xf32>
    %378 = vector.broadcast %377 : vector<2x8x1xf32> to vector<2x8x8xf32>
    %379 = arith.divf %375, %378 : vector<2x8x8xf32>
    "tpu.trace_start"() <{level = 10 : i32, message = "bqk,bkd->bqd"}> : () -> ()
    %cst_174 = arith.constant dense<0.000000e+00> : vector<2x8x8xf32>
    %380 = tpu.matmul %379, %365, %cst_174 {dimension_numbers = #tpu.dot_dimension_numbers<[2], [1], [1], [2], [0, 0, 0, 1, 1, 2], [0], [0]>} : vector<2x8x8xf32>, vector<2x8x8xf32>, vector<2x8x8xf32> -> vector<2x8x8xf32>
    "tpu.trace_stop"() : () -> ()
    %381 = vector.shape_cast %380 : vector<2x8x8xf32> to vector<16x8xf32>
    %382 = vector.extract_strided_slice %308 {offsets = [16, 0], sizes = [8, 32], strides = [1, 1]} : vector<32x32xf32> to vector<8x32xf32>
    %cst_175 = arith.constant dense<0.000000e+00> : vector<16x32xf32>
    %383 = tpu.matmul %381, %382, %cst_175 {dimension_numbers = #tpu.dot_dimension_numbers<[1], [0], [0], [1], [0, 0, 1, 1], [], []>} : vector<16x8xf32>, vector<8x32xf32>, vector<16x32xf32> -> vector<16x32xf32>
    %384 = arith.addf %359, %383 : vector<16x32xf32>
    %385 = vector.extract_strided_slice %306 {offsets = [0, 24], sizes = [16, 8], strides = [1, 1]} : vector<16x96xf32> to vector<16x8xf32>
    %386 = vector.shape_cast %385 : vector<16x8xf32> to vector<2x8x8xf32>
    %387 = vector.extract_strided_slice %306 {offsets = [0, 56], sizes = [16, 8], strides = [1, 1]} : vector<16x96xf32> to vector<16x8xf32>
    %388 = vector.shape_cast %387 : vector<16x8xf32> to vector<2x8x8xf32>
    %389 = vector.extract_strided_slice %306 {offsets = [0, 88], sizes = [16, 8], strides = [1, 1]} : vector<16x96xf32> to vector<16x8xf32>
    %390 = vector.shape_cast %389 : vector<16x8xf32> to vector<2x8x8xf32>
    "tpu.trace_start"() <{level = 10 : i32, message = "bqd,bkd->bqk"}> : () -> ()
    %cst_176 = arith.constant dense<0.000000e+00> : vector<2x8x8xf32>
    %391 = tpu.matmul %386, %388, %cst_176 {dimension_numbers = #tpu.dot_dimension_numbers<[2], [2], [1], [1], [0, 0, 0, 1, 1, 1], [0], [0]>} : vector<2x8x8xf32>, vector<2x8x8xf32>, vector<2x8x8xf32> -> vector<2x8x8xf32>
    "tpu.trace_stop"() : () -> ()
    %cst_177 = arith.constant 0.353553385 : f32
    %392 = vector.broadcast %cst_177 : f32 to vector<2x8x8xf32>
    %393 = arith.mulf %391, %392 : vector<2x8x8xf32>
    %394 = vector.broadcast %40 : vector<2x1x8xf32> to vector<2x8x8xf32>
    %395 = arith.addf %393, %394 : vector<2x8x8xf32>
    %cst_178 = arith.constant dense<0xFF800000> : vector<2x8xf32>
    %396 = vector.multi_reduction <maximumf>, %395, %cst_178 [2] : vector<2x8x8xf32> to vector<2x8xf32>
    %397 = vector.shape_cast %396 : vector<2x8xf32> to vector<2x8x1xf32>
    %398 = vector.broadcast %397 : vector<2x8x1xf32> to vector<2x8x8xf32>
    %399 = arith.subf %395, %398 : vector<2x8x8xf32>
    %400 = math.exp %399 : vector<2x8x8xf32>
    %cst_179 = arith.constant dense<0.000000e+00> : vector<2x8xf32>
    %401 = vector.multi_reduction <add>, %400, %cst_179 [2] : vector<2x8x8xf32> to vector<2x8xf32>
    %402 = vector.shape_cast %401 : vector<2x8xf32> to vector<2x8x1xf32>
    %403 = vector.broadcast %402 : vector<2x8x1xf32> to vector<2x8x8xf32>
    %404 = arith.divf %400, %403 : vector<2x8x8xf32>
    "tpu.trace_start"() <{level = 10 : i32, message = "bqk,bkd->bqd"}> : () -> ()
    %cst_180 = arith.constant dense<0.000000e+00> : vector<2x8x8xf32>
    %405 = tpu.matmul %404, %390, %cst_180 {dimension_numbers = #tpu.dot_dimension_numbers<[2], [1], [1], [2], [0, 0, 0, 1, 1, 2], [0], [0]>} : vector<2x8x8xf32>, vector<2x8x8xf32>, vector<2x8x8xf32> -> vector<2x8x8xf32>
    "tpu.trace_stop"() : () -> ()
    %406 = vector.shape_cast %405 : vector<2x8x8xf32> to vector<16x8xf32>
    %407 = vector.extract_strided_slice %308 {offsets = [24, 0], sizes = [8, 32], strides = [1, 1]} : vector<32x32xf32> to vector<8x32xf32>
    %cst_181 = arith.constant dense<0.000000e+00> : vector<16x32xf32>
    %408 = tpu.matmul %406, %407, %cst_181 {dimension_numbers = #tpu.dot_dimension_numbers<[1], [0], [0], [1], [0, 0, 1, 1], [], []>} : vector<16x8xf32>, vector<8x32xf32>, vector<16x32xf32> -> vector<16x32xf32>
    %409 = arith.addf %384, %408 : vector<16x32xf32>
    %c1_182 = arith.constant 1 : index
    %c0_183 = arith.constant 0 : index
    %c0_184 = arith.constant 0 : index
    %410 = vector.load %arg20[%c1_182, %c0_183, %c0_184] : memref<2x1x32xf32, #tpu.memory_space<vmem>>, vector<1x1x32xf32>
    %411 = vector.shape_cast %410 : vector<1x1x32xf32> to vector<1x32xf32>
    %412 = vector.broadcast %411 : vector<1x32xf32> to vector<16x32xf32>
    %413 = arith.addf %409, %412 : vector<16x32xf32>
    %414 = arith.addf %413, %299 : vector<16x32xf32>
    %c1_185 = arith.constant 1 : index
    %c0_186 = arith.constant 0 : index
    %c0_187 = arith.constant 0 : index
    %415 = vector.load %arg21[%c1_185, %c0_186, %c0_187] : memref<2x1x32xf32, #tpu.memory_space<vmem>>, vector<1x1x32xf32>
    %416 = vector.shape_cast %415 : vector<1x1x32xf32> to vector<1x32xf32>
    %c1_188 = arith.constant 1 : index
    %c0_189 = arith.constant 0 : index
    %c0_190 = arith.constant 0 : index
    %417 = vector.load %arg22[%c1_188, %c0_189, %c0_190] : memref<2x1x32xf32, #tpu.memory_space<vmem>>, vector<1x1x32xf32>
    %418 = vector.shape_cast %417 : vector<1x1x32xf32> to vector<1x32xf32>
    %cst_191 = arith.constant dense<0.000000e+00> : vector<16xf32>
    %419 = vector.multi_reduction <add>, %414, %cst_191 [1] : vector<16x32xf32> to vector<16xf32>
    %420 = vector.shape_cast %419 : vector<16xf32> to vector<16x1xf32>
    %cst_192 = arith.constant 3.200000e+01 : f32
    %421 = vector.broadcast %cst_192 : f32 to vector<16x1xf32>
    %422 = arith.divf %420, %421 : vector<16x1xf32>
    %423 = vector.broadcast %422 : vector<16x1xf32> to vector<16x32xf32>
    %424 = arith.subf %414, %423 : vector<16x32xf32>
    %425 = arith.mulf %424, %424 : vector<16x32xf32>
    %cst_193 = arith.constant dense<0.000000e+00> : vector<16xf32>
    %426 = vector.multi_reduction <add>, %425, %cst_193 [1] : vector<16x32xf32> to vector<16xf32>
    %427 = vector.shape_cast %426 : vector<16xf32> to vector<16x1xf32>
    %cst_194 = arith.constant 3.200000e+01 : f32
    %428 = vector.broadcast %cst_194 : f32 to vector<16x1xf32>
    %429 = arith.divf %427, %428 : vector<16x1xf32>
    %cst_195 = arith.constant 9.99999996E-13 : f32
    %430 = vector.broadcast %cst_195 : f32 to vector<16x1xf32>
    %431 = arith.addf %429, %430 : vector<16x1xf32>
    %432 = math.rsqrt %431 : vector<16x1xf32>
    %433 = vector.broadcast %432 : vector<16x1xf32> to vector<16x32xf32>
    %434 = arith.mulf %424, %433 : vector<16x32xf32>
    %435 = vector.broadcast %416 : vector<1x32xf32> to vector<16x32xf32>
    %436 = arith.mulf %434, %435 : vector<16x32xf32>
    %437 = vector.broadcast %418 : vector<1x32xf32> to vector<16x32xf32>
    %438 = arith.addf %436, %437 : vector<16x32xf32>
    %c1_196 = arith.constant 1 : index
    %c0_197 = arith.constant 0 : index
    %c0_198 = arith.constant 0 : index
    %439 = vector.load %arg23[%c1_196, %c0_197, %c0_198] : memref<2x32x64xf32, #tpu.memory_space<vmem>>, vector<1x32x64xf32>
    %440 = vector.shape_cast %439 : vector<1x32x64xf32> to vector<32x64xf32>
    %cst_199 = arith.constant dense<0.000000e+00> : vector<16x64xf32>
    %441 = tpu.matmul %438, %440, %cst_199 {dimension_numbers = #tpu.dot_dimension_numbers<[1], [0], [0], [1], [0, 0, 1, 1], [], []>} : vector<16x32xf32>, vector<32x64xf32>, vector<16x64xf32> -> vector<16x64xf32>
    %c1_200 = arith.constant 1 : index
    %c0_201 = arith.constant 0 : index
    %c0_202 = arith.constant 0 : index
    %442 = vector.load %arg24[%c1_200, %c0_201, %c0_202] : memref<2x1x64xf32, #tpu.memory_space<vmem>>, vector<1x1x64xf32>
    %443 = vector.shape_cast %442 : vector<1x1x64xf32> to vector<1x64xf32>
    %444 = vector.broadcast %443 : vector<1x64xf32> to vector<16x64xf32>
    %445 = arith.addf %441, %444 : vector<16x64xf32>
    %cst_203 = arith.constant 5.000000e-01 : f32
    %446 = vector.broadcast %cst_203 : f32 to vector<16x64xf32>
    %447 = arith.mulf %446, %445 : vector<16x64xf32>
    %cst_204 = arith.constant 0.707106769 : f32
    %448 = vector.broadcast %cst_204 : f32 to vector<16x64xf32>
    %449 = arith.mulf %445, %448 : vector<16x64xf32>
    %450 = math.absf %449 : vector<16x64xf32>
    %cst_205 = arith.constant 0.327591091 : f32
    %451 = vector.broadcast %cst_205 : f32 to vector<16x64xf32>
    %452 = arith.mulf %451, %450 : vector<16x64xf32>
    %cst_206 = arith.constant 1.000000e+00 : f32
    %453 = vector.broadcast %cst_206 : f32 to vector<16x64xf32>
    %454 = arith.addf %453, %452 : vector<16x64xf32>
    %cst_207 = arith.constant 1.000000e+00 : f32
    %455 = vector.broadcast %cst_207 : f32 to vector<16x64xf32>
    %456 = arith.divf %455, %454 : vector<16x64xf32>
    %cst_208 = arith.constant 1.06140542 : f32
    %457 = vector.broadcast %cst_208 : f32 to vector<16x64xf32>
    %458 = arith.mulf %457, %456 : vector<16x64xf32>
    %cst_209 = arith.constant -1.45315206 : f32
    %459 = vector.broadcast %cst_209 : f32 to vector<16x64xf32>
    %460 = arith.addf %458, %459 : vector<16x64xf32>
    %461 = arith.mulf %460, %456 : vector<16x64xf32>
    %cst_210 = arith.constant 1.42141378 : f32
    %462 = vector.broadcast %cst_210 : f32 to vector<16x64xf32>
    %463 = arith.addf %461, %462 : vector<16x64xf32>
    %464 = arith.mulf %463, %456 : vector<16x64xf32>
    %cst_211 = arith.constant -0.284496725 : f32
    %465 = vector.broadcast %cst_211 : f32 to vector<16x64xf32>
    %466 = arith.addf %464, %465 : vector<16x64xf32>
    %467 = arith.mulf %466, %456 : vector<16x64xf32>
    %cst_212 = arith.constant 0.254829586 : f32
    %468 = vector.broadcast %cst_212 : f32 to vector<16x64xf32>
    %469 = arith.addf %467, %468 : vector<16x64xf32>
    %470 = arith.mulf %469, %456 : vector<16x64xf32>
    %cst_213 = arith.constant 0.000000e+00 : f32
    %471 = vector.broadcast %cst_213 : f32 to vector<16x64xf32>
    %472 = arith.subf %471, %450 : vector<16x64xf32>
    %473 = arith.mulf %472, %450 : vector<16x64xf32>
    %474 = math.exp %473 : vector<16x64xf32>
    %475 = arith.mulf %470, %474 : vector<16x64xf32>
    %cst_214 = arith.constant 1.000000e+00 : f32
    %476 = vector.broadcast %cst_214 : f32 to vector<16x64xf32>
    %477 = arith.subf %476, %475 : vector<16x64xf32>
    %cst_215 = arith.constant 0.000000e+00 : f32
    %478 = vector.broadcast %cst_215 : f32 to vector<16x64xf32>
    %479 = arith.cmpf olt, %449, %478 : vector<16x64xf32>
    %cst_216 = arith.constant 0.000000e+00 : f32
    %480 = vector.broadcast %cst_216 : f32 to vector<16x64xf32>
    %481 = arith.subf %480, %477 : vector<16x64xf32>
    %482 = arith.select %479, %481, %477 : vector<16x64xi1>, vector<16x64xf32>
    %cst_217 = arith.constant 1.000000e+00 : f32
    %483 = vector.broadcast %cst_217 : f32 to vector<16x64xf32>
    %484 = arith.addf %483, %482 : vector<16x64xf32>
    %485 = arith.mulf %447, %484 : vector<16x64xf32>
    %c1_218 = arith.constant 1 : index
    %c0_219 = arith.constant 0 : index
    %c0_220 = arith.constant 0 : index
    %486 = vector.load %arg25[%c1_218, %c0_219, %c0_220] : memref<2x64x32xf32, #tpu.memory_space<vmem>>, vector<1x64x32xf32>
    %487 = vector.shape_cast %486 : vector<1x64x32xf32> to vector<64x32xf32>
    %cst_221 = arith.constant dense<0.000000e+00> : vector<16x32xf32>
    %488 = tpu.matmul %485, %487, %cst_221 {dimension_numbers = #tpu.dot_dimension_numbers<[1], [0], [0], [1], [0, 0, 1, 1], [], []>} : vector<16x64xf32>, vector<64x32xf32>, vector<16x32xf32> -> vector<16x32xf32>
    %c1_222 = arith.constant 1 : index
    %c0_223 = arith.constant 0 : index
    %c0_224 = arith.constant 0 : index
    %489 = vector.load %arg26[%c1_222, %c0_223, %c0_224] : memref<2x1x32xf32, #tpu.memory_space<vmem>>, vector<1x1x32xf32>
    %490 = vector.shape_cast %489 : vector<1x1x32xf32> to vector<1x32xf32>
    %491 = vector.broadcast %490 : vector<1x32xf32> to vector<16x32xf32>
    %492 = arith.addf %488, %491 : vector<16x32xf32>
    %493 = arith.addf %492, %438 : vector<16x32xf32>
    %c1_225 = arith.constant 1 : index
    %c0_226 = arith.constant 0 : index
    %c0_227 = arith.constant 0 : index
    %494 = vector.load %arg27[%c1_225, %c0_226, %c0_227] : memref<2x1x32xf32, #tpu.memory_space<vmem>>, vector<1x1x32xf32>
    %495 = vector.shape_cast %494 : vector<1x1x32xf32> to vector<1x32xf32>
    %c1_228 = arith.constant 1 : index
    %c0_229 = arith.constant 0 : index
    %c0_230 = arith.constant 0 : index
    %496 = vector.load %arg28[%c1_228, %c0_229, %c0_230] : memref<2x1x32xf32, #tpu.memory_space<vmem>>, vector<1x1x32xf32>
    %497 = vector.shape_cast %496 : vector<1x1x32xf32> to vector<1x32xf32>
    %cst_231 = arith.constant dense<0.000000e+00> : vector<16xf32>
    %498 = vector.multi_reduction <add>, %493, %cst_231 [1] : vector<16x32xf32> to vector<16xf32>
    %499 = vector.shape_cast %498 : vector<16xf32> to vector<16x1xf32>
    %cst_232 = arith.constant 3.200000e+01 : f32
    %500 = vector.broadcast %cst_232 : f32 to vector<16x1xf32>
    %501 = arith.divf %499, %500 : vector<16x1xf32>
    %502 = vector.broadcast %501 : vector<16x1xf32> to vector<16x32xf32>
    %503 = arith.subf %493, %502 : vector<16x32xf32>
    %504 = arith.mulf %503, %503 : vector<16x32xf32>
    %cst_233 = arith.constant dense<0.000000e+00> : vector<16xf32>
    %505 = vector.multi_reduction <add>, %504, %cst_233 [1] : vector<16x32xf32> to vector<16xf32>
    %506 = vector.shape_cast %505 : vector<16xf32> to vector<16x1xf32>
    %cst_234 = arith.constant 3.200000e+01 : f32
    %507 = vector.broadcast %cst_234 : f32 to vector<16x1xf32>
    %508 = arith.divf %506, %507 : vector<16x1xf32>
    %cst_235 = arith.constant 9.99999996E-13 : f32
    %509 = vector.broadcast %cst_235 : f32 to vector<16x1xf32>
    %510 = arith.addf %508, %509 : vector<16x1xf32>
    %511 = math.rsqrt %510 : vector<16x1xf32>
    %512 = vector.broadcast %511 : vector<16x1xf32> to vector<16x32xf32>
    %513 = arith.mulf %503, %512 : vector<16x32xf32>
    %514 = vector.broadcast %495 : vector<1x32xf32> to vector<16x32xf32>
    %515 = arith.mulf %513, %514 : vector<16x32xf32>
    %516 = vector.broadcast %497 : vector<1x32xf32> to vector<16x32xf32>
    %517 = arith.addf %515, %516 : vector<16x32xf32>
    %c0_236 = arith.constant 0 : index
    %c0_237 = arith.constant 0 : index
    %518 = vector.load %arg29[%c0_236, %c0_237] : memref<32x16xf32, #tpu.memory_space<vmem>>, vector<32x16xf32>
    %cst_238 = arith.constant dense<0.000000e+00> : vector<16x16xf32>
    %519 = tpu.matmul %517, %518, %cst_238 {dimension_numbers = #tpu.dot_dimension_numbers<[1], [0], [0], [1], [0, 0, 1, 1], [], []>} : vector<16x32xf32>, vector<32x16xf32>, vector<16x16xf32> -> vector<16x16xf32>
    %c0_239 = arith.constant 0 : index
    %c0_240 = arith.constant 0 : index
    %520 = vector.load %arg30[%c0_239, %c0_240] : memref<1x16xf32, #tpu.memory_space<vmem>>, vector<1x16xf32>
    %521 = vector.broadcast %520 : vector<1x16xf32> to vector<16x16xf32>
    %522 = arith.addf %519, %521 : vector<16x16xf32>
    %c0_241 = arith.constant 0 : index
    %c0_242 = arith.constant 0 : index
    %523 = vector.load %arg31[%c0_241, %c0_242] : memref<16x16xf32, #tpu.memory_space<vmem>>, vector<16x16xf32>
    tpu.vector_store %arg31[%c0_241, %c0_242], %522 {strides = array<i32>} : memref<16x16xf32, #tpu.memory_space<vmem>>, vector<16x16xf32>,
    return
  }
}

</mosaic_0001>

<llo_original>
// kernel: score_estimator_forward.1
$region0: #{score_estimator_forward.1}
  #allocation0 [shape = 'u32[]', space=smem, size = 0x4, offset = 0x4, fixed_abs, tag = 'smem constant byte address 0x4 - core index']
  #allocation1 [shape = 'u32[144,128]{1,0:T(1,128)}', space=vmem, size = 0x12000, scoped, tag = 'internal scratch']
  %s0 = inlined_call_operand.smem [shape: u32[32], index: -1, kind: input, shape index: {}]
  %s1 = sld [smem:[%s0]]
  %s2 = scalar_lea.smem %s0, 1
  %s3 = sld [smem:[%s2]]
  %s4 = scalar_lea.smem %s0, 2
  %s5 = sld [smem:[%s4]]
  %s6 = scalar_lea.smem %s0, 3
  %s7 = sld [smem:[%s6]]
  %s8 = scalar_lea.smem %s0, 4
  %s9 = sld [smem:[%s8]]
  %s10 = scalar_lea.smem %s0, 5
  %s11 = sld [smem:[%s10]]
  %s12 = scalar_lea.smem %s0, 6
  %s13 = sld [smem:[%s12]]
  %s14 = scalar_lea.smem %s0, 7
  %s15 = sld [smem:[%s14]]
  %s16 = scalar_lea.smem %s0, 8
  %s17 = sld [smem:[%s16]]
  %s18 = scalar_lea.smem %s0, 9
  %s19 = sld [smem:[%s18]]
  %s20 = scalar_lea.smem %s0, 10
  %s21 = sld [smem:[%s20]]
  %s22 = scalar_lea.smem %s0, 11
  %s23 = sld [smem:[%s22]]
  %s24 = scalar_lea.smem %s0, 12
  %s25 = sld [smem:[%s24]]
  %s26 = scalar_lea.smem %s0, 13
  %s27 = sld [smem:[%s26]]
  %s28 = scalar_lea.smem %s0, 14
  %s29 = sld [smem:[%s28]]
  %s30 = scalar_lea.smem %s0, 15
  %s31 = sld [smem:[%s30]]
  %s32 = scalar_lea.smem %s0, 16
  %s33 = sld [smem:[%s32]]
  %s34 = scalar_lea.smem %s0, 17
  %s35 = sld [smem:[%s34]]
  %s36 = scalar_lea.smem %s0, 18
  %s37 = sld [smem:[%s36]]
  %s38 = scalar_lea.smem %s0, 19
  %s39 = sld [smem:[%s38]]
  %s40 = scalar_lea.smem %s0, 20
  %s41 = sld [smem:[%s40]]
  %s42 = scalar_lea.smem %s0, 21
  %s43 = sld [smem:[%s42]]
  %s44 = scalar_lea.smem %s0, 22
  %s45 = sld [smem:[%s44]]
  %s46 = scalar_lea.smem %s0, 23
  %s47 = sld [smem:[%s46]]
  %s48 = scalar_lea.smem %s0, 24
  %s49 = sld [smem:[%s48]]
  %s50 = scalar_lea.smem %s0, 25
  %s51 = sld [smem:[%s50]]
  %s52 = scalar_lea.smem %s0, 26
  %s53 = sld [smem:[%s52]]
  %s54 = scalar_lea.smem %s0, 27
  %s55 = sld [smem:[%s54]]
  %s56 = scalar_lea.smem %s0, 28
  %s57 = sld [smem:[%s56]]
  %s58 = scalar_lea.smem %s0, 29
  %s59 = sld [smem:[%s58]]
  %s60 = scalar_lea.smem %s0, 30
  %s61 = sld [smem:[%s60]]
  %s62 = scalar_lea.smem %s0, 31
  %s63 = sld [smem:[%s62]]
  %s64 = sld [smem:[#allocation0]]
  $region222: #{score_estimator_forward.1} parent=0
    _
  %s66 = ssub.s32 1, %s64
  %s67 = scalar_select 0, %s66, %s64
  $region1: #{score_estimator_forward.1} parent=0
    #allocation2 [shape = 'u8[8192]{0}', space=vmem, size = 0x2000, scoped, tag = 'input window, operand 1, single buffered']
    #allocation3 [shape = 's32[1]{0}', space=sflag, size = 0x4, scoped, tag = 'scoped memory for score_estimator_forward.1']
    #allocation4 [shape = 's32[1]{0}', space=sflag, size = 0x4, scoped, tag = 'scoped memory for score_estimator_forward.1']
    #allocation5 [shape = 'u8[8192]{0}', space=vmem, size = 0x2000, scoped, tag = 'input window, operand 2, single buffered']
    #allocation6 [shape = 's32[1]{0}', space=sflag, size = 0x4, scoped, tag = 'scoped memory for score_estimator_forward.1']
    #allocation7 [shape = 'u8[32768]{0}', space=vmem, size = 0x8000, scoped, tag = 'input window, operand 3, single buffered']
    #allocation8 [shape = 'u8[16384]{0}', space=vmem, size = 0x4000, scoped, tag = 'input window, operand 5, single buffered']
    #allocation9 [shape = 's32[1]{0}', space=sflag, size = 0x4, scoped, tag = 'scoped memory for score_estimator_forward.1']
    #allocation10 [shape = 'u8[512]{0}', space=vmem, size = 0x400, scoped, tag = 'input window, operand 6, single buffered']
    #allocation11 [shape = 'u8[32768]{0}', space=vmem, size = 0x8000, scoped, tag = 'input window, operand 7, single buffered']
    #allocation12 [shape = 's32[1]{0}', space=sflag, size = 0x4, scoped, tag = 'scoped memory for score_estimator_forward.1']
    #allocation13 [shape = 'u8[512]{0}', space=vmem, size = 0x400, scoped, tag = 'input window, operand 8, single buffered']
    #allocation14 [shape = 'u8[8192]{0}', space=vmem, size = 0x2000, scoped, tag = 'input window, operand 9, single buffered']
    #allocation15 [shape = 's32[1]{0}', space=sflag, size = 0x4, scoped, tag = 'scoped memory for score_estimator_forward.1']
    #allocation16 [shape = 'u8[512]{0}', space=vmem, size = 0x400, scoped, tag = 'input window, operand 10, single buffered']
    #allocation17 [shape = 'u8[8192]{0}', space=vmem, size = 0x2000, scoped, tag = 'input window, operand 11, single buffered']
    #allocation18 [shape = 's32[1]{0}', space=sflag, size = 0x4, scoped, tag = 'scoped memory for score_estimator_forward.1']
    #allocation19 [shape = 'u8[512]{0}', space=vmem, size = 0x400, scoped, tag = 'input window, operand 12, single buffered']
    #allocation20 [shape = 'u8[32768]{0}', space=vmem, size = 0x8000, scoped, tag = 'input window, operand 13, single buffered']
    #allocation21 [shape = 's32[1]{0}', space=sflag, size = 0x4, scoped, tag = 'scoped memory for score_estimator_forward.1']
    #allocation22 [shape = 'u8[1024]{0}', space=vmem, size = 0x400, scoped, tag = 'input window, operand 14, single buffered']
    #allocation23 [shape = 'u8[32768]{0}', space=vmem, size = 0x8000, scoped, tag = 'input window, operand 15, single buffered']
    #allocation24 [shape = 's32[1]{0}', space=sflag, size = 0x4, scoped, tag = 'scoped memory for score_estimator_forward.1']
    #allocation25 [shape = 'u8[1024]{0}', space=vmem, size = 0x400, scoped, tag = 'input window, operand 16, single buffered']
    #allocation26 [shape = 'u8[32768]{0}', space=vmem, size = 0x8000, scoped, tag = 'input window, operand 17, single buffered']
    #allocation27 [shape = 's32[1]{0}', space=sflag, size = 0x4, scoped, tag = 'scoped memory for score_estimator_forward.1']
    #allocation28 [shape = 'u8[1024]{0}', space=vmem, size = 0x400, scoped, tag = 'input window, operand 18, single buffered']
    #allocation29 [shape = 'u8[32768]{0}', space=vmem, size = 0x8000, scoped, tag = 'input window, operand 19, single buffered']
    #allocation30 [shape = 's32[1]{0}', space=sflag, size = 0x4, scoped, tag = 'scoped memory for score_estimator_forward.1']
    #allocation31 [shape = 'u8[1024]{0}', space=vmem, size = 0x400, scoped, tag = 'input window, operand 20, single buffered']
    #allocation32 [shape = 'u8[32768]{0}', space=vmem, size = 0x8000, scoped, tag = 'input window, operand 23, single buffered']
    #allocation33 [shape = 's32[1]{0}', space=sflag, size = 0x4, scoped, tag = 'scoped memory for score_estimator_forward.1']
    #allocation34 [shape = 'u8[1024]{0}', space=vmem, size = 0x400, scoped, tag = 'input window, operand 24, single buffered']
    #allocation35 [shape = 'u8[16384]{0}', space=vmem, size = 0x4000, scoped, tag = 'input window, operand 29, single buffered']
    #allocation36 [shape = 's32[1]{0}', space=sflag, size = 0x4, scoped, tag = 'scoped memory for score_estimator_forward.1']
    #allocation37 [shape = 'u8[8192]{0}', space=vmem, size = 0x2000, scoped, tag = 'output window, operand 0, single buffered']
    %68 = vsyncpa [#allocation3], 0
    %69 = vsyncpa [#allocation6], 0
    %70 = vsyncpa [#allocation9], 0
    %71 = vsyncpa [#allocation12], 0
    %72 = vsyncpa [#allocation15], 0
    %73 = vsyncpa [#allocation18], 0
    %74 = vsyncpa [#allocation21], 0
    %75 = vsyncpa [#allocation24], 0
    %76 = vsyncpa [#allocation27], 0
    %77 = vsyncpa [#allocation30], 0
    %78 = vsyncpa [#allocation33], 0
    %79 = vsyncpa [#allocation36], 0
    %80 = vsyncpa [#allocation4], 0
    // Predicated region
    $region2: #{score_estimator_forward.1} parent=1 // pred_check
      _
    $region3: #{score_estimator_forward.1} parent=1 // pred_check_branch
      %82 = sbr.rel (0) target = $region5
    $region4: #{score_estimator_forward.1} parent=1 // pred_region
      _
    $region5: #{score_estimator_forward.1} parent=1 // pred_fallthru
      _
    // Predicated region
    $region6: #{score_estimator_forward.1} parent=1 // pred_check
      _
    $region7: #{score_estimator_forward.1} parent=1 // pred_check_branch
      %84 = sbr.rel (0) target = $region9
    $region8: #{score_estimator_forward.1} parent=1 // pred_region
      %s86 = ssub.s32 256, 256
      %87 = vsyncadd [#allocation3], %s86
      %s88 = sshll.u32 [#allocation2], 4
      %s89 = int_to_ptr.vmem [resolvable:$true] %s88
      %94 = dma.hbm_to_vmem [thread:$0]  %s3, 256, %s89, [#allocation3], 128, 128, 8
    $region9: #{score_estimator_forward.1} parent=1 // pred_fallthru
      _
    // Predicated region
    $region10: #{score_estimator_forward.1} parent=1 // pred_check
      _
    $region11: #{score_estimator_forward.1} parent=1 // pred_check_branch
      %96 = sbr.rel (0) target = $region13
    $region12: #{score_estimator_forward.1} parent=1 // pred_region
      %s98 = ssub.s32 256, 256
      %99 = vsyncadd [#allocation6], %s98
      %s100 = sshll.u32 [#allocation5], 4
      %s101 = int_to_ptr.vmem [resolvable:$true] %s100
      %106 = dma.hbm_to_vmem [thread:$0]  %s5, 256, %s101, [#allocation6], 128, 128, 8
    $region13: #{score_estimator_forward.1} parent=1 // pred_fallthru
      _
    // Predicated region
    $region14: #{score_estimator_forward.1} parent=1 // pred_check
      _
    $region15: #{score_estimator_forward.1} parent=1 // pred_check_branch
      %108 = sbr.rel (0) target = $region17
    $region16: #{score_estimator_forward.1} parent=1 // pred_region
      %s110 = ssub.s32 1024, 1024
      %111 = vsyncadd [#allocation6], %s110
      %s112 = sshll.u32 [#allocation7], 4
      %s113 = int_to_ptr.vmem [resolvable:$true] %s112
      %118 = dma.hbm_to_vmem [thread:$0]  %s7, 1024, %s113, [#allocation6], 128, 128, 8
    $region17: #{score_estimator_forward.1} parent=1 // pred_fallthru
      _
    // Predicated region
    $region18: #{score_estimator_forward.1} parent=1 // pred_check
      _
    $region19: #{score_estimator_forward.1} parent=1 // pred_check_branch
      %120 = sbr.rel (0) target = $region21
    $region20: #{score_estimator_forward.1} parent=1 // pred_region
      _
    $region21: #{score_estimator_forward.1} parent=1 // pred_fallthru
      _
    // Predicated region
    $region22: #{score_estimator_forward.1} parent=1 // pred_check
      _
    $region23: #{score_estimator_forward.1} parent=1 // pred_check_branch
      %122 = sbr.rel (0) target = $region25
    $region24: #{score_estimator_forward.1} parent=1 // pred_region
      %s124 = ssub.s32 512, 512
      %125 = vsyncadd [#allocation9], %s124
      %s126 = sshll.u32 [#allocation8], 4
      %s127 = int_to_ptr.vmem [resolvable:$true] %s126
      %132 = dma.hbm_to_vmem [thread:$0]  %s11, 512, %s127, [#allocation9], 128, 128, 8
    $region25: #{score_estimator_forward.1} parent=1 // pred_fallthru
      _
    // Predicated region
    $region26: #{score_estimator_forward.1} parent=1 // pred_check
      _
    $region27: #{score_estimator_forward.1} parent=1 // pred_check_branch
      %134 = sbr.rel (0) target = $region29
    $region28: #{score_estimator_forward.1} parent=1 // pred_region
      %s136 = ssub.s32 16, 16
      %137 = vsyncadd [#allocation9], %s136
      %s139 = sshll.u32 [#allocation10], 4
      %s140 = int_to_ptr.vmem [resolvable:$true] %s139
      %142 = dma.hbm_to_vmem [thread:$0]  %s13, 16, %s140, [#allocation9]
    $region29: #{score_estimator_forward.1} parent=1 // pred_fallthru
      _
    // Predicated region
    $region30: #{score_estimator_forward.1} parent=1 // pred_check
      _
    $region31: #{score_estimator_forward.1} parent=1 // pred_check_branch
      %144 = sbr.rel (0) target = $region33
    $region32: #{score_estimator_forward.1} parent=1 // pred_region
      %s146 = ssub.s32 1024, 1024
      %147 = vsyncadd [#allocation12], %s146
      %s148 = sshll.u32 [#allocation11], 4
      %s149 = int_to_ptr.vmem [resolvable:$true] %s148
      %154 = dma.hbm_to_vmem [thread:$0]  %s15, 1024, %s149, [#allocation12], 128, 128, 8
    $region33: #{score_estimator_forward.1} parent=1 // pred_fallthru
      _
    // Predicated region
    $region34: #{score_estimator_forward.1} parent=1 // pred_check
      _
    $region35: #{score_estimator_forward.1} parent=1 // pred_check_branch
      %156 = sbr.rel (0) target = $region37
    $region36: #{score_estimator_forward.1} parent=1 // pred_region
      %s158 = ssub.s32 16, 16
      %159 = vsyncadd [#allocation12], %s158
      %s161 = sshll.u32 [#allocation13], 4
      %s162 = int_to_ptr.vmem [resolvable:$true] %s161
      %164 = dma.hbm_to_vmem [thread:$0]  %s17, 16, %s162, [#allocation12]
    $region37: #{score_estimator_forward.1} parent=1 // pred_fallthru
      _
    // Predicated region
    $region38: #{score_estimator_forward.1} parent=1 // pred_check
      _
    $region39: #{score_estimator_forward.1} parent=1 // pred_check_branch
      %166 = sbr.rel (0) target = $region41
    $region40: #{score_estimator_forward.1} parent=1 // pred_region
      %s168 = ssub.s32 256, 256
      %169 = vsyncadd [#allocation15], %s168
      %s170 = sshll.u32 [#allocation14], 4
      %s171 = int_to_ptr.vmem [resolvable:$true] %s170
      %176 = dma.hbm_to_vmem [thread:$0]  %s19, 256, %s171, [#allocation15], 128, 128, 8
    $region41: #{score_estimator_forward.1} parent=1 // pred_fallthru
      _
    // Predicated region
    $region42: #{score_estimator_forward.1} parent=1 // pred_check
      _
    $region43: #{score_estimator_forward.1} parent=1 // pred_check_branch
      %178 = sbr.rel (0) target = $region45
    $region44: #{score_estimator_forward.1} parent=1 // pred_region
      %s180 = ssub.s32 16, 16
      %181 = vsyncadd [#allocation15], %s180
      %s183 = sshll.u32 [#allocation16], 4
      %s184 = int_to_ptr.vmem [resolvable:$true] %s183
      %186 = dma.hbm_to_vmem [thread:$0]  %s21, 16, %s184, [#allocation15]
    $region45: #{score_estimator_forward.1} parent=1 // pred_fallthru
      _
    // Predicated region
    $region46: #{score_estimator_forward.1} parent=1 // pred_check
      _
    $region47: #{score_estimator_forward.1} parent=1 // pred_check_branch
      %188 = sbr.rel (0) target = $region49
    $region48: #{score_estimator_forward.1} parent=1 // pred_region
      %s190 = ssub.s32 256, 256
      %191 = vsyncadd [#allocation18], %s190
      %s192 = sshll.u32 [#allocation17], 4
      %s193 = int_to_ptr.vmem [resolvable:$true] %s192
      %198 = dma.hbm_to_vmem [thread:$0]  %s23, 256, %s193, [#allocation18], 128, 128, 8
    $region49: #{score_estimator_forward.1} parent=1 // pred_fallthru
      _
    // Predicated region
    $region50: #{score_estimator_forward.1} parent=1 // pred_check
      _
    $region51: #{score_estimator_forward.1} parent=1 // pred_check_branch
      %200 = sbr.rel (0) target = $region53
    $region52: #{score_estimator_forward.1} parent=1 // pred_region
      %s202 = ssub.s32 16, 16
      %203 = vsyncadd [#allocation18], %s202
      %s205 = sshll.u32 [#allocation19], 4
      %s206 = int_to_ptr.vmem [resolvable:$true] %s205
      %208 = dma.hbm_to_vmem [thread:$0]  %s25, 16, %s206, [#allocation18]
    $region53: #{score_estimator_forward.1} parent=1 // pred_fallthru
      _
    // Predicated region
    $region54: #{score_estimator_forward.1} parent=1 // pred_check
      _
    $region55: #{score_estimator_forward.1} parent=1 // pred_check_branch
      %210 = sbr.rel (0) target = $region57
    $region56: #{score_estimator_forward.1} parent=1 // pred_region
      %s212 = ssub.s32 1024, 1024
      %213 = vsyncadd [#allocation21], %s212
      %s214 = sshll.u32 [#allocation20], 4
      %s215 = int_to_ptr.vmem [resolvable:$true] %s214
      %220 = dma.hbm_to_vmem [thread:$0]  %s27, 1024, %s215, [#allocation21], 128, 128, 8
    $region57: #{score_estimator_forward.1} parent=1 // pred_fallthru
      _
    // Predicated region
    $region58: #{score_estimator_forward.1} parent=1 // pred_check
      _
    $region59: #{score_estimator_forward.1} parent=1 // pred_check_branch
      %222 = sbr.rel (0) target = $region61
    $region60: #{score_estimator_forward.1} parent=1 // pred_region
      %s224 = ssub.s32 32, 32
      %225 = vsyncadd [#allocation21], %s224
      %s226 = sshll.u32 [#allocation22], 4
      %s227 = int_to_ptr.vmem [resolvable:$true] %s226
      %232 = dma.hbm_to_vmem [thread:$0]  %s29, 32, %s227, [#allocation21], 16, 16, 1
    $region61: #{score_estimator_forward.1} parent=1 // pred_fallthru
      _
    // Predicated region
    $region62: #{score_estimator_forward.1} parent=1 // pred_check
      _
    $region63: #{score_estimator_forward.1} parent=1 // pred_check_branch
      %234 = sbr.rel (0) target = $region65
    $region64: #{score_estimator_forward.1} parent=1 // pred_region
      %s236 = ssub.s32 1024, 1024
      %237 = vsyncadd [#allocation24], %s236
      %s238 = sshll.u32 [#allocation23], 4
      %s239 = int_to_ptr.vmem [resolvable:$true] %s238
      %244 = dma.hbm_to_vmem [thread:$0]  %s31, 1024, %s239, [#allocation24], 128, 128, 8
    $region65: #{score_estimator_forward.1} parent=1 // pred_fallthru
      _
    // Predicated region
    $region66: #{score_estimator_forward.1} parent=1 // pred_check
      _
    $region67: #{score_estimator_forward.1} parent=1 // pred_check_branch
      %246 = sbr.rel (0) target = $region69
    $region68: #{score_estimator_forward.1} parent=1 // pred_region
      %s248 = ssub.s32 32, 32
      %249 = vsyncadd [#allocation24], %s248
      %s250 = sshll.u32 [#allocation25], 4
      %s251 = int_to_ptr.vmem [resolvable:$true] %s250
      %256 = dma.hbm_to_vmem [thread:$0]  %s33, 32, %s251, [#allocation24], 16, 16, 1
    $region69: #{score_estimator_forward.1} parent=1 // pred_fallthru
      _
    // Predicated region
    $region70: #{score_estimator_forward.1} parent=1 // pred_check
      _
    $region71: #{score_estimator_forward.1} parent=1 // pred_check_branch
      %258 = sbr.rel (0) target = $region73
    $region72: #{score_estimator_forward.1} parent=1 // pred_region
      %s260 = ssub.s32 1024, 1024
      %261 = vsyncadd [#allocation27], %s260
      %s262 = sshll.u32 [#allocation26], 4
      %s263 = int_to_ptr.vmem [resolvable:$true] %s262
      %268 = dma.hbm_to_vmem [thread:$0]  %s35, 1024, %s263, [#allocation27], 128, 128, 8
    $region73: #{score_estimator_forward.1} parent=1 // pred_fallthru
      _
    // Predicated region
    $region74: #{score_estimator_forward.1} parent=1 // pred_check
      _
    $region75: #{score_estimator_forward.1} parent=1 // pred_check_branch
      %270 = sbr.rel (0) target = $region77
    $region76: #{score_estimator_forward.1} parent=1 // pred_region
      %s272 = ssub.s32 32, 32
      %273 = vsyncadd [#allocation27], %s272
      %s274 = sshll.u32 [#allocation28], 4
      %s275 = int_to_ptr.vmem [resolvable:$true] %s274
      %280 = dma.hbm_to_vmem [thread:$0]  %s37, 32, %s275, [#allocation27], 16, 16, 1
    $region77: #{score_estimator_forward.1} parent=1 // pred_fallthru
      _
    // Predicated region
    $region78: #{score_estimator_forward.1} parent=1 // pred_check
      _
    $region79: #{score_estimator_forward.1} parent=1 // pred_check_branch
      %282 = sbr.rel (0) target = $region81
    $region80: #{score_estimator_forward.1} parent=1 // pred_region
      %s284 = ssub.s32 1024, 1024
      %285 = vsyncadd [#allocation30], %s284
      %s286 = sshll.u32 [#allocation29], 4
      %s287 = int_to_ptr.vmem [resolvable:$true] %s286
      %292 = dma.hbm_to_vmem [thread:$0]  %s39, 1024, %s287, [#allocation30], 128, 128, 8
    $region81: #{score_estimator_forward.1} parent=1 // pred_fallthru
      _
    // Predicated region
    $region82: #{score_estimator_forward.1} parent=1 // pred_check
      _
    $region83: #{score_estimator_forward.1} parent=1 // pred_check_branch
      %294 = sbr.rel (0) target = $region85
    $region84: #{score_estimator_forward.1} parent=1 // pred_region
      %s296 = ssub.s32 32, 32
      %297 = vsyncadd [#allocation30], %s296
      %s298 = sshll.u32 [#allocation31], 4
      %s299 = int_to_ptr.vmem [resolvable:$true] %s298
      %304 = dma.hbm_to_vmem [thread:$0]  %s41, 32, %s299, [#allocation30], 16, 16, 1
    $region85: #{score_estimator_forward.1} parent=1 // pred_fallthru
      _
    // Predicated region
    $region86: #{score_estimator_forward.1} parent=1 // pred_check
      _
    $region87: #{score_estimator_forward.1} parent=1 // pred_check_branch
      %306 = sbr.rel (0) target = $region89
    $region88: #{score_estimator_forward.1} parent=1 // pred_region
      _
    $region89: #{score_estimator_forward.1} parent=1 // pred_fallthru
      _
    // Predicated region
    $region90: #{score_estimator_forward.1} parent=1 // pred_check
      _
    $region91: #{score_estimator_forward.1} parent=1 // pred_check_branch
      %308 = sbr.rel (0) target = $region93
    $region92: #{score_estimator_forward.1} parent=1 // pred_region
      _
    $region93: #{score_estimator_forward.1} parent=1 // pred_fallthru
      _
    // Predicated region
    $region94: #{score_estimator_forward.1} parent=1 // pred_check
      _
    $region95: #{score_estimator_forward.1} parent=1 // pred_check_branch
      %310 = sbr.rel (0) target = $region97
    $region96: #{score_estimator_forward.1} parent=1 // pred_region
      %s312 = ssub.s32 1024, 1024
      %313 = vsyncadd [#allocation33], %s312
      %s314 = sshll.u32 [#allocation32], 4
      %s315 = int_to_ptr.vmem [resolvable:$true] %s314
      %320 = dma.hbm_to_vmem [thread:$0]  %s47, 1024, %s315, [#allocation33], 128, 128, 8
    $region97: #{score_estimator_forward.1} parent=1 // pred_fallthru
      _
    // Predicated region
    $region98: #{score_estimator_forward.1} parent=1 // pred_check
      _
    $region99: #{score_estimator_forward.1} parent=1 // pred_check_branch
      %322 = sbr.rel (0) target = $region101
    $region100: #{score_estimator_forward.1} parent=1 // pred_region
      %s324 = ssub.s32 32, 32
      %325 = vsyncadd [#allocation33], %s324
      %s326 = sshll.u32 [#allocation34], 4
      %s327 = int_to_ptr.vmem [resolvable:$true] %s326
      %332 = dma.hbm_to_vmem [thread:$0]  %s49, 32, %s327, [#allocation33], 16, 16, 1
    $region101: #{score_estimator_forward.1} parent=1 // pred_fallthru
      _
    // Predicated region
    $region102: #{score_estimator_forward.1} parent=1 // pred_check
      _
    $region103: #{score_estimator_forward.1} parent=1 // pred_check_branch
      %334 = sbr.rel (0) target = $region105
    $region104: #{score_estimator_forward.1} parent=1 // pred_region
      _
    $region105: #{score_estimator_forward.1} parent=1 // pred_fallthru
      _
    // Predicated region
    $region106: #{score_estimator_forward.1} parent=1 // pred_check
      _
    $region107: #{score_estimator_forward.1} parent=1 // pred_check_branch
      %336 = sbr.rel (0) target = $region109
    $region108: #{score_estimator_forward.1} parent=1 // pred_region
      _
    $region109: #{score_estimator_forward.1} parent=1 // pred_fallthru
      _
    // Predicated region
    $region110: #{score_estimator_forward.1} parent=1 // pred_check
      _
    $region111: #{score_estimator_forward.1} parent=1 // pred_check_branch
      %338 = sbr.rel (0) target = $region113
    $region112: #{score_estimator_forward.1} parent=1 // pred_region
      _
    $region113: #{score_estimator_forward.1} parent=1 // pred_fallthru
      _
    // Predicated region
    $region114: #{score_estimator_forward.1} parent=1 // pred_check
      _
    $region115: #{score_estimator_forward.1} parent=1 // pred_check_branch
      %340 = sbr.rel (0) target = $region117
    $region116: #{score_estimator_forward.1} parent=1 // pred_region
      _
    $region117: #{score_estimator_forward.1} parent=1 // pred_fallthru
      _
    // Predicated region
    $region118: #{score_estimator_forward.1} parent=1 // pred_check
      _
    $region119: #{score_estimator_forward.1} parent=1 // pred_check_branch
      %342 = sbr.rel (0) target = $region121
    $region120: #{score_estimator_forward.1} parent=1 // pred_region
      %s344 = ssub.s32 512, 512
      %345 = vsyncadd [#allocation36], %s344
      %s346 = sshll.u32 [#allocation35], 4
      %s347 = int_to_ptr.vmem [resolvable:$true] %s346
      %352 = dma.hbm_to_vmem [thread:$0]  %s59, 512, %s347, [#allocation36], 128, 128, 8
    $region121: #{score_estimator_forward.1} parent=1 // pred_fallthru
      _
    // Predicated region
    $region122: #{score_estimator_forward.1} parent=1 // pred_check
      _
    $region123: #{score_estimator_forward.1} parent=1 // pred_check_branch
      %354 = sbr.rel (0) target = $region125
    $region124: #{score_estimator_forward.1} parent=1 // pred_region
      _
    $region125: #{score_estimator_forward.1} parent=1 // pred_fallthru
      _
    // Predicated region
    $region126: #{score_estimator_forward.1} parent=1 // pred_check
      _
    $region127: #{score_estimator_forward.1} parent=1 // pred_check_branch
      %356 = sbr.rel (0) target = $region129
    $region128: #{score_estimator_forward.1} parent=1 // pred_region
      %357 = dma.done [#allocation3], 256
    $region129: #{score_estimator_forward.1} parent=1 // pred_fallthru
      _
    // Predicated region
    $region130: #{score_estimator_forward.1} parent=1 // pred_check
      _
    $region131: #{score_estimator_forward.1} parent=1 // pred_check_branch
      %359 = sbr.rel (0) target = $region133
    $region132: #{score_estimator_forward.1} parent=1 // pred_region
      %360 = dma.done [#allocation6], 256
    $region133: #{score_estimator_forward.1} parent=1 // pred_fallthru
      _
    // Predicated region
    $region134: #{score_estimator_forward.1} parent=1 // pred_check
      _
    $region135: #{score_estimator_forward.1} parent=1 // pred_check_branch
      %362 = sbr.rel (0) target = $region137
    $region136: #{score_estimator_forward.1} parent=1 // pred_region
      %363 = dma.done [#allocation6], 1024
    $region137: #{score_estimator_forward.1} parent=1 // pred_fallthru
      _
    // Predicated region
    $region138: #{score_estimator_forward.1} parent=1 // pred_check
      _
    $region139: #{score_estimator_forward.1} parent=1 // pred_check_branch
      %365 = sbr.rel (0) target = $region141
    $region140: #{score_estimator_forward.1} parent=1 // pred_region
      %366 = dma.done [#allocation9], 512
    $region141: #{score_estimator_forward.1} parent=1 // pred_fallthru
      _
    // Predicated region
    $region142: #{score_estimator_forward.1} parent=1 // pred_check
      _
    $region143: #{score_estimator_forward.1} parent=1 // pred_check_branch
      %368 = sbr.rel (0) target = $region145
    $region144: #{score_estimator_forward.1} parent=1 // pred_region
      %369 = dma.done [#allocation9], 16
    $region145: #{score_estimator_forward.1} parent=1 // pred_fallthru
      _
    // Predicated region
    $region146: #{score_estimator_forward.1} parent=1 // pred_check
      _
    $region147: #{score_estimator_forward.1} parent=1 // pred_check_branch
      %371 = sbr.rel (0) target = $region149
    $region148: #{score_estimator_forward.1} parent=1 // pred_region
      %372 = dma.done [#allocation12], 1024
    $region149: #{score_estimator_forward.1} parent=1 // pred_fallthru
      _
    // Predicated region
    $region150: #{score_estimator_forward.1} parent=1 // pred_check
      _
    $region151: #{score_estimator_forward.1} parent=1 // pred_check_branch
      %374 = sbr.rel (0) target = $region153
    $region152: #{score_estimator_forward.1} parent=1 // pred_region
      %375 = dma.done [#allocation12], 16
    $region153: #{score_estimator_forward.1} parent=1 // pred_fallthru
      _
    // Predicated region
    $region154: #{score_estimator_forward.1} parent=1 // pred_check
      _
    $region155: #{score_estimator_forward.1} parent=1 // pred_check_branch
      %377 = sbr.rel (0) target = $region157
    $region156: #{score_estimator_forward.1} parent=1 // pred_region
      %378 = dma.done [#allocation15], 256
    $region157: #{score_estimator_forward.1} parent=1 // pred_fallthru
      _
    // Predicated region
    $region158: #{score_estimator_forward.1} parent=1 // pred_check
      _
    $region159: #{score_estimator_forward.1} parent=1 // pred_check_branch
      %380 = sbr.rel (0) target = $region161
    $region160: #{score_estimator_forward.1} parent=1 // pred_region
      %381 = dma.done [#allocation15], 16
    $region161: #{score_estimator_forward.1} parent=1 // pred_fallthru
      _
    // Predicated region
    $region162: #{score_estimator_forward.1} parent=1 // pred_check
      _
    $region163: #{score_estimator_forward.1} parent=1 // pred_check_branch
      %383 = sbr.rel (0) target = $region165
    $region164: #{score_estimator_forward.1} parent=1 // pred_region
      %384 = dma.done [#allocation18], 256
    $region165: #{score_estimator_forward.1} parent=1 // pred_fallthru
      _
    // Predicated region
    $region166: #{score_estimator_forward.1} parent=1 // pred_check
      _
    $region167: #{score_estimator_forward.1} parent=1 // pred_check_branch
      %386 = sbr.rel (0) target = $region169
    $region168: #{score_estimator_forward.1} parent=1 // pred_region
      %387 = dma.done [#allocation18], 16
    $region169: #{score_estimator_forward.1} parent=1 // pred_fallthru
      _
    // Predicated region
    $region170: #{score_estimator_forward.1} parent=1 // pred_check
      _
    $region171: #{score_estimator_forward.1} parent=1 // pred_check_branch
      %389 = sbr.rel (0) target = $region173
    $region172: #{score_estimator_forward.1} parent=1 // pred_region
      %390 = dma.done [#allocation21], 1024
    $region173: #{score_estimator_forward.1} parent=1 // pred_fallthru
      _
    // Predicated region
    $region174: #{score_estimator_forward.1} parent=1 // pred_check
      _
    $region175: #{score_estimator_forward.1} parent=1 // pred_check_branch
      %392 = sbr.rel (0) target = $region177
    $region176: #{score_estimator_forward.1} parent=1 // pred_region
      %393 = dma.done [#allocation21], 32
    $region177: #{score_estimator_forward.1} parent=1 // pred_fallthru
      _
    // Predicated region
    $region178: #{score_estimator_forward.1} parent=1 // pred_check
      _
    $region179: #{score_estimator_forward.1} parent=1 // pred_check_branch
      %395 = sbr.rel (0) target = $region181
    $region180: #{score_estimator_forward.1} parent=1 // pred_region
      %396 = dma.done [#allocation24], 1024
    $region181: #{score_estimator_forward.1} parent=1 // pred_fallthru
      _
    // Predicated region
    $region182: #{score_estimator_forward.1} parent=1 // pred_check
      _
    $region183: #{score_estimator_forward.1} parent=1 // pred_check_branch
      %398 = sbr.rel (0) target = $region185
    $region184: #{score_estimator_forward.1} parent=1 // pred_region
      %399 = dma.done [#allocation24], 32
    $region185: #{score_estimator_forward.1} parent=1 // pred_fallthru
      _
    // Predicated region
    $region186: #{score_estimator_forward.1} parent=1 // pred_check
      _
    $region187: #{score_estimator_forward.1} parent=1 // pred_check_branch
      %401 = sbr.rel (0) target = $region189
    $region188: #{score_estimator_forward.1} parent=1 // pred_region
      %402 = dma.done [#allocation27], 1024
    $region189: #{score_estimator_forward.1} parent=1 // pred_fallthru
      _
    // Predicated region
    $region190: #{score_estimator_forward.1} parent=1 // pred_check
      _
    $region191: #{score_estimator_forward.1} parent=1 // pred_check_branch
      %404 = sbr.rel (0) target = $region193
    $region192: #{score_estimator_forward.1} parent=1 // pred_region
      %405 = dma.done [#allocation27], 32
    $region193: #{score_estimator_forward.1} parent=1 // pred_fallthru
      _
    // Predicated region
    $region194: #{score_estimator_forward.1} parent=1 // pred_check
      _
    $region195: #{score_estimator_forward.1} parent=1 // pred_check_branch
      %407 = sbr.rel (0) target = $region197
    $region196: #{score_estimator_forward.1} parent=1 // pred_region
      %408 = dma.done [#allocation30], 1024
    $region197: #{score_estimator_forward.1} parent=1 // pred_fallthru
      _
    // Predicated region
    $region198: #{score_estimator_forward.1} parent=1 // pred_check
      _
    $region199: #{score_estimator_forward.1} parent=1 // pred_check_branch
      %410 = sbr.rel (0) target = $region201
    $region200: #{score_estimator_forward.1} parent=1 // pred_region
      %411 = dma.done [#allocation30], 32
    $region201: #{score_estimator_forward.1} parent=1 // pred_fallthru
      _
    // Predicated region
    $region202: #{score_estimator_forward.1} parent=1 // pred_check
      _
    $region203: #{score_estimator_forward.1} parent=1 // pred_check_branch
      %413 = sbr.rel (0) target = $region205
    $region204: #{score_estimator_forward.1} parent=1 // pred_region
      %414 = dma.done [#allocation33], 1024
    $region205: #{score_estimator_forward.1} parent=1 // pred_fallthru
      _
    // Predicated region
    $region206: #{score_estimator_forward.1} parent=1 // pred_check
      _
    $region207: #{score_estimator_forward.1} parent=1 // pred_check_branch
      %416 = sbr.rel (0) target = $region209
    $region208: #{score_estimator_forward.1} parent=1 // pred_region
      %417 = dma.done [#allocation33], 32
    $region209: #{score_estimator_forward.1} parent=1 // pred_fallthru
      _
    // Predicated region
    $region210: #{score_estimator_forward.1} parent=1 // pred_check
      _
    $region211: #{score_estimator_forward.1} parent=1 // pred_check_branch
      %419 = sbr.rel (0) target = $region213
    $region212: #{score_estimator_forward.1} parent=1 // pred_region
      %420 = dma.done [#allocation36], 512
    $region213: #{score_estimator_forward.1} parent=1 // pred_fallthru
      _
    %v421 = vld [vmem:[%s1] sm:$0x3]
    %v422 = vld [vmem:[#allocation8] sm:$0xff]
    %v423 = vld [vmem:[#allocation8 + $0x8] sm:$0xff]
    %v424 = vld [vmem:[#allocation8 + $0x10] sm:$0xff]
    %v425 = vld [vmem:[#allocation8 + $0x18] sm:$0xff]
    %v426 = vld [vmem:[#allocation10] sm:$0x1]
    %v428 = vlaneseq
    %v429 = vshrl.u32 %v428, 7
    %v430 = vsub.s32 0, %v429
    %v431 = vrot.slane %v426, %v430
    %vm433 = vcmask 261120
    %v435 = vsel %vm433, %v421, 0
    %437 = vmatprep.subr.mxu0 0.0
    %438 = vmatpush1.msra.mxu0 %v422
    %439 = vmatprep.subr.mxu0 0.0
    %440 = vmatpush1.msra.mxu0 %v423
    %441 = vmatprep.subr.mxu0 0.0
    %442 = vmatpush1.msra.mxu0 %v424
    %443 = vmatprep.subr.mxu0 0.0
    %444 = vmatpush1.msra.mxu0 %v425
    %445 = vmatprep.subr.mxu0 0.0
    %446 = vmatpush1.msra.mxu0 0.0
    %447 = vmatprep.subr.mxu0 0.0
    %448 = vmatpush1.msra.mxu0 0.0
    %449 = vmatprep.subr.mxu0 0.0
    %450 = vmatpush1.msra.mxu0 0.0
    %451 = vmatprep.subr.mxu0 0.0
    %452 = vmatpush1.msra.mxu0 0.0
    %453 = vmatprep.subr.mxu0 0.0
    %454 = vmatpush1.msra.mxu0 0.0
    %455 = vmatprep.subr.mxu0 0.0
    %456 = vmatpush1.msra.mxu0 0.0
    %457 = vmatprep.subr.mxu0 0.0
    %458 = vmatpush1.msra.mxu0 0.0
    %459 = vmatprep.subr.mxu0 0.0
    %460 = vmatpush1.msra.mxu0 0.0
    %461 = vmatprep.subr.mxu0 0.0
    %462 = vmatpush1.msra.mxu0 0.0
    %463 = vmatprep.subr.mxu0 0.0
    %464 = vmatpush1.msra.mxu0 0.0
    %465 = vmatprep.subr.mxu0 0.0
    %466 = vmatpush1.msra.mxu0 0.0
    %467 = vmatprep.subr.mxu0 0.0
    %468 = vmatpush1.msra.mxu0 0.0
    %469 = vmatprep.subr.mxu0 0.0
    %470 = vmatpush1.msra.mxu0 0.0
    %471 = vmatprep.subr.mxu0 0.0
    %472 = vmatpush1.msra.mxu0 0.0
    %473 = vmatprep.subr.mxu0 0.0
    %474 = vmatpush1.msra.mxu0 0.0
    %475 = vmatprep.subr.mxu0 0.0
    %476 = vmatpush1.msra.mxu0 0.0
    %477 = vmatprep.subr.mxu0 0.0
    %478 = vmatpush1.msra.mxu0 0.0
    %479 = vmatprep.subr.mxu0 0.0
    %480 = vmatpush1.msra.mxu0 0.0
    %481 = vmatprep.subr.mxu0 0.0
    %482 = vmatpush1.msra.mxu0 0.0
    %483 = vmatprep.subr.mxu0 0.0
    %484 = vmatpush1.msra.mxu0 0.0
    %485 = vmatprep.subr.mxu0 0.0
    %486 = vmatpush1.msra.mxu0 0.0
    %487 = vmatprep.subr.mxu0 0.0
    %488 = vmatpush1.msra.mxu0 0.0
    %489 = vmatprep.subr.mxu0 0.0
    %490 = vmatpush1.msra.mxu0 0.0
    %491 = vmatprep.subr.mxu0 0.0
    %492 = vmatpush1.msra.mxu0 0.0
    %493 = vmatprep.subr.mxu0 0.0
    %494 = vmatpush1.msra.mxu0 0.0
    %495 = vmatprep.subr.mxu0 0.0
    %496 = vmatpush1.msra.mxu0 0.0
    %497 = vmatprep.subr.mxu0 0.0
    %498 = vmatpush1.msra.mxu0 0.0
    %499 = vmatprep.subr.mxu0 0.0
    %500 = vmatpush1.msra.mxu0 0.0
    %501 = vmatprep.mubr.f32.mxu0 0.0
    %502 = vmatmul.mubr.f32.gmra.mrb[0].mxu0 %v435
    %v503 = vpop.f32.mrb[0].mxu0
    %v504 = vadd.f32 %v431, %v503
    %v505 = vpop.f32.mrb[0].mxu0
    %506 = vdwg.mxu0
    %v507 = vxor.u32 %v504, 2147483648
    %v508 = vmul.f32 %v507, 1.442695
    %v509 = vpow.pop %v508
    %v510 = vadd.f32 %v509, 1.0
    %v511 = vrcp.pop %v510
    %v512 = vmul.f32 1.0, %v511
    %v513 = vmul.f32 %v504, %v512
    %v514 = vld [vmem:[#allocation11] sm:$0xff]
    %v515 = vld [vmem:[#allocation11 + $0x8] sm:$0xff]
    %v516 = vld [vmem:[#allocation11 + $0x10] sm:$0xff]
    %v517 = vld [vmem:[#allocation11 + $0x18] sm:$0xff]
    %v518 = vld [vmem:[#allocation11 + $0x20] sm:$0xff]
    %v519 = vld [vmem:[#allocation11 + $0x28] sm:$0xff]
    %v520 = vld [vmem:[#allocation11 + $0x30] sm:$0xff]
    %v521 = vld [vmem:[#allocation11 + $0x38] sm:$0xff]
    %v522 = vld [vmem:[#allocation13] sm:$0x1]
    %v524 = vlaneseq
    %v525 = vshrl.u32 %v524, 7
    %v526 = vsub.s32 0, %v525
    %v527 = vrot.slane %v522, %v526
    %vm529 = vcmask 523264
    %v531 = vsel %vm529, %v513, 0
    %533 = vmatprep.subr.mxu0 0.0
    %534 = vmatpush1.msra.mxu0 %v514
    %535 = vmatprep.subr.mxu0 0.0
    %536 = vmatpush1.msra.mxu0 %v515
    %537 = vmatprep.subr.mxu0 0.0
    %538 = vmatpush1.msra.mxu0 %v516
    %539 = vmatprep.subr.mxu0 0.0
    %540 = vmatpush1.msra.mxu0 %v517
    %541 = vmatprep.subr.mxu0 0.0
    %542 = vmatpush1.msra.mxu0 %v518
    %543 = vmatprep.subr.mxu0 0.0
    %544 = vmatpush1.msra.mxu0 %v519
    %545 = vmatprep.subr.mxu0 0.0
    %546 = vmatpush1.msra.mxu0 %v520
    %547 = vmatprep.subr.mxu0 0.0
    %548 = vmatpush1.msra.mxu0 %v521
    %549 = vmatprep.subr.mxu0 0.0
    %550 = vmatpush1.msra.mxu0 0.0
    %551 = vmatprep.subr.mxu0 0.0
    %552 = vmatpush1.msra.mxu0 0.0
    %553 = vmatprep.subr.mxu0 0.0
    %554 = vmatpush1.msra.mxu0 0.0
    %555 = vmatprep.subr.mxu0 0.0
    %556 = vmatpush1.msra.mxu0 0.0
    %557 = vmatprep.subr.mxu0 0.0
    %558 = vmatpush1.msra.mxu0 0.0
    %559 = vmatprep.subr.mxu0 0.0
    %560 = vmatpush1.msra.mxu0 0.0
    %561 = vmatprep.subr.mxu0 0.0
    %562 = vmatpush1.msra.mxu0 0.0
    %563 = vmatprep.subr.mxu0 0.0
    %564 = vmatpush1.msra.mxu0 0.0
    %565 = vmatprep.subr.mxu0 0.0
    %566 = vmatpush1.msra.mxu0 0.0
    %567 = vmatprep.subr.mxu0 0.0
    %568 = vmatpush1.msra.mxu0 0.0
    %569 = vmatprep.subr.mxu0 0.0
    %570 = vmatpush1.msra.mxu0 0.0
    %571 = vmatprep.subr.mxu0 0.0
    %572 = vmatpush1.msra.mxu0 0.0
    %573 = vmatprep.subr.mxu0 0.0
    %574 = vmatpush1.msra.mxu0 0.0
    %575 = vmatprep.subr.mxu0 0.0
    %576 = vmatpush1.msra.mxu0 0.0
    %577 = vmatprep.subr.mxu0 0.0
    %578 = vmatpush1.msra.mxu0 0.0
    %579 = vmatprep.subr.mxu0 0.0
    %580 = vmatpush1.msra.mxu0 0.0
    %581 = vmatprep.subr.mxu0 0.0
    %582 = vmatpush1.msra.mxu0 0.0
    %583 = vmatprep.subr.mxu0 0.0
    %584 = vmatpush1.msra.mxu0 0.0
    %585 = vmatprep.subr.mxu0 0.0
    %586 = vmatpush1.msra.mxu0 0.0
    %587 = vmatprep.subr.mxu0 0.0
    %588 = vmatpush1.msra.mxu0 0.0
    %589 = vmatprep.subr.mxu0 0.0
    %590 = vmatpush1.msra.mxu0 0.0
    %591 = vmatprep.subr.mxu0 0.0
    %592 = vmatpush1.msra.mxu0 0.0
    %593 = vmatprep.subr.mxu0 0.0
    %594 = vmatpush1.msra.mxu0 0.0
    %595 = vmatprep.subr.mxu0 0.0
    %596 = vmatpush1.msra.mxu0 0.0
    %597 = vmatprep.mubr.f32.mxu0 0.0
    %598 = vmatmul.mubr.f32.gmra.mrb[0].mxu0 %v531
    %v599 = vpop.f32.mrb[0].mxu0
    %v600 = vadd.f32 %v527, %v599
    %v601 = vpop.f32.mrb[0].mxu0
    %602 = vdwg.mxu0
    %v603 = vld [vmem:[#allocation2] sm:$0xff]
    %v604 = vld [vmem:[#allocation2 + $0x8] sm:$0xff]
    %v605 = vld [vmem:[#allocation14] sm:$0xff]
    %v606 = vld [vmem:[#allocation14 + $0x8] sm:$0xff]
    %v607 = vld [vmem:[#allocation16] sm:$0x1]
    %v609 = vlaneseq
    %v610 = vshrl.u32 %v609, 7
    %v611 = vsub.s32 0, %v610
    %v612 = vrot.slane %v607, %v611
    %vm614 = vcmask 130048
    %v616 = vsel %vm614, %v603, 0
    %v619 = vsel %vm614, %v604, 0
    %621 = vmatprep.subr.mxu0 0.0
    %622 = vmatpush1.msra.mxu0 %v605
    %623 = vmatprep.subr.mxu0 0.0
    %624 = vmatpush1.msra.mxu0 %v606
    %625 = vmatprep.subr.mxu0 0.0
    %626 = vmatpush1.msra.mxu0 0.0
    %627 = vmatprep.subr.mxu0 0.0
    %628 = vmatpush1.msra.mxu0 0.0
    %629 = vmatprep.subr.mxu0 0.0
    %630 = vmatpush1.msra.mxu0 0.0
    %631 = vmatprep.subr.mxu0 0.0
    %632 = vmatpush1.msra.mxu0 0.0
    %633 = vmatprep.subr.mxu0 0.0
    %634 = vmatpush1.msra.mxu0 0.0
    %635 = vmatprep.subr.mxu0 0.0
    %636 = vmatpush1.msra.mxu0 0.0
    %637 = vmatprep.subr.mxu0 0.0
    %638 = vmatpush1.msra.mxu0 0.0
    %639 = vmatprep.subr.mxu0 0.0
    %640 = vmatpush1.msra.mxu0 0.0
    %641 = vmatprep.subr.mxu0 0.0
    %642 = vmatpush1.msra.mxu0 0.0
    %643 = vmatprep.subr.mxu0 0.0
    %644 = vmatpush1.msra.mxu0 0.0
    %645 = vmatprep.subr.mxu0 0.0
    %646 = vmatpush1.msra.mxu0 0.0
    %647 = vmatprep.subr.mxu0 0.0
    %648 = vmatpush1.msra.mxu0 0.0
    %649 = vmatprep.subr.mxu0 0.0
    %650 = vmatpush1.msra.mxu0 0.0
    %651 = vmatprep.subr.mxu0 0.0
    %652 = vmatpush1.msra.mxu0 0.0
    %653 = vmatprep.subr.mxu0 0.0
    %654 = vmatpush1.msra.mxu0 0.0
    %655 = vmatprep.subr.mxu0 0.0
    %656 = vmatpush1.msra.mxu0 0.0
    %657 = vmatprep.subr.mxu0 0.0
    %658 = vmatpush1.msra.mxu0 0.0
    %659 = vmatprep.subr.mxu0 0.0
    %660 = vmatpush1.msra.mxu0 0.0
    %661 = vmatprep.subr.mxu0 0.0
    %662 = vmatpush1.msra.mxu0 0.0
    %663 = vmatprep.subr.mxu0 0.0
    %664 = vmatpush1.msra.mxu0 0.0
    %665 = vmatprep.subr.mxu0 0.0
    %666 = vmatpush1.msra.mxu0 0.0
    %667 = vmatprep.subr.mxu0 0.0
    %668 = vmatpush1.msra.mxu0 0.0
    %669 = vmatprep.subr.mxu0 0.0
    %670 = vmatpush1.msra.mxu0 0.0
    %671 = vmatprep.subr.mxu0 0.0
    %672 = vmatpush1.msra.mxu0 0.0
    %673 = vmatprep.subr.mxu0 0.0
    %674 = vmatpush1.msra.mxu0 0.0
    %675 = vmatprep.subr.mxu0 0.0
    %676 = vmatpush1.msra.mxu0 0.0
    %677 = vmatprep.subr.mxu0 0.0
    %678 = vmatpush1.msra.mxu0 0.0
    %679 = vmatprep.subr.mxu0 0.0
    %680 = vmatpush1.msra.mxu0 0.0
    %681 = vmatprep.subr.mxu0 0.0
    %682 = vmatpush1.msra.mxu0 0.0
    %683 = vmatprep.subr.mxu0 0.0
    %684 = vmatpush1.msra.mxu0 0.0
    %685 = vmatprep.mubr.f32.mxu0 0.0
    %686 = vmatmul.mubr.f32.gmra.mrb[0].mxu0 %v616
    %v687 = vpop.f32.mrb[0].mxu0
    %v688 = vadd.f32 %v612, %v687
    %v689 = vpop.f32.mrb[0].mxu0
    %690 = vmatprep.mubr.f32.mxu0 0.0
    %691 = vmatmul.mubr.f32.gmra.mrb[0].mxu0 %v619
    %v692 = vpop.f32.mrb[0].mxu0
    %v693 = vadd.f32 %v612, %v692
    %v694 = vpop.f32.mrb[0].mxu0
    %695 = vdwg.mxu0
    %v696 = vld [vmem:[#allocation5] sm:$0xff]
    %v697 = vld [vmem:[#allocation5 + $0x8] sm:$0xff]
    %v698 = vld [vmem:[#allocation17] sm:$0xff]
    %v699 = vld [vmem:[#allocation17 + $0x8] sm:$0xff]
    %v700 = vld [vmem:[#allocation19] sm:$0x1]
    %v702 = vlaneseq
    %v703 = vshrl.u32 %v702, 7
    %v704 = vsub.s32 0, %v703
    %v705 = vrot.slane %v700, %v704
    %v708 = vsel %vm614, %v696, 0
    %v711 = vsel %vm614, %v697, 0
    %713 = vmatprep.subr.mxu0 0.0
    %714 = vmatpush1.msra.mxu0 %v698
    %715 = vmatprep.subr.mxu0 0.0
    %716 = vmatpush1.msra.mxu0 %v699
    %717 = vmatprep.subr.mxu0 0.0
    %718 = vmatpush1.msra.mxu0 0.0
    %719 = vmatprep.subr.mxu0 0.0
    %720 = vmatpush1.msra.mxu0 0.0
    %721 = vmatprep.subr.mxu0 0.0
    %722 = vmatpush1.msra.mxu0 0.0
    %723 = vmatprep.subr.mxu0 0.0
    %724 = vmatpush1.msra.mxu0 0.0
    %725 = vmatprep.subr.mxu0 0.0
    %726 = vmatpush1.msra.mxu0 0.0
    %727 = vmatprep.subr.mxu0 0.0
    %728 = vmatpush1.msra.mxu0 0.0
    %729 = vmatprep.subr.mxu0 0.0
    %730 = vmatpush1.msra.mxu0 0.0
    %731 = vmatprep.subr.mxu0 0.0
    %732 = vmatpush1.msra.mxu0 0.0
    %733 = vmatprep.subr.mxu0 0.0
    %734 = vmatpush1.msra.mxu0 0.0
    %735 = vmatprep.subr.mxu0 0.0
    %736 = vmatpush1.msra.mxu0 0.0
    %737 = vmatprep.subr.mxu0 0.0
    %738 = vmatpush1.msra.mxu0 0.0
    %739 = vmatprep.subr.mxu0 0.0
    %740 = vmatpush1.msra.mxu0 0.0
    %741 = vmatprep.subr.mxu0 0.0
    %742 = vmatpush1.msra.mxu0 0.0
    %743 = vmatprep.subr.mxu0 0.0
    %744 = vmatpush1.msra.mxu0 0.0
    %745 = vmatprep.subr.mxu0 0.0
    %746 = vmatpush1.msra.mxu0 0.0
    %747 = vmatprep.subr.mxu0 0.0
    %748 = vmatpush1.msra.mxu0 0.0
    %749 = vmatprep.subr.mxu0 0.0
    %750 = vmatpush1.msra.mxu0 0.0
    %751 = vmatprep.subr.mxu0 0.0
    %752 = vmatpush1.msra.mxu0 0.0
    %753 = vmatprep.subr.mxu0 0.0
    %754 = vmatpush1.msra.mxu0 0.0
    %755 = vmatprep.subr.mxu0 0.0
    %756 = vmatpush1.msra.mxu0 0.0
    %757 = vmatprep.subr.mxu0 0.0
    %758 = vmatpush1.msra.mxu0 0.0
    %759 = vmatprep.subr.mxu0 0.0
    %760 = vmatpush1.msra.mxu0 0.0
    %761 = vmatprep.subr.mxu0 0.0
    %762 = vmatpush1.msra.mxu0 0.0
    %763 = vmatprep.subr.mxu0 0.0
    %764 = vmatpush1.msra.mxu0 0.0
    %765 = vmatprep.subr.mxu0 0.0
    %766 = vmatpush1.msra.mxu0 0.0
    %767 = vmatprep.subr.mxu0 0.0
    %768 = vmatpush1.msra.mxu0 0.0
    %769 = vmatprep.subr.mxu0 0.0
    %770 = vmatpush1.msra.mxu0 0.0
    %771 = vmatprep.subr.mxu0 0.0
    %772 = vmatpush1.msra.mxu0 0.0
    %773 = vmatprep.subr.mxu0 0.0
    %774 = vmatpush1.msra.mxu0 0.0
    %775 = vmatprep.subr.mxu0 0.0
    %776 = vmatpush1.msra.mxu0 0.0
    %777 = vmatprep.mubr.f32.mxu0 0.0
    %778 = vmatmul.mubr.f32.gmra.mrb[0].mxu0 %v708
    %v779 = vpop.f32.mrb[0].mxu0
    %v780 = vadd.f32 %v705, %v779
    %v781 = vpop.f32.mrb[0].mxu0
    %782 = vmatprep.mubr.f32.mxu0 0.0
    %783 = vmatmul.mubr.f32.gmra.mrb[0].mxu0 %v711
    %v784 = vpop.f32.mrb[0].mxu0
    %v785 = vadd.f32 %v705, %v784
    %v786 = vpop.f32.mrb[0].mxu0
    %787 = vdwg.mxu0
    %v788 = vld [vmem:[#allocation7] sm:$0xff]
    %v789 = vadd.f32 %v688, %v788
    %v790 = vadd.f32 %v693, %v788
    %v791 = vld [vmem:[%s9] sm:$0x3]
    %v792 = vsub.f32 1.0, %v791
    %v793 = vmul.f32 %v792, -3.4028235e+38
    %v796 = vunpack.c.l.s4 1966171168
    %v797 = vunpack.c.0.s8 %v796
    %v798 = vlaneseq
    %v799 = vshrl.u32 %v798, 7
    %v800 = vsub.s32 %v797, %v799
    %v801 = vrot.slane %v793, %v800
    %v802 = vcombine.high %v801, %v801
    %v804 = vunpack.c.l.s4 1966171168
    %v805 = vunpack.c.0.s8 %v804
    %v806 = vlaneseq
    %v807 = vshrl.u32 %v806, 7
    %v808 = vsub.s32 %v805, %v807
    %v809 = vrot.slane %v801, %v808
    %v811 = vunpack.c.l.s4 1966171168
    %v812 = vunpack.c.0.s8 %v811
    %v813 = vlaneseq
    %v814 = vshrl.u32 %v813, 7
    %v815 = vsub.s32 %v812, %v814
    %v816 = vrot.slane %v802, %v815
    %v817 = vld [vmem:[#allocation20] sm:$0xff]
    %v818 = vld [vmem:[#allocation20 + $0x8] sm:$0xff]
    %v819 = vld [vmem:[#allocation20 + $0x10] sm:$0xff]
    %v820 = vld [vmem:[#allocation20 + $0x18] sm:$0xff]
    %v821 = vld [vmem:[#allocation22] sm:$0x1]
    %v823 = vlaneseq
    %v824 = vshrl.u32 %v823, 7
    %v825 = vsub.s32 0, %v824
    %v826 = vrot.slane %v821, %v825
    %v829 = vsel %vm433, %v600, 0
    %831 = vmatprep.subr.mxu0 0.0
    %832 = vmatpush1.msra.mxu0 %v817
    %833 = vmatprep.subr.mxu0 0.0
    %834 = vmatpush1.msra.mxu0 %v818
    %835 = vmatprep.subr.mxu0 0.0
    %836 = vmatpush1.msra.mxu0 %v819
    %837 = vmatprep.subr.mxu0 0.0
    %838 = vmatpush1.msra.mxu0 %v820
    %839 = vmatprep.subr.mxu0 0.0
    %840 = vmatpush1.msra.mxu0 0.0
    %841 = vmatprep.subr.mxu0 0.0
    %842 = vmatpush1.msra.mxu0 0.0
    %843 = vmatprep.subr.mxu0 0.0
    %844 = vmatpush1.msra.mxu0 0.0
    %845 = vmatprep.subr.mxu0 0.0
    %846 = vmatpush1.msra.mxu0 0.0
    %847 = vmatprep.subr.mxu0 0.0
    %848 = vmatpush1.msra.mxu0 0.0
    %849 = vmatprep.subr.mxu0 0.0
    %850 = vmatpush1.msra.mxu0 0.0
    %851 = vmatprep.subr.mxu0 0.0
    %852 = vmatpush1.msra.mxu0 0.0
    %853 = vmatprep.subr.mxu0 0.0
    %854 = vmatpush1.msra.mxu0 0.0
    %855 = vmatprep.subr.mxu0 0.0
    %856 = vmatpush1.msra.mxu0 0.0
    %857 = vmatprep.subr.mxu0 0.0
    %858 = vmatpush1.msra.mxu0 0.0
    %859 = vmatprep.subr.mxu0 0.0
    %860 = vmatpush1.msra.mxu0 0.0
    %861 = vmatprep.subr.mxu0 0.0
    %862 = vmatpush1.msra.mxu0 0.0
    %863 = vmatprep.subr.mxu0 0.0
    %864 = vmatpush1.msra.mxu0 0.0
    %865 = vmatprep.subr.mxu0 0.0
    %866 = vmatpush1.msra.mxu0 0.0
    %867 = vmatprep.subr.mxu0 0.0
    %868 = vmatpush1.msra.mxu0 0.0
    %869 = vmatprep.subr.mxu0 0.0
    %870 = vmatpush1.msra.mxu0 0.0
    %871 = vmatprep.subr.mxu0 0.0
    %872 = vmatpush1.msra.mxu0 0.0
    %873 = vmatprep.subr.mxu0 0.0
    %874 = vmatpush1.msra.mxu0 0.0
    %875 = vmatprep.subr.mxu0 0.0
    %876 = vmatpush1.msra.mxu0 0.0
    %877 = vmatprep.subr.mxu0 0.0
    %878 = vmatpush1.msra.mxu0 0.0
    %879 = vmatprep.subr.mxu0 0.0
    %880 = vmatpush1.msra.mxu0 0.0
    %881 = vmatprep.subr.mxu0 0.0
    %882 = vmatpush1.msra.mxu0 0.0
    %883 = vmatprep.subr.mxu0 0.0
    %884 = vmatpush1.msra.mxu0 0.0
    %885 = vmatprep.subr.mxu0 0.0
    %886 = vmatpush1.msra.mxu0 0.0
    %887 = vmatprep.subr.mxu0 0.0
    %888 = vmatpush1.msra.mxu0 0.0
    %889 = vmatprep.subr.mxu0 0.0
    %890 = vmatpush1.msra.mxu0 0.0
    %891 = vmatprep.subr.mxu0 0.0
    %892 = vmatpush1.msra.mxu0 0.0
    %893 = vmatprep.subr.mxu0 0.0
    %894 = vmatpush1.msra.mxu0 0.0
    %895 = vmatprep.mubr.f32.mxu0 0.0
    %896 = vmatmul.mubr.f32.gmra.mrb[0].mxu0 %v829
    %v897 = vpop.f32.mrb[0].mxu0
    %v898 = vadd.f32 %v826, %v897
    %v899 = vpop.f32.mrb[0].mxu0
    %900 = vdwg.mxu0
    %v903 = vunpack.c.l.s4 1966171168
    %v904 = vunpack.c.0.s8 %v903
    %v905 = vlaneseq
    %v906 = vshrl.u32 %v905, 7
    %v907 = vsub.s32 %v904, %v906
    %v908 = vrot.slane %v898, %v907
    %v909 = vcombine.high %v908, %v908
    %v911 = vunpack.c.l.s4 1966171168
    %v912 = vunpack.c.0.s8 %v911
    %v913 = vlaneseq
    %v914 = vshrl.u32 %v913, 7
    %v915 = vsub.s32 %v912, %v914
    %v916 = vrot.slane %v908, %v915
    %v918 = vunpack.c.l.s4 1966171168
    %v919 = vunpack.c.0.s8 %v918
    %v920 = vlaneseq
    %v921 = vshrl.u32 %v920, 7
    %v922 = vsub.s32 %v919, %v921
    %v923 = vrot.slane %v909, %v922
    %v924 = vlaneseq
    %v925 = vshrl.u32 %v924, 7
    %v926 = vsub.s32 0, %v925
    %v927 = vrot.slane %v916, %v926
    %v928 = vlaneseq
    %v929 = vshrl.u32 %v928, 7
    %v930 = vsub.s32 0, %v929
    %v931 = vrot.slane %v923, %v930
    %v934 = vadd.f32 %v789, %v927
    %v935 = vadd.f32 %v790, %v931
    %v936 = vld [vmem:[#allocation23] sm:$0xff]
    %v937 = vld [vmem:[#allocation23 + $0x8] sm:$0xff]
    %v938 = vld [vmem:[#allocation23 + $0x10] sm:$0xff]
    %v939 = vld [vmem:[#allocation23 + $0x18] sm:$0xff]
    %v941 = vsel %vm433, %v780, 0
    %v944 = vsel %vm433, %v785, 0
    %946 = vmatprep.subr.mxu0 0.0
    %947 = vmatpush1.msra.mxu0 %v936
    %948 = vmatprep.subr.mxu0 0.0
    %949 = vmatpush1.msra.mxu0 %v937
    %950 = vmatprep.subr.mxu0 0.0
    %951 = vmatpush1.msra.mxu0 %v938
    %952 = vmatprep.subr.mxu0 0.0
    %953 = vmatpush1.msra.mxu0 %v939
    %954 = vmatprep.subr.mxu0 0.0
    %955 = vmatpush1.msra.mxu0 0.0
    %956 = vmatprep.subr.mxu0 0.0
    %957 = vmatpush1.msra.mxu0 0.0
    %958 = vmatprep.subr.mxu0 0.0
    %959 = vmatpush1.msra.mxu0 0.0
    %960 = vmatprep.subr.mxu0 0.0
    %961 = vmatpush1.msra.mxu0 0.0
    %962 = vmatprep.subr.mxu0 0.0
    %963 = vmatpush1.msra.mxu0 0.0
    %964 = vmatprep.subr.mxu0 0.0
    %965 = vmatpush1.msra.mxu0 0.0
    %966 = vmatprep.subr.mxu0 0.0
    %967 = vmatpush1.msra.mxu0 0.0
    %968 = vmatprep.subr.mxu0 0.0
    %969 = vmatpush1.msra.mxu0 0.0
    %970 = vmatprep.subr.mxu0 0.0
    %971 = vmatpush1.msra.mxu0 0.0
    %972 = vmatprep.subr.mxu0 0.0
    %973 = vmatpush1.msra.mxu0 0.0
    %974 = vmatprep.subr.mxu0 0.0
    %975 = vmatpush1.msra.mxu0 0.0
    %976 = vmatprep.subr.mxu0 0.0
    %977 = vmatpush1.msra.mxu0 0.0
    %978 = vmatprep.subr.mxu0 0.0
    %979 = vmatpush1.msra.mxu0 0.0
    %980 = vmatprep.subr.mxu0 0.0
    %981 = vmatpush1.msra.mxu0 0.0
    %982 = vmatprep.subr.mxu0 0.0
    %983 = vmatpush1.msra.mxu0 0.0
    %984 = vmatprep.subr.mxu0 0.0
    %985 = vmatpush1.msra.mxu0 0.0
    %986 = vmatprep.subr.mxu0 0.0
    %987 = vmatpush1.msra.mxu0 0.0
    %988 = vmatprep.subr.mxu0 0.0
    %989 = vmatpush1.msra.mxu0 0.0
    %990 = vmatprep.subr.mxu0 0.0
    %991 = vmatpush1.msra.mxu0 0.0
    %992 = vmatprep.subr.mxu0 0.0
    %993 = vmatpush1.msra.mxu0 0.0
    %994 = vmatprep.subr.mxu0 0.0
    %995 = vmatpush1.msra.mxu0 0.0
    %996 = vmatprep.subr.mxu0 0.0
    %997 = vmatpush1.msra.mxu0 0.0
    %998 = vmatprep.subr.mxu0 0.0
    %999 = vmatpush1.msra.mxu0 0.0
    %1000 = vmatprep.subr.mxu0 0.0
    %1001 = vmatpush1.msra.mxu0 0.0
    %1002 = vmatprep.subr.mxu0 0.0
    %1003 = vmatpush1.msra.mxu0 0.0
    %1004 = vmatprep.subr.mxu0 0.0
    %1005 = vmatpush1.msra.mxu0 0.0
    %1006 = vmatprep.subr.mxu0 0.0
    %1007 = vmatpush1.msra.mxu0 0.0
    %1008 = vmatprep.subr.mxu0 0.0
    %1009 = vmatpush1.msra.mxu0 0.0
    %1010 = vmatprep.mubr.f32.mxu0 0.0
    %1011 = vmatmul.mubr.f32.gmra.mrb[0].mxu0 %v941
    %v1012 = vpop.f32.mrb[0].mxu0
    %v1013 = vadd.f32 0.0, %v1012
    %v1014 = vpop.f32.mrb[0].mxu0
    %1015 = vmatprep.mubr.f32.mxu0 0.0
    %1016 = vmatmul.mubr.f32.gmra.mrb[0].mxu0 %v944
    %v1017 = vpop.f32.mrb[0].mxu0
    %v1018 = vadd.f32 0.0, %v1017
    %v1019 = vpop.f32.mrb[0].mxu0
    %1020 = vdwg.mxu0
    %v1021 = vadd.f32 %v934, %v1013
    %v1022 = vadd.f32 %v935, %v1018
    %v1023 = vld [vmem:[#allocation25] sm:$0x1]
    %v1025 = vlaneseq
    %v1026 = vshrl.u32 %v1025, 7
    %v1027 = vsub.s32 0, %v1026
    %v1028 = vrot.slane %v1023, %v1027
    %v1030 = vadd.f32 %v1021, %v1028
    %v1031 = vadd.f32 %v1022, %v1028
    %v1032 = vld [vmem:[#allocation26] sm:$0xff]
    %v1033 = vld [vmem:[#allocation26 + $0x8] sm:$0xff]
    %v1034 = vld [vmem:[#allocation26 + $0x10] sm:$0xff]
    %v1035 = vld [vmem:[#allocation26 + $0x18] sm:$0xff]
    %v1036 = vld [vmem:[#allocation28] sm:$0x1]
    %v1038 = vlaneseq
    %v1039 = vshrl.u32 %v1038, 7
    %v1040 = vsub.s32 0, %v1039
    %v1041 = vrot.slane %v1036, %v1040
    %v1044 = vsel %vm433, %v1030, 0
    %v1047 = vsel %vm433, %v1031, 0
    %1049 = vmatprep.subr.mxu0 0.0
    %1050 = vmatpush1.msra.mxu0 %v1032
    %1051 = vmatprep.subr.mxu0 0.0
    %1052 = vmatpush1.msra.mxu0 %v1033
    %1053 = vmatprep.subr.mxu0 0.0
    %1054 = vmatpush1.msra.mxu0 %v1034
    %1055 = vmatprep.subr.mxu0 0.0
    %1056 = vmatpush1.msra.mxu0 %v1035
    %1057 = vmatprep.subr.mxu0 0.0
    %1058 = vmatpush1.msra.mxu0 0.0
    %1059 = vmatprep.subr.mxu0 0.0
    %1060 = vmatpush1.msra.mxu0 0.0
    %1061 = vmatprep.subr.mxu0 0.0
    %1062 = vmatpush1.msra.mxu0 0.0
    %1063 = vmatprep.subr.mxu0 0.0
    %1064 = vmatpush1.msra.mxu0 0.0
    %1065 = vmatprep.subr.mxu0 0.0
    %1066 = vmatpush1.msra.mxu0 0.0
    %1067 = vmatprep.subr.mxu0 0.0
    %1068 = vmatpush1.msra.mxu0 0.0
    %1069 = vmatprep.subr.mxu0 0.0
    %1070 = vmatpush1.msra.mxu0 0.0
    %1071 = vmatprep.subr.mxu0 0.0
    %1072 = vmatpush1.msra.mxu0 0.0
    %1073 = vmatprep.subr.mxu0 0.0
    %1074 = vmatpush1.msra.mxu0 0.0
    %1075 = vmatprep.subr.mxu0 0.0
    %1076 = vmatpush1.msra.mxu0 0.0
    %1077 = vmatprep.subr.mxu0 0.0
    %1078 = vmatpush1.msra.mxu0 0.0
    %1079 = vmatprep.subr.mxu0 0.0
    %1080 = vmatpush1.msra.mxu0 0.0
    %1081 = vmatprep.subr.mxu0 0.0
    %1082 = vmatpush1.msra.mxu0 0.0
    %1083 = vmatprep.subr.mxu0 0.0
    %1084 = vmatpush1.msra.mxu0 0.0
    %1085 = vmatprep.subr.mxu0 0.0
    %1086 = vmatpush1.msra.mxu0 0.0
    %1087 = vmatprep.subr.mxu0 0.0
    %1088 = vmatpush1.msra.mxu0 0.0
    %1089 = vmatprep.subr.mxu0 0.0
    %1090 = vmatpush1.msra.mxu0 0.0
    %1091 = vmatprep.subr.mxu0 0.0
    %1092 = vmatpush1.msra.mxu0 0.0
    %1093 = vmatprep.subr.mxu0 0.0
    %1094 = vmatpush1.msra.mxu0 0.0
    %1095 = vmatprep.subr.mxu0 0.0
    %1096 = vmatpush1.msra.mxu0 0.0
    %1097 = vmatprep.subr.mxu0 0.0
    %1098 = vmatpush1.msra.mxu0 0.0
    %1099 = vmatprep.subr.mxu0 0.0
    %1100 = vmatpush1.msra.mxu0 0.0
    %1101 = vmatprep.subr.mxu0 0.0
    %1102 = vmatpush1.msra.mxu0 0.0
    %1103 = vmatprep.subr.mxu0 0.0
    %1104 = vmatpush1.msra.mxu0 0.0
    %1105 = vmatprep.subr.mxu0 0.0
    %1106 = vmatpush1.msra.mxu0 0.0
    %1107 = vmatprep.subr.mxu0 0.0
    %1108 = vmatpush1.msra.mxu0 0.0
    %1109 = vmatprep.subr.mxu0 0.0
    %1110 = vmatpush1.msra.mxu0 0.0
    %1111 = vmatprep.subr.mxu0 0.0
    %1112 = vmatpush1.msra.mxu0 0.0
    %1113 = vmatprep.mubr.f32.mxu0 0.0
    %1114 = vmatmul.mubr.f32.gmra.mrb[0].mxu0 %v1044
    %v1115 = vpop.f32.mrb[0].mxu0
    %v1116 = vadd.f32 %v1041, %v1115
    %v1117 = vpop.f32.mrb[0].mxu0
    %1118 = vmatprep.mubr.f32.mxu0 0.0
    %1119 = vmatmul.mubr.f32.gmra.mrb[0].mxu0 %v1047
    %v1120 = vpop.f32.mrb[0].mxu0
    %v1121 = vadd.f32 %v1041, %v1120
    %v1122 = vpop.f32.mrb[0].mxu0
    %1123 = vdwg.mxu0
    %v1124 = vld [vmem:[#allocation29] sm:$0xff]
    %v1125 = vld [vmem:[#allocation29 + $0x8] sm:$0xff]
    %v1126 = vld [vmem:[#allocation29 + $0x10] sm:$0xff]
    %v1127 = vld [vmem:[#allocation29 + $0x18] sm:$0xff]
    %1129 = vrot.lane.b32.xlu0 %v1116, 96
    %v1130 = vpop.permute.xlu0 %1129
    %vm1131 = vcmask 64512
    %v1132 = vsel %vm1131, %v1116, 0
    %v1134 = vsel %vm1131, %v1130, 0
    %1136 = vmatprep.subr.mxu0 0.0
    %1137 = vmatpush1.xpose.msra.mxu0 %v1134
    %1138 = vmatprep.subr.mxu0 0.0
    %1139 = vmatpush1.xpose.msra.mxu0 0.0
    %1140 = vmatprep.subr.mxu0 0.0
    %1141 = vmatpush1.xpose.msra.mxu0 0.0
    %1142 = vmatprep.subr.mxu0 0.0
    %1143 = vmatpush1.xpose.msra.mxu0 0.0
    %1144 = vmatprep.subr.mxu0 0.0
    %1145 = vmatpush1.xpose.msra.mxu0 0.0
    %1146 = vmatprep.subr.mxu0 0.0
    %1147 = vmatpush1.xpose.msra.mxu0 0.0
    %1148 = vmatprep.subr.mxu0 0.0
    %1149 = vmatpush1.xpose.msra.mxu0 0.0
    %1150 = vmatprep.subr.mxu0 0.0
    %1151 = vmatpush1.xpose.msra.mxu0 0.0
    %1152 = vmatprep.subr.mxu0 0.0
    %1153 = vmatpush1.xpose.msra.mxu0 0.0
    %1154 = vmatprep.subr.mxu0 0.0
    %1155 = vmatpush1.xpose.msra.mxu0 0.0
    %1156 = vmatprep.subr.mxu0 0.0
    %1157 = vmatpush1.xpose.msra.mxu0 0.0
    %1158 = vmatprep.subr.mxu0 0.0
    %1159 = vmatpush1.xpose.msra.mxu0 0.0
    %1160 = vmatprep.subr.mxu0 0.0
    %1161 = vmatpush1.xpose.msra.mxu0 0.0
    %1162 = vmatprep.subr.mxu0 0.0
    %1163 = vmatpush1.xpose.msra.mxu0 0.0
    %1164 = vmatprep.subr.mxu0 0.0
    %1165 = vmatpush1.xpose.msra.mxu0 0.0
    %1166 = vmatprep.subr.mxu0 0.0
    %1167 = vmatpush1.xpose.msra.mxu0 0.0
    %1168 = vmatprep.subr.mxu0 0.0
    %1169 = vmatpush1.xpose.msra.mxu0 0.0
    %1170 = vmatprep.subr.mxu0 0.0
    %1171 = vmatpush1.xpose.msra.mxu0 0.0
    %1172 = vmatprep.subr.mxu0 0.0
    %1173 = vmatpush1.xpose.msra.mxu0 0.0
    %1174 = vmatprep.subr.mxu0 0.0
    %1175 = vmatpush1.xpose.msra.mxu0 0.0
    %1176 = vmatprep.subr.mxu0 0.0
    %1177 = vmatpush1.xpose.msra.mxu0 0.0
    %1178 = vmatprep.subr.mxu0 0.0
    %1179 = vmatpush1.xpose.msra.mxu0 0.0
    %1180 = vmatprep.subr.mxu0 0.0
    %1181 = vmatpush1.xpose.msra.mxu0 0.0
    %1182 = vmatprep.subr.mxu0 0.0
    %1183 = vmatpush1.xpose.msra.mxu0 0.0
    %1184 = vmatprep.subr.mxu0 0.0
    %1185 = vmatpush1.xpose.msra.mxu0 0.0
    %1186 = vmatprep.subr.mxu0 0.0
    %1187 = vmatpush1.xpose.msra.mxu0 0.0
    %1188 = vmatprep.subr.mxu0 0.0
    %1189 = vmatpush1.xpose.msra.mxu0 0.0
    %1190 = vmatprep.subr.mxu0 0.0
    %1191 = vmatpush1.xpose.msra.mxu0 0.0
    %1192 = vmatprep.subr.mxu0 0.0
    %1193 = vmatpush1.xpose.msra.mxu0 0.0
    %1194 = vmatprep.subr.mxu0 0.0
    %1195 = vmatpush1.xpose.msra.mxu0 0.0
    %1196 = vmatprep.subr.mxu0 0.0
    %1197 = vmatpush1.xpose.msra.mxu0 0.0
    %1198 = vmatprep.subr.mxu0 0.0
    %1199 = vmatpush1.xpose.msra.mxu0 0.0
    %1200 = vmatprep.mubr.f32.mxu0 0.0
    %1201 = vmatmul.mubr.f32.gmra.mrb[0].mxu0 %v1132
    %v1202 = vpop.f32.mrb[0].mxu0
    %v1203 = vadd.f32 0.0, %v1202
    %v1204 = vpop.f32.mrb[0].mxu0
    %1205 = vdwg.mxu0
    %1207 = vrot.lane.b32.xlu0 %v1121, 96
    %v1208 = vpop.permute.xlu0 %1207
    %v1209 = vsel %vm1131, %v1121, 0
    %v1211 = vsel %vm1131, %v1208, 0
    %1213 = vmatprep.subr.mxu0 0.0
    %1214 = vmatpush1.xpose.msra.mxu0 %v1211
    %1215 = vmatprep.subr.mxu0 0.0
    %1216 = vmatpush1.xpose.msra.mxu0 0.0
    %1217 = vmatprep.subr.mxu0 0.0
    %1218 = vmatpush1.xpose.msra.mxu0 0.0
    %1219 = vmatprep.subr.mxu0 0.0
    %1220 = vmatpush1.xpose.msra.mxu0 0.0
    %1221 = vmatprep.subr.mxu0 0.0
    %1222 = vmatpush1.xpose.msra.mxu0 0.0
    %1223 = vmatprep.subr.mxu0 0.0
    %1224 = vmatpush1.xpose.msra.mxu0 0.0
    %1225 = vmatprep.subr.mxu0 0.0
    %1226 = vmatpush1.xpose.msra.mxu0 0.0
    %1227 = vmatprep.subr.mxu0 0.0
    %1228 = vmatpush1.xpose.msra.mxu0 0.0
    %1229 = vmatprep.subr.mxu0 0.0
    %1230 = vmatpush1.xpose.msra.mxu0 0.0
    %1231 = vmatprep.subr.mxu0 0.0
    %1232 = vmatpush1.xpose.msra.mxu0 0.0
    %1233 = vmatprep.subr.mxu0 0.0
    %1234 = vmatpush1.xpose.msra.mxu0 0.0
    %1235 = vmatprep.subr.mxu0 0.0
    %1236 = vmatpush1.xpose.msra.mxu0 0.0
    %1237 = vmatprep.subr.mxu0 0.0
    %1238 = vmatpush1.xpose.msra.mxu0 0.0
    %1239 = vmatprep.subr.mxu0 0.0
    %1240 = vmatpush1.xpose.msra.mxu0 0.0
    %1241 = vmatprep.subr.mxu0 0.0
    %1242 = vmatpush1.xpose.msra.mxu0 0.0
    %1243 = vmatprep.subr.mxu0 0.0
    %1244 = vmatpush1.xpose.msra.mxu0 0.0
    %1245 = vmatprep.subr.mxu0 0.0
    %1246 = vmatpush1.xpose.msra.mxu0 0.0
    %1247 = vmatprep.subr.mxu0 0.0
    %1248 = vmatpush1.xpose.msra.mxu0 0.0
    %1249 = vmatprep.subr.mxu0 0.0
    %1250 = vmatpush1.xpose.msra.mxu0 0.0
    %1251 = vmatprep.subr.mxu0 0.0
    %1252 = vmatpush1.xpose.msra.mxu0 0.0
    %1253 = vmatprep.subr.mxu0 0.0
    %1254 = vmatpush1.xpose.msra.mxu0 0.0
    %1255 = vmatprep.subr.mxu0 0.0
    %1256 = vmatpush1.xpose.msra.mxu0 0.0
    %1257 = vmatprep.subr.mxu0 0.0
    %1258 = vmatpush1.xpose.msra.mxu0 0.0
    %1259 = vmatprep.subr.mxu0 0.0
    %1260 = vmatpush1.xpose.msra.mxu0 0.0
    %1261 = vmatprep.subr.mxu0 0.0
    %1262 = vmatpush1.xpose.msra.mxu0 0.0
    %1263 = vmatprep.subr.mxu0 0.0
    %1264 = vmatpush1.xpose.msra.mxu0 0.0
    %1265 = vmatprep.subr.mxu0 0.0
    %1266 = vmatpush1.xpose.msra.mxu0 0.0
    %1267 = vmatprep.subr.mxu0 0.0
    %1268 = vmatpush1.xpose.msra.mxu0 0.0
    %1269 = vmatprep.subr.mxu0 0.0
    %1270 = vmatpush1.xpose.msra.mxu0 0.0
    %1271 = vmatprep.subr.mxu0 0.0
    %1272 = vmatpush1.xpose.msra.mxu0 0.0
    %1273 = vmatprep.subr.mxu0 0.0
    %1274 = vmatpush1.xpose.msra.mxu0 0.0
    %1275 = vmatprep.subr.mxu0 0.0
    %1276 = vmatpush1.xpose.msra.mxu0 0.0
    %1277 = vmatprep.mubr.f32.mxu0 0.0
    %1278 = vmatmul.mubr.f32.gmra.mrb[0].mxu0 %v1209
    %v1279 = vpop.f32.mrb[0].mxu0
    %v1280 = vadd.f32 0.0, %v1279
    %v1281 = vpop.f32.mrb[0].mxu0
    %1282 = vdwg.mxu0
    %v1283 = vmul.f32 %v1203, 0.35355338
    %v1284 = vmul.f32 %v1280, 0.35355338
    %v1285 = vlaneseq
    %v1286 = vshrl.u32 %v1285, 7
    %v1287 = vsub.s32 0, %v1286
    %v1288 = vrot.slane %v809, %v1287
    %v1289 = vlaneseq
    %v1290 = vshrl.u32 %v1289, 7
    %v1291 = vsub.s32 0, %v1290
    %v1292 = vrot.slane %v816, %v1291
    %v1295 = vadd.f32 %v1283, %v1288
    %v1296 = vadd.f32 %v1284, %v1292
    %v1297 = vsel %vm1131, %v1295, -inf
    %1298 = vmax.xlane.f32.xlu0 %v1297
    %v1299 = vpop.xlane.xlu0 %1298
    %v1300 = vsel %vm1131, %v1296, -inf
    %1301 = vmax.xlane.f32.xlu0 %v1300
    %v1302 = vpop.xlane.xlu0 %1301
    %v1303 = vsub.f32 %v1295, %v1299
    %v1304 = vsub.f32 %v1296, %v1302
    %v1305 = vmul.f32 %v1303, 1.442695
    %v1306 = vpow.pop %v1305
    %v1307 = vmul.f32 %v1304, 1.442695
    %v1308 = vpow.pop %v1307
    %v1309 = vsel %vm1131, %v1306, 0.0
    %1310 = vadd.xlane.f32.xlu0 %v1309
    %v1311 = vpop.xlane.xlu0 %1310
    %v1312 = vsel %vm1131, %v1308, 0.0
    %1313 = vadd.xlane.f32.xlu0 %v1312
    %v1314 = vpop.xlane.xlu0 %1313
    %v1315 = vrcp.pop %v1311
    %v1316 = vmul.f32 %v1306, %v1315
    %v1317 = vrcp.pop %v1314
    %v1318 = vmul.f32 %v1308, %v1317
    %1319 = vrot.lane.b32.xlu0 %v1116, 64
    %v1320 = vpop.permute.xlu0 %1319
    %v1323 = vsel %vm1131, %v1316, 0
    %1325 = vmatprep.subr.mxu0 0.0
    %1326 = vmatpush1.msra.mxu0 %v1320
    %1327 = vmatprep.subr.mxu0 0.0
    %1328 = vmatpush1.msra.mxu0 0.0
    %1329 = vmatprep.subr.mxu0 0.0
    %1330 = vmatpush1.msra.mxu0 0.0
    %1331 = vmatprep.subr.mxu0 0.0
    %1332 = vmatpush1.msra.mxu0 0.0
    %1333 = vmatprep.subr.mxu0 0.0
    %1334 = vmatpush1.msra.mxu0 0.0
    %1335 = vmatprep.subr.mxu0 0.0
    %1336 = vmatpush1.msra.mxu0 0.0
    %1337 = vmatprep.subr.mxu0 0.0
    %1338 = vmatpush1.msra.mxu0 0.0
    %1339 = vmatprep.subr.mxu0 0.0
    %1340 = vmatpush1.msra.mxu0 0.0
    %1341 = vmatprep.subr.mxu0 0.0
    %1342 = vmatpush1.msra.mxu0 0.0
    %1343 = vmatprep.subr.mxu0 0.0
    %1344 = vmatpush1.msra.mxu0 0.0
    %1345 = vmatprep.subr.mxu0 0.0
    %1346 = vmatpush1.msra.mxu0 0.0
    %1347 = vmatprep.subr.mxu0 0.0
    %1348 = vmatpush1.msra.mxu0 0.0
    %1349 = vmatprep.subr.mxu0 0.0
    %1350 = vmatpush1.msra.mxu0 0.0
    %1351 = vmatprep.subr.mxu0 0.0
    %1352 = vmatpush1.msra.mxu0 0.0
    %1353 = vmatprep.subr.mxu0 0.0
    %1354 = vmatpush1.msra.mxu0 0.0
    %1355 = vmatprep.subr.mxu0 0.0
    %1356 = vmatpush1.msra.mxu0 0.0
    %1357 = vmatprep.subr.mxu0 0.0
    %1358 = vmatpush1.msra.mxu0 0.0
    %1359 = vmatprep.subr.mxu0 0.0
    %1360 = vmatpush1.msra.mxu0 0.0
    %1361 = vmatprep.subr.mxu0 0.0
    %1362 = vmatpush1.msra.mxu0 0.0
    %1363 = vmatprep.subr.mxu0 0.0
    %1364 = vmatpush1.msra.mxu0 0.0
    %1365 = vmatprep.subr.mxu0 0.0
    %1366 = vmatpush1.msra.mxu0 0.0
    %1367 = vmatprep.subr.mxu0 0.0
    %1368 = vmatpush1.msra.mxu0 0.0
    %1369 = vmatprep.subr.mxu0 0.0
    %1370 = vmatpush1.msra.mxu0 0.0
    %1371 = vmatprep.subr.mxu0 0.0
    %1372 = vmatpush1.msra.mxu0 0.0
    %1373 = vmatprep.subr.mxu0 0.0
    %1374 = vmatpush1.msra.mxu0 0.0
    %1375 = vmatprep.subr.mxu0 0.0
    %1376 = vmatpush1.msra.mxu0 0.0
    %1377 = vmatprep.subr.mxu0 0.0
    %1378 = vmatpush1.msra.mxu0 0.0
    %1379 = vmatprep.subr.mxu0 0.0
    %1380 = vmatpush1.msra.mxu0 0.0
    %1381 = vmatprep.subr.mxu0 0.0
    %1382 = vmatpush1.msra.mxu0 0.0
    %1383 = vmatprep.subr.mxu0 0.0
    %1384 = vmatpush1.msra.mxu0 0.0
    %1385 = vmatprep.subr.mxu0 0.0
    %1386 = vmatpush1.msra.mxu0 0.0
    %1387 = vmatprep.subr.mxu0 0.0
    %1388 = vmatpush1.msra.mxu0 0.0
    %1389 = vmatprep.mubr.f32.mxu0 0.0
    %1390 = vmatmul.mubr.f32.gmra.mrb[0].mxu0 %v1323
    %v1391 = vpop.f32.mrb[0].mxu0
    %v1392 = vadd.f32 0.0, %v1391
    %v1393 = vpop.f32.mrb[0].mxu0
    %1394 = vdwg.mxu0
    %1395 = vrot.lane.b32.xlu0 %v1121, 64
    %v1396 = vpop.permute.xlu0 %1395
    %v1399 = vsel %vm1131, %v1318, 0
    %1401 = vmatprep.subr.mxu0 0.0
    %1402 = vmatpush1.msra.mxu0 %v1396
    %1403 = vmatprep.subr.mxu0 0.0
    %1404 = vmatpush1.msra.mxu0 0.0
    %1405 = vmatprep.subr.mxu0 0.0
    %1406 = vmatpush1.msra.mxu0 0.0
    %1407 = vmatprep.subr.mxu0 0.0
    %1408 = vmatpush1.msra.mxu0 0.0
    %1409 = vmatprep.subr.mxu0 0.0
    %1410 = vmatpush1.msra.mxu0 0.0
    %1411 = vmatprep.subr.mxu0 0.0
    %1412 = vmatpush1.msra.mxu0 0.0
    %1413 = vmatprep.subr.mxu0 0.0
    %1414 = vmatpush1.msra.mxu0 0.0
    %1415 = vmatprep.subr.mxu0 0.0
    %1416 = vmatpush1.msra.mxu0 0.0
    %1417 = vmatprep.subr.mxu0 0.0
    %1418 = vmatpush1.msra.mxu0 0.0
    %1419 = vmatprep.subr.mxu0 0.0
    %1420 = vmatpush1.msra.mxu0 0.0
    %1421 = vmatprep.subr.mxu0 0.0
    %1422 = vmatpush1.msra.mxu0 0.0
    %1423 = vmatprep.subr.mxu0 0.0
    %1424 = vmatpush1.msra.mxu0 0.0
    %1425 = vmatprep.subr.mxu0 0.0
    %1426 = vmatpush1.msra.mxu0 0.0
    %1427 = vmatprep.subr.mxu0 0.0
    %1428 = vmatpush1.msra.mxu0 0.0
    %1429 = vmatprep.subr.mxu0 0.0
    %1430 = vmatpush1.msra.mxu0 0.0
    %1431 = vmatprep.subr.mxu0 0.0
    %1432 = vmatpush1.msra.mxu0 0.0
    %1433 = vmatprep.subr.mxu0 0.0
    %1434 = vmatpush1.msra.mxu0 0.0
    %1435 = vmatprep.subr.mxu0 0.0
    %1436 = vmatpush1.msra.mxu0 0.0
    %1437 = vmatprep.subr.mxu0 0.0
    %1438 = vmatpush1.msra.mxu0 0.0
    %1439 = vmatprep.subr.mxu0 0.0
    %1440 = vmatpush1.msra.mxu0 0.0
    %1441 = vmatprep.subr.mxu0 0.0
    %1442 = vmatpush1.msra.mxu0 0.0
    %1443 = vmatprep.subr.mxu0 0.0
    %1444 = vmatpush1.msra.mxu0 0.0
    %1445 = vmatprep.subr.mxu0 0.0
    %1446 = vmatpush1.msra.mxu0 0.0
    %1447 = vmatprep.subr.mxu0 0.0
    %1448 = vmatpush1.msra.mxu0 0.0
    %1449 = vmatprep.subr.mxu0 0.0
    %1450 = vmatpush1.msra.mxu0 0.0
    %1451 = vmatprep.subr.mxu0 0.0
    %1452 = vmatpush1.msra.mxu0 0.0
    %1453 = vmatprep.subr.mxu0 0.0
    %1454 = vmatpush1.msra.mxu0 0.0
    %1455 = vmatprep.subr.mxu0 0.0
    %1456 = vmatpush1.msra.mxu0 0.0
    %1457 = vmatprep.subr.mxu0 0.0
    %1458 = vmatpush1.msra.mxu0 0.0
    %1459 = vmatprep.subr.mxu0 0.0
    %1460 = vmatpush1.msra.mxu0 0.0
    %1461 = vmatprep.subr.mxu0 0.0
    %1462 = vmatpush1.msra.mxu0 0.0
    %1463 = vmatprep.subr.mxu0 0.0
    %1464 = vmatpush1.msra.mxu0 0.0
    %1465 = vmatprep.mubr.f32.mxu0 0.0
    %1466 = vmatmul.mubr.f32.gmra.mrb[0].mxu0 %v1399
    %v1467 = vpop.f32.mrb[0].mxu0
    %v1468 = vadd.f32 0.0, %v1467
    %v1469 = vpop.f32.mrb[0].mxu0
    %1470 = vdwg.mxu0
    %1471 = vrot.lane.b32.xlu0 %v1116, 120
    %v1472 = vpop.permute.xlu0 %1471
    %1473 = vrot.lane.b32.xlu0 %v1116, 88
    %v1474 = vpop.permute.xlu0 %1473
    %v1475 = vsel %vm1131, %v1472, 0
    %v1477 = vsel %vm1131, %v1474, 0
    %1479 = vmatprep.subr.mxu0 0.0
    %1480 = vmatpush1.xpose.msra.mxu0 %v1477
    %1481 = vmatprep.subr.mxu0 0.0
    %1482 = vmatpush1.xpose.msra.mxu0 0.0
    %1483 = vmatprep.subr.mxu0 0.0
    %1484 = vmatpush1.xpose.msra.mxu0 0.0
    %1485 = vmatprep.subr.mxu0 0.0
    %1486 = vmatpush1.xpose.msra.mxu0 0.0
    %1487 = vmatprep.subr.mxu0 0.0
    %1488 = vmatpush1.xpose.msra.mxu0 0.0
    %1489 = vmatprep.subr.mxu0 0.0
    %1490 = vmatpush1.xpose.msra.mxu0 0.0
    %1491 = vmatprep.subr.mxu0 0.0
    %1492 = vmatpush1.xpose.msra.mxu0 0.0
    %1493 = vmatprep.subr.mxu0 0.0
    %1494 = vmatpush1.xpose.msra.mxu0 0.0
    %1495 = vmatprep.subr.mxu0 0.0
    %1496 = vmatpush1.xpose.msra.mxu0 0.0
    %1497 = vmatprep.subr.mxu0 0.0
    %1498 = vmatpush1.xpose.msra.mxu0 0.0
    %1499 = vmatprep.subr.mxu0 0.0
    %1500 = vmatpush1.xpose.msra.mxu0 0.0
    %1501 = vmatprep.subr.mxu0 0.0
    %1502 = vmatpush1.xpose.msra.mxu0 0.0
    %1503 = vmatprep.subr.mxu0 0.0
    %1504 = vmatpush1.xpose.msra.mxu0 0.0
    %1505 = vmatprep.subr.mxu0 0.0
    %1506 = vmatpush1.xpose.msra.mxu0 0.0
    %1507 = vmatprep.subr.mxu0 0.0
    %1508 = vmatpush1.xpose.msra.mxu0 0.0
    %1509 = vmatprep.subr.mxu0 0.0
    %1510 = vmatpush1.xpose.msra.mxu0 0.0
    %1511 = vmatprep.subr.mxu0 0.0
    %1512 = vmatpush1.xpose.msra.mxu0 0.0
    %1513 = vmatprep.subr.mxu0 0.0
    %1514 = vmatpush1.xpose.msra.mxu0 0.0
    %1515 = vmatprep.subr.mxu0 0.0
    %1516 = vmatpush1.xpose.msra.mxu0 0.0
    %1517 = vmatprep.subr.mxu0 0.0
    %1518 = vmatpush1.xpose.msra.mxu0 0.0
    %1519 = vmatprep.subr.mxu0 0.0
    %1520 = vmatpush1.xpose.msra.mxu0 0.0
    %1521 = vmatprep.subr.mxu0 0.0
    %1522 = vmatpush1.xpose.msra.mxu0 0.0
    %1523 = vmatprep.subr.mxu0 0.0
    %1524 = vmatpush1.xpose.msra.mxu0 0.0
    %1525 = vmatprep.subr.mxu0 0.0
    %1526 = vmatpush1.xpose.msra.mxu0 0.0
    %1527 = vmatprep.subr.mxu0 0.0
    %1528 = vmatpush1.xpose.msra.mxu0 0.0
    %1529 = vmatprep.subr.mxu0 0.0
    %1530 = vmatpush1.xpose.msra.mxu0 0.0
    %1531 = vmatprep.subr.mxu0 0.0
    %1532 = vmatpush1.xpose.msra.mxu0 0.0
    %1533 = vmatprep.subr.mxu0 0.0
    %1534 = vmatpush1.xpose.msra.mxu0 0.0
    %1535 = vmatprep.subr.mxu0 0.0
    %1536 = vmatpush1.xpose.msra.mxu0 0.0
    %1537 = vmatprep.subr.mxu0 0.0
    %1538 = vmatpush1.xpose.msra.mxu0 0.0
    %1539 = vmatprep.subr.mxu0 0.0
    %1540 = vmatpush1.xpose.msra.mxu0 0.0
    %1541 = vmatprep.subr.mxu0 0.0
    %1542 = vmatpush1.xpose.msra.mxu0 0.0
    %1543 = vmatprep.mubr.f32.mxu0 0.0
    %1544 = vmatmul.mubr.f32.gmra.mrb[0].mxu0 %v1475
    %v1545 = vpop.f32.mrb[0].mxu0
    %v1546 = vadd.f32 0.0, %v1545
    %v1547 = vpop.f32.mrb[0].mxu0
    %1548 = vdwg.mxu0
    %1549 = vrot.lane.b32.xlu0 %v1121, 120
    %v1550 = vpop.permute.xlu0 %1549
    %1551 = vrot.lane.b32.xlu0 %v1121, 88
    %v1552 = vpop.permute.xlu0 %1551
    %v1553 = vsel %vm1131, %v1550, 0
    %v1555 = vsel %vm1131, %v1552, 0
    %1557 = vmatprep.subr.mxu0 0.0
    %1558 = vmatpush1.xpose.msra.mxu0 %v1555
    %1559 = vmatprep.subr.mxu0 0.0
    %1560 = vmatpush1.xpose.msra.mxu0 0.0
    %1561 = vmatprep.subr.mxu0 0.0
    %1562 = vmatpush1.xpose.msra.mxu0 0.0
    %1563 = vmatprep.subr.mxu0 0.0
    %1564 = vmatpush1.xpose.msra.mxu0 0.0
    %1565 = vmatprep.subr.mxu0 0.0
    %1566 = vmatpush1.xpose.msra.mxu0 0.0
    %1567 = vmatprep.subr.mxu0 0.0
    %1568 = vmatpush1.xpose.msra.mxu0 0.0
    %1569 = vmatprep.subr.mxu0 0.0
    %1570 = vmatpush1.xpose.msra.mxu0 0.0
    %1571 = vmatprep.subr.mxu0 0.0
    %1572 = vmatpush1.xpose.msra.mxu0 0.0
    %1573 = vmatprep.subr.mxu0 0.0
    %1574 = vmatpush1.xpose.msra.mxu0 0.0
    %1575 = vmatprep.subr.mxu0 0.0
    %1576 = vmatpush1.xpose.msra.mxu0 0.0
    %1577 = vmatprep.subr.mxu0 0.0
    %1578 = vmatpush1.xpose.msra.mxu0 0.0
    %1579 = vmatprep.subr.mxu0 0.0
    %1580 = vmatpush1.xpose.msra.mxu0 0.0
    %1581 = vmatprep.subr.mxu0 0.0
    %1582 = vmatpush1.xpose.msra.mxu0 0.0
    %1583 = vmatprep.subr.mxu0 0.0
    %1584 = vmatpush1.xpose.msra.mxu0 0.0
    %1585 = vmatprep.subr.mxu0 0.0
    %1586 = vmatpush1.xpose.msra.mxu0 0.0
    %1587 = vmatprep.subr.mxu0 0.0
    %1588 = vmatpush1.xpose.msra.mxu0 0.0
    %1589 = vmatprep.subr.mxu0 0.0
    %1590 = vmatpush1.xpose.msra.mxu0 0.0
    %1591 = vmatprep.subr.mxu0 0.0
    %1592 = vmatpush1.xpose.msra.mxu0 0.0
    %1593 = vmatprep.subr.mxu0 0.0
    %1594 = vmatpush1.xpose.msra.mxu0 0.0
    %1595 = vmatprep.subr.mxu0 0.0
    %1596 = vmatpush1.xpose.msra.mxu0 0.0
    %1597 = vmatprep.subr.mxu0 0.0
    %1598 = vmatpush1.xpose.msra.mxu0 0.0
    %1599 = vmatprep.subr.mxu0 0.0
    %1600 = vmatpush1.xpose.msra.mxu0 0.0
    %1601 = vmatprep.subr.mxu0 0.0
    %1602 = vmatpush1.xpose.msra.mxu0 0.0
    %1603 = vmatprep.subr.mxu0 0.0
    %1604 = vmatpush1.xpose.msra.mxu0 0.0
    %1605 = vmatprep.subr.mxu0 0.0
    %1606 = vmatpush1.xpose.msra.mxu0 0.0
    %1607 = vmatprep.subr.mxu0 0.0
    %1608 = vmatpush1.xpose.msra.mxu0 0.0
    %1609 = vmatprep.subr.mxu0 0.0
    %1610 = vmatpush1.xpose.msra.mxu0 0.0
    %1611 = vmatprep.subr.mxu0 0.0
    %1612 = vmatpush1.xpose.msra.mxu0 0.0
    %1613 = vmatprep.subr.mxu0 0.0
    %1614 = vmatpush1.xpose.msra.mxu0 0.0
    %1615 = vmatprep.subr.mxu0 0.0
    %1616 = vmatpush1.xpose.msra.mxu0 0.0
    %1617 = vmatprep.subr.mxu0 0.0
    %1618 = vmatpush1.xpose.msra.mxu0 0.0
    %1619 = vmatprep.subr.mxu0 0.0
    %1620 = vmatpush1.xpose.msra.mxu0 0.0
    %1621 = vmatprep.mubr.f32.mxu0 0.0
    %1622 = vmatmul.mubr.f32.gmra.mrb[0].mxu0 %v1553
    %v1623 = vpop.f32.mrb[0].mxu0
    %v1624 = vadd.f32 0.0, %v1623
    %v1625 = vpop.f32.mrb[0].mxu0
    %1626 = vdwg.mxu0
    %v1627 = vmul.f32 %v1546, 0.35355338
    %v1628 = vmul.f32 %v1624, 0.35355338
    %v1629 = vadd.f32 %v1627, %v1288
    %v1630 = vadd.f32 %v1628, %v1292
    %v1631 = vsel %vm1131, %v1629, -inf
    %1632 = vmax.xlane.f32.xlu0 %v1631
    %v1633 = vpop.xlane.xlu0 %1632
    %v1634 = vsel %vm1131, %v1630, -inf
    %1635 = vmax.xlane.f32.xlu0 %v1634
    %v1636 = vpop.xlane.xlu0 %1635
    %v1637 = vsub.f32 %v1629, %v1633
    %v1638 = vsub.f32 %v1630, %v1636
    %v1639 = vmul.f32 %v1637, 1.442695
    %v1640 = vpow.pop %v1639
    %v1641 = vmul.f32 %v1638, 1.442695
    %v1642 = vpow.pop %v1641
    %v1643 = vsel %vm1131, %v1640, 0.0
    %1644 = vadd.xlane.f32.xlu0 %v1643
    %v1645 = vpop.xlane.xlu0 %1644
    %v1646 = vsel %vm1131, %v1642, 0.0
    %1647 = vadd.xlane.f32.xlu0 %v1646
    %v1648 = vpop.xlane.xlu0 %1647
    %v1649 = vrcp.pop %v1645
    %v1650 = vmul.f32 %v1640, %v1649
    %v1651 = vrcp.pop %v1648
    %v1652 = vmul.f32 %v1642, %v1651
    %1653 = vrot.lane.b32.xlu0 %v1116, 56
    %v1654 = vpop.permute.xlu0 %1653
    %v1657 = vsel %vm1131, %v1650, 0
    %1659 = vmatprep.subr.mxu0 0.0
    %1660 = vmatpush1.msra.mxu0 %v1654
    %1661 = vmatprep.subr.mxu0 0.0
    %1662 = vmatpush1.msra.mxu0 0.0
    %1663 = vmatprep.subr.mxu0 0.0
    %1664 = vmatpush1.msra.mxu0 0.0
    %1665 = vmatprep.subr.mxu0 0.0
    %1666 = vmatpush1.msra.mxu0 0.0
    %1667 = vmatprep.subr.mxu0 0.0
    %1668 = vmatpush1.msra.mxu0 0.0
    %1669 = vmatprep.subr.mxu0 0.0
    %1670 = vmatpush1.msra.mxu0 0.0
    %1671 = vmatprep.subr.mxu0 0.0
    %1672 = vmatpush1.msra.mxu0 0.0
    %1673 = vmatprep.subr.mxu0 0.0
    %1674 = vmatpush1.msra.mxu0 0.0
    %1675 = vmatprep.subr.mxu0 0.0
    %1676 = vmatpush1.msra.mxu0 0.0
    %1677 = vmatprep.subr.mxu0 0.0
    %1678 = vmatpush1.msra.mxu0 0.0
    %1679 = vmatprep.subr.mxu0 0.0
    %1680 = vmatpush1.msra.mxu0 0.0
    %1681 = vmatprep.subr.mxu0 0.0
    %1682 = vmatpush1.msra.mxu0 0.0
    %1683 = vmatprep.subr.mxu0 0.0
    %1684 = vmatpush1.msra.mxu0 0.0
    %1685 = vmatprep.subr.mxu0 0.0
    %1686 = vmatpush1.msra.mxu0 0.0
    %1687 = vmatprep.subr.mxu0 0.0
    %1688 = vmatpush1.msra.mxu0 0.0
    %1689 = vmatprep.subr.mxu0 0.0
    %1690 = vmatpush1.msra.mxu0 0.0
    %1691 = vmatprep.subr.mxu0 0.0
    %1692 = vmatpush1.msra.mxu0 0.0
    %1693 = vmatprep.subr.mxu0 0.0
    %1694 = vmatpush1.msra.mxu0 0.0
    %1695 = vmatprep.subr.mxu0 0.0
    %1696 = vmatpush1.msra.mxu0 0.0
    %1697 = vmatprep.subr.mxu0 0.0
    %1698 = vmatpush1.msra.mxu0 0.0
    %1699 = vmatprep.subr.mxu0 0.0
    %1700 = vmatpush1.msra.mxu0 0.0
    %1701 = vmatprep.subr.mxu0 0.0
    %1702 = vmatpush1.msra.mxu0 0.0
    %1703 = vmatprep.subr.mxu0 0.0
    %1704 = vmatpush1.msra.mxu0 0.0
    %1705 = vmatprep.subr.mxu0 0.0
    %1706 = vmatpush1.msra.mxu0 0.0
    %1707 = vmatprep.subr.mxu0 0.0
    %1708 = vmatpush1.msra.mxu0 0.0
    %1709 = vmatprep.subr.mxu0 0.0
    %1710 = vmatpush1.msra.mxu0 0.0
    %1711 = vmatprep.subr.mxu0 0.0
    %1712 = vmatpush1.msra.mxu0 0.0
    %1713 = vmatprep.subr.mxu0 0.0
    %1714 = vmatpush1.msra.mxu0 0.0
    %1715 = vmatprep.subr.mxu0 0.0
    %1716 = vmatpush1.msra.mxu0 0.0
    %1717 = vmatprep.subr.mxu0 0.0
    %1718 = vmatpush1.msra.mxu0 0.0
    %1719 = vmatprep.subr.mxu0 0.0
    %1720 = vmatpush1.msra.mxu0 0.0
    %1721 = vmatprep.subr.mxu0 0.0
    %1722 = vmatpush1.msra.mxu0 0.0
    %1723 = vmatprep.mubr.f32.mxu0 0.0
    %1724 = vmatmul.mubr.f32.gmra.mrb[0].mxu0 %v1657
    %v1725 = vpop.f32.mrb[0].mxu0
    %v1726 = vadd.f32 0.0, %v1725
    %v1727 = vpop.f32.mrb[0].mxu0
    %1728 = vdwg.mxu0
    %1729 = vrot.lane.b32.xlu0 %v1121, 56
    %v1730 = vpop.permute.xlu0 %1729
    %v1733 = vsel %vm1131, %v1652, 0
    %1735 = vmatprep.subr.mxu0 0.0
    %1736 = vmatpush1.msra.mxu0 %v1730
    %1737 = vmatprep.subr.mxu0 0.0
    %1738 = vmatpush1.msra.mxu0 0.0
    %1739 = vmatprep.subr.mxu0 0.0
    %1740 = vmatpush1.msra.mxu0 0.0
    %1741 = vmatprep.subr.mxu0 0.0
    %1742 = vmatpush1.msra.mxu0 0.0
    %1743 = vmatprep.subr.mxu0 0.0
    %1744 = vmatpush1.msra.mxu0 0.0
    %1745 = vmatprep.subr.mxu0 0.0
    %1746 = vmatpush1.msra.mxu0 0.0
    %1747 = vmatprep.subr.mxu0 0.0
    %1748 = vmatpush1.msra.mxu0 0.0
    %1749 = vmatprep.subr.mxu0 0.0
    %1750 = vmatpush1.msra.mxu0 0.0
    %1751 = vmatprep.subr.mxu0 0.0
    %1752 = vmatpush1.msra.mxu0 0.0
    %1753 = vmatprep.subr.mxu0 0.0
    %1754 = vmatpush1.msra.mxu0 0.0
    %1755 = vmatprep.subr.mxu0 0.0
    %1756 = vmatpush1.msra.mxu0 0.0
    %1757 = vmatprep.subr.mxu0 0.0
    %1758 = vmatpush1.msra.mxu0 0.0
    %1759 = vmatprep.subr.mxu0 0.0
    %1760 = vmatpush1.msra.mxu0 0.0
    %1761 = vmatprep.subr.mxu0 0.0
    %1762 = vmatpush1.msra.mxu0 0.0
    %1763 = vmatprep.subr.mxu0 0.0
    %1764 = vmatpush1.msra.mxu0 0.0
    %1765 = vmatprep.subr.mxu0 0.0
    %1766 = vmatpush1.msra.mxu0 0.0
    %1767 = vmatprep.subr.mxu0 0.0
    %1768 = vmatpush1.msra.mxu0 0.0
    %1769 = vmatprep.subr.mxu0 0.0
    %1770 = vmatpush1.msra.mxu0 0.0
    %1771 = vmatprep.subr.mxu0 0.0
    %1772 = vmatpush1.msra.mxu0 0.0
    %1773 = vmatprep.subr.mxu0 0.0
    %1774 = vmatpush1.msra.mxu0 0.0
    %1775 = vmatprep.subr.mxu0 0.0
    %1776 = vmatpush1.msra.mxu0 0.0
    %1777 = vmatprep.subr.mxu0 0.0
    %1778 = vmatpush1.msra.mxu0 0.0
    %1779 = vmatprep.subr.mxu0 0.0
    %1780 = vmatpush1.msra.mxu0 0.0
    %1781 = vmatprep.subr.mxu0 0.0
    %1782 = vmatpush1.msra.mxu0 0.0
    %1783 = vmatprep.subr.mxu0 0.0
    %1784 = vmatpush1.msra.mxu0 0.0
    %1785 = vmatprep.subr.mxu0 0.0
    %1786 = vmatpush1.msra.mxu0 0.0
    %1787 = vmatprep.subr.mxu0 0.0
    %1788 = vmatpush1.msra.mxu0 0.0
    %1789 = vmatprep.subr.mxu0 0.0
    %1790 = vmatpush1.msra.mxu0 0.0
    %1791 = vmatprep.subr.mxu0 0.0
    %1792 = vmatpush1.msra.mxu0 0.0
    %1793 = vmatprep.subr.mxu0 0.0
    %1794 = vmatpush1.msra.mxu0 0.0
    %1795 = vmatprep.subr.mxu0 0.0
    %1796 = vmatpush1.msra.mxu0 0.0
    %1797 = vmatprep.subr.mxu0 0.0
    %1798 = vmatpush1.msra.mxu0 0.0
    %1799 = vmatprep.mubr.f32.mxu0 0.0
    %1800 = vmatmul.mubr.f32.gmra.mrb[0].mxu0 %v1733
    %v1801 = vpop.f32.mrb[0].mxu0
    %v1802 = vadd.f32 0.0, %v1801
    %v1803 = vpop.f32.mrb[0].mxu0
    %1804 = vdwg.mxu0
    %v1806 = vsel %vm1131, %v1726, 0
    %v1809 = vsel %vm1131, %v1802, 0
    %1811 = vmatprep.subr.mxu0 0.0
    %1812 = vmatpush1.msra.mxu0 %v1125
    %1813 = vmatprep.subr.mxu0 0.0
    %1814 = vmatpush1.msra.mxu0 0.0
    %1815 = vmatprep.subr.mxu0 0.0
    %1816 = vmatpush1.msra.mxu0 0.0
    %1817 = vmatprep.subr.mxu0 0.0
    %1818 = vmatpush1.msra.mxu0 0.0
    %1819 = vmatprep.subr.mxu0 0.0
    %1820 = vmatpush1.msra.mxu0 0.0
    %1821 = vmatprep.subr.mxu0 0.0
    %1822 = vmatpush1.msra.mxu0 0.0
    %1823 = vmatprep.subr.mxu0 0.0
    %1824 = vmatpush1.msra.mxu0 0.0
    %1825 = vmatprep.subr.mxu0 0.0
    %1826 = vmatpush1.msra.mxu0 0.0
    %1827 = vmatprep.subr.mxu0 0.0
    %1828 = vmatpush1.msra.mxu0 0.0
    %1829 = vmatprep.subr.mxu0 0.0
    %1830 = vmatpush1.msra.mxu0 0.0
    %1831 = vmatprep.subr.mxu0 0.0
    %1832 = vmatpush1.msra.mxu0 0.0
    %1833 = vmatprep.subr.mxu0 0.0
    %1834 = vmatpush1.msra.mxu0 0.0
    %1835 = vmatprep.subr.mxu0 0.0
    %1836 = vmatpush1.msra.mxu0 0.0
    %1837 = vmatprep.subr.mxu0 0.0
    %1838 = vmatpush1.msra.mxu0 0.0
    %1839 = vmatprep.subr.mxu0 0.0
    %1840 = vmatpush1.msra.mxu0 0.0
    %1841 = vmatprep.subr.mxu0 0.0
    %1842 = vmatpush1.msra.mxu0 0.0
    %1843 = vmatprep.subr.mxu0 0.0
    %1844 = vmatpush1.msra.mxu0 0.0
    %1845 = vmatprep.subr.mxu0 0.0
    %1846 = vmatpush1.msra.mxu0 0.0
    %1847 = vmatprep.subr.mxu0 0.0
    %1848 = vmatpush1.msra.mxu0 0.0
    %1849 = vmatprep.subr.mxu0 0.0
    %1850 = vmatpush1.msra.mxu0 0.0
    %1851 = vmatprep.subr.mxu0 0.0
    %1852 = vmatpush1.msra.mxu0 0.0
    %1853 = vmatprep.subr.mxu0 0.0
    %1854 = vmatpush1.msra.mxu0 0.0
    %1855 = vmatprep.subr.mxu0 0.0
    %1856 = vmatpush1.msra.mxu0 0.0
    %1857 = vmatprep.subr.mxu0 0.0
    %1858 = vmatpush1.msra.mxu0 0.0
    %1859 = vmatprep.subr.mxu0 0.0
    %1860 = vmatpush1.msra.mxu0 0.0
    %1861 = vmatprep.subr.mxu0 0.0
    %1862 = vmatpush1.msra.mxu0 0.0
    %1863 = vmatprep.subr.mxu0 0.0
    %1864 = vmatpush1.msra.mxu0 0.0
    %1865 = vmatprep.subr.mxu0 0.0
    %1866 = vmatpush1.msra.mxu0 0.0
    %1867 = vmatprep.subr.mxu0 0.0
    %1868 = vmatpush1.msra.mxu0 0.0
    %1869 = vmatprep.subr.mxu0 0.0
    %1870 = vmatpush1.msra.mxu0 0.0
    %1871 = vmatprep.subr.mxu0 0.0
    %1872 = vmatpush1.msra.mxu0 0.0
    %1873 = vmatprep.subr.mxu0 0.0
    %1874 = vmatpush1.msra.mxu0 0.0
    %1875 = vmatprep.mubr.f32.mxu0 0.0
    %1876 = vmatmul.mubr.f32.gmra.mrb[0].mxu0 %v1806
    %v1877 = vpop.f32.mrb[0].mxu0
    %v1878 = vadd.f32 0.0, %v1877
    %v1879 = vpop.f32.mrb[0].mxu0
    %1880 = vmatprep.mubr.f32.mxu0 0.0
    %1881 = vmatmul.mubr.f32.gmra.mrb[0].mxu0 %v1809
    %v1882 = vpop.f32.mrb[0].mxu0
    %v1883 = vadd.f32 0.0, %v1882
    %v1884 = vpop.f32.mrb[0].mxu0
    %1885 = vdwg.mxu0
    %v1887 = vsel %vm1131, %v1392, 0
    %v1890 = vsel %vm1131, %v1468, 0
    %1892 = vmatprep.subr.mxu0 0.0
    %1893 = vmatpush1.msra.mxu0 %v1124
    %1894 = vmatprep.subr.mxu0 0.0
    %1895 = vmatpush1.msra.mxu0 0.0
    %1896 = vmatprep.subr.mxu0 0.0
    %1897 = vmatpush1.msra.mxu0 0.0
    %1898 = vmatprep.subr.mxu0 0.0
    %1899 = vmatpush1.msra.mxu0 0.0
    %1900 = vmatprep.subr.mxu0 0.0
    %1901 = vmatpush1.msra.mxu0 0.0
    %1902 = vmatprep.subr.mxu0 0.0
    %1903 = vmatpush1.msra.mxu0 0.0
    %1904 = vmatprep.subr.mxu0 0.0
    %1905 = vmatpush1.msra.mxu0 0.0
    %1906 = vmatprep.subr.mxu0 0.0
    %1907 = vmatpush1.msra.mxu0 0.0
    %1908 = vmatprep.subr.mxu0 0.0
    %1909 = vmatpush1.msra.mxu0 0.0
    %1910 = vmatprep.subr.mxu0 0.0
    %1911 = vmatpush1.msra.mxu0 0.0
    %1912 = vmatprep.subr.mxu0 0.0
    %1913 = vmatpush1.msra.mxu0 0.0
    %1914 = vmatprep.subr.mxu0 0.0
    %1915 = vmatpush1.msra.mxu0 0.0
    %1916 = vmatprep.subr.mxu0 0.0
    %1917 = vmatpush1.msra.mxu0 0.0
    %1918 = vmatprep.subr.mxu0 0.0
    %1919 = vmatpush1.msra.mxu0 0.0
    %1920 = vmatprep.subr.mxu0 0.0
    %1921 = vmatpush1.msra.mxu0 0.0
    %1922 = vmatprep.subr.mxu0 0.0
    %1923 = vmatpush1.msra.mxu0 0.0
    %1924 = vmatprep.subr.mxu0 0.0
    %1925 = vmatpush1.msra.mxu0 0.0
    %1926 = vmatprep.subr.mxu0 0.0
    %1927 = vmatpush1.msra.mxu0 0.0
    %1928 = vmatprep.subr.mxu0 0.0
    %1929 = vmatpush1.msra.mxu0 0.0
    %1930 = vmatprep.subr.mxu0 0.0
    %1931 = vmatpush1.msra.mxu0 0.0
    %1932 = vmatprep.subr.mxu0 0.0
    %1933 = vmatpush1.msra.mxu0 0.0
    %1934 = vmatprep.subr.mxu0 0.0
    %1935 = vmatpush1.msra.mxu0 0.0
    %1936 = vmatprep.subr.mxu0 0.0
    %1937 = vmatpush1.msra.mxu0 0.0
    %1938 = vmatprep.subr.mxu0 0.0
    %1939 = vmatpush1.msra.mxu0 0.0
    %1940 = vmatprep.subr.mxu0 0.0
    %1941 = vmatpush1.msra.mxu0 0.0
    %1942 = vmatprep.subr.mxu0 0.0
    %1943 = vmatpush1.msra.mxu0 0.0
    %1944 = vmatprep.subr.mxu0 0.0
    %1945 = vmatpush1.msra.mxu0 0.0
    %1946 = vmatprep.subr.mxu0 0.0
    %1947 = vmatpush1.msra.mxu0 0.0
    %1948 = vmatprep.subr.mxu0 0.0
    %1949 = vmatpush1.msra.mxu0 0.0
    %1950 = vmatprep.subr.mxu0 0.0
    %1951 = vmatpush1.msra.mxu0 0.0
    %1952 = vmatprep.subr.mxu0 0.0
    %1953 = vmatpush1.msra.mxu0 0.0
    %1954 = vmatprep.subr.mxu0 0.0
    %1955 = vmatpush1.msra.mxu0 0.0
    %1956 = vmatprep.mubr.f32.mxu0 0.0
    %1957 = vmatmul.mubr.f32.gmra.mrb[0].mxu0 %v1887
    %v1958 = vpop.f32.mrb[0].mxu0
    %v1959 = vadd.f32 %v1878, %v1958
    %v1960 = vpop.f32.mrb[0].mxu0
    %1961 = vmatprep.mubr.f32.mxu0 0.0
    %1962 = vmatmul.mubr.f32.gmra.mrb[0].mxu0 %v1890
    %v1963 = vpop.f32.mrb[0].mxu0
    %v1964 = vadd.f32 %v1883, %v1963
    %v1965 = vpop.f32.mrb[0].mxu0
    %1966 = vdwg.mxu0
    %1967 = vrot.lane.b32.xlu0 %v1116, 112
    %v1968 = vpop.permute.xlu0 %1967
    %1969 = vrot.lane.b32.xlu0 %v1116, 80
    %v1970 = vpop.permute.xlu0 %1969
    %v1971 = vsel %vm1131, %v1968, 0
    %v1973 = vsel %vm1131, %v1970, 0
    %1975 = vmatprep.subr.mxu0 0.0
    %1976 = vmatpush1.xpose.msra.mxu0 %v1973
    %1977 = vmatprep.subr.mxu0 0.0
    %1978 = vmatpush1.xpose.msra.mxu0 0.0
    %1979 = vmatprep.subr.mxu0 0.0
    %1980 = vmatpush1.xpose.msra.mxu0 0.0
    %1981 = vmatprep.subr.mxu0 0.0
    %1982 = vmatpush1.xpose.msra.mxu0 0.0
    %1983 = vmatprep.subr.mxu0 0.0
    %1984 = vmatpush1.xpose.msra.mxu0 0.0
    %1985 = vmatprep.subr.mxu0 0.0
    %1986 = vmatpush1.xpose.msra.mxu0 0.0
    %1987 = vmatprep.subr.mxu0 0.0
    %1988 = vmatpush1.xpose.msra.mxu0 0.0
    %1989 = vmatprep.subr.mxu0 0.0
    %1990 = vmatpush1.xpose.msra.mxu0 0.0
    %1991 = vmatprep.subr.mxu0 0.0
    %1992 = vmatpush1.xpose.msra.mxu0 0.0
    %1993 = vmatprep.subr.mxu0 0.0
    %1994 = vmatpush1.xpose.msra.mxu0 0.0
    %1995 = vmatprep.subr.mxu0 0.0
    %1996 = vmatpush1.xpose.msra.mxu0 0.0
    %1997 = vmatprep.subr.mxu0 0.0
    %1998 = vmatpush1.xpose.msra.mxu0 0.0
    %1999 = vmatprep.subr.mxu0 0.0
    %2000 = vmatpush1.xpose.msra.mxu0 0.0
    %2001 = vmatprep.subr.mxu0 0.0
    %2002 = vmatpush1.xpose.msra.mxu0 0.0
    %2003 = vmatprep.subr.mxu0 0.0
    %2004 = vmatpush1.xpose.msra.mxu0 0.0
    %2005 = vmatprep.subr.mxu0 0.0
    %2006 = vmatpush1.xpose.msra.mxu0 0.0
    %2007 = vmatprep.subr.mxu0 0.0
    %2008 = vmatpush1.xpose.msra.mxu0 0.0
    %2009 = vmatprep.subr.mxu0 0.0
    %2010 = vmatpush1.xpose.msra.mxu0 0.0
    %2011 = vmatprep.subr.mxu0 0.0
    %2012 = vmatpush1.xpose.msra.mxu0 0.0
    %2013 = vmatprep.subr.mxu0 0.0
    %2014 = vmatpush1.xpose.msra.mxu0 0.0
    %2015 = vmatprep.subr.mxu0 0.0
    %2016 = vmatpush1.xpose.msra.mxu0 0.0
    %2017 = vmatprep.subr.mxu0 0.0
    %2018 = vmatpush1.xpose.msra.mxu0 0.0
    %2019 = vmatprep.subr.mxu0 0.0
    %2020 = vmatpush1.xpose.msra.mxu0 0.0
    %2021 = vmatprep.subr.mxu0 0.0
    %2022 = vmatpush1.xpose.msra.mxu0 0.0
    %2023 = vmatprep.subr.mxu0 0.0
    %2024 = vmatpush1.xpose.msra.mxu0 0.0
    %2025 = vmatprep.subr.mxu0 0.0
    %2026 = vmatpush1.xpose.msra.mxu0 0.0
    %2027 = vmatprep.subr.mxu0 0.0
    %2028 = vmatpush1.xpose.msra.mxu0 0.0
    %2029 = vmatprep.subr.mxu0 0.0
    %2030 = vmatpush1.xpose.msra.mxu0 0.0
    %2031 = vmatprep.subr.mxu0 0.0
    %2032 = vmatpush1.xpose.msra.mxu0 0.0
    %2033 = vmatprep.subr.mxu0 0.0
    %2034 = vmatpush1.xpose.msra.mxu0 0.0
    %2035 = vmatprep.subr.mxu0 0.0
    %2036 = vmatpush1.xpose.msra.mxu0 0.0
    %2037 = vmatprep.subr.mxu0 0.0
    %2038 = vmatpush1.xpose.msra.mxu0 0.0
    %2039 = vmatprep.mubr.f32.mxu0 0.0
    %2040 = vmatmul.mubr.f32.gmra.mrb[0].mxu0 %v1971
    %v2041 = vpop.f32.mrb[0].mxu0
    %v2042 = vadd.f32 0.0, %v2041
    %v2043 = vpop.f32.mrb[0].mxu0
    %2044 = vdwg.mxu0
    %2045 = vrot.lane.b32.xlu0 %v1121, 112
    %v2046 = vpop.permute.xlu0 %2045
    %2047 = vrot.lane.b32.xlu0 %v1121, 80
    %v2048 = vpop.permute.xlu0 %2047
    %v2049 = vsel %vm1131, %v2046, 0
    %v2051 = vsel %vm1131, %v2048, 0
    %2053 = vmatprep.subr.mxu0 0.0
    %2054 = vmatpush1.xpose.msra.mxu0 %v2051
    %2055 = vmatprep.subr.mxu0 0.0
    %2056 = vmatpush1.xpose.msra.mxu0 0.0
    %2057 = vmatprep.subr.mxu0 0.0
    %2058 = vmatpush1.xpose.msra.mxu0 0.0
    %2059 = vmatprep.subr.mxu0 0.0
    %2060 = vmatpush1.xpose.msra.mxu0 0.0
    %2061 = vmatprep.subr.mxu0 0.0
    %2062 = vmatpush1.xpose.msra.mxu0 0.0
    %2063 = vmatprep.subr.mxu0 0.0
    %2064 = vmatpush1.xpose.msra.mxu0 0.0
    %2065 = vmatprep.subr.mxu0 0.0
    %2066 = vmatpush1.xpose.msra.mxu0 0.0
    %2067 = vmatprep.subr.mxu0 0.0
    %2068 = vmatpush1.xpose.msra.mxu0 0.0
    %2069 = vmatprep.subr.mxu0 0.0
    %2070 = vmatpush1.xpose.msra.mxu0 0.0
    %2071 = vmatprep.subr.mxu0 0.0
    %2072 = vmatpush1.xpose.msra.mxu0 0.0
    %2073 = vmatprep.subr.mxu0 0.0
    %2074 = vmatpush1.xpose.msra.mxu0 0.0
    %2075 = vmatprep.subr.mxu0 0.0
    %2076 = vmatpush1.xpose.msra.mxu0 0.0
    %2077 = vmatprep.subr.mxu0 0.0
    %2078 = vmatpush1.xpose.msra.mxu0 0.0
    %2079 = vmatprep.subr.mxu0 0.0
    %2080 = vmatpush1.xpose.msra.mxu0 0.0
    %2081 = vmatprep.subr.mxu0 0.0
    %2082 = vmatpush1.xpose.msra.mxu0 0.0
    %2083 = vmatprep.subr.mxu0 0.0
    %2084 = vmatpush1.xpose.msra.mxu0 0.0
    %2085 = vmatprep.subr.mxu0 0.0
    %2086 = vmatpush1.xpose.msra.mxu0 0.0
    %2087 = vmatprep.subr.mxu0 0.0
    %2088 = vmatpush1.xpose.msra.mxu0 0.0
    %2089 = vmatprep.subr.mxu0 0.0
    %2090 = vmatpush1.xpose.msra.mxu0 0.0
    %2091 = vmatprep.subr.mxu0 0.0
    %2092 = vmatpush1.xpose.msra.mxu0 0.0
    %2093 = vmatprep.subr.mxu0 0.0
    %2094 = vmatpush1.xpose.msra.mxu0 0.0
    %2095 = vmatprep.subr.mxu0 0.0
    %2096 = vmatpush1.xpose.msra.mxu0 0.0
    %2097 = vmatprep.subr.mxu0 0.0
    %2098 = vmatpush1.xpose.msra.mxu0 0.0
    %2099 = vmatprep.subr.mxu0 0.0
    %2100 = vmatpush1.xpose.msra.mxu0 0.0
    %2101 = vmatprep.subr.mxu0 0.0
    %2102 = vmatpush1.xpose.msra.mxu0 0.0
    %2103 = vmatprep.subr.mxu0 0.0
    %2104 = vmatpush1.xpose.msra.mxu0 0.0
    %2105 = vmatprep.subr.mxu0 0.0
    %2106 = vmatpush1.xpose.msra.mxu0 0.0
    %2107 = vmatprep.subr.mxu0 0.0
    %2108 = vmatpush1.xpose.msra.mxu0 0.0
    %2109 = vmatprep.subr.mxu0 0.0
    %2110 = vmatpush1.xpose.msra.mxu0 0.0
    %2111 = vmatprep.subr.mxu0 0.0
    %2112 = vmatpush1.xpose.msra.mxu0 0.0
    %2113 = vmatprep.subr.mxu0 0.0
    %2114 = vmatpush1.xpose.msra.mxu0 0.0
    %2115 = vmatprep.subr.mxu0 0.0
    %2116 = vmatpush1.xpose.msra.mxu0 0.0
    %2117 = vmatprep.mubr.f32.mxu0 0.0
    %2118 = vmatmul.mubr.f32.gmra.mrb[0].mxu0 %v2049
    %v2119 = vpop.f32.mrb[0].mxu0
    %v2120 = vadd.f32 0.0, %v2119
    %v2121 = vpop.f32.mrb[0].mxu0
    %2122 = vdwg.mxu0
    %v2123 = vmul.f32 %v2042, 0.35355338
    %v2124 = vmul.f32 %v2120, 0.35355338
    %v2125 = vadd.f32 %v2123, %v1288
    %v2126 = vadd.f32 %v2124, %v1292
    %v2127 = vsel %vm1131, %v2125, -inf
    %2128 = vmax.xlane.f32.xlu0 %v2127
    %v2129 = vpop.xlane.xlu0 %2128
    %v2130 = vsel %vm1131, %v2126, -inf
    %2131 = vmax.xlane.f32.xlu0 %v2130
    %v2132 = vpop.xlane.xlu0 %2131
    %v2133 = vsub.f32 %v2125, %v2129
    %v2134 = vsub.f32 %v2126, %v2132
    %v2135 = vmul.f32 %v2133, 1.442695
    %v2136 = vpow.pop %v2135
    %v2137 = vmul.f32 %v2134, 1.442695
    %v2138 = vpow.pop %v2137
    %v2139 = vsel %vm1131, %v2136, 0.0
    %2140 = vadd.xlane.f32.xlu0 %v2139
    %v2141 = vpop.xlane.xlu0 %2140
    %v2142 = vsel %vm1131, %v2138, 0.0
    %2143 = vadd.xlane.f32.xlu0 %v2142
    %v2144 = vpop.xlane.xlu0 %2143
    %v2145 = vrcp.pop %v2141
    %v2146 = vmul.f32 %v2136, %v2145
    %v2147 = vrcp.pop %v2144
    %v2148 = vmul.f32 %v2138, %v2147
    %2149 = vrot.lane.b32.xlu0 %v1116, 48
    %v2150 = vpop.permute.xlu0 %2149
    %v2153 = vsel %vm1131, %v2146, 0
    %2155 = vmatprep.subr.mxu0 0.0
    %2156 = vmatpush1.msra.mxu0 %v2150
    %2157 = vmatprep.subr.mxu0 0.0
    %2158 = vmatpush1.msra.mxu0 0.0
    %2159 = vmatprep.subr.mxu0 0.0
    %2160 = vmatpush1.msra.mxu0 0.0
    %2161 = vmatprep.subr.mxu0 0.0
    %2162 = vmatpush1.msra.mxu0 0.0
    %2163 = vmatprep.subr.mxu0 0.0
    %2164 = vmatpush1.msra.mxu0 0.0
    %2165 = vmatprep.subr.mxu0 0.0
    %2166 = vmatpush1.msra.mxu0 0.0
    %2167 = vmatprep.subr.mxu0 0.0
    %2168 = vmatpush1.msra.mxu0 0.0
    %2169 = vmatprep.subr.mxu0 0.0
    %2170 = vmatpush1.msra.mxu0 0.0
    %2171 = vmatprep.subr.mxu0 0.0
    %2172 = vmatpush1.msra.mxu0 0.0
    %2173 = vmatprep.subr.mxu0 0.0
    %2174 = vmatpush1.msra.mxu0 0.0
    %2175 = vmatprep.subr.mxu0 0.0
    %2176 = vmatpush1.msra.mxu0 0.0
    %2177 = vmatprep.subr.mxu0 0.0
    %2178 = vmatpush1.msra.mxu0 0.0
    %2179 = vmatprep.subr.mxu0 0.0
    %2180 = vmatpush1.msra.mxu0 0.0
    %2181 = vmatprep.subr.mxu0 0.0
    %2182 = vmatpush1.msra.mxu0 0.0
    %2183 = vmatprep.subr.mxu0 0.0
    %2184 = vmatpush1.msra.mxu0 0.0
    %2185 = vmatprep.subr.mxu0 0.0
    %2186 = vmatpush1.msra.mxu0 0.0
    %2187 = vmatprep.subr.mxu0 0.0
    %2188 = vmatpush1.msra.mxu0 0.0
    %2189 = vmatprep.subr.mxu0 0.0
    %2190 = vmatpush1.msra.mxu0 0.0
    %2191 = vmatprep.subr.mxu0 0.0
    %2192 = vmatpush1.msra.mxu0 0.0
    %2193 = vmatprep.subr.mxu0 0.0
    %2194 = vmatpush1.msra.mxu0 0.0
    %2195 = vmatprep.subr.mxu0 0.0
    %2196 = vmatpush1.msra.mxu0 0.0
    %2197 = vmatprep.subr.mxu0 0.0
    %2198 = vmatpush1.msra.mxu0 0.0
    %2199 = vmatprep.subr.mxu0 0.0
    %2200 = vmatpush1.msra.mxu0 0.0
    %2201 = vmatprep.subr.mxu0 0.0
    %2202 = vmatpush1.msra.mxu0 0.0
    %2203 = vmatprep.subr.mxu0 0.0
    %2204 = vmatpush1.msra.mxu0 0.0
    %2205 = vmatprep.subr.mxu0 0.0
    %2206 = vmatpush1.msra.mxu0 0.0
    %2207 = vmatprep.subr.mxu0 0.0
    %2208 = vmatpush1.msra.mxu0 0.0
    %2209 = vmatprep.subr.mxu0 0.0
    %2210 = vmatpush1.msra.mxu0 0.0
    %2211 = vmatprep.subr.mxu0 0.0
    %2212 = vmatpush1.msra.mxu0 0.0
    %2213 = vmatprep.subr.mxu0 0.0
    %2214 = vmatpush1.msra.mxu0 0.0
    %2215 = vmatprep.subr.mxu0 0.0
    %2216 = vmatpush1.msra.mxu0 0.0
    %2217 = vmatprep.subr.mxu0 0.0
    %2218 = vmatpush1.msra.mxu0 0.0
    %2219 = vmatprep.mubr.f32.mxu0 0.0
    %2220 = vmatmul.mubr.f32.gmra.mrb[0].mxu0 %v2153
    %v2221 = vpop.f32.mrb[0].mxu0
    %v2222 = vadd.f32 0.0, %v2221
    %v2223 = vpop.f32.mrb[0].mxu0
    %2224 = vdwg.mxu0
    %2225 = vrot.lane.b32.xlu0 %v1121, 48
    %v2226 = vpop.permute.xlu0 %2225
    %v2229 = vsel %vm1131, %v2148, 0
    %2231 = vmatprep.subr.mxu0 0.0
    %2232 = vmatpush1.msra.mxu0 %v2226
    %2233 = vmatprep.subr.mxu0 0.0
    %2234 = vmatpush1.msra.mxu0 0.0
    %2235 = vmatprep.subr.mxu0 0.0
    %2236 = vmatpush1.msra.mxu0 0.0
    %2237 = vmatprep.subr.mxu0 0.0
    %2238 = vmatpush1.msra.mxu0 0.0
    %2239 = vmatprep.subr.mxu0 0.0
    %2240 = vmatpush1.msra.mxu0 0.0
    %2241 = vmatprep.subr.mxu0 0.0
    %2242 = vmatpush1.msra.mxu0 0.0
    %2243 = vmatprep.subr.mxu0 0.0
    %2244 = vmatpush1.msra.mxu0 0.0
    %2245 = vmatprep.subr.mxu0 0.0
    %2246 = vmatpush1.msra.mxu0 0.0
    %2247 = vmatprep.subr.mxu0 0.0
    %2248 = vmatpush1.msra.mxu0 0.0
    %2249 = vmatprep.subr.mxu0 0.0
    %2250 = vmatpush1.msra.mxu0 0.0
    %2251 = vmatprep.subr.mxu0 0.0
    %2252 = vmatpush1.msra.mxu0 0.0
    %2253 = vmatprep.subr.mxu0 0.0
    %2254 = vmatpush1.msra.mxu0 0.0
    %2255 = vmatprep.subr.mxu0 0.0
    %2256 = vmatpush1.msra.mxu0 0.0
    %2257 = vmatprep.subr.mxu0 0.0
    %2258 = vmatpush1.msra.mxu0 0.0
    %2259 = vmatprep.subr.mxu0 0.0
    %2260 = vmatpush1.msra.mxu0 0.0
    %2261 = vmatprep.subr.mxu0 0.0
    %2262 = vmatpush1.msra.mxu0 0.0
    %2263 = vmatprep.subr.mxu0 0.0
    %2264 = vmatpush1.msra.mxu0 0.0
    %2265 = vmatprep.subr.mxu0 0.0
    %2266 = vmatpush1.msra.mxu0 0.0
    %2267 = vmatprep.subr.mxu0 0.0
    %2268 = vmatpush1.msra.mxu0 0.0
    %2269 = vmatprep.subr.mxu0 0.0
    %2270 = vmatpush1.msra.mxu0 0.0
    %2271 = vmatprep.subr.mxu0 0.0
    %2272 = vmatpush1.msra.mxu0 0.0
    %2273 = vmatprep.subr.mxu0 0.0
    %2274 = vmatpush1.msra.mxu0 0.0
    %2275 = vmatprep.subr.mxu0 0.0
    %2276 = vmatpush1.msra.mxu0 0.0
    %2277 = vmatprep.subr.mxu0 0.0
    %2278 = vmatpush1.msra.mxu0 0.0
    %2279 = vmatprep.subr.mxu0 0.0
    %2280 = vmatpush1.msra.mxu0 0.0
    %2281 = vmatprep.subr.mxu0 0.0
    %2282 = vmatpush1.msra.mxu0 0.0
    %2283 = vmatprep.subr.mxu0 0.0
    %2284 = vmatpush1.msra.mxu0 0.0
    %2285 = vmatprep.subr.mxu0 0.0
    %2286 = vmatpush1.msra.mxu0 0.0
    %2287 = vmatprep.subr.mxu0 0.0
    %2288 = vmatpush1.msra.mxu0 0.0
    %2289 = vmatprep.subr.mxu0 0.0
    %2290 = vmatpush1.msra.mxu0 0.0
    %2291 = vmatprep.subr.mxu0 0.0
    %2292 = vmatpush1.msra.mxu0 0.0
    %2293 = vmatprep.subr.mxu0 0.0
    %2294 = vmatpush1.msra.mxu0 0.0
    %2295 = vmatprep.mubr.f32.mxu0 0.0
    %2296 = vmatmul.mubr.f32.gmra.mrb[0].mxu0 %v2229
    %v2297 = vpop.f32.mrb[0].mxu0
    %v2298 = vadd.f32 0.0, %v2297
    %v2299 = vpop.f32.mrb[0].mxu0
    %2300 = vdwg.mxu0
    %v2302 = vsel %vm1131, %v2222, 0
    %v2305 = vsel %vm1131, %v2298, 0
    %2307 = vmatprep.subr.mxu0 0.0
    %2308 = vmatpush1.msra.mxu0 %v1126
    %2309 = vmatprep.subr.mxu0 0.0
    %2310 = vmatpush1.msra.mxu0 0.0
    %2311 = vmatprep.subr.mxu0 0.0
    %2312 = vmatpush1.msra.mxu0 0.0
    %2313 = vmatprep.subr.mxu0 0.0
    %2314 = vmatpush1.msra.mxu0 0.0
    %2315 = vmatprep.subr.mxu0 0.0
    %2316 = vmatpush1.msra.mxu0 0.0
    %2317 = vmatprep.subr.mxu0 0.0
    %2318 = vmatpush1.msra.mxu0 0.0
    %2319 = vmatprep.subr.mxu0 0.0
    %2320 = vmatpush1.msra.mxu0 0.0
    %2321 = vmatprep.subr.mxu0 0.0
    %2322 = vmatpush1.msra.mxu0 0.0
    %2323 = vmatprep.subr.mxu0 0.0
    %2324 = vmatpush1.msra.mxu0 0.0
    %2325 = vmatprep.subr.mxu0 0.0
    %2326 = vmatpush1.msra.mxu0 0.0
    %2327 = vmatprep.subr.mxu0 0.0
    %2328 = vmatpush1.msra.mxu0 0.0
    %2329 = vmatprep.subr.mxu0 0.0
    %2330 = vmatpush1.msra.mxu0 0.0
    %2331 = vmatprep.subr.mxu0 0.0
    %2332 = vmatpush1.msra.mxu0 0.0
    %2333 = vmatprep.subr.mxu0 0.0
    %2334 = vmatpush1.msra.mxu0 0.0
    %2335 = vmatprep.subr.mxu0 0.0
    %2336 = vmatpush1.msra.mxu0 0.0
    %2337 = vmatprep.subr.mxu0 0.0
    %2338 = vmatpush1.msra.mxu0 0.0
    %2339 = vmatprep.subr.mxu0 0.0
    %2340 = vmatpush1.msra.mxu0 0.0
    %2341 = vmatprep.subr.mxu0 0.0
    %2342 = vmatpush1.msra.mxu0 0.0
    %2343 = vmatprep.subr.mxu0 0.0
    %2344 = vmatpush1.msra.mxu0 0.0
    %2345 = vmatprep.subr.mxu0 0.0
    %2346 = vmatpush1.msra.mxu0 0.0
    %2347 = vmatprep.subr.mxu0 0.0
    %2348 = vmatpush1.msra.mxu0 0.0
    %2349 = vmatprep.subr.mxu0 0.0
    %2350 = vmatpush1.msra.mxu0 0.0
    %2351 = vmatprep.subr.mxu0 0.0
    %2352 = vmatpush1.msra.mxu0 0.0
    %2353 = vmatprep.subr.mxu0 0.0
    %2354 = vmatpush1.msra.mxu0 0.0
    %2355 = vmatprep.subr.mxu0 0.0
    %2356 = vmatpush1.msra.mxu0 0.0
    %2357 = vmatprep.subr.mxu0 0.0
    %2358 = vmatpush1.msra.mxu0 0.0
    %2359 = vmatprep.subr.mxu0 0.0
    %2360 = vmatpush1.msra.mxu0 0.0
    %2361 = vmatprep.subr.mxu0 0.0
    %2362 = vmatpush1.msra.mxu0 0.0
    %2363 = vmatprep.subr.mxu0 0.0
    %2364 = vmatpush1.msra.mxu0 0.0
    %2365 = vmatprep.subr.mxu0 0.0
    %2366 = vmatpush1.msra.mxu0 0.0
    %2367 = vmatprep.subr.mxu0 0.0
    %2368 = vmatpush1.msra.mxu0 0.0
    %2369 = vmatprep.subr.mxu0 0.0
    %2370 = vmatpush1.msra.mxu0 0.0
    %2371 = vmatprep.mubr.f32.mxu0 0.0
    %2372 = vmatmul.mubr.f32.gmra.mrb[0].mxu0 %v2302
    %v2373 = vpop.f32.mrb[0].mxu0
    %v2374 = vadd.f32 0.0, %v2373
    %v2375 = vpop.f32.mrb[0].mxu0
    %2376 = vmatprep.mubr.f32.mxu0 0.0
    %2377 = vmatmul.mubr.f32.gmra.mrb[0].mxu0 %v2305
    %v2378 = vpop.f32.mrb[0].mxu0
    %v2379 = vadd.f32 0.0, %v2378
    %v2380 = vpop.f32.mrb[0].mxu0
    %2381 = vdwg.mxu0
    %v2382 = vadd.f32 %v1959, %v2374
    %v2383 = vadd.f32 %v1964, %v2379
    %2384 = vrot.lane.b32.xlu0 %v1116, 104
    %v2385 = vpop.permute.xlu0 %2384
    %2386 = vrot.lane.b32.xlu0 %v1116, 72
    %v2387 = vpop.permute.xlu0 %2386
    %v2388 = vsel %vm1131, %v2385, 0
    %v2390 = vsel %vm1131, %v2387, 0
    %2392 = vmatprep.subr.mxu0 0.0
    %2393 = vmatpush1.xpose.msra.mxu0 %v2390
    %2394 = vmatprep.subr.mxu0 0.0
    %2395 = vmatpush1.xpose.msra.mxu0 0.0
    %2396 = vmatprep.subr.mxu0 0.0
    %2397 = vmatpush1.xpose.msra.mxu0 0.0
    %2398 = vmatprep.subr.mxu0 0.0
    %2399 = vmatpush1.xpose.msra.mxu0 0.0
    %2400 = vmatprep.subr.mxu0 0.0
    %2401 = vmatpush1.xpose.msra.mxu0 0.0
    %2402 = vmatprep.subr.mxu0 0.0
    %2403 = vmatpush1.xpose.msra.mxu0 0.0
    %2404 = vmatprep.subr.mxu0 0.0
    %2405 = vmatpush1.xpose.msra.mxu0 0.0
    %2406 = vmatprep.subr.mxu0 0.0
    %2407 = vmatpush1.xpose.msra.mxu0 0.0
    %2408 = vmatprep.subr.mxu0 0.0
    %2409 = vmatpush1.xpose.msra.mxu0 0.0
    %2410 = vmatprep.subr.mxu0 0.0
    %2411 = vmatpush1.xpose.msra.mxu0 0.0
    %2412 = vmatprep.subr.mxu0 0.0
    %2413 = vmatpush1.xpose.msra.mxu0 0.0
    %2414 = vmatprep.subr.mxu0 0.0
    %2415 = vmatpush1.xpose.msra.mxu0 0.0
    %2416 = vmatprep.subr.mxu0 0.0
    %2417 = vmatpush1.xpose.msra.mxu0 0.0
    %2418 = vmatprep.subr.mxu0 0.0
    %2419 = vmatpush1.xpose.msra.mxu0 0.0
    %2420 = vmatprep.subr.mxu0 0.0
    %2421 = vmatpush1.xpose.msra.mxu0 0.0
    %2422 = vmatprep.subr.mxu0 0.0
    %2423 = vmatpush1.xpose.msra.mxu0 0.0
    %2424 = vmatprep.subr.mxu0 0.0
    %2425 = vmatpush1.xpose.msra.mxu0 0.0
    %2426 = vmatprep.subr.mxu0 0.0
    %2427 = vmatpush1.xpose.msra.mxu0 0.0
    %2428 = vmatprep.subr.mxu0 0.0
    %2429 = vmatpush1.xpose.msra.mxu0 0.0
    %2430 = vmatprep.subr.mxu0 0.0
    %2431 = vmatpush1.xpose.msra.mxu0 0.0
    %2432 = vmatprep.subr.mxu0 0.0
    %2433 = vmatpush1.xpose.msra.mxu0 0.0
    %2434 = vmatprep.subr.mxu0 0.0
    %2435 = vmatpush1.xpose.msra.mxu0 0.0
    %2436 = vmatprep.subr.mxu0 0.0
    %2437 = vmatpush1.xpose.msra.mxu0 0.0
    %2438 = vmatprep.subr.mxu0 0.0
    %2439 = vmatpush1.xpose.msra.mxu0 0.0
    %2440 = vmatprep.subr.mxu0 0.0
    %2441 = vmatpush1.xpose.msra.mxu0 0.0
    %2442 = vmatprep.subr.mxu0 0.0
    %2443 = vmatpush1.xpose.msra.mxu0 0.0
    %2444 = vmatprep.subr.mxu0 0.0
    %2445 = vmatpush1.xpose.msra.mxu0 0.0
    %2446 = vmatprep.subr.mxu0 0.0
    %2447 = vmatpush1.xpose.msra.mxu0 0.0
    %2448 = vmatprep.subr.mxu0 0.0
    %2449 = vmatpush1.xpose.msra.mxu0 0.0
    %2450 = vmatprep.subr.mxu0 0.0
    %2451 = vmatpush1.xpose.msra.mxu0 0.0
    %2452 = vmatprep.subr.mxu0 0.0
    %2453 = vmatpush1.xpose.msra.mxu0 0.0
    %2454 = vmatprep.subr.mxu0 0.0
    %2455 = vmatpush1.xpose.msra.mxu0 0.0
    %2456 = vmatprep.mubr.f32.mxu0 0.0
    %2457 = vmatmul.mubr.f32.gmra.mrb[0].mxu0 %v2388
    %v2458 = vpop.f32.mrb[0].mxu0
    %v2459 = vadd.f32 0.0, %v2458
    %v2460 = vpop.f32.mrb[0].mxu0
    %2461 = vdwg.mxu0
    %2462 = vrot.lane.b32.xlu0 %v1121, 104
    %v2463 = vpop.permute.xlu0 %2462
    %2464 = vrot.lane.b32.xlu0 %v1121, 72
    %v2465 = vpop.permute.xlu0 %2464
    %v2466 = vsel %vm1131, %v2463, 0
    %v2468 = vsel %vm1131, %v2465, 0
    %2470 = vmatprep.subr.mxu0 0.0
    %2471 = vmatpush1.xpose.msra.mxu0 %v2468
    %2472 = vmatprep.subr.mxu0 0.0
    %2473 = vmatpush1.xpose.msra.mxu0 0.0
    %2474 = vmatprep.subr.mxu0 0.0
    %2475 = vmatpush1.xpose.msra.mxu0 0.0
    %2476 = vmatprep.subr.mxu0 0.0
    %2477 = vmatpush1.xpose.msra.mxu0 0.0
    %2478 = vmatprep.subr.mxu0 0.0
    %2479 = vmatpush1.xpose.msra.mxu0 0.0
    %2480 = vmatprep.subr.mxu0 0.0
    %2481 = vmatpush1.xpose.msra.mxu0 0.0
    %2482 = vmatprep.subr.mxu0 0.0
    %2483 = vmatpush1.xpose.msra.mxu0 0.0
    %2484 = vmatprep.subr.mxu0 0.0
    %2485 = vmatpush1.xpose.msra.mxu0 0.0
    %2486 = vmatprep.subr.mxu0 0.0
    %2487 = vmatpush1.xpose.msra.mxu0 0.0
    %2488 = vmatprep.subr.mxu0 0.0
    %2489 = vmatpush1.xpose.msra.mxu0 0.0
    %2490 = vmatprep.subr.mxu0 0.0
    %2491 = vmatpush1.xpose.msra.mxu0 0.0
    %2492 = vmatprep.subr.mxu0 0.0
    %2493 = vmatpush1.xpose.msra.mxu0 0.0
    %2494 = vmatprep.subr.mxu0 0.0
    %2495 = vmatpush1.xpose.msra.mxu0 0.0
    %2496 = vmatprep.subr.mxu0 0.0
    %2497 = vmatpush1.xpose.msra.mxu0 0.0
    %2498 = vmatprep.subr.mxu0 0.0
    %2499 = vmatpush1.xpose.msra.mxu0 0.0
    %2500 = vmatprep.subr.mxu0 0.0
    %2501 = vmatpush1.xpose.msra.mxu0 0.0
    %2502 = vmatprep.subr.mxu0 0.0
    %2503 = vmatpush1.xpose.msra.mxu0 0.0
    %2504 = vmatprep.subr.mxu0 0.0
    %2505 = vmatpush1.xpose.msra.mxu0 0.0
    %2506 = vmatprep.subr.mxu0 0.0
    %2507 = vmatpush1.xpose.msra.mxu0 0.0
    %2508 = vmatprep.subr.mxu0 0.0
    %2509 = vmatpush1.xpose.msra.mxu0 0.0
    %2510 = vmatprep.subr.mxu0 0.0
    %2511 = vmatpush1.xpose.msra.mxu0 0.0
    %2512 = vmatprep.subr.mxu0 0.0
    %2513 = vmatpush1.xpose.msra.mxu0 0.0
    %2514 = vmatprep.subr.mxu0 0.0
    %2515 = vmatpush1.xpose.msra.mxu0 0.0
    %2516 = vmatprep.subr.mxu0 0.0
    %2517 = vmatpush1.xpose.msra.mxu0 0.0
    %2518 = vmatprep.subr.mxu0 0.0
    %2519 = vmatpush1.xpose.msra.mxu0 0.0
    %2520 = vmatprep.subr.mxu0 0.0
    %2521 = vmatpush1.xpose.msra.mxu0 0.0
    %2522 = vmatprep.subr.mxu0 0.0
    %2523 = vmatpush1.xpose.msra.mxu0 0.0
    %2524 = vmatprep.subr.mxu0 0.0
    %2525 = vmatpush1.xpose.msra.mxu0 0.0
    %2526 = vmatprep.subr.mxu0 0.0
    %2527 = vmatpush1.xpose.msra.mxu0 0.0
    %2528 = vmatprep.subr.mxu0 0.0
    %2529 = vmatpush1.xpose.msra.mxu0 0.0
    %2530 = vmatprep.subr.mxu0 0.0
    %2531 = vmatpush1.xpose.msra.mxu0 0.0
    %2532 = vmatprep.subr.mxu0 0.0
    %2533 = vmatpush1.xpose.msra.mxu0 0.0
    %2534 = vmatprep.mubr.f32.mxu0 0.0
    %2535 = vmatmul.mubr.f32.gmra.mrb[0].mxu0 %v2466
    %v2536 = vpop.f32.mrb[0].mxu0
    %v2537 = vadd.f32 0.0, %v2536
    %v2538 = vpop.f32.mrb[0].mxu0
    %2539 = vdwg.mxu0
    %v2540 = vmul.f32 %v2459, 0.35355338
    %v2541 = vmul.f32 %v2537, 0.35355338
    %v2542 = vadd.f32 %v2540, %v1288
    %v2543 = vadd.f32 %v2541, %v1292
    %v2544 = vsel %vm1131, %v2542, -inf
    %2545 = vmax.xlane.f32.xlu0 %v2544
    %v2546 = vpop.xlane.xlu0 %2545
    %v2547 = vsel %vm1131, %v2543, -inf
    %2548 = vmax.xlane.f32.xlu0 %v2547
    %v2549 = vpop.xlane.xlu0 %2548
    %v2550 = vsub.f32 %v2542, %v2546
    %v2551 = vsub.f32 %v2543, %v2549
    %v2552 = vmul.f32 %v2550, 1.442695
    %v2553 = vpow.pop %v2552
    %v2554 = vmul.f32 %v2551, 1.442695
    %v2555 = vpow.pop %v2554
    %v2556 = vsel %vm1131, %v2553, 0.0
    %2557 = vadd.xlane.f32.xlu0 %v2556
    %v2558 = vpop.xlane.xlu0 %2557
    %v2559 = vsel %vm1131, %v2555, 0.0
    %2560 = vadd.xlane.f32.xlu0 %v2559
    %v2561 = vpop.xlane.xlu0 %2560
    %v2562 = vrcp.pop %v2558
    %v2563 = vmul.f32 %v2553, %v2562
    %v2564 = vrcp.pop %v2561
    %v2565 = vmul.f32 %v2555, %v2564
    %2566 = vrot.lane.b32.xlu0 %v1116, 40
    %v2567 = vpop.permute.xlu0 %2566
    %v2570 = vsel %vm1131, %v2563, 0
    %2572 = vmatprep.subr.mxu0 0.0
    %2573 = vmatpush1.msra.mxu0 %v2567
    %2574 = vmatprep.subr.mxu0 0.0
    %2575 = vmatpush1.msra.mxu0 0.0
    %2576 = vmatprep.subr.mxu0 0.0
    %2577 = vmatpush1.msra.mxu0 0.0
    %2578 = vmatprep.subr.mxu0 0.0
    %2579 = vmatpush1.msra.mxu0 0.0
    %2580 = vmatprep.subr.mxu0 0.0
    %2581 = vmatpush1.msra.mxu0 0.0
    %2582 = vmatprep.subr.mxu0 0.0
    %2583 = vmatpush1.msra.mxu0 0.0
    %2584 = vmatprep.subr.mxu0 0.0
    %2585 = vmatpush1.msra.mxu0 0.0
    %2586 = vmatprep.subr.mxu0 0.0
    %2587 = vmatpush1.msra.mxu0 0.0
    %2588 = vmatprep.subr.mxu0 0.0
    %2589 = vmatpush1.msra.mxu0 0.0
    %2590 = vmatprep.subr.mxu0 0.0
    %2591 = vmatpush1.msra.mxu0 0.0
    %2592 = vmatprep.subr.mxu0 0.0
    %2593 = vmatpush1.msra.mxu0 0.0
    %2594 = vmatprep.subr.mxu0 0.0
    %2595 = vmatpush1.msra.mxu0 0.0
    %2596 = vmatprep.subr.mxu0 0.0
    %2597 = vmatpush1.msra.mxu0 0.0
    %2598 = vmatprep.subr.mxu0 0.0
    %2599 = vmatpush1.msra.mxu0 0.0
    %2600 = vmatprep.subr.mxu0 0.0
    %2601 = vmatpush1.msra.mxu0 0.0
    %2602 = vmatprep.subr.mxu0 0.0
    %2603 = vmatpush1.msra.mxu0 0.0
    %2604 = vmatprep.subr.mxu0 0.0
    %2605 = vmatpush1.msra.mxu0 0.0
    %2606 = vmatprep.subr.mxu0 0.0
    %2607 = vmatpush1.msra.mxu0 0.0
    %2608 = vmatprep.subr.mxu0 0.0
    %2609 = vmatpush1.msra.mxu0 0.0
    %2610 = vmatprep.subr.mxu0 0.0
    %2611 = vmatpush1.msra.mxu0 0.0
    %2612 = vmatprep.subr.mxu0 0.0
    %2613 = vmatpush1.msra.mxu0 0.0
    %2614 = vmatprep.subr.mxu0 0.0
    %2615 = vmatpush1.msra.mxu0 0.0
    %2616 = vmatprep.subr.mxu0 0.0
    %2617 = vmatpush1.msra.mxu0 0.0
    %2618 = vmatprep.subr.mxu0 0.0
    %2619 = vmatpush1.msra.mxu0 0.0
    %2620 = vmatprep.subr.mxu0 0.0
    %2621 = vmatpush1.msra.mxu0 0.0
    %2622 = vmatprep.subr.mxu0 0.0
    %2623 = vmatpush1.msra.mxu0 0.0
    %2624 = vmatprep.subr.mxu0 0.0
    %2625 = vmatpush1.msra.mxu0 0.0
    %2626 = vmatprep.subr.mxu0 0.0
    %2627 = vmatpush1.msra.mxu0 0.0
    %2628 = vmatprep.subr.mxu0 0.0
    %2629 = vmatpush1.msra.mxu0 0.0
    %2630 = vmatprep.subr.mxu0 0.0
    %2631 = vmatpush1.msra.mxu0 0.0
    %2632 = vmatprep.subr.mxu0 0.0
    %2633 = vmatpush1.msra.mxu0 0.0
    %2634 = vmatprep.subr.mxu0 0.0
    %2635 = vmatpush1.msra.mxu0 0.0
    %2636 = vmatprep.mubr.f32.mxu0 0.0
    %2637 = vmatmul.mubr.f32.gmra.mrb[0].mxu0 %v2570
    %v2638 = vpop.f32.mrb[0].mxu0
    %v2639 = vadd.f32 0.0, %v2638
    %v2640 = vpop.f32.mrb[0].mxu0
    %2641 = vdwg.mxu0
    %2642 = vrot.lane.b32.xlu0 %v1121, 40
    %v2643 = vpop.permute.xlu0 %2642
    %v2646 = vsel %vm1131, %v2565, 0
    %2648 = vmatprep.subr.mxu0 0.0
    %2649 = vmatpush1.msra.mxu0 %v2643
    %2650 = vmatprep.subr.mxu0 0.0
    %2651 = vmatpush1.msra.mxu0 0.0
    %2652 = vmatprep.subr.mxu0 0.0
    %2653 = vmatpush1.msra.mxu0 0.0
    %2654 = vmatprep.subr.mxu0 0.0
    %2655 = vmatpush1.msra.mxu0 0.0
    %2656 = vmatprep.subr.mxu0 0.0
    %2657 = vmatpush1.msra.mxu0 0.0
    %2658 = vmatprep.subr.mxu0 0.0
    %2659 = vmatpush1.msra.mxu0 0.0
    %2660 = vmatprep.subr.mxu0 0.0
    %2661 = vmatpush1.msra.mxu0 0.0
    %2662 = vmatprep.subr.mxu0 0.0
    %2663 = vmatpush1.msra.mxu0 0.0
    %2664 = vmatprep.subr.mxu0 0.0
    %2665 = vmatpush1.msra.mxu0 0.0
    %2666 = vmatprep.subr.mxu0 0.0
    %2667 = vmatpush1.msra.mxu0 0.0
    %2668 = vmatprep.subr.mxu0 0.0
    %2669 = vmatpush1.msra.mxu0 0.0
    %2670 = vmatprep.subr.mxu0 0.0
    %2671 = vmatpush1.msra.mxu0 0.0
    %2672 = vmatprep.subr.mxu0 0.0
    %2673 = vmatpush1.msra.mxu0 0.0
    %2674 = vmatprep.subr.mxu0 0.0
    %2675 = vmatpush1.msra.mxu0 0.0
    %2676 = vmatprep.subr.mxu0 0.0
    %2677 = vmatpush1.msra.mxu0 0.0
    %2678 = vmatprep.subr.mxu0 0.0
    %2679 = vmatpush1.msra.mxu0 0.0
    %2680 = vmatprep.subr.mxu0 0.0
    %2681 = vmatpush1.msra.mxu0 0.0
    %2682 = vmatprep.subr.mxu0 0.0
    %2683 = vmatpush1.msra.mxu0 0.0
    %2684 = vmatprep.subr.mxu0 0.0
    %2685 = vmatpush1.msra.mxu0 0.0
    %2686 = vmatprep.subr.mxu0 0.0
    %2687 = vmatpush1.msra.mxu0 0.0
    %2688 = vmatprep.subr.mxu0 0.0
    %2689 = vmatpush1.msra.mxu0 0.0
    %2690 = vmatprep.subr.mxu0 0.0
    %2691 = vmatpush1.msra.mxu0 0.0
    %2692 = vmatprep.subr.mxu0 0.0
    %2693 = vmatpush1.msra.mxu0 0.0
    %2694 = vmatprep.subr.mxu0 0.0
    %2695 = vmatpush1.msra.mxu0 0.0
    %2696 = vmatprep.subr.mxu0 0.0
    %2697 = vmatpush1.msra.mxu0 0.0
    %2698 = vmatprep.subr.mxu0 0.0
    %2699 = vmatpush1.msra.mxu0 0.0
    %2700 = vmatprep.subr.mxu0 0.0
    %2701 = vmatpush1.msra.mxu0 0.0
    %2702 = vmatprep.subr.mxu0 0.0
    %2703 = vmatpush1.msra.mxu0 0.0
    %2704 = vmatprep.subr.mxu0 0.0
    %2705 = vmatpush1.msra.mxu0 0.0
    %2706 = vmatprep.subr.mxu0 0.0
    %2707 = vmatpush1.msra.mxu0 0.0
    %2708 = vmatprep.subr.mxu0 0.0
    %2709 = vmatpush1.msra.mxu0 0.0
    %2710 = vmatprep.subr.mxu0 0.0
    %2711 = vmatpush1.msra.mxu0 0.0
    %2712 = vmatprep.mubr.f32.mxu0 0.0
    %2713 = vmatmul.mubr.f32.gmra.mrb[0].mxu0 %v2646
    %v2714 = vpop.f32.mrb[0].mxu0
    %v2715 = vadd.f32 0.0, %v2714
    %v2716 = vpop.f32.mrb[0].mxu0
    %2717 = vdwg.mxu0
    %v2719 = vsel %vm1131, %v2639, 0
    %v2722 = vsel %vm1131, %v2715, 0
    %2724 = vmatprep.subr.mxu0 0.0
    %2725 = vmatpush1.msra.mxu0 %v1127
    %2726 = vmatprep.subr.mxu0 0.0
    %2727 = vmatpush1.msra.mxu0 0.0
    %2728 = vmatprep.subr.mxu0 0.0
    %2729 = vmatpush1.msra.mxu0 0.0
    %2730 = vmatprep.subr.mxu0 0.0
    %2731 = vmatpush1.msra.mxu0 0.0
    %2732 = vmatprep.subr.mxu0 0.0
    %2733 = vmatpush1.msra.mxu0 0.0
    %2734 = vmatprep.subr.mxu0 0.0
    %2735 = vmatpush1.msra.mxu0 0.0
    %2736 = vmatprep.subr.mxu0 0.0
    %2737 = vmatpush1.msra.mxu0 0.0
    %2738 = vmatprep.subr.mxu0 0.0
    %2739 = vmatpush1.msra.mxu0 0.0
    %2740 = vmatprep.subr.mxu0 0.0
    %2741 = vmatpush1.msra.mxu0 0.0
    %2742 = vmatprep.subr.mxu0 0.0
    %2743 = vmatpush1.msra.mxu0 0.0
    %2744 = vmatprep.subr.mxu0 0.0
    %2745 = vmatpush1.msra.mxu0 0.0
    %2746 = vmatprep.subr.mxu0 0.0
    %2747 = vmatpush1.msra.mxu0 0.0
    %2748 = vmatprep.subr.mxu0 0.0
    %2749 = vmatpush1.msra.mxu0 0.0
    %2750 = vmatprep.subr.mxu0 0.0
    %2751 = vmatpush1.msra.mxu0 0.0
    %2752 = vmatprep.subr.mxu0 0.0
    %2753 = vmatpush1.msra.mxu0 0.0
    %2754 = vmatprep.subr.mxu0 0.0
    %2755 = vmatpush1.msra.mxu0 0.0
    %2756 = vmatprep.subr.mxu0 0.0
    %2757 = vmatpush1.msra.mxu0 0.0
    %2758 = vmatprep.subr.mxu0 0.0
    %2759 = vmatpush1.msra.mxu0 0.0
    %2760 = vmatprep.subr.mxu0 0.0
    %2761 = vmatpush1.msra.mxu0 0.0
    %2762 = vmatprep.subr.mxu0 0.0
    %2763 = vmatpush1.msra.mxu0 0.0
    %2764 = vmatprep.subr.mxu0 0.0
    %2765 = vmatpush1.msra.mxu0 0.0
    %2766 = vmatprep.subr.mxu0 0.0
    %2767 = vmatpush1.msra.mxu0 0.0
    %2768 = vmatprep.subr.mxu0 0.0
    %2769 = vmatpush1.msra.mxu0 0.0
    %2770 = vmatprep.subr.mxu0 0.0
    %2771 = vmatpush1.msra.mxu0 0.0
    %2772 = vmatprep.subr.mxu0 0.0
    %2773 = vmatpush1.msra.mxu0 0.0
    %2774 = vmatprep.subr.mxu0 0.0
    %2775 = vmatpush1.msra.mxu0 0.0
    %2776 = vmatprep.subr.mxu0 0.0
    %2777 = vmatpush1.msra.mxu0 0.0
    %2778 = vmatprep.subr.mxu0 0.0
    %2779 = vmatpush1.msra.mxu0 0.0
    %2780 = vmatprep.subr.mxu0 0.0
    %2781 = vmatpush1.msra.mxu0 0.0
    %2782 = vmatprep.subr.mxu0 0.0
    %2783 = vmatpush1.msra.mxu0 0.0
    %2784 = vmatprep.subr.mxu0 0.0
    %2785 = vmatpush1.msra.mxu0 0.0
    %2786 = vmatprep.subr.mxu0 0.0
    %2787 = vmatpush1.msra.mxu0 0.0
    %2788 = vmatprep.mubr.f32.mxu0 0.0
    %2789 = vmatmul.mubr.f32.gmra.mrb[0].mxu0 %v2719
    %v2790 = vpop.f32.mrb[0].mxu0
    %v2791 = vadd.f32 0.0, %v2790
    %v2792 = vpop.f32.mrb[0].mxu0
    %2793 = vmatprep.mubr.f32.mxu0 0.0
    %2794 = vmatmul.mubr.f32.gmra.mrb[0].mxu0 %v2722
    %v2795 = vpop.f32.mrb[0].mxu0
    %v2796 = vadd.f32 0.0, %v2795
    %v2797 = vpop.f32.mrb[0].mxu0
    %2798 = vdwg.mxu0
    %v2799 = vadd.f32 %v2382, %v2791
    %v2800 = vadd.f32 %v2383, %v2796
    %v2801 = vld [vmem:[#allocation31] sm:$0x1]
    %v2803 = vlaneseq
    %v2804 = vshrl.u32 %v2803, 7
    %v2805 = vsub.s32 0, %v2804
    %v2806 = vrot.slane %v2801, %v2805
    %v2808 = vadd.f32 %v2799, %v2806
    %v2809 = vadd.f32 %v2800, %v2806
    %v2810 = vadd.f32 %v2808, %v1030
    %v2811 = vadd.f32 %v2809, %v1031
    %v2812 = vld [vmem:[%s43] sm:$0x1]
    %v2813 = vld [vmem:[%s45] sm:$0x1]
    %v2814 = vsel %vm433, %v2810, 0.0
    %2815 = vadd.xlane.f32.xlu0 %v2814
    %v2816 = vpop.xlane.xlu0 %2815
    %v2817 = vsel %vm433, %v2811, 0.0
    %2818 = vadd.xlane.f32.xlu0 %v2817
    %v2819 = vpop.xlane.xlu0 %2818
    %v2820 = vrcp.pop 32.0
    %v2821 = vmul.f32 %v2816, %v2820
    %v2822 = vmul.f32 %v2819, %v2820
    %v2823 = vsub.f32 %v2810, %v2821
    %v2824 = vsub.f32 %v2811, %v2822
    %v2825 = vmul.f32 %v2823, %v2823
    %v2826 = vmul.f32 %v2824, %v2824
    %v2827 = vsel %vm433, %v2825, 0.0
    %2828 = vadd.xlane.f32.xlu0 %v2827
    %v2829 = vpop.xlane.xlu0 %2828
    %v2830 = vsel %vm433, %v2826, 0.0
    %2831 = vadd.xlane.f32.xlu0 %v2830
    %v2832 = vpop.xlane.xlu0 %2831
    %v2833 = vmul.f32 %v2829, %v2820
    %v2834 = vmul.f32 %v2832, %v2820
    %v2835 = vadd.f32 %v2833, 1e-12
    %v2836 = vadd.f32 %v2834, 1e-12
    %v2837 = vrsqrt.pop %v2835
    %v2838 = vrsqrt.pop %v2836
    %v2839 = vmul.f32 %v2823, %v2837
    %v2840 = vmul.f32 %v2824, %v2838
    %v2842 = vlaneseq
    %v2843 = vshrl.u32 %v2842, 7
    %v2844 = vsub.s32 0, %v2843
    %v2845 = vrot.slane %v2812, %v2844
    %v2847 = vmul.f32 %v2839, %v2845
    %v2848 = vmul.f32 %v2840, %v2845
    %v2850 = vlaneseq
    %v2851 = vshrl.u32 %v2850, 7
    %v2852 = vsub.s32 0, %v2851
    %v2853 = vrot.slane %v2813, %v2852
    %v2855 = vadd.f32 %v2847, %v2853
    %v2856 = vadd.f32 %v2848, %v2853
    %v2857 = vld [vmem:[#allocation32] sm:$0xff]
    %v2858 = vld [vmem:[#allocation32 + $0x8] sm:$0xff]
    %v2859 = vld [vmem:[#allocation32 + $0x10] sm:$0xff]
    %v2860 = vld [vmem:[#allocation32 + $0x18] sm:$0xff]
    %v2861 = vld [vmem:[#allocation34] sm:$0x1]
    %v2863 = vlaneseq
    %v2864 = vshrl.u32 %v2863, 7
    %v2865 = vsub.s32 0, %v2864
    %v2866 = vrot.slane %v2861, %v2865
    %v2869 = vsel %vm433, %v2855, 0
    %v2872 = vsel %vm433, %v2856, 0
    %2874 = vmatprep.subr.mxu0 0.0
    %2875 = vmatpush1.msra.mxu0 %v2857
    %2876 = vmatprep.subr.mxu0 0.0
    %2877 = vmatpush1.msra.mxu0 %v2858
    %2878 = vmatprep.subr.mxu0 0.0
    %2879 = vmatpush1.msra.mxu0 %v2859
    %2880 = vmatprep.subr.mxu0 0.0
    %2881 = vmatpush1.msra.mxu0 %v2860
    %2882 = vmatprep.subr.mxu0 0.0
    %2883 = vmatpush1.msra.mxu0 0.0
    %2884 = vmatprep.subr.mxu0 0.0
    %2885 = vmatpush1.msra.mxu0 0.0
    %2886 = vmatprep.subr.mxu0 0.0
    %2887 = vmatpush1.msra.mxu0 0.0
    %2888 = vmatprep.subr.mxu0 0.0
    %2889 = vmatpush1.msra.mxu0 0.0
    %2890 = vmatprep.subr.mxu0 0.0
    %2891 = vmatpush1.msra.mxu0 0.0
    %2892 = vmatprep.subr.mxu0 0.0
    %2893 = vmatpush1.msra.mxu0 0.0
    %2894 = vmatprep.subr.mxu0 0.0
    %2895 = vmatpush1.msra.mxu0 0.0
    %2896 = vmatprep.subr.mxu0 0.0
    %2897 = vmatpush1.msra.mxu0 0.0
    %2898 = vmatprep.subr.mxu0 0.0
    %2899 = vmatpush1.msra.mxu0 0.0
    %2900 = vmatprep.subr.mxu0 0.0
    %2901 = vmatpush1.msra.mxu0 0.0
    %2902 = vmatprep.subr.mxu0 0.0
    %2903 = vmatpush1.msra.mxu0 0.0
    %2904 = vmatprep.subr.mxu0 0.0
    %2905 = vmatpush1.msra.mxu0 0.0
    %2906 = vmatprep.subr.mxu0 0.0
    %2907 = vmatpush1.msra.mxu0 0.0
    %2908 = vmatprep.subr.mxu0 0.0
    %2909 = vmatpush1.msra.mxu0 0.0
    %2910 = vmatprep.subr.mxu0 0.0
    %2911 = vmatpush1.msra.mxu0 0.0
    %2912 = vmatprep.subr.mxu0 0.0
    %2913 = vmatpush1.msra.mxu0 0.0
    %2914 = vmatprep.subr.mxu0 0.0
    %2915 = vmatpush1.msra.mxu0 0.0
    %2916 = vmatprep.subr.mxu0 0.0
    %2917 = vmatpush1.msra.mxu0 0.0
    %2918 = vmatprep.subr.mxu0 0.0
    %2919 = vmatpush1.msra.mxu0 0.0
    %2920 = vmatprep.subr.mxu0 0.0
    %2921 = vmatpush1.msra.mxu0 0.0
    %2922 = vmatprep.subr.mxu0 0.0
    %2923 = vmatpush1.msra.mxu0 0.0
    %2924 = vmatprep.subr.mxu0 0.0
    %2925 = vmatpush1.msra.mxu0 0.0
    %2926 = vmatprep.subr.mxu0 0.0
    %2927 = vmatpush1.msra.mxu0 0.0
    %2928 = vmatprep.subr.mxu0 0.0
    %2929 = vmatpush1.msra.mxu0 0.0
    %2930 = vmatprep.subr.mxu0 0.0
    %2931 = vmatpush1.msra.mxu0 0.0
    %2932 = vmatprep.subr.mxu0 0.0
    %2933 = vmatpush1.msra.mxu0 0.0
    %2934 = vmatprep.subr.mxu0 0.0
    %2935 = vmatpush1.msra.mxu0 0.0
    %2936 = vmatprep.subr.mxu0 0.0
    %2937 = vmatpush1.msra.mxu0 0.0
    %2938 = vmatprep.mubr.f32.mxu0 0.0
    %2939 = vmatmul.mubr.f32.gmra.mrb[0].mxu0 %v2869
    %v2940 = vpop.f32.mrb[0].mxu0
    %v2941 = vadd.f32 %v2866, %v2940
    %v2942 = vpop.f32.mrb[0].mxu0
    %2943 = vmatprep.mubr.f32.mxu0 0.0
    %2944 = vmatmul.mubr.f32.gmra.mrb[0].mxu0 %v2872
    %v2945 = vpop.f32.mrb[0].mxu0
    %v2946 = vadd.f32 %v2866, %v2945
    %v2947 = vpop.f32.mrb[0].mxu0
    %2948 = vdwg.mxu0
    %v2949 = vmul.f32 %v2941, 0.5
    %v2950 = vmul.f32 %v2946, 0.5
    %v2951 = vmul.f32 %v2941, 0.70710677
    %v2952 = vmul.f32 %v2946, 0.70710677
    %v2953 = vand.u32 2147483647, %v2951
    %v2954 = vand.u32 2147483647, %v2952
    %v2955 = vmul.f32 %v2953, 0.3275911
    %v2956 = vmul.f32 %v2954, 0.3275911
    %v2957 = vadd.f32 %v2955, 1.0
    %v2958 = vadd.f32 %v2956, 1.0
    %v2959 = vrcp.pop %v2957
    %v2960 = vmul.f32 1.0, %v2959
    %v2961 = vrcp.pop %v2958
    %v2962 = vmul.f32 1.0, %v2961
    %v2963 = vmul.f32 %v2960, 1.0614054
    %v2964 = vmul.f32 %v2962, 1.0614054
    %v2965 = vadd.f32 %v2963, -1.4531521
    %v2966 = vadd.f32 %v2964, -1.4531521
    %v2967 = vmul.f32 %v2965, %v2960
    %v2968 = vmul.f32 %v2966, %v2962
    %v2969 = vadd.f32 %v2967, 1.4214138
    %v2970 = vadd.f32 %v2968, 1.4214138
    %v2971 = vmul.f32 %v2969, %v2960
    %v2972 = vmul.f32 %v2970, %v2962
    %v2973 = vadd.f32 %v2971, -0.28449672
    %v2974 = vadd.f32 %v2972, -0.28449672
    %v2975 = vmul.f32 %v2973, %v2960
    %v2976 = vmul.f32 %v2974, %v2962
    %v2977 = vadd.f32 %v2975, 0.2548296
    %v2978 = vadd.f32 %v2976, 0.2548296
    %v2979 = vmul.f32 %v2977, %v2960
    %v2980 = vmul.f32 %v2978, %v2962
    %v2981 = vsub.f32 0.0, %v2953
    %v2982 = vsub.f32 0.0, %v2954
    %v2983 = vmul.f32 %v2981, %v2953
    %v2984 = vmul.f32 %v2982, %v2954
    %v2985 = vmul.f32 %v2983, 1.442695
    %v2986 = vpow.pop %v2985
    %v2987 = vmul.f32 %v2984, 1.442695
    %v2988 = vpow.pop %v2987
    %v2989 = vmul.f32 %v2979, %v2986
    %v2990 = vmul.f32 %v2980, %v2988
    %v2991 = vsub.f32 1.0, %v2989
    %v2992 = vsub.f32 1.0, %v2990
    %vm2993 = vcmp.lt.f32.partialorder %v2951, 0.0
    %vm2994 = vcmp.lt.f32.partialorder %v2952, 0.0
    %v2995 = vsub.f32 0.0, %v2991
    %v2996 = vsub.f32 0.0, %v2992
    %v2997 = vsel %vm2993, %v2995, %v2991
    %v2998 = vsel %vm2994, %v2996, %v2992
    %v2999 = vadd.f32 %v2997, 1.0
    %v3000 = vadd.f32 %v2998, 1.0
    %v3001 = vmul.f32 %v2949, %v2999
    %v3002 = vmul.f32 %v2950, %v3000
    %v3003 = vld [vmem:[%s51] sm:$0xff]
    %v3004 = vld [vmem:[%s51 + $0x8] sm:$0xff]
    %v3005 = vld [vmem:[%s51 + $0x10] sm:$0xff]
    %v3006 = vld [vmem:[%s51 + $0x18] sm:$0xff]
    %v3007 = vld [vmem:[%s51 + $0x20] sm:$0xff]
    %v3008 = vld [vmem:[%s51 + $0x28] sm:$0xff]
    %v3009 = vld [vmem:[%s51 + $0x30] sm:$0xff]
    %v3010 = vld [vmem:[%s51 + $0x38] sm:$0xff]
    %v3011 = vld [vmem:[%s53] sm:$0x1]
    %v3013 = vlaneseq
    %v3014 = vshrl.u32 %v3013, 7
    %v3015 = vsub.s32 0, %v3014
    %v3016 = vrot.slane %v3011, %v3015
    %v3019 = vsel %vm529, %v3001, 0
    %v3022 = vsel %vm529, %v3002, 0
    %3024 = vmatprep.subr.mxu0 0.0
    %3025 = vmatpush1.msra.mxu0 %v3003
    %3026 = vmatprep.subr.mxu0 0.0
    %3027 = vmatpush1.msra.mxu0 %v3004
    %3028 = vmatprep.subr.mxu0 0.0
    %3029 = vmatpush1.msra.mxu0 %v3005
    %3030 = vmatprep.subr.mxu0 0.0
    %3031 = vmatpush1.msra.mxu0 %v3006
    %3032 = vmatprep.subr.mxu0 0.0
    %3033 = vmatpush1.msra.mxu0 %v3007
    %3034 = vmatprep.subr.mxu0 0.0
    %3035 = vmatpush1.msra.mxu0 %v3008
    %3036 = vmatprep.subr.mxu0 0.0
    %3037 = vmatpush1.msra.mxu0 %v3009
    %3038 = vmatprep.subr.mxu0 0.0
    %3039 = vmatpush1.msra.mxu0 %v3010
    %3040 = vmatprep.subr.mxu0 0.0
    %3041 = vmatpush1.msra.mxu0 0.0
    %3042 = vmatprep.subr.mxu0 0.0
    %3043 = vmatpush1.msra.mxu0 0.0
    %3044 = vmatprep.subr.mxu0 0.0
    %3045 = vmatpush1.msra.mxu0 0.0
    %3046 = vmatprep.subr.mxu0 0.0
    %3047 = vmatpush1.msra.mxu0 0.0
    %3048 = vmatprep.subr.mxu0 0.0
    %3049 = vmatpush1.msra.mxu0 0.0
    %3050 = vmatprep.subr.mxu0 0.0
    %3051 = vmatpush1.msra.mxu0 0.0
    %3052 = vmatprep.subr.mxu0 0.0
    %3053 = vmatpush1.msra.mxu0 0.0
    %3054 = vmatprep.subr.mxu0 0.0
    %3055 = vmatpush1.msra.mxu0 0.0
    %3056 = vmatprep.subr.mxu0 0.0
    %3057 = vmatpush1.msra.mxu0 0.0
    %3058 = vmatprep.subr.mxu0 0.0
    %3059 = vmatpush1.msra.mxu0 0.0
    %3060 = vmatprep.subr.mxu0 0.0
    %3061 = vmatpush1.msra.mxu0 0.0
    %3062 = vmatprep.subr.mxu0 0.0
    %3063 = vmatpush1.msra.mxu0 0.0
    %3064 = vmatprep.subr.mxu0 0.0
    %3065 = vmatpush1.msra.mxu0 0.0
    %3066 = vmatprep.subr.mxu0 0.0
    %3067 = vmatpush1.msra.mxu0 0.0
    %3068 = vmatprep.subr.mxu0 0.0
    %3069 = vmatpush1.msra.mxu0 0.0
    %3070 = vmatprep.subr.mxu0 0.0
    %3071 = vmatpush1.msra.mxu0 0.0
    %3072 = vmatprep.subr.mxu0 0.0
    %3073 = vmatpush1.msra.mxu0 0.0
    %3074 = vmatprep.subr.mxu0 0.0
    %3075 = vmatpush1.msra.mxu0 0.0
    %3076 = vmatprep.subr.mxu0 0.0
    %3077 = vmatpush1.msra.mxu0 0.0
    %3078 = vmatprep.subr.mxu0 0.0
    %3079 = vmatpush1.msra.mxu0 0.0
    %3080 = vmatprep.subr.mxu0 0.0
    %3081 = vmatpush1.msra.mxu0 0.0
    %3082 = vmatprep.subr.mxu0 0.0
    %3083 = vmatpush1.msra.mxu0 0.0
    %3084 = vmatprep.subr.mxu0 0.0
    %3085 = vmatpush1.msra.mxu0 0.0
    %3086 = vmatprep.subr.mxu0 0.0
    %3087 = vmatpush1.msra.mxu0 0.0
    %3088 = vmatprep.mubr.f32.mxu0 0.0
    %3089 = vmatmul.mubr.f32.gmra.mrb[0].mxu0 %v3019
    %v3090 = vpop.f32.mrb[0].mxu0
    %v3091 = vadd.f32 %v3016, %v3090
    %v3092 = vpop.f32.mrb[0].mxu0
    %3093 = vmatprep.mubr.f32.mxu0 0.0
    %3094 = vmatmul.mubr.f32.gmra.mrb[0].mxu0 %v3022
    %v3095 = vpop.f32.mrb[0].mxu0
    %v3096 = vadd.f32 %v3016, %v3095
    %v3097 = vpop.f32.mrb[0].mxu0
    %3098 = vdwg.mxu0
    %v3099 = vadd.f32 %v3091, %v2855
    %v3100 = vadd.f32 %v3096, %v2856
    %v3101 = vld [vmem:[%s55] sm:$0x1]
    %v3102 = vld [vmem:[%s57] sm:$0x1]
    %v3103 = vsel %vm433, %v3099, 0.0
    %3104 = vadd.xlane.f32.xlu0 %v3103
    %v3105 = vpop.xlane.xlu0 %3104
    %v3106 = vsel %vm433, %v3100, 0.0
    %3107 = vadd.xlane.f32.xlu0 %v3106
    %v3108 = vpop.xlane.xlu0 %3107
    %v3109 = vmul.f32 %v3105, %v2820
    %v3110 = vmul.f32 %v3108, %v2820
    %v3111 = vsub.f32 %v3099, %v3109
    %v3112 = vsub.f32 %v3100, %v3110
    %v3113 = vmul.f32 %v3111, %v3111
    %v3114 = vmul.f32 %v3112, %v3112
    %v3115 = vsel %vm433, %v3113, 0.0
    %3116 = vadd.xlane.f32.xlu0 %v3115
    %v3117 = vpop.xlane.xlu0 %3116
    %v3118 = vsel %vm433, %v3114, 0.0
    %3119 = vadd.xlane.f32.xlu0 %v3118
    %v3120 = vpop.xlane.xlu0 %3119
    %v3121 = vmul.f32 %v3117, %v2820
    %v3122 = vmul.f32 %v3120, %v2820
    %v3123 = vadd.f32 %v3121, 1e-12
    %v3124 = vadd.f32 %v3122, 1e-12
    %v3125 = vrsqrt.pop %v3123
    %v3126 = vrsqrt.pop %v3124
    %v3127 = vmul.f32 %v3111, %v3125
    %v3128 = vmul.f32 %v3112, %v3126
    %v3130 = vlaneseq
    %v3131 = vshrl.u32 %v3130, 7
    %v3132 = vsub.s32 0, %v3131
    %v3133 = vrot.slane %v3101, %v3132
    %v3135 = vmul.f32 %v3127, %v3133
    %v3136 = vmul.f32 %v3128, %v3133
    %v3138 = vlaneseq
    %v3139 = vshrl.u32 %v3138, 7
    %v3140 = vsub.s32 0, %v3139
    %v3141 = vrot.slane %v3102, %v3140
    %v3143 = vadd.f32 %v3135, %v3141
    %v3144 = vadd.f32 %v3136, %v3141
    %v3145 = vadd.f32 %v3143, %v789
    %v3146 = vadd.f32 %v3144, %v790
    %s3147 = scalar_lea.vmem [#allocation20], 32
    %v3148 = vld [vmem:[%s3147] sm:$0xff]
    %v3149 = vld [vmem:[%s3147 + $0x8] sm:$0xff]
    %v3150 = vld [vmem:[%s3147 + $0x10] sm:$0xff]
    %v3151 = vld [vmem:[%s3147 + $0x18] sm:$0xff]
    %s3152 = scalar_lea.vmem [#allocation22], 1
    %v3153 = vld [vmem:[%s3152] sm:$0x1]
    %v3155 = vlaneseq
    %v3156 = vshrl.u32 %v3155, 7
    %v3157 = vsub.s32 0, %v3156
    %v3158 = vrot.slane %v3153, %v3157
    %3160 = vmatprep.subr.mxu0 0.0
    %3161 = vmatpush1.msra.mxu0 %v3148
    %3162 = vmatprep.subr.mxu0 0.0
    %3163 = vmatpush1.msra.mxu0 %v3149
    %3164 = vmatprep.subr.mxu0 0.0
    %3165 = vmatpush1.msra.mxu0 %v3150
    %3166 = vmatprep.subr.mxu0 0.0
    %3167 = vmatpush1.msra.mxu0 %v3151
    %3168 = vmatprep.subr.mxu0 0.0
    %3169 = vmatpush1.msra.mxu0 0.0
    %3170 = vmatprep.subr.mxu0 0.0
    %3171 = vmatpush1.msra.mxu0 0.0
    %3172 = vmatprep.subr.mxu0 0.0
    %3173 = vmatpush1.msra.mxu0 0.0
    %3174 = vmatprep.subr.mxu0 0.0
    %3175 = vmatpush1.msra.mxu0 0.0
    %3176 = vmatprep.subr.mxu0 0.0
    %3177 = vmatpush1.msra.mxu0 0.0
    %3178 = vmatprep.subr.mxu0 0.0
    %3179 = vmatpush1.msra.mxu0 0.0
    %3180 = vmatprep.subr.mxu0 0.0
    %3181 = vmatpush1.msra.mxu0 0.0
    %3182 = vmatprep.subr.mxu0 0.0
    %3183 = vmatpush1.msra.mxu0 0.0
    %3184 = vmatprep.subr.mxu0 0.0
    %3185 = vmatpush1.msra.mxu0 0.0
    %3186 = vmatprep.subr.mxu0 0.0
    %3187 = vmatpush1.msra.mxu0 0.0
    %3188 = vmatprep.subr.mxu0 0.0
    %3189 = vmatpush1.msra.mxu0 0.0
    %3190 = vmatprep.subr.mxu0 0.0
    %3191 = vmatpush1.msra.mxu0 0.0
    %3192 = vmatprep.subr.mxu0 0.0
    %3193 = vmatpush1.msra.mxu0 0.0
    %3194 = vmatprep.subr.mxu0 0.0
    %3195 = vmatpush1.msra.mxu0 0.0
    %3196 = vmatprep.subr.mxu0 0.0
    %3197 = vmatpush1.msra.mxu0 0.0
    %3198 = vmatprep.subr.mxu0 0.0
    %3199 = vmatpush1.msra.mxu0 0.0
    %3200 = vmatprep.subr.mxu0 0.0
    %3201 = vmatpush1.msra.mxu0 0.0
    %3202 = vmatprep.subr.mxu0 0.0
    %3203 = vmatpush1.msra.mxu0 0.0
    %3204 = vmatprep.subr.mxu0 0.0
    %3205 = vmatpush1.msra.mxu0 0.0
    %3206 = vmatprep.subr.mxu0 0.0
    %3207 = vmatpush1.msra.mxu0 0.0
    %3208 = vmatprep.subr.mxu0 0.0
    %3209 = vmatpush1.msra.mxu0 0.0
    %3210 = vmatprep.subr.mxu0 0.0
    %3211 = vmatpush1.msra.mxu0 0.0
    %3212 = vmatprep.subr.mxu0 0.0
    %3213 = vmatpush1.msra.mxu0 0.0
    %3214 = vmatprep.subr.mxu0 0.0
    %3215 = vmatpush1.msra.mxu0 0.0
    %3216 = vmatprep.subr.mxu0 0.0
    %3217 = vmatpush1.msra.mxu0 0.0
    %3218 = vmatprep.subr.mxu0 0.0
    %3219 = vmatpush1.msra.mxu0 0.0
    %3220 = vmatprep.subr.mxu0 0.0
    %3221 = vmatpush1.msra.mxu0 0.0
    %3222 = vmatprep.subr.mxu0 0.0
    %3223 = vmatpush1.msra.mxu0 0.0
    %3224 = vmatprep.mubr.f32.mxu0 0.0
    %3225 = vmatmul.mubr.f32.gmra.mrb[0].mxu0 %v829
    %v3226 = vpop.f32.mrb[0].mxu0
    %v3227 = vadd.f32 %v3158, %v3226
    %v3228 = vpop.f32.mrb[0].mxu0
    %3229 = vdwg.mxu0
    %v3232 = vunpack.c.l.s4 1966171168
    %v3233 = vunpack.c.0.s8 %v3232
    %v3234 = vlaneseq
    %v3235 = vshrl.u32 %v3234, 7
    %v3236 = vsub.s32 %v3233, %v3235
    %v3237 = vrot.slane %v3227, %v3236
    %v3238 = vcombine.high %v3237, %v3237
    %v3240 = vunpack.c.l.s4 1966171168
    %v3241 = vunpack.c.0.s8 %v3240
    %v3242 = vlaneseq
    %v3243 = vshrl.u32 %v3242, 7
    %v3244 = vsub.s32 %v3241, %v3243
    %v3245 = vrot.slane %v3237, %v3244
    %v3247 = vunpack.c.l.s4 1966171168
    %v3248 = vunpack.c.0.s8 %v3247
    %v3249 = vlaneseq
    %v3250 = vshrl.u32 %v3249, 7
    %v3251 = vsub.s32 %v3248, %v3250
    %v3252 = vrot.slane %v3238, %v3251
    %v3253 = vlaneseq
    %v3254 = vshrl.u32 %v3253, 7
    %v3255 = vsub.s32 0, %v3254
    %v3256 = vrot.slane %v3245, %v3255
    %v3257 = vlaneseq
    %v3258 = vshrl.u32 %v3257, 7
    %v3259 = vsub.s32 0, %v3258
    %v3260 = vrot.slane %v3252, %v3259
    %v3263 = vadd.f32 %v3145, %v3256
    %v3264 = vadd.f32 %v3146, %v3260
    %s3265 = scalar_lea.vmem [#allocation23], 32
    %v3266 = vld [vmem:[%s3265] sm:$0xff]
    %v3267 = vld [vmem:[%s3265 + $0x8] sm:$0xff]
    %v3268 = vld [vmem:[%s3265 + $0x10] sm:$0xff]
    %v3269 = vld [vmem:[%s3265 + $0x18] sm:$0xff]
    %3270 = vmatprep.subr.mxu0 0.0
    %3271 = vmatpush1.msra.mxu0 %v3266
    %3272 = vmatprep.subr.mxu0 0.0
    %3273 = vmatpush1.msra.mxu0 %v3267
    %3274 = vmatprep.subr.mxu0 0.0
    %3275 = vmatpush1.msra.mxu0 %v3268
    %3276 = vmatprep.subr.mxu0 0.0
    %3277 = vmatpush1.msra.mxu0 %v3269
    %3278 = vmatprep.subr.mxu0 0.0
    %3279 = vmatpush1.msra.mxu0 0.0
    %3280 = vmatprep.subr.mxu0 0.0
    %3281 = vmatpush1.msra.mxu0 0.0
    %3282 = vmatprep.subr.mxu0 0.0
    %3283 = vmatpush1.msra.mxu0 0.0
    %3284 = vmatprep.subr.mxu0 0.0
    %3285 = vmatpush1.msra.mxu0 0.0
    %3286 = vmatprep.subr.mxu0 0.0
    %3287 = vmatpush1.msra.mxu0 0.0
    %3288 = vmatprep.subr.mxu0 0.0
    %3289 = vmatpush1.msra.mxu0 0.0
    %3290 = vmatprep.subr.mxu0 0.0
    %3291 = vmatpush1.msra.mxu0 0.0
    %3292 = vmatprep.subr.mxu0 0.0
    %3293 = vmatpush1.msra.mxu0 0.0
    %3294 = vmatprep.subr.mxu0 0.0
    %3295 = vmatpush1.msra.mxu0 0.0
    %3296 = vmatprep.subr.mxu0 0.0
    %3297 = vmatpush1.msra.mxu0 0.0
    %3298 = vmatprep.subr.mxu0 0.0
    %3299 = vmatpush1.msra.mxu0 0.0
    %3300 = vmatprep.subr.mxu0 0.0
    %3301 = vmatpush1.msra.mxu0 0.0
    %3302 = vmatprep.subr.mxu0 0.0
    %3303 = vmatpush1.msra.mxu0 0.0
    %3304 = vmatprep.subr.mxu0 0.0
    %3305 = vmatpush1.msra.mxu0 0.0
    %3306 = vmatprep.subr.mxu0 0.0
    %3307 = vmatpush1.msra.mxu0 0.0
    %3308 = vmatprep.subr.mxu0 0.0
    %3309 = vmatpush1.msra.mxu0 0.0
    %3310 = vmatprep.subr.mxu0 0.0
    %3311 = vmatpush1.msra.mxu0 0.0
    %3312 = vmatprep.subr.mxu0 0.0
    %3313 = vmatpush1.msra.mxu0 0.0
    %3314 = vmatprep.subr.mxu0 0.0
    %3315 = vmatpush1.msra.mxu0 0.0
    %3316 = vmatprep.subr.mxu0 0.0
    %3317 = vmatpush1.msra.mxu0 0.0
    %3318 = vmatprep.subr.mxu0 0.0
    %3319 = vmatpush1.msra.mxu0 0.0
    %3320 = vmatprep.subr.mxu0 0.0
    %3321 = vmatpush1.msra.mxu0 0.0
    %3322 = vmatprep.subr.mxu0 0.0
    %3323 = vmatpush1.msra.mxu0 0.0
    %3324 = vmatprep.subr.mxu0 0.0
    %3325 = vmatpush1.msra.mxu0 0.0
    %3326 = vmatprep.subr.mxu0 0.0
    %3327 = vmatpush1.msra.mxu0 0.0
    %3328 = vmatprep.subr.mxu0 0.0
    %3329 = vmatpush1.msra.mxu0 0.0
    %3330 = vmatprep.subr.mxu0 0.0
    %3331 = vmatpush1.msra.mxu0 0.0
    %3332 = vmatprep.subr.mxu0 0.0
    %3333 = vmatpush1.msra.mxu0 0.0
    %3334 = vmatprep.mubr.f32.mxu0 0.0
    %3335 = vmatmul.mubr.f32.gmra.mrb[0].mxu0 %v941
    %v3336 = vpop.f32.mrb[0].mxu0
    %v3337 = vadd.f32 0.0, %v3336
    %v3338 = vpop.f32.mrb[0].mxu0
    %3339 = vmatprep.mubr.f32.mxu0 0.0
    %3340 = vmatmul.mubr.f32.gmra.mrb[0].mxu0 %v944
    %v3341 = vpop.f32.mrb[0].mxu0
    %v3342 = vadd.f32 0.0, %v3341
    %v3343 = vpop.f32.mrb[0].mxu0
    %3344 = vdwg.mxu0
    %v3345 = vadd.f32 %v3263, %v3337
    %v3346 = vadd.f32 %v3264, %v3342
    %s3347 = scalar_lea.vmem [#allocation25], 1
    %v3348 = vld [vmem:[%s3347] sm:$0x1]
    %v3350 = vlaneseq
    %v3351 = vshrl.u32 %v3350, 7
    %v3352 = vsub.s32 0, %v3351
    %v3353 = vrot.slane %v3348, %v3352
    %v3355 = vadd.f32 %v3345, %v3353
    %v3356 = vadd.f32 %v3346, %v3353
    %s3357 = scalar_lea.vmem [#allocation26], 32
    %v3358 = vld [vmem:[%s3357] sm:$0xff]
    %v3359 = vld [vmem:[%s3357 + $0x8] sm:$0xff]
    %v3360 = vld [vmem:[%s3357 + $0x10] sm:$0xff]
    %v3361 = vld [vmem:[%s3357 + $0x18] sm:$0xff]
    %s3362 = scalar_lea.vmem [#allocation28], 1
    %v3363 = vld [vmem:[%s3362] sm:$0x1]
    %v3365 = vlaneseq
    %v3366 = vshrl.u32 %v3365, 7
    %v3367 = vsub.s32 0, %v3366
    %v3368 = vrot.slane %v3363, %v3367
    %v3371 = vsel %vm433, %v3355, 0
    %v3374 = vsel %vm433, %v3356, 0
    %3376 = vmatprep.subr.mxu0 0.0
    %3377 = vmatpush1.msra.mxu0 %v3358
    %3378 = vmatprep.subr.mxu0 0.0
    %3379 = vmatpush1.msra.mxu0 %v3359
    %3380 = vmatprep.subr.mxu0 0.0
    %3381 = vmatpush1.msra.mxu0 %v3360
    %3382 = vmatprep.subr.mxu0 0.0
    %3383 = vmatpush1.msra.mxu0 %v3361
    %3384 = vmatprep.subr.mxu0 0.0
    %3385 = vmatpush1.msra.mxu0 0.0
    %3386 = vmatprep.subr.mxu0 0.0
    %3387 = vmatpush1.msra.mxu0 0.0
    %3388 = vmatprep.subr.mxu0 0.0
    %3389 = vmatpush1.msra.mxu0 0.0
    %3390 = vmatprep.subr.mxu0 0.0
    %3391 = vmatpush1.msra.mxu0 0.0
    %3392 = vmatprep.subr.mxu0 0.0
    %3393 = vmatpush1.msra.mxu0 0.0
    %3394 = vmatprep.subr.mxu0 0.0
    %3395 = vmatpush1.msra.mxu0 0.0
    %3396 = vmatprep.subr.mxu0 0.0
    %3397 = vmatpush1.msra.mxu0 0.0
    %3398 = vmatprep.subr.mxu0 0.0
    %3399 = vmatpush1.msra.mxu0 0.0
    %3400 = vmatprep.subr.mxu0 0.0
    %3401 = vmatpush1.msra.mxu0 0.0
    %3402 = vmatprep.subr.mxu0 0.0
    %3403 = vmatpush1.msra.mxu0 0.0
    %3404 = vmatprep.subr.mxu0 0.0
    %3405 = vmatpush1.msra.mxu0 0.0
    %3406 = vmatprep.subr.mxu0 0.0
    %3407 = vmatpush1.msra.mxu0 0.0
    %3408 = vmatprep.subr.mxu0 0.0
    %3409 = vmatpush1.msra.mxu0 0.0
    %3410 = vmatprep.subr.mxu0 0.0
    %3411 = vmatpush1.msra.mxu0 0.0
    %3412 = vmatprep.subr.mxu0 0.0
    %3413 = vmatpush1.msra.mxu0 0.0
    %3414 = vmatprep.subr.mxu0 0.0
    %3415 = vmatpush1.msra.mxu0 0.0
    %3416 = vmatprep.subr.mxu0 0.0
    %3417 = vmatpush1.msra.mxu0 0.0
    %3418 = vmatprep.subr.mxu0 0.0
    %3419 = vmatpush1.msra.mxu0 0.0
    %3420 = vmatprep.subr.mxu0 0.0
    %3421 = vmatpush1.msra.mxu0 0.0
    %3422 = vmatprep.subr.mxu0 0.0
    %3423 = vmatpush1.msra.mxu0 0.0
    %3424 = vmatprep.subr.mxu0 0.0
    %3425 = vmatpush1.msra.mxu0 0.0
    %3426 = vmatprep.subr.mxu0 0.0
    %3427 = vmatpush1.msra.mxu0 0.0
    %3428 = vmatprep.subr.mxu0 0.0
    %3429 = vmatpush1.msra.mxu0 0.0
    %3430 = vmatprep.subr.mxu0 0.0
    %3431 = vmatpush1.msra.mxu0 0.0
    %3432 = vmatprep.subr.mxu0 0.0
    %3433 = vmatpush1.msra.mxu0 0.0
    %3434 = vmatprep.subr.mxu0 0.0
    %3435 = vmatpush1.msra.mxu0 0.0
    %3436 = vmatprep.subr.mxu0 0.0
    %3437 = vmatpush1.msra.mxu0 0.0
    %3438 = vmatprep.subr.mxu0 0.0
    %3439 = vmatpush1.msra.mxu0 0.0
    %3440 = vmatprep.mubr.f32.mxu0 0.0
    %3441 = vmatmul.mubr.f32.gmra.mrb[0].mxu0 %v3371
    %v3442 = vpop.f32.mrb[0].mxu0
    %v3443 = vadd.f32 %v3368, %v3442
    %v3444 = vpop.f32.mrb[0].mxu0
    %3445 = vmatprep.mubr.f32.mxu0 0.0
    %3446 = vmatmul.mubr.f32.gmra.mrb[0].mxu0 %v3374
    %v3447 = vpop.f32.mrb[0].mxu0
    %v3448 = vadd.f32 %v3368, %v3447
    %v3449 = vpop.f32.mrb[0].mxu0
    %3450 = vdwg.mxu0
    %s3451 = scalar_lea.vmem [#allocation29], 32
    %v3452 = vld [vmem:[%s3451] sm:$0xff]
    %v3453 = vld [vmem:[%s3451 + $0x8] sm:$0xff]
    %v3454 = vld [vmem:[%s3451 + $0x10] sm:$0xff]
    %v3455 = vld [vmem:[%s3451 + $0x18] sm:$0xff]
    %3457 = vrot.lane.b32.xlu0 %v3443, 96
    %v3458 = vpop.permute.xlu0 %3457
    %v3459 = vsel %vm1131, %v3443, 0
    %v3461 = vsel %vm1131, %v3458, 0
    %3463 = vmatprep.subr.mxu0 0.0
    %3464 = vmatpush1.xpose.msra.mxu0 %v3461
    %3465 = vmatprep.subr.mxu0 0.0
    %3466 = vmatpush1.xpose.msra.mxu0 0.0
    %3467 = vmatprep.subr.mxu0 0.0
    %3468 = vmatpush1.xpose.msra.mxu0 0.0
    %3469 = vmatprep.subr.mxu0 0.0
    %3470 = vmatpush1.xpose.msra.mxu0 0.0
    %3471 = vmatprep.subr.mxu0 0.0
    %3472 = vmatpush1.xpose.msra.mxu0 0.0
    %3473 = vmatprep.subr.mxu0 0.0
    %3474 = vmatpush1.xpose.msra.mxu0 0.0
    %3475 = vmatprep.subr.mxu0 0.0
    %3476 = vmatpush1.xpose.msra.mxu0 0.0
    %3477 = vmatprep.subr.mxu0 0.0
    %3478 = vmatpush1.xpose.msra.mxu0 0.0
    %3479 = vmatprep.subr.mxu0 0.0
    %3480 = vmatpush1.xpose.msra.mxu0 0.0
    %3481 = vmatprep.subr.mxu0 0.0
    %3482 = vmatpush1.xpose.msra.mxu0 0.0
    %3483 = vmatprep.subr.mxu0 0.0
    %3484 = vmatpush1.xpose.msra.mxu0 0.0
    %3485 = vmatprep.subr.mxu0 0.0
    %3486 = vmatpush1.xpose.msra.mxu0 0.0
    %3487 = vmatprep.subr.mxu0 0.0
    %3488 = vmatpush1.xpose.msra.mxu0 0.0
    %3489 = vmatprep.subr.mxu0 0.0
    %3490 = vmatpush1.xpose.msra.mxu0 0.0
    %3491 = vmatprep.subr.mxu0 0.0
    %3492 = vmatpush1.xpose.msra.mxu0 0.0
    %3493 = vmatprep.subr.mxu0 0.0
    %3494 = vmatpush1.xpose.msra.mxu0 0.0
    %3495 = vmatprep.subr.mxu0 0.0
    %3496 = vmatpush1.xpose.msra.mxu0 0.0
    %3497 = vmatprep.subr.mxu0 0.0
    %3498 = vmatpush1.xpose.msra.mxu0 0.0
    %3499 = vmatprep.subr.mxu0 0.0
    %3500 = vmatpush1.xpose.msra.mxu0 0.0
    %3501 = vmatprep.subr.mxu0 0.0
    %3502 = vmatpush1.xpose.msra.mxu0 0.0
    %3503 = vmatprep.subr.mxu0 0.0
    %3504 = vmatpush1.xpose.msra.mxu0 0.0
    %3505 = vmatprep.subr.mxu0 0.0
    %3506 = vmatpush1.xpose.msra.mxu0 0.0
    %3507 = vmatprep.subr.mxu0 0.0
    %3508 = vmatpush1.xpose.msra.mxu0 0.0
    %3509 = vmatprep.subr.mxu0 0.0
    %3510 = vmatpush1.xpose.msra.mxu0 0.0
    %3511 = vmatprep.subr.mxu0 0.0
    %3512 = vmatpush1.xpose.msra.mxu0 0.0
    %3513 = vmatprep.subr.mxu0 0.0
    %3514 = vmatpush1.xpose.msra.mxu0 0.0
    %3515 = vmatprep.subr.mxu0 0.0
    %3516 = vmatpush1.xpose.msra.mxu0 0.0
    %3517 = vmatprep.subr.mxu0 0.0
    %3518 = vmatpush1.xpose.msra.mxu0 0.0
    %3519 = vmatprep.subr.mxu0 0.0
    %3520 = vmatpush1.xpose.msra.mxu0 0.0
    %3521 = vmatprep.subr.mxu0 0.0
    %3522 = vmatpush1.xpose.msra.mxu0 0.0
    %3523 = vmatprep.subr.mxu0 0.0
    %3524 = vmatpush1.xpose.msra.mxu0 0.0
    %3525 = vmatprep.subr.mxu0 0.0
    %3526 = vmatpush1.xpose.msra.mxu0 0.0
    %3527 = vmatprep.mubr.f32.mxu0 0.0
    %3528 = vmatmul.mubr.f32.gmra.mrb[0].mxu0 %v3459
    %v3529 = vpop.f32.mrb[0].mxu0
    %v3530 = vadd.f32 0.0, %v3529
    %v3531 = vpop.f32.mrb[0].mxu0
    %3532 = vdwg.mxu0
    %3534 = vrot.lane.b32.xlu0 %v3448, 96
    %v3535 = vpop.permute.xlu0 %3534
    %v3536 = vsel %vm1131, %v3448, 0
    %v3538 = vsel %vm1131, %v3535, 0
    %3540 = vmatprep.subr.mxu0 0.0
    %3541 = vmatpush1.xpose.msra.mxu0 %v3538
    %3542 = vmatprep.subr.mxu0 0.0
    %3543 = vmatpush1.xpose.msra.mxu0 0.0
    %3544 = vmatprep.subr.mxu0 0.0
    %3545 = vmatpush1.xpose.msra.mxu0 0.0
    %3546 = vmatprep.subr.mxu0 0.0
    %3547 = vmatpush1.xpose.msra.mxu0 0.0
    %3548 = vmatprep.subr.mxu0 0.0
    %3549 = vmatpush1.xpose.msra.mxu0 0.0
    %3550 = vmatprep.subr.mxu0 0.0
    %3551 = vmatpush1.xpose.msra.mxu0 0.0
    %3552 = vmatprep.subr.mxu0 0.0
    %3553 = vmatpush1.xpose.msra.mxu0 0.0
    %3554 = vmatprep.subr.mxu0 0.0
    %3555 = vmatpush1.xpose.msra.mxu0 0.0
    %3556 = vmatprep.subr.mxu0 0.0
    %3557 = vmatpush1.xpose.msra.mxu0 0.0
    %3558 = vmatprep.subr.mxu0 0.0
    %3559 = vmatpush1.xpose.msra.mxu0 0.0
    %3560 = vmatprep.subr.mxu0 0.0
    %3561 = vmatpush1.xpose.msra.mxu0 0.0
    %3562 = vmatprep.subr.mxu0 0.0
    %3563 = vmatpush1.xpose.msra.mxu0 0.0
    %3564 = vmatprep.subr.mxu0 0.0
    %3565 = vmatpush1.xpose.msra.mxu0 0.0
    %3566 = vmatprep.subr.mxu0 0.0
    %3567 = vmatpush1.xpose.msra.mxu0 0.0
    %3568 = vmatprep.subr.mxu0 0.0
    %3569 = vmatpush1.xpose.msra.mxu0 0.0
    %3570 = vmatprep.subr.mxu0 0.0
    %3571 = vmatpush1.xpose.msra.mxu0 0.0
    %3572 = vmatprep.subr.mxu0 0.0
    %3573 = vmatpush1.xpose.msra.mxu0 0.0
    %3574 = vmatprep.subr.mxu0 0.0
    %3575 = vmatpush1.xpose.msra.mxu0 0.0
    %3576 = vmatprep.subr.mxu0 0.0
    %3577 = vmatpush1.xpose.msra.mxu0 0.0
    %3578 = vmatprep.subr.mxu0 0.0
    %3579 = vmatpush1.xpose.msra.mxu0 0.0
    %3580 = vmatprep.subr.mxu0 0.0
    %3581 = vmatpush1.xpose.msra.mxu0 0.0
    %3582 = vmatprep.subr.mxu0 0.0
    %3583 = vmatpush1.xpose.msra.mxu0 0.0
    %3584 = vmatprep.subr.mxu0 0.0
    %3585 = vmatpush1.xpose.msra.mxu0 0.0
    %3586 = vmatprep.subr.mxu0 0.0
    %3587 = vmatpush1.xpose.msra.mxu0 0.0
    %3588 = vmatprep.subr.mxu0 0.0
    %3589 = vmatpush1.xpose.msra.mxu0 0.0
    %3590 = vmatprep.subr.mxu0 0.0
    %3591 = vmatpush1.xpose.msra.mxu0 0.0
    %3592 = vmatprep.subr.mxu0 0.0
    %3593 = vmatpush1.xpose.msra.mxu0 0.0
    %3594 = vmatprep.subr.mxu0 0.0
    %3595 = vmatpush1.xpose.msra.mxu0 0.0
    %3596 = vmatprep.subr.mxu0 0.0
    %3597 = vmatpush1.xpose.msra.mxu0 0.0
    %3598 = vmatprep.subr.mxu0 0.0
    %3599 = vmatpush1.xpose.msra.mxu0 0.0
    %3600 = vmatprep.subr.mxu0 0.0
    %3601 = vmatpush1.xpose.msra.mxu0 0.0
    %3602 = vmatprep.subr.mxu0 0.0
    %3603 = vmatpush1.xpose.msra.mxu0 0.0
    %3604 = vmatprep.mubr.f32.mxu0 0.0
    %3605 = vmatmul.mubr.f32.gmra.mrb[0].mxu0 %v3536
    %v3606 = vpop.f32.mrb[0].mxu0
    %v3607 = vadd.f32 0.0, %v3606
    %v3608 = vpop.f32.mrb[0].mxu0
    %3609 = vdwg.mxu0
    %v3610 = vmul.f32 %v3530, 0.35355338
    %v3611 = vmul.f32 %v3607, 0.35355338
    %v3612 = vadd.f32 %v3610, %v1288
    %v3613 = vadd.f32 %v3611, %v1292
    %v3614 = vsel %vm1131, %v3612, -inf
    %3615 = vmax.xlane.f32.xlu0 %v3614
    %v3616 = vpop.xlane.xlu0 %3615
    %v3617 = vsel %vm1131, %v3613, -inf
    %3618 = vmax.xlane.f32.xlu0 %v3617
    %v3619 = vpop.xlane.xlu0 %3618
    %v3620 = vsub.f32 %v3612, %v3616
    %v3621 = vsub.f32 %v3613, %v3619
    %v3622 = vmul.f32 %v3620, 1.442695
    %v3623 = vpow.pop %v3622
    %v3624 = vmul.f32 %v3621, 1.442695
    %v3625 = vpow.pop %v3624
    %v3626 = vsel %vm1131, %v3623, 0.0
    %3627 = vadd.xlane.f32.xlu0 %v3626
    %v3628 = vpop.xlane.xlu0 %3627
    %v3629 = vsel %vm1131, %v3625, 0.0
    %3630 = vadd.xlane.f32.xlu0 %v3629
    %v3631 = vpop.xlane.xlu0 %3630
    %v3632 = vrcp.pop %v3628
    %v3633 = vmul.f32 %v3623, %v3632
    %v3634 = vrcp.pop %v3631
    %v3635 = vmul.f32 %v3625, %v3634
    %3636 = vrot.lane.b32.xlu0 %v3443, 64
    %v3637 = vpop.permute.xlu0 %3636
    %v3640 = vsel %vm1131, %v3633, 0
    %3642 = vmatprep.subr.mxu0 0.0
    %3643 = vmatpush1.msra.mxu0 %v3637
    %3644 = vmatprep.subr.mxu0 0.0
    %3645 = vmatpush1.msra.mxu0 0.0
    %3646 = vmatprep.subr.mxu0 0.0
    %3647 = vmatpush1.msra.mxu0 0.0
    %3648 = vmatprep.subr.mxu0 0.0
    %3649 = vmatpush1.msra.mxu0 0.0
    %3650 = vmatprep.subr.mxu0 0.0
    %3651 = vmatpush1.msra.mxu0 0.0
    %3652 = vmatprep.subr.mxu0 0.0
    %3653 = vmatpush1.msra.mxu0 0.0
    %3654 = vmatprep.subr.mxu0 0.0
    %3655 = vmatpush1.msra.mxu0 0.0
    %3656 = vmatprep.subr.mxu0 0.0
    %3657 = vmatpush1.msra.mxu0 0.0
    %3658 = vmatprep.subr.mxu0 0.0
    %3659 = vmatpush1.msra.mxu0 0.0
    %3660 = vmatprep.subr.mxu0 0.0
    %3661 = vmatpush1.msra.mxu0 0.0
    %3662 = vmatprep.subr.mxu0 0.0
    %3663 = vmatpush1.msra.mxu0 0.0
    %3664 = vmatprep.subr.mxu0 0.0
    %3665 = vmatpush1.msra.mxu0 0.0
    %3666 = vmatprep.subr.mxu0 0.0
    %3667 = vmatpush1.msra.mxu0 0.0
    %3668 = vmatprep.subr.mxu0 0.0
    %3669 = vmatpush1.msra.mxu0 0.0
    %3670 = vmatprep.subr.mxu0 0.0
    %3671 = vmatpush1.msra.mxu0 0.0
    %3672 = vmatprep.subr.mxu0 0.0
    %3673 = vmatpush1.msra.mxu0 0.0
    %3674 = vmatprep.subr.mxu0 0.0
    %3675 = vmatpush1.msra.mxu0 0.0
    %3676 = vmatprep.subr.mxu0 0.0
    %3677 = vmatpush1.msra.mxu0 0.0
    %3678 = vmatprep.subr.mxu0 0.0
    %3679 = vmatpush1.msra.mxu0 0.0
    %3680 = vmatprep.subr.mxu0 0.0
    %3681 = vmatpush1.msra.mxu0 0.0
    %3682 = vmatprep.subr.mxu0 0.0
    %3683 = vmatpush1.msra.mxu0 0.0
    %3684 = vmatprep.subr.mxu0 0.0
    %3685 = vmatpush1.msra.mxu0 0.0
    %3686 = vmatprep.subr.mxu0 0.0
    %3687 = vmatpush1.msra.mxu0 0.0
    %3688 = vmatprep.subr.mxu0 0.0
    %3689 = vmatpush1.msra.mxu0 0.0
    %3690 = vmatprep.subr.mxu0 0.0
    %3691 = vmatpush1.msra.mxu0 0.0
    %3692 = vmatprep.subr.mxu0 0.0
    %3693 = vmatpush1.msra.mxu0 0.0
    %3694 = vmatprep.subr.mxu0 0.0
    %3695 = vmatpush1.msra.mxu0 0.0
    %3696 = vmatprep.subr.mxu0 0.0
    %3697 = vmatpush1.msra.mxu0 0.0
    %3698 = vmatprep.subr.mxu0 0.0
    %3699 = vmatpush1.msra.mxu0 0.0
    %3700 = vmatprep.subr.mxu0 0.0
    %3701 = vmatpush1.msra.mxu0 0.0
    %3702 = vmatprep.subr.mxu0 0.0
    %3703 = vmatpush1.msra.mxu0 0.0
    %3704 = vmatprep.subr.mxu0 0.0
    %3705 = vmatpush1.msra.mxu0 0.0
    %3706 = vmatprep.mubr.f32.mxu0 0.0
    %3707 = vmatmul.mubr.f32.gmra.mrb[0].mxu0 %v3640
    %v3708 = vpop.f32.mrb[0].mxu0
    %v3709 = vadd.f32 0.0, %v3708
    %v3710 = vpop.f32.mrb[0].mxu0
    %3711 = vdwg.mxu0
    %3712 = vrot.lane.b32.xlu0 %v3448, 64
    %v3713 = vpop.permute.xlu0 %3712
    %v3716 = vsel %vm1131, %v3635, 0
    %3718 = vmatprep.subr.mxu0 0.0
    %3719 = vmatpush1.msra.mxu0 %v3713
    %3720 = vmatprep.subr.mxu0 0.0
    %3721 = vmatpush1.msra.mxu0 0.0
    %3722 = vmatprep.subr.mxu0 0.0
    %3723 = vmatpush1.msra.mxu0 0.0
    %3724 = vmatprep.subr.mxu0 0.0
    %3725 = vmatpush1.msra.mxu0 0.0
    %3726 = vmatprep.subr.mxu0 0.0
    %3727 = vmatpush1.msra.mxu0 0.0
    %3728 = vmatprep.subr.mxu0 0.0
    %3729 = vmatpush1.msra.mxu0 0.0
    %3730 = vmatprep.subr.mxu0 0.0
    %3731 = vmatpush1.msra.mxu0 0.0
    %3732 = vmatprep.subr.mxu0 0.0
    %3733 = vmatpush1.msra.mxu0 0.0
    %3734 = vmatprep.subr.mxu0 0.0
    %3735 = vmatpush1.msra.mxu0 0.0
    %3736 = vmatprep.subr.mxu0 0.0
    %3737 = vmatpush1.msra.mxu0 0.0
    %3738 = vmatprep.subr.mxu0 0.0
    %3739 = vmatpush1.msra.mxu0 0.0
    %3740 = vmatprep.subr.mxu0 0.0
    %3741 = vmatpush1.msra.mxu0 0.0
    %3742 = vmatprep.subr.mxu0 0.0
    %3743 = vmatpush1.msra.mxu0 0.0
    %3744 = vmatprep.subr.mxu0 0.0
    %3745 = vmatpush1.msra.mxu0 0.0
    %3746 = vmatprep.subr.mxu0 0.0
    %3747 = vmatpush1.msra.mxu0 0.0
    %3748 = vmatprep.subr.mxu0 0.0
    %3749 = vmatpush1.msra.mxu0 0.0
    %3750 = vmatprep.subr.mxu0 0.0
    %3751 = vmatpush1.msra.mxu0 0.0
    %3752 = vmatprep.subr.mxu0 0.0
    %3753 = vmatpush1.msra.mxu0 0.0
    %3754 = vmatprep.subr.mxu0 0.0
    %3755 = vmatpush1.msra.mxu0 0.0
    %3756 = vmatprep.subr.mxu0 0.0
    %3757 = vmatpush1.msra.mxu0 0.0
    %3758 = vmatprep.subr.mxu0 0.0
    %3759 = vmatpush1.msra.mxu0 0.0
    %3760 = vmatprep.subr.mxu0 0.0
    %3761 = vmatpush1.msra.mxu0 0.0
    %3762 = vmatprep.subr.mxu0 0.0
    %3763 = vmatpush1.msra.mxu0 0.0
    %3764 = vmatprep.subr.mxu0 0.0
    %3765 = vmatpush1.msra.mxu0 0.0
    %3766 = vmatprep.subr.mxu0 0.0
    %3767 = vmatpush1.msra.mxu0 0.0
    %3768 = vmatprep.subr.mxu0 0.0
    %3769 = vmatpush1.msra.mxu0 0.0
    %3770 = vmatprep.subr.mxu0 0.0
    %3771 = vmatpush1.msra.mxu0 0.0
    %3772 = vmatprep.subr.mxu0 0.0
    %3773 = vmatpush1.msra.mxu0 0.0
    %3774 = vmatprep.subr.mxu0 0.0
    %3775 = vmatpush1.msra.mxu0 0.0
    %3776 = vmatprep.subr.mxu0 0.0
    %3777 = vmatpush1.msra.mxu0 0.0
    %3778 = vmatprep.subr.mxu0 0.0
    %3779 = vmatpush1.msra.mxu0 0.0
    %3780 = vmatprep.subr.mxu0 0.0
    %3781 = vmatpush1.msra.mxu0 0.0
    %3782 = vmatprep.mubr.f32.mxu0 0.0
    %3783 = vmatmul.mubr.f32.gmra.mrb[0].mxu0 %v3716
    %v3784 = vpop.f32.mrb[0].mxu0
    %v3785 = vadd.f32 0.0, %v3784
    %v3786 = vpop.f32.mrb[0].mxu0
    %3787 = vdwg.mxu0
    %3788 = vrot.lane.b32.xlu0 %v3443, 120
    %v3789 = vpop.permute.xlu0 %3788
    %3790 = vrot.lane.b32.xlu0 %v3443, 88
    %v3791 = vpop.permute.xlu0 %3790
    %v3792 = vsel %vm1131, %v3789, 0
    %v3794 = vsel %vm1131, %v3791, 0
    %3796 = vmatprep.subr.mxu0 0.0
    %3797 = vmatpush1.xpose.msra.mxu0 %v3794
    %3798 = vmatprep.subr.mxu0 0.0
    %3799 = vmatpush1.xpose.msra.mxu0 0.0
    %3800 = vmatprep.subr.mxu0 0.0
    %3801 = vmatpush1.xpose.msra.mxu0 0.0
    %3802 = vmatprep.subr.mxu0 0.0
    %3803 = vmatpush1.xpose.msra.mxu0 0.0
    %3804 = vmatprep.subr.mxu0 0.0
    %3805 = vmatpush1.xpose.msra.mxu0 0.0
    %3806 = vmatprep.subr.mxu0 0.0
    %3807 = vmatpush1.xpose.msra.mxu0 0.0
    %3808 = vmatprep.subr.mxu0 0.0
    %3809 = vmatpush1.xpose.msra.mxu0 0.0
    %3810 = vmatprep.subr.mxu0 0.0
    %3811 = vmatpush1.xpose.msra.mxu0 0.0
    %3812 = vmatprep.subr.mxu0 0.0
    %3813 = vmatpush1.xpose.msra.mxu0 0.0
    %3814 = vmatprep.subr.mxu0 0.0
    %3815 = vmatpush1.xpose.msra.mxu0 0.0
    %3816 = vmatprep.subr.mxu0 0.0
    %3817 = vmatpush1.xpose.msra.mxu0 0.0
    %3818 = vmatprep.subr.mxu0 0.0
    %3819 = vmatpush1.xpose.msra.mxu0 0.0
    %3820 = vmatprep.subr.mxu0 0.0
    %3821 = vmatpush1.xpose.msra.mxu0 0.0
    %3822 = vmatprep.subr.mxu0 0.0
    %3823 = vmatpush1.xpose.msra.mxu0 0.0
    %3824 = vmatprep.subr.mxu0 0.0
    %3825 = vmatpush1.xpose.msra.mxu0 0.0
    %3826 = vmatprep.subr.mxu0 0.0
    %3827 = vmatpush1.xpose.msra.mxu0 0.0
    %3828 = vmatprep.subr.mxu0 0.0
    %3829 = vmatpush1.xpose.msra.mxu0 0.0
    %3830 = vmatprep.subr.mxu0 0.0
    %3831 = vmatpush1.xpose.msra.mxu0 0.0
    %3832 = vmatprep.subr.mxu0 0.0
    %3833 = vmatpush1.xpose.msra.mxu0 0.0
    %3834 = vmatprep.subr.mxu0 0.0
    %3835 = vmatpush1.xpose.msra.mxu0 0.0
    %3836 = vmatprep.subr.mxu0 0.0
    %3837 = vmatpush1.xpose.msra.mxu0 0.0
    %3838 = vmatprep.subr.mxu0 0.0
    %3839 = vmatpush1.xpose.msra.mxu0 0.0
    %3840 = vmatprep.subr.mxu0 0.0
    %3841 = vmatpush1.xpose.msra.mxu0 0.0
    %3842 = vmatprep.subr.mxu0 0.0
    %3843 = vmatpush1.xpose.msra.mxu0 0.0
    %3844 = vmatprep.subr.mxu0 0.0
    %3845 = vmatpush1.xpose.msra.mxu0 0.0
    %3846 = vmatprep.subr.mxu0 0.0
    %3847 = vmatpush1.xpose.msra.mxu0 0.0
    %3848 = vmatprep.subr.mxu0 0.0
    %3849 = vmatpush1.xpose.msra.mxu0 0.0
    %3850 = vmatprep.subr.mxu0 0.0
    %3851 = vmatpush1.xpose.msra.mxu0 0.0
    %3852 = vmatprep.subr.mxu0 0.0
    %3853 = vmatpush1.xpose.msra.mxu0 0.0
    %3854 = vmatprep.subr.mxu0 0.0
    %3855 = vmatpush1.xpose.msra.mxu0 0.0
    %3856 = vmatprep.subr.mxu0 0.0
    %3857 = vmatpush1.xpose.msra.mxu0 0.0
    %3858 = vmatprep.subr.mxu0 0.0
    %3859 = vmatpush1.xpose.msra.mxu0 0.0
    %3860 = vmatprep.mubr.f32.mxu0 0.0
    %3861 = vmatmul.mubr.f32.gmra.mrb[0].mxu0 %v3792
    %v3862 = vpop.f32.mrb[0].mxu0
    %v3863 = vadd.f32 0.0, %v3862
    %v3864 = vpop.f32.mrb[0].mxu0
    %3865 = vdwg.mxu0
    %3866 = vrot.lane.b32.xlu0 %v3448, 120
    %v3867 = vpop.permute.xlu0 %3866
    %3868 = vrot.lane.b32.xlu0 %v3448, 88
    %v3869 = vpop.permute.xlu0 %3868
    %v3870 = vsel %vm1131, %v3867, 0
    %v3872 = vsel %vm1131, %v3869, 0
    %3874 = vmatprep.subr.mxu0 0.0
    %3875 = vmatpush1.xpose.msra.mxu0 %v3872
    %3876 = vmatprep.subr.mxu0 0.0
    %3877 = vmatpush1.xpose.msra.mxu0 0.0
    %3878 = vmatprep.subr.mxu0 0.0
    %3879 = vmatpush1.xpose.msra.mxu0 0.0
    %3880 = vmatprep.subr.mxu0 0.0
    %3881 = vmatpush1.xpose.msra.mxu0 0.0
    %3882 = vmatprep.subr.mxu0 0.0
    %3883 = vmatpush1.xpose.msra.mxu0 0.0
    %3884 = vmatprep.subr.mxu0 0.0
    %3885 = vmatpush1.xpose.msra.mxu0 0.0
    %3886 = vmatprep.subr.mxu0 0.0
    %3887 = vmatpush1.xpose.msra.mxu0 0.0
    %3888 = vmatprep.subr.mxu0 0.0
    %3889 = vmatpush1.xpose.msra.mxu0 0.0
    %3890 = vmatprep.subr.mxu0 0.0
    %3891 = vmatpush1.xpose.msra.mxu0 0.0
    %3892 = vmatprep.subr.mxu0 0.0
    %3893 = vmatpush1.xpose.msra.mxu0 0.0
    %3894 = vmatprep.subr.mxu0 0.0
    %3895 = vmatpush1.xpose.msra.mxu0 0.0
    %3896 = vmatprep.subr.mxu0 0.0
    %3897 = vmatpush1.xpose.msra.mxu0 0.0
    %3898 = vmatprep.subr.mxu0 0.0
    %3899 = vmatpush1.xpose.msra.mxu0 0.0
    %3900 = vmatprep.subr.mxu0 0.0
    %3901 = vmatpush1.xpose.msra.mxu0 0.0
    %3902 = vmatprep.subr.mxu0 0.0
    %3903 = vmatpush1.xpose.msra.mxu0 0.0
    %3904 = vmatprep.subr.mxu0 0.0
    %3905 = vmatpush1.xpose.msra.mxu0 0.0
    %3906 = vmatprep.subr.mxu0 0.0
    %3907 = vmatpush1.xpose.msra.mxu0 0.0
    %3908 = vmatprep.subr.mxu0 0.0
    %3909 = vmatpush1.xpose.msra.mxu0 0.0
    %3910 = vmatprep.subr.mxu0 0.0
    %3911 = vmatpush1.xpose.msra.mxu0 0.0
    %3912 = vmatprep.subr.mxu0 0.0
    %3913 = vmatpush1.xpose.msra.mxu0 0.0
    %3914 = vmatprep.subr.mxu0 0.0
    %3915 = vmatpush1.xpose.msra.mxu0 0.0
    %3916 = vmatprep.subr.mxu0 0.0
    %3917 = vmatpush1.xpose.msra.mxu0 0.0
    %3918 = vmatprep.subr.mxu0 0.0
    %3919 = vmatpush1.xpose.msra.mxu0 0.0
    %3920 = vmatprep.subr.mxu0 0.0
    %3921 = vmatpush1.xpose.msra.mxu0 0.0
    %3922 = vmatprep.subr.mxu0 0.0
    %3923 = vmatpush1.xpose.msra.mxu0 0.0
    %3924 = vmatprep.subr.mxu0 0.0
    %3925 = vmatpush1.xpose.msra.mxu0 0.0
    %3926 = vmatprep.subr.mxu0 0.0
    %3927 = vmatpush1.xpose.msra.mxu0 0.0
    %3928 = vmatprep.subr.mxu0 0.0
    %3929 = vmatpush1.xpose.msra.mxu0 0.0
    %3930 = vmatprep.subr.mxu0 0.0
    %3931 = vmatpush1.xpose.msra.mxu0 0.0
    %3932 = vmatprep.subr.mxu0 0.0
    %3933 = vmatpush1.xpose.msra.mxu0 0.0
    %3934 = vmatprep.subr.mxu0 0.0
    %3935 = vmatpush1.xpose.msra.mxu0 0.0
    %3936 = vmatprep.subr.mxu0 0.0
    %3937 = vmatpush1.xpose.msra.mxu0 0.0
    %3938 = vmatprep.mubr.f32.mxu0 0.0
    %3939 = vmatmul.mubr.f32.gmra.mrb[0].mxu0 %v3870
    %v3940 = vpop.f32.mrb[0].mxu0
    %v3941 = vadd.f32 0.0, %v3940
    %v3942 = vpop.f32.mrb[0].mxu0
    %3943 = vdwg.mxu0
    %v3944 = vmul.f32 %v3863, 0.35355338
    %v3945 = vmul.f32 %v3941, 0.35355338
    %v3946 = vadd.f32 %v3944, %v1288
    %v3947 = vadd.f32 %v3945, %v1292
    %v3948 = vsel %vm1131, %v3946, -inf
    %3949 = vmax.xlane.f32.xlu0 %v3948
    %v3950 = vpop.xlane.xlu0 %3949
    %v3951 = vsel %vm1131, %v3947, -inf
    %3952 = vmax.xlane.f32.xlu0 %v3951
    %v3953 = vpop.xlane.xlu0 %3952
    %v3954 = vsub.f32 %v3946, %v3950
    %v3955 = vsub.f32 %v3947, %v3953
    %v3956 = vmul.f32 %v3954, 1.442695
    %v3957 = vpow.pop %v3956
    %v3958 = vmul.f32 %v3955, 1.442695
    %v3959 = vpow.pop %v3958
    %v3960 = vsel %vm1131, %v3957, 0.0
    %3961 = vadd.xlane.f32.xlu0 %v3960
    %v3962 = vpop.xlane.xlu0 %3961
    %v3963 = vsel %vm1131, %v3959, 0.0
    %3964 = vadd.xlane.f32.xlu0 %v3963
    %v3965 = vpop.xlane.xlu0 %3964
    %v3966 = vrcp.pop %v3962
    %v3967 = vmul.f32 %v3957, %v3966
    %v3968 = vrcp.pop %v3965
    %v3969 = vmul.f32 %v3959, %v3968
    %3970 = vrot.lane.b32.xlu0 %v3443, 56
    %v3971 = vpop.permute.xlu0 %3970
    %v3974 = vsel %vm1131, %v3967, 0
    %3976 = vmatprep.subr.mxu0 0.0
    %3977 = vmatpush1.msra.mxu0 %v3971
    %3978 = vmatprep.subr.mxu0 0.0
    %3979 = vmatpush1.msra.mxu0 0.0
    %3980 = vmatprep.subr.mxu0 0.0
    %3981 = vmatpush1.msra.mxu0 0.0
    %3982 = vmatprep.subr.mxu0 0.0
    %3983 = vmatpush1.msra.mxu0 0.0
    %3984 = vmatprep.subr.mxu0 0.0
    %3985 = vmatpush1.msra.mxu0 0.0
    %3986 = vmatprep.subr.mxu0 0.0
    %3987 = vmatpush1.msra.mxu0 0.0
    %3988 = vmatprep.subr.mxu0 0.0
    %3989 = vmatpush1.msra.mxu0 0.0
    %3990 = vmatprep.subr.mxu0 0.0
    %3991 = vmatpush1.msra.mxu0 0.0
    %3992 = vmatprep.subr.mxu0 0.0
    %3993 = vmatpush1.msra.mxu0 0.0
    %3994 = vmatprep.subr.mxu0 0.0
    %3995 = vmatpush1.msra.mxu0 0.0
    %3996 = vmatprep.subr.mxu0 0.0
    %3997 = vmatpush1.msra.mxu0 0.0
    %3998 = vmatprep.subr.mxu0 0.0
    %3999 = vmatpush1.msra.mxu0 0.0
    %4000 = vmatprep.subr.mxu0 0.0
    %4001 = vmatpush1.msra.mxu0 0.0
    %4002 = vmatprep.subr.mxu0 0.0
    %4003 = vmatpush1.msra.mxu0 0.0
    %4004 = vmatprep.subr.mxu0 0.0
    %4005 = vmatpush1.msra.mxu0 0.0
    %4006 = vmatprep.subr.mxu0 0.0
    %4007 = vmatpush1.msra.mxu0 0.0
    %4008 = vmatprep.subr.mxu0 0.0
    %4009 = vmatpush1.msra.mxu0 0.0
    %4010 = vmatprep.subr.mxu0 0.0
    %4011 = vmatpush1.msra.mxu0 0.0
    %4012 = vmatprep.subr.mxu0 0.0
    %4013 = vmatpush1.msra.mxu0 0.0
    %4014 = vmatprep.subr.mxu0 0.0
    %4015 = vmatpush1.msra.mxu0 0.0
    %4016 = vmatprep.subr.mxu0 0.0
    %4017 = vmatpush1.msra.mxu0 0.0
    %4018 = vmatprep.subr.mxu0 0.0
    %4019 = vmatpush1.msra.mxu0 0.0
    %4020 = vmatprep.subr.mxu0 0.0
    %4021 = vmatpush1.msra.mxu0 0.0
    %4022 = vmatprep.subr.mxu0 0.0
    %4023 = vmatpush1.msra.mxu0 0.0
    %4024 = vmatprep.subr.mxu0 0.0
    %4025 = vmatpush1.msra.mxu0 0.0
    %4026 = vmatprep.subr.mxu0 0.0
    %4027 = vmatpush1.msra.mxu0 0.0
    %4028 = vmatprep.subr.mxu0 0.0
    %4029 = vmatpush1.msra.mxu0 0.0
    %4030 = vmatprep.subr.mxu0 0.0
    %4031 = vmatpush1.msra.mxu0 0.0
    %4032 = vmatprep.subr.mxu0 0.0
    %4033 = vmatpush1.msra.mxu0 0.0
    %4034 = vmatprep.subr.mxu0 0.0
    %4035 = vmatpush1.msra.mxu0 0.0
    %4036 = vmatprep.subr.mxu0 0.0
    %4037 = vmatpush1.msra.mxu0 0.0
    %4038 = vmatprep.subr.mxu0 0.0
    %4039 = vmatpush1.msra.mxu0 0.0
    %4040 = vmatprep.mubr.f32.mxu0 0.0
    %4041 = vmatmul.mubr.f32.gmra.mrb[0].mxu0 %v3974
    %v4042 = vpop.f32.mrb[0].mxu0
    %v4043 = vadd.f32 0.0, %v4042
    %v4044 = vpop.f32.mrb[0].mxu0
    %4045 = vdwg.mxu0
    %4046 = vrot.lane.b32.xlu0 %v3448, 56
    %v4047 = vpop.permute.xlu0 %4046
    %v4050 = vsel %vm1131, %v3969, 0
    %4052 = vmatprep.subr.mxu0 0.0
    %4053 = vmatpush1.msra.mxu0 %v4047
    %4054 = vmatprep.subr.mxu0 0.0
    %4055 = vmatpush1.msra.mxu0 0.0
    %4056 = vmatprep.subr.mxu0 0.0
    %4057 = vmatpush1.msra.mxu0 0.0
    %4058 = vmatprep.subr.mxu0 0.0
    %4059 = vmatpush1.msra.mxu0 0.0
    %4060 = vmatprep.subr.mxu0 0.0
    %4061 = vmatpush1.msra.mxu0 0.0
    %4062 = vmatprep.subr.mxu0 0.0
    %4063 = vmatpush1.msra.mxu0 0.0
    %4064 = vmatprep.subr.mxu0 0.0
    %4065 = vmatpush1.msra.mxu0 0.0
    %4066 = vmatprep.subr.mxu0 0.0
    %4067 = vmatpush1.msra.mxu0 0.0
    %4068 = vmatprep.subr.mxu0 0.0
    %4069 = vmatpush1.msra.mxu0 0.0
    %4070 = vmatprep.subr.mxu0 0.0
    %4071 = vmatpush1.msra.mxu0 0.0
    %4072 = vmatprep.subr.mxu0 0.0
    %4073 = vmatpush1.msra.mxu0 0.0
    %4074 = vmatprep.subr.mxu0 0.0
    %4075 = vmatpush1.msra.mxu0 0.0
    %4076 = vmatprep.subr.mxu0 0.0
    %4077 = vmatpush1.msra.mxu0 0.0
    %4078 = vmatprep.subr.mxu0 0.0
    %4079 = vmatpush1.msra.mxu0 0.0
    %4080 = vmatprep.subr.mxu0 0.0
    %4081 = vmatpush1.msra.mxu0 0.0
    %4082 = vmatprep.subr.mxu0 0.0
    %4083 = vmatpush1.msra.mxu0 0.0
    %4084 = vmatprep.subr.mxu0 0.0
    %4085 = vmatpush1.msra.mxu0 0.0
    %4086 = vmatprep.subr.mxu0 0.0
    %4087 = vmatpush1.msra.mxu0 0.0
    %4088 = vmatprep.subr.mxu0 0.0
    %4089 = vmatpush1.msra.mxu0 0.0
    %4090 = vmatprep.subr.mxu0 0.0
    %4091 = vmatpush1.msra.mxu0 0.0
    %4092 = vmatprep.subr.mxu0 0.0
    %4093 = vmatpush1.msra.mxu0 0.0
    %4094 = vmatprep.subr.mxu0 0.0
    %4095 = vmatpush1.msra.mxu0 0.0
    %4096 = vmatprep.subr.mxu0 0.0
    %4097 = vmatpush1.msra.mxu0 0.0
    %4098 = vmatprep.subr.mxu0 0.0
    %4099 = vmatpush1.msra.mxu0 0.0
    %4100 = vmatprep.subr.mxu0 0.0
    %4101 = vmatpush1.msra.mxu0 0.0
    %4102 = vmatprep.subr.mxu0 0.0
    %4103 = vmatpush1.msra.mxu0 0.0
    %4104 = vmatprep.subr.mxu0 0.0
    %4105 = vmatpush1.msra.mxu0 0.0
    %4106 = vmatprep.subr.mxu0 0.0
    %4107 = vmatpush1.msra.mxu0 0.0
    %4108 = vmatprep.subr.mxu0 0.0
    %4109 = vmatpush1.msra.mxu0 0.0
    %4110 = vmatprep.subr.mxu0 0.0
    %4111 = vmatpush1.msra.mxu0 0.0
    %4112 = vmatprep.subr.mxu0 0.0
    %4113 = vmatpush1.msra.mxu0 0.0
    %4114 = vmatprep.subr.mxu0 0.0
    %4115 = vmatpush1.msra.mxu0 0.0
    %4116 = vmatprep.mubr.f32.mxu0 0.0
    %4117 = vmatmul.mubr.f32.gmra.mrb[0].mxu0 %v4050
    %v4118 = vpop.f32.mrb[0].mxu0
    %v4119 = vadd.f32 0.0, %v4118
    %v4120 = vpop.f32.mrb[0].mxu0
    %4121 = vdwg.mxu0
    %v4123 = vsel %vm1131, %v4043, 0
    %v4126 = vsel %vm1131, %v4119, 0
    %4128 = vmatprep.subr.mxu0 0.0
    %4129 = vmatpush1.msra.mxu0 %v3453
    %4130 = vmatprep.subr.mxu0 0.0
    %4131 = vmatpush1.msra.mxu0 0.0
    %4132 = vmatprep.subr.mxu0 0.0
    %4133 = vmatpush1.msra.mxu0 0.0
    %4134 = vmatprep.subr.mxu0 0.0
    %4135 = vmatpush1.msra.mxu0 0.0
    %4136 = vmatprep.subr.mxu0 0.0
    %4137 = vmatpush1.msra.mxu0 0.0
    %4138 = vmatprep.subr.mxu0 0.0
    %4139 = vmatpush1.msra.mxu0 0.0
    %4140 = vmatprep.subr.mxu0 0.0
    %4141 = vmatpush1.msra.mxu0 0.0
    %4142 = vmatprep.subr.mxu0 0.0
    %4143 = vmatpush1.msra.mxu0 0.0
    %4144 = vmatprep.subr.mxu0 0.0
    %4145 = vmatpush1.msra.mxu0 0.0
    %4146 = vmatprep.subr.mxu0 0.0
    %4147 = vmatpush1.msra.mxu0 0.0
    %4148 = vmatprep.subr.mxu0 0.0
    %4149 = vmatpush1.msra.mxu0 0.0
    %4150 = vmatprep.subr.mxu0 0.0
    %4151 = vmatpush1.msra.mxu0 0.0
    %4152 = vmatprep.subr.mxu0 0.0
    %4153 = vmatpush1.msra.mxu0 0.0
    %4154 = vmatprep.subr.mxu0 0.0
    %4155 = vmatpush1.msra.mxu0 0.0
    %4156 = vmatprep.subr.mxu0 0.0
    %4157 = vmatpush1.msra.mxu0 0.0
    %4158 = vmatprep.subr.mxu0 0.0
    %4159 = vmatpush1.msra.mxu0 0.0
    %4160 = vmatprep.subr.mxu0 0.0
    %4161 = vmatpush1.msra.mxu0 0.0
    %4162 = vmatprep.subr.mxu0 0.0
    %4163 = vmatpush1.msra.mxu0 0.0
    %4164 = vmatprep.subr.mxu0 0.0
    %4165 = vmatpush1.msra.mxu0 0.0
    %4166 = vmatprep.subr.mxu0 0.0
    %4167 = vmatpush1.msra.mxu0 0.0
    %4168 = vmatprep.subr.mxu0 0.0
    %4169 = vmatpush1.msra.mxu0 0.0
    %4170 = vmatprep.subr.mxu0 0.0
    %4171 = vmatpush1.msra.mxu0 0.0
    %4172 = vmatprep.subr.mxu0 0.0
    %4173 = vmatpush1.msra.mxu0 0.0
    %4174 = vmatprep.subr.mxu0 0.0
    %4175 = vmatpush1.msra.mxu0 0.0
    %4176 = vmatprep.subr.mxu0 0.0
    %4177 = vmatpush1.msra.mxu0 0.0
    %4178 = vmatprep.subr.mxu0 0.0
    %4179 = vmatpush1.msra.mxu0 0.0
    %4180 = vmatprep.subr.mxu0 0.0
    %4181 = vmatpush1.msra.mxu0 0.0
    %4182 = vmatprep.subr.mxu0 0.0
    %4183 = vmatpush1.msra.mxu0 0.0
    %4184 = vmatprep.subr.mxu0 0.0
    %4185 = vmatpush1.msra.mxu0 0.0
    %4186 = vmatprep.subr.mxu0 0.0
    %4187 = vmatpush1.msra.mxu0 0.0
    %4188 = vmatprep.subr.mxu0 0.0
    %4189 = vmatpush1.msra.mxu0 0.0
    %4190 = vmatprep.subr.mxu0 0.0
    %4191 = vmatpush1.msra.mxu0 0.0
    %4192 = vmatprep.mubr.f32.mxu0 0.0
    %4193 = vmatmul.mubr.f32.gmra.mrb[0].mxu0 %v4123
    %v4194 = vpop.f32.mrb[0].mxu0
    %v4195 = vadd.f32 0.0, %v4194
    %v4196 = vpop.f32.mrb[0].mxu0
    %4197 = vmatprep.mubr.f32.mxu0 0.0
    %4198 = vmatmul.mubr.f32.gmra.mrb[0].mxu0 %v4126
    %v4199 = vpop.f32.mrb[0].mxu0
    %v4200 = vadd.f32 0.0, %v4199
    %v4201 = vpop.f32.mrb[0].mxu0
    %4202 = vdwg.mxu0
    %v4204 = vsel %vm1131, %v3709, 0
    %v4207 = vsel %vm1131, %v3785, 0
    %4209 = vmatprep.subr.mxu0 0.0
    %4210 = vmatpush1.msra.mxu0 %v3452
    %4211 = vmatprep.subr.mxu0 0.0
    %4212 = vmatpush1.msra.mxu0 0.0
    %4213 = vmatprep.subr.mxu0 0.0
    %4214 = vmatpush1.msra.mxu0 0.0
    %4215 = vmatprep.subr.mxu0 0.0
    %4216 = vmatpush1.msra.mxu0 0.0
    %4217 = vmatprep.subr.mxu0 0.0
    %4218 = vmatpush1.msra.mxu0 0.0
    %4219 = vmatprep.subr.mxu0 0.0
    %4220 = vmatpush1.msra.mxu0 0.0
    %4221 = vmatprep.subr.mxu0 0.0
    %4222 = vmatpush1.msra.mxu0 0.0
    %4223 = vmatprep.subr.mxu0 0.0
    %4224 = vmatpush1.msra.mxu0 0.0
    %4225 = vmatprep.subr.mxu0 0.0
    %4226 = vmatpush1.msra.mxu0 0.0
    %4227 = vmatprep.subr.mxu0 0.0
    %4228 = vmatpush1.msra.mxu0 0.0
    %4229 = vmatprep.subr.mxu0 0.0
    %4230 = vmatpush1.msra.mxu0 0.0
    %4231 = vmatprep.subr.mxu0 0.0
    %4232 = vmatpush1.msra.mxu0 0.0
    %4233 = vmatprep.subr.mxu0 0.0
    %4234 = vmatpush1.msra.mxu0 0.0
    %4235 = vmatprep.subr.mxu0 0.0
    %4236 = vmatpush1.msra.mxu0 0.0
    %4237 = vmatprep.subr.mxu0 0.0
    %4238 = vmatpush1.msra.mxu0 0.0
    %4239 = vmatprep.subr.mxu0 0.0
    %4240 = vmatpush1.msra.mxu0 0.0
    %4241 = vmatprep.subr.mxu0 0.0
    %4242 = vmatpush1.msra.mxu0 0.0
    %4243 = vmatprep.subr.mxu0 0.0
    %4244 = vmatpush1.msra.mxu0 0.0
    %4245 = vmatprep.subr.mxu0 0.0
    %4246 = vmatpush1.msra.mxu0 0.0
    %4247 = vmatprep.subr.mxu0 0.0
    %4248 = vmatpush1.msra.mxu0 0.0
    %4249 = vmatprep.subr.mxu0 0.0
    %4250 = vmatpush1.msra.mxu0 0.0
    %4251 = vmatprep.subr.mxu0 0.0
    %4252 = vmatpush1.msra.mxu0 0.0
    %4253 = vmatprep.subr.mxu0 0.0
    %4254 = vmatpush1.msra.mxu0 0.0
    %4255 = vmatprep.subr.mxu0 0.0
    %4256 = vmatpush1.msra.mxu0 0.0
    %4257 = vmatprep.subr.mxu0 0.0
    %4258 = vmatpush1.msra.mxu0 0.0
    %4259 = vmatprep.subr.mxu0 0.0
    %4260 = vmatpush1.msra.mxu0 0.0
    %4261 = vmatprep.subr.mxu0 0.0
    %4262 = vmatpush1.msra.mxu0 0.0
    %4263 = vmatprep.subr.mxu0 0.0
    %4264 = vmatpush1.msra.mxu0 0.0
    %4265 = vmatprep.subr.mxu0 0.0
    %4266 = vmatpush1.msra.mxu0 0.0
    %4267 = vmatprep.subr.mxu0 0.0
    %4268 = vmatpush1.msra.mxu0 0.0
    %4269 = vmatprep.subr.mxu0 0.0
    %4270 = vmatpush1.msra.mxu0 0.0
    %4271 = vmatprep.subr.mxu0 0.0
    %4272 = vmatpush1.msra.mxu0 0.0
    %4273 = vmatprep.mubr.f32.mxu0 0.0
    %4274 = vmatmul.mubr.f32.gmra.mrb[0].mxu0 %v4204
    %v4275 = vpop.f32.mrb[0].mxu0
    %v4276 = vadd.f32 %v4195, %v4275
    %v4277 = vpop.f32.mrb[0].mxu0
    %4278 = vmatprep.mubr.f32.mxu0 0.0
    %4279 = vmatmul.mubr.f32.gmra.mrb[0].mxu0 %v4207
    %v4280 = vpop.f32.mrb[0].mxu0
    %v4281 = vadd.f32 %v4200, %v4280
    %v4282 = vpop.f32.mrb[0].mxu0
    %4283 = vdwg.mxu0
    %4284 = vrot.lane.b32.xlu0 %v3443, 112
    %v4285 = vpop.permute.xlu0 %4284
    %4286 = vrot.lane.b32.xlu0 %v3443, 80
    %v4287 = vpop.permute.xlu0 %4286
    %v4288 = vsel %vm1131, %v4285, 0
    %v4290 = vsel %vm1131, %v4287, 0
    %4292 = vmatprep.subr.mxu0 0.0
    %4293 = vmatpush1.xpose.msra.mxu0 %v4290
    %4294 = vmatprep.subr.mxu0 0.0
    %4295 = vmatpush1.xpose.msra.mxu0 0.0
    %4296 = vmatprep.subr.mxu0 0.0
    %4297 = vmatpush1.xpose.msra.mxu0 0.0
    %4298 = vmatprep.subr.mxu0 0.0
    %4299 = vmatpush1.xpose.msra.mxu0 0.0
    %4300 = vmatprep.subr.mxu0 0.0
    %4301 = vmatpush1.xpose.msra.mxu0 0.0
    %4302 = vmatprep.subr.mxu0 0.0
    %4303 = vmatpush1.xpose.msra.mxu0 0.0
    %4304 = vmatprep.subr.mxu0 0.0
    %4305 = vmatpush1.xpose.msra.mxu0 0.0
    %4306 = vmatprep.subr.mxu0 0.0
    %4307 = vmatpush1.xpose.msra.mxu0 0.0
    %4308 = vmatprep.subr.mxu0 0.0
    %4309 = vmatpush1.xpose.msra.mxu0 0.0
    %4310 = vmatprep.subr.mxu0 0.0
    %4311 = vmatpush1.xpose.msra.mxu0 0.0
    %4312 = vmatprep.subr.mxu0 0.0
    %4313 = vmatpush1.xpose.msra.mxu0 0.0
    %4314 = vmatprep.subr.mxu0 0.0
    %4315 = vmatpush1.xpose.msra.mxu0 0.0
    %4316 = vmatprep.subr.mxu0 0.0
    %4317 = vmatpush1.xpose.msra.mxu0 0.0
    %4318 = vmatprep.subr.mxu0 0.0
    %4319 = vmatpush1.xpose.msra.mxu0 0.0
    %4320 = vmatprep.subr.mxu0 0.0
    %4321 = vmatpush1.xpose.msra.mxu0 0.0
    %4322 = vmatprep.subr.mxu0 0.0
    %4323 = vmatpush1.xpose.msra.mxu0 0.0
    %4324 = vmatprep.subr.mxu0 0.0
    %4325 = vmatpush1.xpose.msra.mxu0 0.0
    %4326 = vmatprep.subr.mxu0 0.0
    %4327 = vmatpush1.xpose.msra.mxu0 0.0
    %4328 = vmatprep.subr.mxu0 0.0
    %4329 = vmatpush1.xpose.msra.mxu0 0.0
    %4330 = vmatprep.subr.mxu0 0.0
    %4331 = vmatpush1.xpose.msra.mxu0 0.0
    %4332 = vmatprep.subr.mxu0 0.0
    %4333 = vmatpush1.xpose.msra.mxu0 0.0
    %4334 = vmatprep.subr.mxu0 0.0
    %4335 = vmatpush1.xpose.msra.mxu0 0.0
    %4336 = vmatprep.subr.mxu0 0.0
    %4337 = vmatpush1.xpose.msra.mxu0 0.0
    %4338 = vmatprep.subr.mxu0 0.0
    %4339 = vmatpush1.xpose.msra.mxu0 0.0
    %4340 = vmatprep.subr.mxu0 0.0
    %4341 = vmatpush1.xpose.msra.mxu0 0.0
    %4342 = vmatprep.subr.mxu0 0.0
    %4343 = vmatpush1.xpose.msra.mxu0 0.0
    %4344 = vmatprep.subr.mxu0 0.0
    %4345 = vmatpush1.xpose.msra.mxu0 0.0
    %4346 = vmatprep.subr.mxu0 0.0
    %4347 = vmatpush1.xpose.msra.mxu0 0.0
    %4348 = vmatprep.subr.mxu0 0.0
    %4349 = vmatpush1.xpose.msra.mxu0 0.0
    %4350 = vmatprep.subr.mxu0 0.0
    %4351 = vmatpush1.xpose.msra.mxu0 0.0
    %4352 = vmatprep.subr.mxu0 0.0
    %4353 = vmatpush1.xpose.msra.mxu0 0.0
    %4354 = vmatprep.subr.mxu0 0.0
    %4355 = vmatpush1.xpose.msra.mxu0 0.0
    %4356 = vmatprep.mubr.f32.mxu0 0.0
    %4357 = vmatmul.mubr.f32.gmra.mrb[0].mxu0 %v4288
    %v4358 = vpop.f32.mrb[0].mxu0
    %v4359 = vadd.f32 0.0, %v4358
    %v4360 = vpop.f32.mrb[0].mxu0
    %4361 = vdwg.mxu0
    %4362 = vrot.lane.b32.xlu0 %v3448, 112
    %v4363 = vpop.permute.xlu0 %4362
    %4364 = vrot.lane.b32.xlu0 %v3448, 80
    %v4365 = vpop.permute.xlu0 %4364
    %v4366 = vsel %vm1131, %v4363, 0
    %v4368 = vsel %vm1131, %v4365, 0
    %4370 = vmatprep.subr.mxu0 0.0
    %4371 = vmatpush1.xpose.msra.mxu0 %v4368
    %4372 = vmatprep.subr.mxu0 0.0
    %4373 = vmatpush1.xpose.msra.mxu0 0.0
    %4374 = vmatprep.subr.mxu0 0.0
    %4375 = vmatpush1.xpose.msra.mxu0 0.0
    %4376 = vmatprep.subr.mxu0 0.0
    %4377 = vmatpush1.xpose.msra.mxu0 0.0
    %4378 = vmatprep.subr.mxu0 0.0
    %4379 = vmatpush1.xpose.msra.mxu0 0.0
    %4380 = vmatprep.subr.mxu0 0.0
    %4381 = vmatpush1.xpose.msra.mxu0 0.0
    %4382 = vmatprep.subr.mxu0 0.0
    %4383 = vmatpush1.xpose.msra.mxu0 0.0
    %4384 = vmatprep.subr.mxu0 0.0
    %4385 = vmatpush1.xpose.msra.mxu0 0.0
    %4386 = vmatprep.subr.mxu0 0.0
    %4387 = vmatpush1.xpose.msra.mxu0 0.0
    %4388 = vmatprep.subr.mxu0 0.0
    %4389 = vmatpush1.xpose.msra.mxu0 0.0
    %4390 = vmatprep.subr.mxu0 0.0
    %4391 = vmatpush1.xpose.msra.mxu0 0.0
    %4392 = vmatprep.subr.mxu0 0.0
    %4393 = vmatpush1.xpose.msra.mxu0 0.0
    %4394 = vmatprep.subr.mxu0 0.0
    %4395 = vmatpush1.xpose.msra.mxu0 0.0
    %4396 = vmatprep.subr.mxu0 0.0
    %4397 = vmatpush1.xpose.msra.mxu0 0.0
    %4398 = vmatprep.subr.mxu0 0.0
    %4399 = vmatpush1.xpose.msra.mxu0 0.0
    %4400 = vmatprep.subr.mxu0 0.0
    %4401 = vmatpush1.xpose.msra.mxu0 0.0
    %4402 = vmatprep.subr.mxu0 0.0
    %4403 = vmatpush1.xpose.msra.mxu0 0.0
    %4404 = vmatprep.subr.mxu0 0.0
    %4405 = vmatpush1.xpose.msra.mxu0 0.0
    %4406 = vmatprep.subr.mxu0 0.0
    %4407 = vmatpush1.xpose.msra.mxu0 0.0
    %4408 = vmatprep.subr.mxu0 0.0
    %4409 = vmatpush1.xpose.msra.mxu0 0.0
    %4410 = vmatprep.subr.mxu0 0.0
    %4411 = vmatpush1.xpose.msra.mxu0 0.0
    %4412 = vmatprep.subr.mxu0 0.0
    %4413 = vmatpush1.xpose.msra.mxu0 0.0
    %4414 = vmatprep.subr.mxu0 0.0
    %4415 = vmatpush1.xpose.msra.mxu0 0.0
    %4416 = vmatprep.subr.mxu0 0.0
    %4417 = vmatpush1.xpose.msra.mxu0 0.0
    %4418 = vmatprep.subr.mxu0 0.0
    %4419 = vmatpush1.xpose.msra.mxu0 0.0
    %4420 = vmatprep.subr.mxu0 0.0
    %4421 = vmatpush1.xpose.msra.mxu0 0.0
    %4422 = vmatprep.subr.mxu0 0.0
    %4423 = vmatpush1.xpose.msra.mxu0 0.0
    %4424 = vmatprep.subr.mxu0 0.0
    %4425 = vmatpush1.xpose.msra.mxu0 0.0
    %4426 = vmatprep.subr.mxu0 0.0
    %4427 = vmatpush1.xpose.msra.mxu0 0.0
    %4428 = vmatprep.subr.mxu0 0.0
    %4429 = vmatpush1.xpose.msra.mxu0 0.0
    %4430 = vmatprep.subr.mxu0 0.0
    %4431 = vmatpush1.xpose.msra.mxu0 0.0
    %4432 = vmatprep.subr.mxu0 0.0
    %4433 = vmatpush1.xpose.msra.mxu0 0.0
    %4434 = vmatprep.mubr.f32.mxu0 0.0
    %4435 = vmatmul.mubr.f32.gmra.mrb[0].mxu0 %v4366
    %v4436 = vpop.f32.mrb[0].mxu0
    %v4437 = vadd.f32 0.0, %v4436
    %v4438 = vpop.f32.mrb[0].mxu0
    %4439 = vdwg.mxu0
    %v4440 = vmul.f32 %v4359, 0.35355338
    %v4441 = vmul.f32 %v4437, 0.35355338
    %v4442 = vadd.f32 %v4440, %v1288
    %v4443 = vadd.f32 %v4441, %v1292
    %v4444 = vsel %vm1131, %v4442, -inf
    %4445 = vmax.xlane.f32.xlu0 %v4444
    %v4446 = vpop.xlane.xlu0 %4445
    %v4447 = vsel %vm1131, %v4443, -inf
    %4448 = vmax.xlane.f32.xlu0 %v4447
    %v4449 = vpop.xlane.xlu0 %4448
    %v4450 = vsub.f32 %v4442, %v4446
    %v4451 = vsub.f32 %v4443, %v4449
    %v4452 = vmul.f32 %v4450, 1.442695
    %v4453 = vpow.pop %v4452
    %v4454 = vmul.f32 %v4451, 1.442695
    %v4455 = vpow.pop %v4454
    %v4456 = vsel %vm1131, %v4453, 0.0
    %4457 = vadd.xlane.f32.xlu0 %v4456
    %v4458 = vpop.xlane.xlu0 %4457
    %v4459 = vsel %vm1131, %v4455, 0.0
    %4460 = vadd.xlane.f32.xlu0 %v4459
    %v4461 = vpop.xlane.xlu0 %4460
    %v4462 = vrcp.pop %v4458
    %v4463 = vmul.f32 %v4453, %v4462
    %v4464 = vrcp.pop %v4461
    %v4465 = vmul.f32 %v4455, %v4464
    %4466 = vrot.lane.b32.xlu0 %v3443, 48
    %v4467 = vpop.permute.xlu0 %4466
    %v4470 = vsel %vm1131, %v4463, 0
    %4472 = vmatprep.subr.mxu0 0.0
    %4473 = vmatpush1.msra.mxu0 %v4467
    %4474 = vmatprep.subr.mxu0 0.0
    %4475 = vmatpush1.msra.mxu0 0.0
    %4476 = vmatprep.subr.mxu0 0.0
    %4477 = vmatpush1.msra.mxu0 0.0
    %4478 = vmatprep.subr.mxu0 0.0
    %4479 = vmatpush1.msra.mxu0 0.0
    %4480 = vmatprep.subr.mxu0 0.0
    %4481 = vmatpush1.msra.mxu0 0.0
    %4482 = vmatprep.subr.mxu0 0.0
    %4483 = vmatpush1.msra.mxu0 0.0
    %4484 = vmatprep.subr.mxu0 0.0
    %4485 = vmatpush1.msra.mxu0 0.0
    %4486 = vmatprep.subr.mxu0 0.0
    %4487 = vmatpush1.msra.mxu0 0.0
    %4488 = vmatprep.subr.mxu0 0.0
    %4489 = vmatpush1.msra.mxu0 0.0
    %4490 = vmatprep.subr.mxu0 0.0
    %4491 = vmatpush1.msra.mxu0 0.0
    %4492 = vmatprep.subr.mxu0 0.0
    %4493 = vmatpush1.msra.mxu0 0.0
    %4494 = vmatprep.subr.mxu0 0.0
    %4495 = vmatpush1.msra.mxu0 0.0
    %4496 = vmatprep.subr.mxu0 0.0
    %4497 = vmatpush1.msra.mxu0 0.0
    %4498 = vmatprep.subr.mxu0 0.0
    %4499 = vmatpush1.msra.mxu0 0.0
    %4500 = vmatprep.subr.mxu0 0.0
    %4501 = vmatpush1.msra.mxu0 0.0
    %4502 = vmatprep.subr.mxu0 0.0
    %4503 = vmatpush1.msra.mxu0 0.0
    %4504 = vmatprep.subr.mxu0 0.0
    %4505 = vmatpush1.msra.mxu0 0.0
    %4506 = vmatprep.subr.mxu0 0.0
    %4507 = vmatpush1.msra.mxu0 0.0
    %4508 = vmatprep.subr.mxu0 0.0
    %4509 = vmatpush1.msra.mxu0 0.0
    %4510 = vmatprep.subr.mxu0 0.0
    %4511 = vmatpush1.msra.mxu0 0.0
    %4512 = vmatprep.subr.mxu0 0.0
    %4513 = vmatpush1.msra.mxu0 0.0
    %4514 = vmatprep.subr.mxu0 0.0
    %4515 = vmatpush1.msra.mxu0 0.0
    %4516 = vmatprep.subr.mxu0 0.0
    %4517 = vmatpush1.msra.mxu0 0.0
    %4518 = vmatprep.subr.mxu0 0.0
    %4519 = vmatpush1.msra.mxu0 0.0
    %4520 = vmatprep.subr.mxu0 0.0
    %4521 = vmatpush1.msra.mxu0 0.0
    %4522 = vmatprep.subr.mxu0 0.0
    %4523 = vmatpush1.msra.mxu0 0.0
    %4524 = vmatprep.subr.mxu0 0.0
    %4525 = vmatpush1.msra.mxu0 0.0
    %4526 = vmatprep.subr.mxu0 0.0
    %4527 = vmatpush1.msra.mxu0 0.0
    %4528 = vmatprep.subr.mxu0 0.0
    %4529 = vmatpush1.msra.mxu0 0.0
    %4530 = vmatprep.subr.mxu0 0.0
    %4531 = vmatpush1.msra.mxu0 0.0
    %4532 = vmatprep.subr.mxu0 0.0
    %4533 = vmatpush1.msra.mxu0 0.0
    %4534 = vmatprep.subr.mxu0 0.0
    %4535 = vmatpush1.msra.mxu0 0.0
    %4536 = vmatprep.mubr.f32.mxu0 0.0
    %4537 = vmatmul.mubr.f32.gmra.mrb[0].mxu0 %v4470
    %v4538 = vpop.f32.mrb[0].mxu0
    %v4539 = vadd.f32 0.0, %v4538
    %v4540 = vpop.f32.mrb[0].mxu0
    %4541 = vdwg.mxu0
    %4542 = vrot.lane.b32.xlu0 %v3448, 48
    %v4543 = vpop.permute.xlu0 %4542
    %v4546 = vsel %vm1131, %v4465, 0
    %4548 = vmatprep.subr.mxu0 0.0
    %4549 = vmatpush1.msra.mxu0 %v4543
    %4550 = vmatprep.subr.mxu0 0.0
    %4551 = vmatpush1.msra.mxu0 0.0
    %4552 = vmatprep.subr.mxu0 0.0
    %4553 = vmatpush1.msra.mxu0 0.0
    %4554 = vmatprep.subr.mxu0 0.0
    %4555 = vmatpush1.msra.mxu0 0.0
    %4556 = vmatprep.subr.mxu0 0.0
    %4557 = vmatpush1.msra.mxu0 0.0
    %4558 = vmatprep.subr.mxu0 0.0
    %4559 = vmatpush1.msra.mxu0 0.0
    %4560 = vmatprep.subr.mxu0 0.0
    %4561 = vmatpush1.msra.mxu0 0.0
    %4562 = vmatprep.subr.mxu0 0.0
    %4563 = vmatpush1.msra.mxu0 0.0
    %4564 = vmatprep.subr.mxu0 0.0
    %4565 = vmatpush1.msra.mxu0 0.0
    %4566 = vmatprep.subr.mxu0 0.0
    %4567 = vmatpush1.msra.mxu0 0.0
    %4568 = vmatprep.subr.mxu0 0.0
    %4569 = vmatpush1.msra.mxu0 0.0
    %4570 = vmatprep.subr.mxu0 0.0
    %4571 = vmatpush1.msra.mxu0 0.0
    %4572 = vmatprep.subr.mxu0 0.0
    %4573 = vmatpush1.msra.mxu0 0.0
    %4574 = vmatprep.subr.mxu0 0.0
    %4575 = vmatpush1.msra.mxu0 0.0
    %4576 = vmatprep.subr.mxu0 0.0
    %4577 = vmatpush1.msra.mxu0 0.0
    %4578 = vmatprep.subr.mxu0 0.0
    %4579 = vmatpush1.msra.mxu0 0.0
    %4580 = vmatprep.subr.mxu0 0.0
    %4581 = vmatpush1.msra.mxu0 0.0
    %4582 = vmatprep.subr.mxu0 0.0
    %4583 = vmatpush1.msra.mxu0 0.0
    %4584 = vmatprep.subr.mxu0 0.0
    %4585 = vmatpush1.msra.mxu0 0.0
    %4586 = vmatprep.subr.mxu0 0.0
    %4587 = vmatpush1.msra.mxu0 0.0
    %4588 = vmatprep.subr.mxu0 0.0
    %4589 = vmatpush1.msra.mxu0 0.0
    %4590 = vmatprep.subr.mxu0 0.0
    %4591 = vmatpush1.msra.mxu0 0.0
    %4592 = vmatprep.subr.mxu0 0.0
    %4593 = vmatpush1.msra.mxu0 0.0
    %4594 = vmatprep.subr.mxu0 0.0
    %4595 = vmatpush1.msra.mxu0 0.0
    %4596 = vmatprep.subr.mxu0 0.0
    %4597 = vmatpush1.msra.mxu0 0.0
    %4598 = vmatprep.subr.mxu0 0.0
    %4599 = vmatpush1.msra.mxu0 0.0
    %4600 = vmatprep.subr.mxu0 0.0
    %4601 = vmatpush1.msra.mxu0 0.0
    %4602 = vmatprep.subr.mxu0 0.0
    %4603 = vmatpush1.msra.mxu0 0.0
    %4604 = vmatprep.subr.mxu0 0.0
    %4605 = vmatpush1.msra.mxu0 0.0
    %4606 = vmatprep.subr.mxu0 0.0
    %4607 = vmatpush1.msra.mxu0 0.0
    %4608 = vmatprep.subr.mxu0 0.0
    %4609 = vmatpush1.msra.mxu0 0.0
    %4610 = vmatprep.subr.mxu0 0.0
    %4611 = vmatpush1.msra.mxu0 0.0
    %4612 = vmatprep.mubr.f32.mxu0 0.0
    %4613 = vmatmul.mubr.f32.gmra.mrb[0].mxu0 %v4546
    %v4614 = vpop.f32.mrb[0].mxu0
    %v4615 = vadd.f32 0.0, %v4614
    %v4616 = vpop.f32.mrb[0].mxu0
    %4617 = vdwg.mxu0
    %v4619 = vsel %vm1131, %v4539, 0
    %v4622 = vsel %vm1131, %v4615, 0
    %4624 = vmatprep.subr.mxu0 0.0
    %4625 = vmatpush1.msra.mxu0 %v3454
    %4626 = vmatprep.subr.mxu0 0.0
    %4627 = vmatpush1.msra.mxu0 0.0
    %4628 = vmatprep.subr.mxu0 0.0
    %4629 = vmatpush1.msra.mxu0 0.0
    %4630 = vmatprep.subr.mxu0 0.0
    %4631 = vmatpush1.msra.mxu0 0.0
    %4632 = vmatprep.subr.mxu0 0.0
    %4633 = vmatpush1.msra.mxu0 0.0
    %4634 = vmatprep.subr.mxu0 0.0
    %4635 = vmatpush1.msra.mxu0 0.0
    %4636 = vmatprep.subr.mxu0 0.0
    %4637 = vmatpush1.msra.mxu0 0.0
    %4638 = vmatprep.subr.mxu0 0.0
    %4639 = vmatpush1.msra.mxu0 0.0
    %4640 = vmatprep.subr.mxu0 0.0
    %4641 = vmatpush1.msra.mxu0 0.0
    %4642 = vmatprep.subr.mxu0 0.0
    %4643 = vmatpush1.msra.mxu0 0.0
    %4644 = vmatprep.subr.mxu0 0.0
    %4645 = vmatpush1.msra.mxu0 0.0
    %4646 = vmatprep.subr.mxu0 0.0
    %4647 = vmatpush1.msra.mxu0 0.0
    %4648 = vmatprep.subr.mxu0 0.0
    %4649 = vmatpush1.msra.mxu0 0.0
    %4650 = vmatprep.subr.mxu0 0.0
    %4651 = vmatpush1.msra.mxu0 0.0
    %4652 = vmatprep.subr.mxu0 0.0
    %4653 = vmatpush1.msra.mxu0 0.0
    %4654 = vmatprep.subr.mxu0 0.0
    %4655 = vmatpush1.msra.mxu0 0.0
    %4656 = vmatprep.subr.mxu0 0.0
    %4657 = vmatpush1.msra.mxu0 0.0
    %4658 = vmatprep.subr.mxu0 0.0
    %4659 = vmatpush1.msra.mxu0 0.0
    %4660 = vmatprep.subr.mxu0 0.0
    %4661 = vmatpush1.msra.mxu0 0.0
    %4662 = vmatprep.subr.mxu0 0.0
    %4663 = vmatpush1.msra.mxu0 0.0
    %4664 = vmatprep.subr.mxu0 0.0
    %4665 = vmatpush1.msra.mxu0 0.0
    %4666 = vmatprep.subr.mxu0 0.0
    %4667 = vmatpush1.msra.mxu0 0.0
    %4668 = vmatprep.subr.mxu0 0.0
    %4669 = vmatpush1.msra.mxu0 0.0
    %4670 = vmatprep.subr.mxu0 0.0
    %4671 = vmatpush1.msra.mxu0 0.0
    %4672 = vmatprep.subr.mxu0 0.0
    %4673 = vmatpush1.msra.mxu0 0.0
    %4674 = vmatprep.subr.mxu0 0.0
    %4675 = vmatpush1.msra.mxu0 0.0
    %4676 = vmatprep.subr.mxu0 0.0
    %4677 = vmatpush1.msra.mxu0 0.0
    %4678 = vmatprep.subr.mxu0 0.0
    %4679 = vmatpush1.msra.mxu0 0.0
    %4680 = vmatprep.subr.mxu0 0.0
    %4681 = vmatpush1.msra.mxu0 0.0
    %4682 = vmatprep.subr.mxu0 0.0
    %4683 = vmatpush1.msra.mxu0 0.0
    %4684 = vmatprep.subr.mxu0 0.0
    %4685 = vmatpush1.msra.mxu0 0.0
    %4686 = vmatprep.subr.mxu0 0.0
    %4687 = vmatpush1.msra.mxu0 0.0
    %4688 = vmatprep.mubr.f32.mxu0 0.0
    %4689 = vmatmul.mubr.f32.gmra.mrb[0].mxu0 %v4619
    %v4690 = vpop.f32.mrb[0].mxu0
    %v4691 = vadd.f32 0.0, %v4690
    %v4692 = vpop.f32.mrb[0].mxu0
    %4693 = vmatprep.mubr.f32.mxu0 0.0
    %4694 = vmatmul.mubr.f32.gmra.mrb[0].mxu0 %v4622
    %v4695 = vpop.f32.mrb[0].mxu0
    %v4696 = vadd.f32 0.0, %v4695
    %v4697 = vpop.f32.mrb[0].mxu0
    %4698 = vdwg.mxu0
    %v4699 = vadd.f32 %v4276, %v4691
    %v4700 = vadd.f32 %v4281, %v4696
    %4701 = vrot.lane.b32.xlu0 %v3443, 104
    %v4702 = vpop.permute.xlu0 %4701
    %4703 = vrot.lane.b32.xlu0 %v3443, 72
    %v4704 = vpop.permute.xlu0 %4703
    %v4705 = vsel %vm1131, %v4702, 0
    %v4707 = vsel %vm1131, %v4704, 0
    %4709 = vmatprep.subr.mxu0 0.0
    %4710 = vmatpush1.xpose.msra.mxu0 %v4707
    %4711 = vmatprep.subr.mxu0 0.0
    %4712 = vmatpush1.xpose.msra.mxu0 0.0
    %4713 = vmatprep.subr.mxu0 0.0
    %4714 = vmatpush1.xpose.msra.mxu0 0.0
    %4715 = vmatprep.subr.mxu0 0.0
    %4716 = vmatpush1.xpose.msra.mxu0 0.0
    %4717 = vmatprep.subr.mxu0 0.0
    %4718 = vmatpush1.xpose.msra.mxu0 0.0
    %4719 = vmatprep.subr.mxu0 0.0
    %4720 = vmatpush1.xpose.msra.mxu0 0.0
    %4721 = vmatprep.subr.mxu0 0.0
    %4722 = vmatpush1.xpose.msra.mxu0 0.0
    %4723 = vmatprep.subr.mxu0 0.0
    %4724 = vmatpush1.xpose.msra.mxu0 0.0
    %4725 = vmatprep.subr.mxu0 0.0
    %4726 = vmatpush1.xpose.msra.mxu0 0.0
    %4727 = vmatprep.subr.mxu0 0.0
    %4728 = vmatpush1.xpose.msra.mxu0 0.0
    %4729 = vmatprep.subr.mxu0 0.0
    %4730 = vmatpush1.xpose.msra.mxu0 0.0
    %4731 = vmatprep.subr.mxu0 0.0
    %4732 = vmatpush1.xpose.msra.mxu0 0.0
    %4733 = vmatprep.subr.mxu0 0.0
    %4734 = vmatpush1.xpose.msra.mxu0 0.0
    %4735 = vmatprep.subr.mxu0 0.0
    %4736 = vmatpush1.xpose.msra.mxu0 0.0
    %4737 = vmatprep.subr.mxu0 0.0
    %4738 = vmatpush1.xpose.msra.mxu0 0.0
    %4739 = vmatprep.subr.mxu0 0.0
    %4740 = vmatpush1.xpose.msra.mxu0 0.0
    %4741 = vmatprep.subr.mxu0 0.0
    %4742 = vmatpush1.xpose.msra.mxu0 0.0
    %4743 = vmatprep.subr.mxu0 0.0
    %4744 = vmatpush1.xpose.msra.mxu0 0.0
    %4745 = vmatprep.subr.mxu0 0.0
    %4746 = vmatpush1.xpose.msra.mxu0 0.0
    %4747 = vmatprep.subr.mxu0 0.0
    %4748 = vmatpush1.xpose.msra.mxu0 0.0
    %4749 = vmatprep.subr.mxu0 0.0
    %4750 = vmatpush1.xpose.msra.mxu0 0.0
    %4751 = vmatprep.subr.mxu0 0.0
    %4752 = vmatpush1.xpose.msra.mxu0 0.0
    %4753 = vmatprep.subr.mxu0 0.0
    %4754 = vmatpush1.xpose.msra.mxu0 0.0
    %4755 = vmatprep.subr.mxu0 0.0
    %4756 = vmatpush1.xpose.msra.mxu0 0.0
    %4757 = vmatprep.subr.mxu0 0.0
    %4758 = vmatpush1.xpose.msra.mxu0 0.0
    %4759 = vmatprep.subr.mxu0 0.0
    %4760 = vmatpush1.xpose.msra.mxu0 0.0
    %4761 = vmatprep.subr.mxu0 0.0
    %4762 = vmatpush1.xpose.msra.mxu0 0.0
    %4763 = vmatprep.subr.mxu0 0.0
    %4764 = vmatpush1.xpose.msra.mxu0 0.0
    %4765 = vmatprep.subr.mxu0 0.0
    %4766 = vmatpush1.xpose.msra.mxu0 0.0
    %4767 = vmatprep.subr.mxu0 0.0
    %4768 = vmatpush1.xpose.msra.mxu0 0.0
    %4769 = vmatprep.subr.mxu0 0.0
    %4770 = vmatpush1.xpose.msra.mxu0 0.0
    %4771 = vmatprep.subr.mxu0 0.0
    %4772 = vmatpush1.xpose.msra.mxu0 0.0
    %4773 = vmatprep.mubr.f32.mxu0 0.0
    %4774 = vmatmul.mubr.f32.gmra.mrb[0].mxu0 %v4705
    %v4775 = vpop.f32.mrb[0].mxu0
    %v4776 = vadd.f32 0.0, %v4775
    %v4777 = vpop.f32.mrb[0].mxu0
    %4778 = vdwg.mxu0
    %4779 = vrot.lane.b32.xlu0 %v3448, 104
    %v4780 = vpop.permute.xlu0 %4779
    %4781 = vrot.lane.b32.xlu0 %v3448, 72
    %v4782 = vpop.permute.xlu0 %4781
    %v4783 = vsel %vm1131, %v4780, 0
    %v4785 = vsel %vm1131, %v4782, 0
    %4787 = vmatprep.subr.mxu0 0.0
    %4788 = vmatpush1.xpose.msra.mxu0 %v4785
    %4789 = vmatprep.subr.mxu0 0.0
    %4790 = vmatpush1.xpose.msra.mxu0 0.0
    %4791 = vmatprep.subr.mxu0 0.0
    %4792 = vmatpush1.xpose.msra.mxu0 0.0
    %4793 = vmatprep.subr.mxu0 0.0
    %4794 = vmatpush1.xpose.msra.mxu0 0.0
    %4795 = vmatprep.subr.mxu0 0.0
    %4796 = vmatpush1.xpose.msra.mxu0 0.0
    %4797 = vmatprep.subr.mxu0 0.0
    %4798 = vmatpush1.xpose.msra.mxu0 0.0
    %4799 = vmatprep.subr.mxu0 0.0
    %4800 = vmatpush1.xpose.msra.mxu0 0.0
    %4801 = vmatprep.subr.mxu0 0.0
    %4802 = vmatpush1.xpose.msra.mxu0 0.0
    %4803 = vmatprep.subr.mxu0 0.0
    %4804 = vmatpush1.xpose.msra.mxu0 0.0
    %4805 = vmatprep.subr.mxu0 0.0
    %4806 = vmatpush1.xpose.msra.mxu0 0.0
    %4807 = vmatprep.subr.mxu0 0.0
    %4808 = vmatpush1.xpose.msra.mxu0 0.0
    %4809 = vmatprep.subr.mxu0 0.0
    %4810 = vmatpush1.xpose.msra.mxu0 0.0
    %4811 = vmatprep.subr.mxu0 0.0
    %4812 = vmatpush1.xpose.msra.mxu0 0.0
    %4813 = vmatprep.subr.mxu0 0.0
    %4814 = vmatpush1.xpose.msra.mxu0 0.0
    %4815 = vmatprep.subr.mxu0 0.0
    %4816 = vmatpush1.xpose.msra.mxu0 0.0
    %4817 = vmatprep.subr.mxu0 0.0
    %4818 = vmatpush1.xpose.msra.mxu0 0.0
    %4819 = vmatprep.subr.mxu0 0.0
    %4820 = vmatpush1.xpose.msra.mxu0 0.0
    %4821 = vmatprep.subr.mxu0 0.0
    %4822 = vmatpush1.xpose.msra.mxu0 0.0
    %4823 = vmatprep.subr.mxu0 0.0
    %4824 = vmatpush1.xpose.msra.mxu0 0.0
    %4825 = vmatprep.subr.mxu0 0.0
    %4826 = vmatpush1.xpose.msra.mxu0 0.0
    %4827 = vmatprep.subr.mxu0 0.0
    %4828 = vmatpush1.xpose.msra.mxu0 0.0
    %4829 = vmatprep.subr.mxu0 0.0
    %4830 = vmatpush1.xpose.msra.mxu0 0.0
    %4831 = vmatprep.subr.mxu0 0.0
    %4832 = vmatpush1.xpose.msra.mxu0 0.0
    %4833 = vmatprep.subr.mxu0 0.0
    %4834 = vmatpush1.xpose.msra.mxu0 0.0
    %4835 = vmatprep.subr.mxu0 0.0
    %4836 = vmatpush1.xpose.msra.mxu0 0.0
    %4837 = vmatprep.subr.mxu0 0.0
    %4838 = vmatpush1.xpose.msra.mxu0 0.0
    %4839 = vmatprep.subr.mxu0 0.0
    %4840 = vmatpush1.xpose.msra.mxu0 0.0
    %4841 = vmatprep.subr.mxu0 0.0
    %4842 = vmatpush1.xpose.msra.mxu0 0.0
    %4843 = vmatprep.subr.mxu0 0.0
    %4844 = vmatpush1.xpose.msra.mxu0 0.0
    %4845 = vmatprep.subr.mxu0 0.0
    %4846 = vmatpush1.xpose.msra.mxu0 0.0
    %4847 = vmatprep.subr.mxu0 0.0
    %4848 = vmatpush1.xpose.msra.mxu0 0.0
    %4849 = vmatprep.subr.mxu0 0.0
    %4850 = vmatpush1.xpose.msra.mxu0 0.0
    %4851 = vmatprep.mubr.f32.mxu0 0.0
    %4852 = vmatmul.mubr.f32.gmra.mrb[0].mxu0 %v4783
    %v4853 = vpop.f32.mrb[0].mxu0
    %v4854 = vadd.f32 0.0, %v4853
    %v4855 = vpop.f32.mrb[0].mxu0
    %4856 = vdwg.mxu0
    %v4857 = vmul.f32 %v4776, 0.35355338
    %v4858 = vmul.f32 %v4854, 0.35355338
    %v4859 = vadd.f32 %v4857, %v1288
    %v4860 = vadd.f32 %v4858, %v1292
    %v4861 = vsel %vm1131, %v4859, -inf
    %4862 = vmax.xlane.f32.xlu0 %v4861
    %v4863 = vpop.xlane.xlu0 %4862
    %v4864 = vsel %vm1131, %v4860, -inf
    %4865 = vmax.xlane.f32.xlu0 %v4864
    %v4866 = vpop.xlane.xlu0 %4865
    %v4867 = vsub.f32 %v4859, %v4863
    %v4868 = vsub.f32 %v4860, %v4866
    %v4869 = vmul.f32 %v4867, 1.442695
    %v4870 = vpow.pop %v4869
    %v4871 = vmul.f32 %v4868, 1.442695
    %v4872 = vpow.pop %v4871
    %v4873 = vsel %vm1131, %v4870, 0.0
    %4874 = vadd.xlane.f32.xlu0 %v4873
    %v4875 = vpop.xlane.xlu0 %4874
    %v4876 = vsel %vm1131, %v4872, 0.0
    %4877 = vadd.xlane.f32.xlu0 %v4876
    %v4878 = vpop.xlane.xlu0 %4877
    %v4879 = vrcp.pop %v4875
    %v4880 = vmul.f32 %v4870, %v4879
    %v4881 = vrcp.pop %v4878
    %v4882 = vmul.f32 %v4872, %v4881
    %4883 = vrot.lane.b32.xlu0 %v3443, 40
    %v4884 = vpop.permute.xlu0 %4883
    %v4887 = vsel %vm1131, %v4880, 0
    %4889 = vmatprep.subr.mxu0 0.0
    %4890 = vmatpush1.msra.mxu0 %v4884
    %4891 = vmatprep.subr.mxu0 0.0
    %4892 = vmatpush1.msra.mxu0 0.0
    %4893 = vmatprep.subr.mxu0 0.0
    %4894 = vmatpush1.msra.mxu0 0.0
    %4895 = vmatprep.subr.mxu0 0.0
    %4896 = vmatpush1.msra.mxu0 0.0
    %4897 = vmatprep.subr.mxu0 0.0
    %4898 = vmatpush1.msra.mxu0 0.0
    %4899 = vmatprep.subr.mxu0 0.0
    %4900 = vmatpush1.msra.mxu0 0.0
    %4901 = vmatprep.subr.mxu0 0.0
    %4902 = vmatpush1.msra.mxu0 0.0
    %4903 = vmatprep.subr.mxu0 0.0
    %4904 = vmatpush1.msra.mxu0 0.0
    %4905 = vmatprep.subr.mxu0 0.0
    %4906 = vmatpush1.msra.mxu0 0.0
    %4907 = vmatprep.subr.mxu0 0.0
    %4908 = vmatpush1.msra.mxu0 0.0
    %4909 = vmatprep.subr.mxu0 0.0
    %4910 = vmatpush1.msra.mxu0 0.0
    %4911 = vmatprep.subr.mxu0 0.0
    %4912 = vmatpush1.msra.mxu0 0.0
    %4913 = vmatprep.subr.mxu0 0.0
    %4914 = vmatpush1.msra.mxu0 0.0
    %4915 = vmatprep.subr.mxu0 0.0
    %4916 = vmatpush1.msra.mxu0 0.0
    %4917 = vmatprep.subr.mxu0 0.0
    %4918 = vmatpush1.msra.mxu0 0.0
    %4919 = vmatprep.subr.mxu0 0.0
    %4920 = vmatpush1.msra.mxu0 0.0
    %4921 = vmatprep.subr.mxu0 0.0
    %4922 = vmatpush1.msra.mxu0 0.0
    %4923 = vmatprep.subr.mxu0 0.0
    %4924 = vmatpush1.msra.mxu0 0.0
    %4925 = vmatprep.subr.mxu0 0.0
    %4926 = vmatpush1.msra.mxu0 0.0
    %4927 = vmatprep.subr.mxu0 0.0
    %4928 = vmatpush1.msra.mxu0 0.0
    %4929 = vmatprep.subr.mxu0 0.0
    %4930 = vmatpush1.msra.mxu0 0.0
    %4931 = vmatprep.subr.mxu0 0.0
    %4932 = vmatpush1.msra.mxu0 0.0
    %4933 = vmatprep.subr.mxu0 0.0
    %4934 = vmatpush1.msra.mxu0 0.0
    %4935 = vmatprep.subr.mxu0 0.0
    %4936 = vmatpush1.msra.mxu0 0.0
    %4937 = vmatprep.subr.mxu0 0.0
    %4938 = vmatpush1.msra.mxu0 0.0
    %4939 = vmatprep.subr.mxu0 0.0
    %4940 = vmatpush1.msra.mxu0 0.0
    %4941 = vmatprep.subr.mxu0 0.0
    %4942 = vmatpush1.msra.mxu0 0.0
    %4943 = vmatprep.subr.mxu0 0.0
    %4944 = vmatpush1.msra.mxu0 0.0
    %4945 = vmatprep.subr.mxu0 0.0
    %4946 = vmatpush1.msra.mxu0 0.0
    %4947 = vmatprep.subr.mxu0 0.0
    %4948 = vmatpush1.msra.mxu0 0.0
    %4949 = vmatprep.subr.mxu0 0.0
    %4950 = vmatpush1.msra.mxu0 0.0
    %4951 = vmatprep.subr.mxu0 0.0
    %4952 = vmatpush1.msra.mxu0 0.0
    %4953 = vmatprep.mubr.f32.mxu0 0.0
    %4954 = vmatmul.mubr.f32.gmra.mrb[0].mxu0 %v4887
    %v4955 = vpop.f32.mrb[0].mxu0
    %v4956 = vadd.f32 0.0, %v4955
    %v4957 = vpop.f32.mrb[0].mxu0
    %4958 = vdwg.mxu0
    %4959 = vrot.lane.b32.xlu0 %v3448, 40
    %v4960 = vpop.permute.xlu0 %4959
    %v4963 = vsel %vm1131, %v4882, 0
    %4965 = vmatprep.subr.mxu0 0.0
    %4966 = vmatpush1.msra.mxu0 %v4960
    %4967 = vmatprep.subr.mxu0 0.0
    %4968 = vmatpush1.msra.mxu0 0.0
    %4969 = vmatprep.subr.mxu0 0.0
    %4970 = vmatpush1.msra.mxu0 0.0
    %4971 = vmatprep.subr.mxu0 0.0
    %4972 = vmatpush1.msra.mxu0 0.0
    %4973 = vmatprep.subr.mxu0 0.0
    %4974 = vmatpush1.msra.mxu0 0.0
    %4975 = vmatprep.subr.mxu0 0.0
    %4976 = vmatpush1.msra.mxu0 0.0
    %4977 = vmatprep.subr.mxu0 0.0
    %4978 = vmatpush1.msra.mxu0 0.0
    %4979 = vmatprep.subr.mxu0 0.0
    %4980 = vmatpush1.msra.mxu0 0.0
    %4981 = vmatprep.subr.mxu0 0.0
    %4982 = vmatpush1.msra.mxu0 0.0
    %4983 = vmatprep.subr.mxu0 0.0
    %4984 = vmatpush1.msra.mxu0 0.0
    %4985 = vmatprep.subr.mxu0 0.0
    %4986 = vmatpush1.msra.mxu0 0.0
    %4987 = vmatprep.subr.mxu0 0.0
    %4988 = vmatpush1.msra.mxu0 0.0
    %4989 = vmatprep.subr.mxu0 0.0
    %4990 = vmatpush1.msra.mxu0 0.0
    %4991 = vmatprep.subr.mxu0 0.0
    %4992 = vmatpush1.msra.mxu0 0.0
    %4993 = vmatprep.subr.mxu0 0.0
    %4994 = vmatpush1.msra.mxu0 0.0
    %4995 = vmatprep.subr.mxu0 0.0
    %4996 = vmatpush1.msra.mxu0 0.0
    %4997 = vmatprep.subr.mxu0 0.0
    %4998 = vmatpush1.msra.mxu0 0.0
    %4999 = vmatprep.subr.mxu0 0.0
    %5000 = vmatpush1.msra.mxu0 0.0
    %5001 = vmatprep.subr.mxu0 0.0
    %5002 = vmatpush1.msra.mxu0 0.0
    %5003 = vmatprep.subr.mxu0 0.0
    %5004 = vmatpush1.msra.mxu0 0.0
    %5005 = vmatprep.subr.mxu0 0.0
    %5006 = vmatpush1.msra.mxu0 0.0
    %5007 = vmatprep.subr.mxu0 0.0
    %5008 = vmatpush1.msra.mxu0 0.0
    %5009 = vmatprep.subr.mxu0 0.0
    %5010 = vmatpush1.msra.mxu0 0.0
    %5011 = vmatprep.subr.mxu0 0.0
    %5012 = vmatpush1.msra.mxu0 0.0
    %5013 = vmatprep.subr.mxu0 0.0
    %5014 = vmatpush1.msra.mxu0 0.0
    %5015 = vmatprep.subr.mxu0 0.0
    %5016 = vmatpush1.msra.mxu0 0.0
    %5017 = vmatprep.subr.mxu0 0.0
    %5018 = vmatpush1.msra.mxu0 0.0
    %5019 = vmatprep.subr.mxu0 0.0
    %5020 = vmatpush1.msra.mxu0 0.0
    %5021 = vmatprep.subr.mxu0 0.0
    %5022 = vmatpush1.msra.mxu0 0.0
    %5023 = vmatprep.subr.mxu0 0.0
    %5024 = vmatpush1.msra.mxu0 0.0
    %5025 = vmatprep.subr.mxu0 0.0
    %5026 = vmatpush1.msra.mxu0 0.0
    %5027 = vmatprep.subr.mxu0 0.0
    %5028 = vmatpush1.msra.mxu0 0.0
    %5029 = vmatprep.mubr.f32.mxu0 0.0
    %5030 = vmatmul.mubr.f32.gmra.mrb[0].mxu0 %v4963
    %v5031 = vpop.f32.mrb[0].mxu0
    %v5032 = vadd.f32 0.0, %v5031
    %v5033 = vpop.f32.mrb[0].mxu0
    %5034 = vdwg.mxu0
    %v5036 = vsel %vm1131, %v4956, 0
    %v5039 = vsel %vm1131, %v5032, 0
    %5041 = vmatprep.subr.mxu0 0.0
    %5042 = vmatpush1.msra.mxu0 %v3455
    %5043 = vmatprep.subr.mxu0 0.0
    %5044 = vmatpush1.msra.mxu0 0.0
    %5045 = vmatprep.subr.mxu0 0.0
    %5046 = vmatpush1.msra.mxu0 0.0
    %5047 = vmatprep.subr.mxu0 0.0
    %5048 = vmatpush1.msra.mxu0 0.0
    %5049 = vmatprep.subr.mxu0 0.0
    %5050 = vmatpush1.msra.mxu0 0.0
    %5051 = vmatprep.subr.mxu0 0.0
    %5052 = vmatpush1.msra.mxu0 0.0
    %5053 = vmatprep.subr.mxu0 0.0
    %5054 = vmatpush1.msra.mxu0 0.0
    %5055 = vmatprep.subr.mxu0 0.0
    %5056 = vmatpush1.msra.mxu0 0.0
    %5057 = vmatprep.subr.mxu0 0.0
    %5058 = vmatpush1.msra.mxu0 0.0
    %5059 = vmatprep.subr.mxu0 0.0
    %5060 = vmatpush1.msra.mxu0 0.0
    %5061 = vmatprep.subr.mxu0 0.0
    %5062 = vmatpush1.msra.mxu0 0.0
    %5063 = vmatprep.subr.mxu0 0.0
    %5064 = vmatpush1.msra.mxu0 0.0
    %5065 = vmatprep.subr.mxu0 0.0
    %5066 = vmatpush1.msra.mxu0 0.0
    %5067 = vmatprep.subr.mxu0 0.0
    %5068 = vmatpush1.msra.mxu0 0.0
    %5069 = vmatprep.subr.mxu0 0.0
    %5070 = vmatpush1.msra.mxu0 0.0
    %5071 = vmatprep.subr.mxu0 0.0
    %5072 = vmatpush1.msra.mxu0 0.0
    %5073 = vmatprep.subr.mxu0 0.0
    %5074 = vmatpush1.msra.mxu0 0.0
    %5075 = vmatprep.subr.mxu0 0.0
    %5076 = vmatpush1.msra.mxu0 0.0
    %5077 = vmatprep.subr.mxu0 0.0
    %5078 = vmatpush1.msra.mxu0 0.0
    %5079 = vmatprep.subr.mxu0 0.0
    %5080 = vmatpush1.msra.mxu0 0.0
    %5081 = vmatprep.subr.mxu0 0.0
    %5082 = vmatpush1.msra.mxu0 0.0
    %5083 = vmatprep.subr.mxu0 0.0
    %5084 = vmatpush1.msra.mxu0 0.0
    %5085 = vmatprep.subr.mxu0 0.0
    %5086 = vmatpush1.msra.mxu0 0.0
    %5087 = vmatprep.subr.mxu0 0.0
    %5088 = vmatpush1.msra.mxu0 0.0
    %5089 = vmatprep.subr.mxu0 0.0
    %5090 = vmatpush1.msra.mxu0 0.0
    %5091 = vmatprep.subr.mxu0 0.0
    %5092 = vmatpush1.msra.mxu0 0.0
    %5093 = vmatprep.subr.mxu0 0.0
    %5094 = vmatpush1.msra.mxu0 0.0
    %5095 = vmatprep.subr.mxu0 0.0
    %5096 = vmatpush1.msra.mxu0 0.0
    %5097 = vmatprep.subr.mxu0 0.0
    %5098 = vmatpush1.msra.mxu0 0.0
    %5099 = vmatprep.subr.mxu0 0.0
    %5100 = vmatpush1.msra.mxu0 0.0
    %5101 = vmatprep.subr.mxu0 0.0
    %5102 = vmatpush1.msra.mxu0 0.0
    %5103 = vmatprep.subr.mxu0 0.0
    %5104 = vmatpush1.msra.mxu0 0.0
    %5105 = vmatprep.mubr.f32.mxu0 0.0
    %5106 = vmatmul.mubr.f32.gmra.mrb[0].mxu0 %v5036
    %v5107 = vpop.f32.mrb[0].mxu0
    %v5108 = vadd.f32 0.0, %v5107
    %v5109 = vpop.f32.mrb[0].mxu0
    %5110 = vmatprep.mubr.f32.mxu0 0.0
    %5111 = vmatmul.mubr.f32.gmra.mrb[0].mxu0 %v5039
    %v5112 = vpop.f32.mrb[0].mxu0
    %v5113 = vadd.f32 0.0, %v5112
    %v5114 = vpop.f32.mrb[0].mxu0
    %5115 = vdwg.mxu0
    %v5116 = vadd.f32 %v4699, %v5108
    %v5117 = vadd.f32 %v4700, %v5113
    %s5118 = scalar_lea.vmem [#allocation31], 1
    %v5119 = vld [vmem:[%s5118] sm:$0x1]
    %v5121 = vlaneseq
    %v5122 = vshrl.u32 %v5121, 7
    %v5123 = vsub.s32 0, %v5122
    %v5124 = vrot.slane %v5119, %v5123
    %v5126 = vadd.f32 %v5116, %v5124
    %v5127 = vadd.f32 %v5117, %v5124
    %v5128 = vadd.f32 %v5126, %v3355
    %v5129 = vadd.f32 %v5127, %v3356
    %s5130 = scalar_lea.vmem %s43, 1
    %v5131 = vld [vmem:[%s5130] sm:$0x1]
    %s5132 = scalar_lea.vmem %s45, 1
    %v5133 = vld [vmem:[%s5132] sm:$0x1]
    %v5134 = vsel %vm433, %v5128, 0.0
    %5135 = vadd.xlane.f32.xlu0 %v5134
    %v5136 = vpop.xlane.xlu0 %5135
    %v5137 = vsel %vm433, %v5129, 0.0
    %5138 = vadd.xlane.f32.xlu0 %v5137
    %v5139 = vpop.xlane.xlu0 %5138
    %v5140 = vmul.f32 %v5136, %v2820
    %v5141 = vmul.f32 %v5139, %v2820
    %v5142 = vsub.f32 %v5128, %v5140
    %v5143 = vsub.f32 %v5129, %v5141
    %v5144 = vmul.f32 %v5142, %v5142
    %v5145 = vmul.f32 %v5143, %v5143
    %v5146 = vsel %vm433, %v5144, 0.0
    %5147 = vadd.xlane.f32.xlu0 %v5146
    %v5148 = vpop.xlane.xlu0 %5147
    %v5149 = vsel %vm433, %v5145, 0.0
    %5150 = vadd.xlane.f32.xlu0 %v5149
    %v5151 = vpop.xlane.xlu0 %5150
    %v5152 = vmul.f32 %v5148, %v2820
    %v5153 = vmul.f32 %v5151, %v2820
    %v5154 = vadd.f32 %v5152, 1e-12
    %v5155 = vadd.f32 %v5153, 1e-12
    %v5156 = vrsqrt.pop %v5154
    %v5157 = vrsqrt.pop %v5155
    %v5158 = vmul.f32 %v5142, %v5156
    %v5159 = vmul.f32 %v5143, %v5157
    %v5161 = vlaneseq
    %v5162 = vshrl.u32 %v5161, 7
    %v5163 = vsub.s32 0, %v5162
    %v5164 = vrot.slane %v5131, %v5163
    %v5166 = vmul.f32 %v5158, %v5164
    %v5167 = vmul.f32 %v5159, %v5164
    %v5169 = vlaneseq
    %v5170 = vshrl.u32 %v5169, 7
    %v5171 = vsub.s32 0, %v5170
    %v5172 = vrot.slane %v5133, %v5171
    %v5174 = vadd.f32 %v5166, %v5172
    %v5175 = vadd.f32 %v5167, %v5172
    %s5176 = scalar_lea.vmem [#allocation32], 32
    %v5177 = vld [vmem:[%s5176] sm:$0xff]
    %v5178 = vld [vmem:[%s5176 + $0x8] sm:$0xff]
    %v5179 = vld [vmem:[%s5176 + $0x10] sm:$0xff]
    %v5180 = vld [vmem:[%s5176 + $0x18] sm:$0xff]
    %s5181 = scalar_lea.vmem [#allocation34], 1
    %v5182 = vld [vmem:[%s5181] sm:$0x1]
    %v5184 = vlaneseq
    %v5185 = vshrl.u32 %v5184, 7
    %v5186 = vsub.s32 0, %v5185
    %v5187 = vrot.slane %v5182, %v5186
    %v5190 = vsel %vm433, %v5174, 0
    %v5193 = vsel %vm433, %v5175, 0
    %5195 = vmatprep.subr.mxu0 0.0
    %5196 = vmatpush1.msra.mxu0 %v5177
    %5197 = vmatprep.subr.mxu0 0.0
    %5198 = vmatpush1.msra.mxu0 %v5178
    %5199 = vmatprep.subr.mxu0 0.0
    %5200 = vmatpush1.msra.mxu0 %v5179
    %5201 = vmatprep.subr.mxu0 0.0
    %5202 = vmatpush1.msra.mxu0 %v5180
    %5203 = vmatprep.subr.mxu0 0.0
    %5204 = vmatpush1.msra.mxu0 0.0
    %5205 = vmatprep.subr.mxu0 0.0
    %5206 = vmatpush1.msra.mxu0 0.0
    %5207 = vmatprep.subr.mxu0 0.0
    %5208 = vmatpush1.msra.mxu0 0.0
    %5209 = vmatprep.subr.mxu0 0.0
    %5210 = vmatpush1.msra.mxu0 0.0
    %5211 = vmatprep.subr.mxu0 0.0
    %5212 = vmatpush1.msra.mxu0 0.0
    %5213 = vmatprep.subr.mxu0 0.0
    %5214 = vmatpush1.msra.mxu0 0.0
    %5215 = vmatprep.subr.mxu0 0.0
    %5216 = vmatpush1.msra.mxu0 0.0
    %5217 = vmatprep.subr.mxu0 0.0
    %5218 = vmatpush1.msra.mxu0 0.0
    %5219 = vmatprep.subr.mxu0 0.0
    %5220 = vmatpush1.msra.mxu0 0.0
    %5221 = vmatprep.subr.mxu0 0.0
    %5222 = vmatpush1.msra.mxu0 0.0
    %5223 = vmatprep.subr.mxu0 0.0
    %5224 = vmatpush1.msra.mxu0 0.0
    %5225 = vmatprep.subr.mxu0 0.0
    %5226 = vmatpush1.msra.mxu0 0.0
    %5227 = vmatprep.subr.mxu0 0.0
    %5228 = vmatpush1.msra.mxu0 0.0
    %5229 = vmatprep.subr.mxu0 0.0
    %5230 = vmatpush1.msra.mxu0 0.0
    %5231 = vmatprep.subr.mxu0 0.0
    %5232 = vmatpush1.msra.mxu0 0.0
    %5233 = vmatprep.subr.mxu0 0.0
    %5234 = vmatpush1.msra.mxu0 0.0
    %5235 = vmatprep.subr.mxu0 0.0
    %5236 = vmatpush1.msra.mxu0 0.0
    %5237 = vmatprep.subr.mxu0 0.0
    %5238 = vmatpush1.msra.mxu0 0.0
    %5239 = vmatprep.subr.mxu0 0.0
    %5240 = vmatpush1.msra.mxu0 0.0
    %5241 = vmatprep.subr.mxu0 0.0
    %5242 = vmatpush1.msra.mxu0 0.0
    %5243 = vmatprep.subr.mxu0 0.0
    %5244 = vmatpush1.msra.mxu0 0.0
    %5245 = vmatprep.subr.mxu0 0.0
    %5246 = vmatpush1.msra.mxu0 0.0
    %5247 = vmatprep.subr.mxu0 0.0
    %5248 = vmatpush1.msra.mxu0 0.0
    %5249 = vmatprep.subr.mxu0 0.0
    %5250 = vmatpush1.msra.mxu0 0.0
    %5251 = vmatprep.subr.mxu0 0.0
    %5252 = vmatpush1.msra.mxu0 0.0
    %5253 = vmatprep.subr.mxu0 0.0
    %5254 = vmatpush1.msra.mxu0 0.0
    %5255 = vmatprep.subr.mxu0 0.0
    %5256 = vmatpush1.msra.mxu0 0.0
    %5257 = vmatprep.subr.mxu0 0.0
    %5258 = vmatpush1.msra.mxu0 0.0
    %5259 = vmatprep.mubr.f32.mxu0 0.0
    %5260 = vmatmul.mubr.f32.gmra.mrb[0].mxu0 %v5190
    %v5261 = vpop.f32.mrb[0].mxu0
    %v5262 = vadd.f32 %v5187, %v5261
    %v5263 = vpop.f32.mrb[0].mxu0
    %5264 = vmatprep.mubr.f32.mxu0 0.0
    %5265 = vmatmul.mubr.f32.gmra.mrb[0].mxu0 %v5193
    %v5266 = vpop.f32.mrb[0].mxu0
    %v5267 = vadd.f32 %v5187, %v5266
    %v5268 = vpop.f32.mrb[0].mxu0
    %5269 = vdwg.mxu0
    %v5270 = vmul.f32 %v5262, 0.5
    %v5271 = vmul.f32 %v5267, 0.5
    %v5272 = vmul.f32 %v5262, 0.70710677
    %v5273 = vmul.f32 %v5267, 0.70710677
    %v5274 = vand.u32 2147483647, %v5272
    %v5275 = vand.u32 2147483647, %v5273
    %v5276 = vmul.f32 %v5274, 0.3275911
    %v5277 = vmul.f32 %v5275, 0.3275911
    %v5278 = vadd.f32 %v5276, 1.0
    %v5279 = vadd.f32 %v5277, 1.0
    %v5280 = vrcp.pop %v5278
    %v5281 = vmul.f32 1.0, %v5280
    %v5282 = vrcp.pop %v5279
    %v5283 = vmul.f32 1.0, %v5282
    %v5284 = vmul.f32 %v5281, 1.0614054
    %v5285 = vmul.f32 %v5283, 1.0614054
    %v5286 = vadd.f32 %v5284, -1.4531521
    %v5287 = vadd.f32 %v5285, -1.4531521
    %v5288 = vmul.f32 %v5286, %v5281
    %v5289 = vmul.f32 %v5287, %v5283
    %v5290 = vadd.f32 %v5288, 1.4214138
    %v5291 = vadd.f32 %v5289, 1.4214138
    %v5292 = vmul.f32 %v5290, %v5281
    %v5293 = vmul.f32 %v5291, %v5283
    %v5294 = vadd.f32 %v5292, -0.28449672
    %v5295 = vadd.f32 %v5293, -0.28449672
    %v5296 = vmul.f32 %v5294, %v5281
    %v5297 = vmul.f32 %v5295, %v5283
    %v5298 = vadd.f32 %v5296, 0.2548296
    %v5299 = vadd.f32 %v5297, 0.2548296
    %v5300 = vmul.f32 %v5298, %v5281
    %v5301 = vmul.f32 %v5299, %v5283
    %v5302 = vsub.f32 0.0, %v5274
    %v5303 = vsub.f32 0.0, %v5275
    %v5304 = vmul.f32 %v5302, %v5274
    %v5305 = vmul.f32 %v5303, %v5275
    %v5306 = vmul.f32 %v5304, 1.442695
    %v5307 = vpow.pop %v5306
    %v5308 = vmul.f32 %v5305, 1.442695
    %v5309 = vpow.pop %v5308
    %v5310 = vmul.f32 %v5300, %v5307
    %v5311 = vmul.f32 %v5301, %v5309
    %v5312 = vsub.f32 1.0, %v5310
    %v5313 = vsub.f32 1.0, %v5311
    %vm5314 = vcmp.lt.f32.partialorder %v5272, 0.0
    %vm5315 = vcmp.lt.f32.partialorder %v5273, 0.0
    %v5316 = vsub.f32 0.0, %v5312
    %v5317 = vsub.f32 0.0, %v5313
    %v5318 = vsel %vm5314, %v5316, %v5312
    %v5319 = vsel %vm5315, %v5317, %v5313
    %v5320 = vadd.f32 %v5318, 1.0
    %v5321 = vadd.f32 %v5319, 1.0
    %v5322 = vmul.f32 %v5270, %v5320
    %v5323 = vmul.f32 %v5271, %v5321
    %s5324 = scalar_lea.vmem %s51, 64
    %v5325 = vld [vmem:[%s5324] sm:$0xff]
    %v5326 = vld [vmem:[%s5324 + $0x8] sm:$0xff]
    %v5327 = vld [vmem:[%s5324 + $0x10] sm:$0xff]
    %v5328 = vld [vmem:[%s5324 + $0x18] sm:$0xff]
    %v5329 = vld [vmem:[%s5324 + $0x20] sm:$0xff]
    %v5330 = vld [vmem:[%s5324 + $0x28] sm:$0xff]
    %v5331 = vld [vmem:[%s5324 + $0x30] sm:$0xff]
    %v5332 = vld [vmem:[%s5324 + $0x38] sm:$0xff]
    %s5333 = scalar_lea.vmem %s53, 1
    %v5334 = vld [vmem:[%s5333] sm:$0x1]
    %v5336 = vlaneseq
    %v5337 = vshrl.u32 %v5336, 7
    %v5338 = vsub.s32 0, %v5337
    %v5339 = vrot.slane %v5334, %v5338
    %v5342 = vsel %vm529, %v5322, 0
    %v5345 = vsel %vm529, %v5323, 0
    %5347 = vmatprep.subr.mxu0 0.0
    %5348 = vmatpush1.msra.mxu0 %v5325
    %5349 = vmatprep.subr.mxu0 0.0
    %5350 = vmatpush1.msra.mxu0 %v5326
    %5351 = vmatprep.subr.mxu0 0.0
    %5352 = vmatpush1.msra.mxu0 %v5327
    %5353 = vmatprep.subr.mxu0 0.0
    %5354 = vmatpush1.msra.mxu0 %v5328
    %5355 = vmatprep.subr.mxu0 0.0
    %5356 = vmatpush1.msra.mxu0 %v5329
    %5357 = vmatprep.subr.mxu0 0.0
    %5358 = vmatpush1.msra.mxu0 %v5330
    %5359 = vmatprep.subr.mxu0 0.0
    %5360 = vmatpush1.msra.mxu0 %v5331
    %5361 = vmatprep.subr.mxu0 0.0
    %5362 = vmatpush1.msra.mxu0 %v5332
    %5363 = vmatprep.subr.mxu0 0.0
    %5364 = vmatpush1.msra.mxu0 0.0
    %5365 = vmatprep.subr.mxu0 0.0
    %5366 = vmatpush1.msra.mxu0 0.0
    %5367 = vmatprep.subr.mxu0 0.0
    %5368 = vmatpush1.msra.mxu0 0.0
    %5369 = vmatprep.subr.mxu0 0.0
    %5370 = vmatpush1.msra.mxu0 0.0
    %5371 = vmatprep.subr.mxu0 0.0
    %5372 = vmatpush1.msra.mxu0 0.0
    %5373 = vmatprep.subr.mxu0 0.0
    %5374 = vmatpush1.msra.mxu0 0.0
    %5375 = vmatprep.subr.mxu0 0.0
    %5376 = vmatpush1.msra.mxu0 0.0
    %5377 = vmatprep.subr.mxu0 0.0
    %5378 = vmatpush1.msra.mxu0 0.0
    %5379 = vmatprep.subr.mxu0 0.0
    %5380 = vmatpush1.msra.mxu0 0.0
    %5381 = vmatprep.subr.mxu0 0.0
    %5382 = vmatpush1.msra.mxu0 0.0
    %5383 = vmatprep.subr.mxu0 0.0
    %5384 = vmatpush1.msra.mxu0 0.0
    %5385 = vmatprep.subr.mxu0 0.0
    %5386 = vmatpush1.msra.mxu0 0.0
    %5387 = vmatprep.subr.mxu0 0.0
    %5388 = vmatpush1.msra.mxu0 0.0
    %5389 = vmatprep.subr.mxu0 0.0
    %5390 = vmatpush1.msra.mxu0 0.0
    %5391 = vmatprep.subr.mxu0 0.0
    %5392 = vmatpush1.msra.mxu0 0.0
    %5393 = vmatprep.subr.mxu0 0.0
    %5394 = vmatpush1.msra.mxu0 0.0
    %5395 = vmatprep.subr.mxu0 0.0
    %5396 = vmatpush1.msra.mxu0 0.0
    %5397 = vmatprep.subr.mxu0 0.0
    %5398 = vmatpush1.msra.mxu0 0.0
    %5399 = vmatprep.subr.mxu0 0.0
    %5400 = vmatpush1.msra.mxu0 0.0
    %5401 = vmatprep.subr.mxu0 0.0
    %5402 = vmatpush1.msra.mxu0 0.0
    %5403 = vmatprep.subr.mxu0 0.0
    %5404 = vmatpush1.msra.mxu0 0.0
    %5405 = vmatprep.subr.mxu0 0.0
    %5406 = vmatpush1.msra.mxu0 0.0
    %5407 = vmatprep.subr.mxu0 0.0
    %5408 = vmatpush1.msra.mxu0 0.0
    %5409 = vmatprep.subr.mxu0 0.0
    %5410 = vmatpush1.msra.mxu0 0.0
    %5411 = vmatprep.mubr.f32.mxu0 0.0
    %5412 = vmatmul.mubr.f32.gmra.mrb[0].mxu0 %v5342
    %v5413 = vpop.f32.mrb[0].mxu0
    %v5414 = vadd.f32 %v5339, %v5413
    %v5415 = vpop.f32.mrb[0].mxu0
    %5416 = vmatprep.mubr.f32.mxu0 0.0
    %5417 = vmatmul.mubr.f32.gmra.mrb[0].mxu0 %v5345
    %v5418 = vpop.f32.mrb[0].mxu0
    %v5419 = vadd.f32 %v5339, %v5418
    %v5420 = vpop.f32.mrb[0].mxu0
    %5421 = vdwg.mxu0
    %v5422 = vadd.f32 %v5414, %v5174
    %v5423 = vadd.f32 %v5419, %v5175
    %s5424 = scalar_lea.vmem %s55, 1
    %v5425 = vld [vmem:[%s5424] sm:$0x1]
    %s5426 = scalar_lea.vmem %s57, 1
    %v5427 = vld [vmem:[%s5426] sm:$0x1]
    %v5428 = vsel %vm433, %v5422, 0.0
    %5429 = vadd.xlane.f32.xlu0 %v5428
    %v5430 = vpop.xlane.xlu0 %5429
    %v5431 = vsel %vm433, %v5423, 0.0
    %5432 = vadd.xlane.f32.xlu0 %v5431
    %v5433 = vpop.xlane.xlu0 %5432
    %v5434 = vmul.f32 %v5430, %v2820
    %v5435 = vmul.f32 %v5433, %v2820
    %v5436 = vsub.f32 %v5422, %v5434
    %v5437 = vsub.f32 %v5423, %v5435
    %v5438 = vmul.f32 %v5436, %v5436
    %v5439 = vmul.f32 %v5437, %v5437
    %v5440 = vsel %vm433, %v5438, 0.0
    %5441 = vadd.xlane.f32.xlu0 %v5440
    %v5442 = vpop.xlane.xlu0 %5441
    %v5443 = vsel %vm433, %v5439, 0.0
    %5444 = vadd.xlane.f32.xlu0 %v5443
    %v5445 = vpop.xlane.xlu0 %5444
    %v5446 = vmul.f32 %v5442, %v2820
    %v5447 = vmul.f32 %v5445, %v2820
    %v5448 = vadd.f32 %v5446, 1e-12
    %v5449 = vadd.f32 %v5447, 1e-12
    %v5450 = vrsqrt.pop %v5448
    %v5451 = vrsqrt.pop %v5449
    %v5452 = vmul.f32 %v5436, %v5450
    %v5453 = vmul.f32 %v5437, %v5451
    %v5455 = vlaneseq
    %v5456 = vshrl.u32 %v5455, 7
    %v5457 = vsub.s32 0, %v5456
    %v5458 = vrot.slane %v5425, %v5457
    %v5460 = vmul.f32 %v5452, %v5458
    %v5461 = vmul.f32 %v5453, %v5458
    %v5463 = vlaneseq
    %v5464 = vshrl.u32 %v5463, 7
    %v5465 = vsub.s32 0, %v5464
    %v5466 = vrot.slane %v5427, %v5465
    %v5468 = vadd.f32 %v5460, %v5466
    %v5469 = vadd.f32 %v5461, %v5466
    %v5470 = vld [vmem:[#allocation35] sm:$0xff]
    %v5471 = vld [vmem:[#allocation35 + $0x8] sm:$0xff]
    %v5472 = vld [vmem:[#allocation35 + $0x10] sm:$0xff]
    %v5473 = vld [vmem:[#allocation35 + $0x18] sm:$0xff]
    %v5474 = vld [vmem:[%s61] sm:$0x1]
    %v5476 = vlaneseq
    %v5477 = vshrl.u32 %v5476, 7
    %v5478 = vsub.s32 0, %v5477
    %v5479 = vrot.slane %v5474, %v5478
    %v5482 = vsel %vm433, %v5468, 0
    %v5485 = vsel %vm433, %v5469, 0
    %5487 = vmatprep.subr.mxu0 0.0
    %5488 = vmatpush1.msra.mxu0 %v5470
    %5489 = vmatprep.subr.mxu0 0.0
    %5490 = vmatpush1.msra.mxu0 %v5471
    %5491 = vmatprep.subr.mxu0 0.0
    %5492 = vmatpush1.msra.mxu0 %v5472
    %5493 = vmatprep.subr.mxu0 0.0
    %5494 = vmatpush1.msra.mxu0 %v5473
    %5495 = vmatprep.subr.mxu0 0.0
    %5496 = vmatpush1.msra.mxu0 0.0
    %5497 = vmatprep.subr.mxu0 0.0
    %5498 = vmatpush1.msra.mxu0 0.0
    %5499 = vmatprep.subr.mxu0 0.0
    %5500 = vmatpush1.msra.mxu0 0.0
    %5501 = vmatprep.subr.mxu0 0.0
    %5502 = vmatpush1.msra.mxu0 0.0
    %5503 = vmatprep.subr.mxu0 0.0
    %5504 = vmatpush1.msra.mxu0 0.0
    %5505 = vmatprep.subr.mxu0 0.0
    %5506 = vmatpush1.msra.mxu0 0.0
    %5507 = vmatprep.subr.mxu0 0.0
    %5508 = vmatpush1.msra.mxu0 0.0
    %5509 = vmatprep.subr.mxu0 0.0
    %5510 = vmatpush1.msra.mxu0 0.0
    %5511 = vmatprep.subr.mxu0 0.0
    %5512 = vmatpush1.msra.mxu0 0.0
    %5513 = vmatprep.subr.mxu0 0.0
    %5514 = vmatpush1.msra.mxu0 0.0
    %5515 = vmatprep.subr.mxu0 0.0
    %5516 = vmatpush1.msra.mxu0 0.0
    %5517 = vmatprep.subr.mxu0 0.0
    %5518 = vmatpush1.msra.mxu0 0.0
    %5519 = vmatprep.subr.mxu0 0.0
    %5520 = vmatpush1.msra.mxu0 0.0
    %5521 = vmatprep.subr.mxu0 0.0
    %5522 = vmatpush1.msra.mxu0 0.0
    %5523 = vmatprep.subr.mxu0 0.0
    %5524 = vmatpush1.msra.mxu0 0.0
    %5525 = vmatprep.subr.mxu0 0.0
    %5526 = vmatpush1.msra.mxu0 0.0
    %5527 = vmatprep.subr.mxu0 0.0
    %5528 = vmatpush1.msra.mxu0 0.0
    %5529 = vmatprep.subr.mxu0 0.0
    %5530 = vmatpush1.msra.mxu0 0.0
    %5531 = vmatprep.subr.mxu0 0.0
    %5532 = vmatpush1.msra.mxu0 0.0
    %5533 = vmatprep.subr.mxu0 0.0
    %5534 = vmatpush1.msra.mxu0 0.0
    %5535 = vmatprep.subr.mxu0 0.0
    %5536 = vmatpush1.msra.mxu0 0.0
    %5537 = vmatprep.subr.mxu0 0.0
    %5538 = vmatpush1.msra.mxu0 0.0
    %5539 = vmatprep.subr.mxu0 0.0
    %5540 = vmatpush1.msra.mxu0 0.0
    %5541 = vmatprep.subr.mxu0 0.0
    %5542 = vmatpush1.msra.mxu0 0.0
    %5543 = vmatprep.subr.mxu0 0.0
    %5544 = vmatpush1.msra.mxu0 0.0
    %5545 = vmatprep.subr.mxu0 0.0
    %5546 = vmatpush1.msra.mxu0 0.0
    %5547 = vmatprep.subr.mxu0 0.0
    %5548 = vmatpush1.msra.mxu0 0.0
    %5549 = vmatprep.subr.mxu0 0.0
    %5550 = vmatpush1.msra.mxu0 0.0
    %5551 = vmatprep.mubr.f32.mxu0 0.0
    %5552 = vmatmul.mubr.f32.gmra.mrb[0].mxu0 %v5482
    %v5553 = vpop.f32.mrb[0].mxu0
    %v5554 = vadd.f32 %v5479, %v5553
    %v5555 = vpop.f32.mrb[0].mxu0
    %5556 = vmatprep.mubr.f32.mxu0 0.0
    %5557 = vmatmul.mubr.f32.gmra.mrb[0].mxu0 %v5485
    %v5558 = vpop.f32.mrb[0].mxu0
    %v5559 = vadd.f32 %v5479, %v5558
    %v5560 = vpop.f32.mrb[0].mxu0
    %5561 = vdwg.mxu0
    %5562 = vst.msk [vmem:[#allocation37] sm:$0xff] %vm614, %v5554
    %5563 = vst.msk [vmem:[#allocation37 + $0x8] sm:$0xff] %vm614, %v5559
    // Predicated region
    $region214: #{score_estimator_forward.1} parent=1 // pred_check
      _
    $region215: #{score_estimator_forward.1} parent=1 // pred_check_branch
      %5565 = sbr.rel (0) target = $region217
    $region216: #{score_estimator_forward.1} parent=1 // pred_region
      %s5567 = ssub.s32 256, 256
      %5568 = vsyncadd [#allocation4], %s5567
      %s5569 = sshll.u32 [#allocation37], 4
      %s5570 = int_to_ptr.vmem [resolvable:$true] %s5569
      %5575 = dma.vmem_to_hbm [thread:$0]  %s5570, 256, %s63, [#allocation4], 128, 128, 8
    $region217: #{score_estimator_forward.1} parent=1 // pred_fallthru
      _
    // Predicated region
    $region218: #{score_estimator_forward.1} parent=1 // pred_check
      _
    $region219: #{score_estimator_forward.1} parent=1 // pred_check_branch
      %5577 = sbr.rel (0) target = $region221
    $region220: #{score_estimator_forward.1} parent=1 // pred_region
      %5578 = dma.done [#allocation4], 256
    $region221: #{score_estimator_forward.1} parent=1 // pred_fallthru
      _
    %5579 = vsyncpa [#allocation3], 1
    %5580 = vsyncpa [#allocation6], 1
    %5581 = vsyncpa [#allocation9], 1
    %5582 = vsyncpa [#allocation12], 1
    %5583 = vsyncpa [#allocation15], 1
    %5584 = vsyncpa [#allocation18], 1
    %5585 = vsyncpa [#allocation21], 1
    %5586 = vsyncpa [#allocation24], 1
    %5587 = vsyncpa [#allocation27], 1
    %5588 = vsyncpa [#allocation30], 1
    %5589 = vsyncpa [#allocation33], 1
    %5590 = vsyncpa [#allocation36], 1
    %5591 = vsyncpa [#allocation4], 1

</llo_original>
